<compile_context>
chip_gen: v7x
topology: tpu7x:2x2x1
jax: 0.10.0
libtpu: 0.0.40
codegen_flags: <defaults>
</compile_context>

<pallas_src>
import functools

import jax
import jax.numpy as jnp
from jax import lax
from jax.experimental import pallas as pl
from jax.experimental.pallas import tpu as pltpu


MXU_DTYPE = jnp.bfloat16   # HBM-resident / in-kernel MXU operand dtype (f32 accumulation)


# --------------------------------------------------------------------------
# The single fused kernel.  One grid step per batch element.
# --------------------------------------------------------------------------
def _fused_kernel(x_ref, refs_ref, w_ref, b_ref, wqkv_ref,
                  sqz_ref, agg_ref, refpt_ref, spt_ref, smask_ref,
                  *, cout, nslots, nrefs, k, iters):
    # x_ref:    (1, Cin, HW)      bf16   target, flattened spatially
    # refs_ref: (1, NR, Cin, HW)  bf16   all references
    # w_ref:    (Cout+S, Cin)     bf16   combined [sqz ; slot] 1x1-conv weight
    # b_ref:    (Cout+S, 1)       f32    combined bias
    # wqkv_ref: (3*Cout, Cout)    bf16   [wq*scale ; wk ; wv]
    w = w_ref[...]
    b = b_ref[...]
    w_sqz = w[:cout]
    b_sqz = b[:cout]

    # ---- target conv: y = W x + b  -> sqz (Cout,HW), slot (S,HW) ----------
    y = jnp.dot(w, x_ref[0], preferred_element_type=jnp.float32) + b
    sqz = y[:cout]
    slot = y[cout:]
    sqz_ref[0] = sqz                                     # module output

    sqz_bf = sqz.astype(MXU_DTYPE)

    # ---- slot prototypes: softmax over the slot axis (PyTorch dim=1) ------
    # Exact normalization (module outputs), not the approx EUP reciprocal.
    ms = slot - jnp.max(slot, axis=0, keepdims=True)
    es = jnp.exp(ms)
    p_slot = es / jnp.sum(es, axis=0, keepdims=True)     # (S, HW)
    smask_ref[0] = p_slot
    spt_ref[0] = lax.dot_general(p_slot.astype(MXU_DTYPE), sqz_bf,
                                 (((1,), (1,)), ((), ())),
                                 preferred_element_type=jnp.float32)   # (S, Cout)

    # ---- k-means prototypes ------------------------------------------------
    # TODO(synk): reference uses fast_pytorch_kmeans (random init); replaced
    # by a deterministic Lloyd's algorithm (evenly spaced init, fixed iters).
    hw = sqz.shape[1]
    stride = hw // k
    row = lax.broadcasted_iota(jnp.int32, (k, hw), 0)
    col = lax.broadcasted_iota(jnp.int32, (k, hw), 1)
    sel = (col == row * stride).astype(MXU_DTYPE)        # one-hot init picker
    c0 = lax.dot_general(sel, sqz_bf, (((1,), (1,)), ((), ())),
                         preferred_element_type=jnp.float32)            # (k, Cout)

    # Ones row appended so cluster counts come out of the SAME matmul as the
    # cluster sums (no per-iteration cross-lane reduction on the XLU path).
    sqz_aug = jnp.concatenate(
        [sqz_bf, jnp.ones((1, hw), MXU_DTYPE)], axis=0)                 # (Cout+1, HW)

    def assign(c):
        # d[i,j] = ||c_i||^2 - 2 c_i . x_j   (||x_j||^2 constant per column)
        cn2 = jnp.sum(c * c, axis=1, keepdims=True)                     # (k, 1)
        d = cn2 - 2.0 * jnp.dot(c, sqz, preferred_element_type=jnp.float32)
        dmin = jnp.min(d, axis=0, keepdims=True)
        cand = jnp.where(d <= dmin, row, jnp.int32(k))
        first = jnp.min(cand, axis=0, keepdims=True)                    # argmin + first-index tiebreak
        return row == first                                             # (k, hw) one-hot bool

    def body(_, c):
        onehot = assign(c).astype(MXU_DTYPE)
        sums_counts = lax.dot_general(onehot, sqz_aug, (((1,), (1,)), ((), ())),
                                      preferred_element_type=jnp.float32)   # (k, Cout+1)
        sums = sums_counts[:, :cout]
        counts = sums_counts[:, cout:cout + 1]
        # Empty clusters keep their previous centroid.
        return jnp.where(counts > 0.5, sums / jnp.maximum(counts, 1.0), c)

    # At these spatial sizes the (k,HW) temporaries are tiny; for much larger
    # HW switch to unroll=False and/or set vmem_limit_bytes (v7x has 64 MiB).
    c_final = lax.fori_loop(0, iters, body, c0, unroll=True)
    onehot_f = assign(c_final).astype(MXU_DTYPE)
    # Cluster SUMS (binary-mask pooling), exactly as the PyTorch reference,
    # already in the 'n c' layout FAT consumes -> no 'c n' copy needed.
    tpt_nc = lax.dot_general(onehot_f, sqz_bf, (((1,), (1,)), ((), ())),
                             preferred_element_type=jnp.float32)        # (k, Cout)

    # ---- reference path: sqz conv + spatial-softmax prototypes ------------
    ref_tokens = []
    for r in range(nrefs):                               # static loop, NR small
        sr = jnp.dot(w_sqz, refs_ref[0, r],
                     preferred_element_type=jnp.float32) + b_sqz        # (Cout, HW)
        mr = sr - jnp.max(sr, axis=1, keepdims=True)     # softmax over HW (dim=2)
        er = jnp.exp(mr)
        pr = er / jnp.sum(er, axis=1, keepdims=True)     # exact (module output)
        pb = lax.dot_general(pr.astype(MXU_DTYPE), sr.astype(MXU_DTYPE),
                             (((1,), (1,)), ((), ())),
                             preferred_element_type=jnp.float32)        # (Cout, Cout)
        refpt_ref[0, r] = pb                             # module output
        ref_tokens.append(pb)

    ref_nc = jnp.concatenate(ref_tokens, axis=0)         # (NR*Cout, Cout), stays in VMEM

    # ---- FAT ----------------------------------------------------------------
    # TODO(synk): Feature_Aggregation_Transformer is not defined in the
    # reference; modeled as single-head cross attention (target prototypes
    # attend over reference prototypes) with a residual connection.
    wqkv = wqkv_ref[...]                                 # (3C, C), scale folded into wq
    qkv_t = lax.dot_general(wqkv, tpt_nc.astype(MXU_DTYPE),
                            (((1,), (1,)), ((), ())),
                            preferred_element_type=jnp.float32)         # (3C, N)
    qkv_r = lax.dot_general(wqkv, ref_nc.astype(MXU_DTYPE),
                            (((1,), (1,)), ((), ())),
                            preferred_element_type=jnp.float32)         # (3C, R)
    q = qkv_t[:cout]                                     # (C, N)
    kk = qkv_r[cout:2 * cout]                            # (C, R)
    vv = qkv_r[2 * cout:]                                # (C, R)
    s = lax.dot_general(q, kk, (((0,), (0,)), ((), ())),
                        preferred_element_type=jnp.float32)             # (N, R)
    s = s - jnp.max(s, axis=1, keepdims=True)
    e = jnp.exp(s)
    a = e * pl.reciprocal(jnp.sum(e, axis=1, keepdims=True), approx=True)
    agg = lax.dot_general(a, vv, (((1,), (1,)), ((), ())),
                          preferred_element_type=jnp.float32)           # (N, C)
    agg_ref[0] = tpt_nc + agg                            # residual, 'b n c'


def fused_forward(tflat, refs_arr, w_comb, b_comb, wqkv, *, cout, nslots, k, iters):
    B, cin, HW = tflat.shape
    NR = refs_arr.shape[1]
    kernel = functools.partial(_fused_kernel, cout=cout, nslots=nslots,
                               nrefs=NR, k=k, iters=iters)
    return pl.pallas_call(
        kernel,
        out_shape=(jax.ShapeDtypeStruct((B, cout, HW), jnp.float32),      # sqz
                   jax.ShapeDtypeStruct((B, k, cout), jnp.float32),       # agg_pt
                   jax.ShapeDtypeStruct((B, NR, cout, cout), jnp.float32),# ref_pts
                   jax.ShapeDtypeStruct((B, nslots, cout), jnp.float32),  # slot_pt
                   jax.ShapeDtypeStruct((B, nslots, HW), jnp.float32)),   # slot_mask
        grid=(B,),
        in_specs=[pl.BlockSpec((1, cin, HW), lambda b: (b, 0, 0)),
                  pl.BlockSpec((1, NR, cin, HW), lambda b: (b, 0, 0, 0)),
                  pl.BlockSpec((cout + nslots, cin), lambda b: (0, 0)),
                  pl.BlockSpec((cout + nslots, 1), lambda b: (0, 0)),
                  pl.BlockSpec((3 * cout, cout), lambda b: (0, 0))],
        out_specs=(pl.BlockSpec((1, cout, HW), lambda b: (b, 0, 0)),
                   pl.BlockSpec((1, k, cout), lambda b: (b, 0, 0)),
                   pl.BlockSpec((1, NR, cout, cout), lambda b: (b, 0, 0, 0)),
                   pl.BlockSpec((1, nslots, cout), lambda b: (b, 0, 0)),
                   pl.BlockSpec((1, nslots, HW), lambda b: (b, 0, 0))),
        # Batch axis parallel -> both v7x TensorCores busy for B>=2.
        # (For B==1 in production, split the NR refs over a leading size-2
        #  parallel axis instead, otherwise one TC idles on v7x.)
        compiler_params=pltpu.CompilerParams(dimension_semantics=("parallel",)),
    )(tflat, refs_arr, w_comb, b_comb, wqkv)


# -------------------------------------------------------------- parameters ---
def init_params(key, in_channels, out_channels, num_slots):
    k1, k2, k3, k4, k5 = jax.random.split(key, 5)

    def kaiming(kk, shape, fan_in):  # kaiming_normal_, mode='fan_in', relu gain
        return jax.random.normal(kk, shape, jnp.float32) * (2.0 / fan_in) ** 0.5

    sqz_w = kaiming(k1, (out_channels, in_channels), in_channels)
    slot_w = kaiming(k2, (num_slots, in_channels), in_channels)
    sqz_b = jnp.zeros((out_channels,), jnp.float32)
    slot_b = jnp.zeros((num_slots,), jnp.float32)
    wq = kaiming(k3, (out_channels, out_channels), out_channels)
    wk = kaiming(k4, (out_channels, out_channels), out_channels)
    wv = kaiming(k5, (out_channels, out_channels), out_channels)

    scale = 1.0 / (out_channels ** 0.5)                  # folded into wq (attention scale)
    return {
        # Pre-concatenated once here, NOT per jitted call.
        "w_comb": jnp.concatenate([sqz_w, slot_w], axis=0).astype(MXU_DTYPE),
        "b_comb": jnp.concatenate([sqz_b, slot_b], axis=0)[:, None],    # f32 (Cout+S, 1)
        "wqkv": jnp.concatenate([wq * scale, wk, wv], axis=0).astype(MXU_DTYPE),
    }


# ------------------------------------------------------------------ forward --
@functools.partial(jax.jit, static_argnames=("num_kmeans", "kmeans_iters"))
def slot_generator_forward(params, target, refs, num_kmeans=64, kmeans_iters=10):
    B, Cin, H, W = target.shape
    HW = H * W
    NR = len(refs)
    Cout = params["wqkv"].shape[1]
    S = params["w_comb"].shape[0] - Cout
    assert HW % num_kmeans == 0, "evenly-spaced k-means init needs k | H*W"

    tflat = target.reshape(B, Cin, HW).astype(MXU_DTYPE)                 # (B, Cin, HW)
    refs_arr = jnp.stack([r.reshape(B, Cin, HW) for r in refs],
                         axis=1).astype(MXU_DTYPE)                       # (B, NR, Cin, HW)

    sqz_flat, agg_pt, ref_pts, slot_pt, slot_mask_flat = fused_forward(
        tflat, refs_arr, params["w_comb"], params["b_comb"], params["wqkv"],
        cout=Cout, nslots=S, k=num_kmeans, iters=kmeans_iters)

    sqz_target = sqz_flat.reshape(B, Cout, H, W)
    slot_mask = slot_mask_flat.reshape(B, S, H, W)
    ref_pt_list = [ref_pts[:, i] for i in range(NR)] + [agg_pt]
    return sqz_target, agg_pt, ref_pt_list, slot_pt, slot_mask


if __name__ == "__main__":
    in_channels, out_channels, num_slots = 8, 16, 8
    B, H, W, num_refs = 2, 16, 16, 2

    key = jax.random.PRNGKey(0)
    pkey, xkey = jax.random.split(key)
    params = init_params(pkey, in_channels, out_channels, num_slots)

    keys = jax.random.split(xkey, 1 + num_refs)
    target = jax.random.normal(keys[0], (B, in_channels, H, W), jnp.float32)
    refs = [jax.random.normal(keys[1 + i], (B, in_channels, H, W), jnp.float32)
            for i in range(num_refs)]

    outs = slot_generator_forward(params, target, refs)
    jax.block_until_ready(outs)

    sqz_target, agg_pt, ref_pt_list, slot_pt, slot_mask = outs
    assert sqz_target.shape == (B, out_channels, H, W)
    assert agg_pt.shape == (B, 64, out_channels)
    assert slot_pt.shape == (B, num_slots, out_channels)
    assert slot_mask.shape == (B, num_slots, H, W)
    assert len(ref_pt_list) == num_refs + 1
    assert ref_pt_list[0].shape == (B, out_channels, out_channels)
    # slot_mask is an exact softmax over the slot axis -> rows sum to 1.
    assert bool(jnp.all(jnp.abs(jnp.sum(slot_mask, axis=1) - 1.0) < 1e-2))
    assert bool(jnp.all(jnp.isfinite(agg_pt)))
    assert bool(jnp.all(jnp.isfinite(slot_pt)))
    assert bool(jnp.all(jnp.isfinite(ref_pt_list[0])))
    print("KERNEL_OK")
</pallas_src>

<mosaic_0001>
module attributes {stable_mosaic.version = 11 : i64} {
  func.func @_fused_kernel(%arg0: i32, %arg1: memref<1x8x256xbf16, #tpu.memory_space<vmem>>, %arg2: memref<1x2x8x256xbf16, #tpu.memory_space<vmem>>, %arg3: memref<24x8xbf16, #tpu.memory_space<vmem>>, %arg4: memref<24x1xf32, #tpu.memory_space<vmem>>, %arg5: memref<48x16xbf16, #tpu.memory_space<vmem>>, %arg6: memref<1x16x256xf32, #tpu.memory_space<vmem>>, %arg7: memref<1x64x16xf32, #tpu.memory_space<vmem>>, %arg8: memref<1x2x16x16xf32, #tpu.memory_space<vmem>>, %arg9: memref<1x8x16xf32, #tpu.memory_space<vmem>>, %arg10: memref<1x8x256xf32, #tpu.memory_space<vmem>>) attributes {dimension_semantics = [#tpu.dimension_semantics<parallel>], iteration_bounds = array<i64: 2>, scalar_prefetch = 0 : i64, scratch_operands = 0 : i64, tpu.core_type = #tpu.core_type<tc>, window_params = [{transform_indices = @transform_0, window_bounds = array<i64: 1, 8, 256>}, {transform_indices = @transform_1, window_bounds = array<i64: 1, 2, 8, 256>}, {pipeline_mode = #tpu.pipeline_mode<synchronous>, transform_indices = @transform_2, window_bounds = array<i64: 24, 8>}, {pipeline_mode = #tpu.pipeline_mode<synchronous>, transform_indices = @transform_3, window_bounds = array<i64: 24, 1>}, {pipeline_mode = #tpu.pipeline_mode<synchronous>, transform_indices = @transform_4, window_bounds = array<i64: 48, 16>}, {transform_indices = @transform_5, window_bounds = array<i64: 1, 16, 256>}, {transform_indices = @transform_6, window_bounds = array<i64: 1, 64, 16>}, {transform_indices = @transform_7, window_bounds = array<i64: 1, 2, 16, 16>}, {transform_indices = @transform_8, window_bounds = array<i64: 1, 8, 16>}, {transform_indices = @transform_9, window_bounds = array<i64: 1, 8, 256>}]} {
    %c0 = arith.constant 0 : index
    %c0_0 = arith.constant 0 : index
    %0 = vector.load %arg3[%c0, %c0_0] : memref<24x8xbf16, #tpu.memory_space<vmem>>, vector<24x8xbf16>
    %c0_1 = arith.constant 0 : index
    %c0_2 = arith.constant 0 : index
    %1 = vector.load %arg4[%c0_1, %c0_2] : memref<24x1xf32, #tpu.memory_space<vmem>>, vector<24x1xf32>
    %2 = vector.extract_strided_slice %0 {offsets = [0, 0], sizes = [16, 8], strides = [1, 1]} : vector<24x8xbf16> to vector<16x8xbf16>
    %3 = vector.extract_strided_slice %1 {offsets = [0, 0], sizes = [16, 1], strides = [1, 1]} : vector<24x1xf32> to vector<16x1xf32>
    %c0_3 = arith.constant 0 : index
    %c0_4 = arith.constant 0 : index
    %c0_5 = arith.constant 0 : index
    %4 = vector.load %arg1[%c0_3, %c0_4, %c0_5] : memref<1x8x256xbf16, #tpu.memory_space<vmem>>, vector<1x8x256xbf16>
    %5 = vector.shape_cast %4 : vector<1x8x256xbf16> to vector<8x256xbf16>
    %cst = arith.constant dense<0.000000e+00> : vector<24x256xf32>
    %6 = tpu.matmul %0, %5, %cst {dimension_numbers = #tpu.dot_dimension_numbers<[1], [0], [0], [1], [0, 0, 1, 1], [], []>} : vector<24x8xbf16>, vector<8x256xbf16>, vector<24x256xf32> -> vector<24x256xf32>
    %7 = vector.broadcast %1 : vector<24x1xf32> to vector<24x256xf32>
    %8 = arith.addf %6, %7 : vector<24x256xf32>
    %9 = vector.extract_strided_slice %8 {offsets = [0, 0], sizes = [16, 256], strides = [1, 1]} : vector<24x256xf32> to vector<16x256xf32>
    %10 = vector.extract_strided_slice %8 {offsets = [16, 0], sizes = [8, 256], strides = [1, 1]} : vector<24x256xf32> to vector<8x256xf32>
    %c0_6 = arith.constant 0 : index
    %c0_7 = arith.constant 0 : index
    %c0_8 = arith.constant 0 : index
    %11 = vector.load %arg6[%c0_6, %c0_7, %c0_8] : memref<1x16x256xf32, #tpu.memory_space<vmem>>, vector<1x16x256xf32>
    %12 = vector.shape_cast %11 : vector<1x16x256xf32> to vector<16x256xf32>
    %13 = vector.shape_cast %9 : vector<16x256xf32> to vector<1x16x256xf32>
    tpu.vector_store %arg6[%c0_6, %c0_7, %c0_8], %13 {strides = array<i32>} : memref<1x16x256xf32, #tpu.memory_space<vmem>>, vector<1x16x256xf32>,
    %14 = arith.truncf %9 : vector<16x256xf32> to vector<16x256xbf16>
    %cst_9 = arith.constant dense<0xFF800000> : vector<256xf32>
    %15 = vector.multi_reduction <maximumf>, %10, %cst_9 [0] : vector<8x256xf32> to vector<256xf32>
    %16 = vector.shape_cast %15 : vector<256xf32> to vector<1x256xf32>
    %17 = vector.broadcast %16 : vector<1x256xf32> to vector<8x256xf32>
    %18 = arith.subf %10, %17 : vector<8x256xf32>
    %19 = math.exp %18 : vector<8x256xf32>
    %cst_10 = arith.constant dense<0.000000e+00> : vector<256xf32>
    %20 = vector.multi_reduction <add>, %19, %cst_10 [0] : vector<8x256xf32> to vector<256xf32>
    %21 = vector.shape_cast %20 : vector<256xf32> to vector<1x256xf32>
    %22 = vector.broadcast %21 : vector<1x256xf32> to vector<8x256xf32>
    %23 = arith.divf %19, %22 : vector<8x256xf32>
    %c0_11 = arith.constant 0 : index
    %c0_12 = arith.constant 0 : index
    %c0_13 = arith.constant 0 : index
    %24 = vector.load %arg10[%c0_11, %c0_12, %c0_13] : memref<1x8x256xf32, #tpu.memory_space<vmem>>, vector<1x8x256xf32>
    %25 = vector.shape_cast %24 : vector<1x8x256xf32> to vector<8x256xf32>
    %26 = vector.shape_cast %23 : vector<8x256xf32> to vector<1x8x256xf32>
    tpu.vector_store %arg10[%c0_11, %c0_12, %c0_13], %26 {strides = array<i32>} : memref<1x8x256xf32, #tpu.memory_space<vmem>>, vector<1x8x256xf32>,
    %27 = arith.truncf %23 : vector<8x256xf32> to vector<8x256xbf16>
    %cst_14 = arith.constant dense<0.000000e+00> : vector<8x16xf32>
    %28 = tpu.matmul %27, %14, %cst_14 {dimension_numbers = #tpu.dot_dimension_numbers<[1], [1], [0], [0], [0, 0, 1, 0], [], []>} : vector<8x256xbf16>, vector<16x256xbf16>, vector<8x16xf32> -> vector<8x16xf32>
    %c0_15 = arith.constant 0 : index
    %c0_16 = arith.constant 0 : index
    %c0_17 = arith.constant 0 : index
    %29 = vector.load %arg9[%c0_15, %c0_16, %c0_17] : memref<1x8x16xf32, #tpu.memory_space<vmem>>, vector<1x8x16xf32>
    %30 = vector.shape_cast %29 : vector<1x8x16xf32> to vector<8x16xf32>
    %31 = vector.shape_cast %28 : vector<8x16xf32> to vector<1x8x16xf32>
    tpu.vector_store %arg9[%c0_15, %c0_16, %c0_17], %31 {strides = array<i32>} : memref<1x8x16xf32, #tpu.memory_space<vmem>>, vector<1x8x16xf32>,
    %32 = tpu.iota {dimensions = array<i32: 0>} : vector<64x256xi32>
    %33 = tpu.iota {dimensions = array<i32: 1>} : vector<64x256xi32>
    %c4_i32 = arith.constant 4 : i32
    %34 = vector.broadcast %c4_i32 : i32 to vector<64x256xi32>
    %35 = arith.muli %32, %34 : vector<64x256xi32>
    %36 = arith.cmpi eq, %33, %35 : vector<64x256xi32>
    %37 = arith.extui %36 : vector<64x256xi1> to vector<64x256xi32>
    %38 = arith.sitofp %37 : vector<64x256xi32> to vector<64x256xf32>
    %39 = arith.truncf %38 : vector<64x256xf32> to vector<64x256xbf16>
    %cst_18 = arith.constant dense<0.000000e+00> : vector<64x16xf32>
    %40 = tpu.matmul %39, %14, %cst_18 {dimension_numbers = #tpu.dot_dimension_numbers<[1], [1], [0], [0], [0, 0, 1, 0], [], []>} : vector<64x256xbf16>, vector<16x256xbf16>, vector<64x16xf32> -> vector<64x16xf32>
    %cst_19 = arith.constant 1.000000e+00 : bf16
    %41 = vector.broadcast %cst_19 : bf16 to vector<1x256xbf16>
    %42 = tpu.concatenate %14, %41 in 0 : vector<16x256xbf16>, vector<1x256xbf16> -> vector<17x256xbf16>
    %c0_i32 = arith.constant 0 : i32
    %43 = arith.mulf %40, %40 : vector<64x16xf32>
    %cst_20 = arith.constant dense<0.000000e+00> : vector<64xf32>
    %44 = vector.multi_reduction <add>, %43, %cst_20 [1] : vector<64x16xf32> to vector<64xf32>
    %45 = vector.shape_cast %44 : vector<64xf32> to vector<64x1xf32>
    %cst_21 = arith.constant dense<0.000000e+00> : vector<64x256xf32>
    %46 = tpu.matmul %40, %9, %cst_21 {dimension_numbers = #tpu.dot_dimension_numbers<[1], [0], [0], [1], [0, 0, 1, 1], [], []>} : vector<64x16xf32>, vector<16x256xf32>, vector<64x256xf32> -> vector<64x256xf32>
    %cst_22 = arith.constant 2.000000e+00 : f32
    %47 = vector.broadcast %cst_22 : f32 to vector<64x256xf32>
    %48 = arith.mulf %47, %46 : vector<64x256xf32>
    %49 = vector.broadcast %45 : vector<64x1xf32> to vector<64x256xf32>
    %50 = arith.subf %49, %48 : vector<64x256xf32>
    %cst_23 = arith.constant dense<0x7F800000> : vector<256xf32>
    %51 = vector.multi_reduction <minimumf>, %50, %cst_23 [0] : vector<64x256xf32> to vector<256xf32>
    %52 = vector.shape_cast %51 : vector<256xf32> to vector<1x256xf32>
    %53 = vector.broadcast %52 : vector<1x256xf32> to vector<64x256xf32>
    %54 = arith.cmpf ole, %50, %53 : vector<64x256xf32>
    %c64_i32 = arith.constant 64 : i32
    %55 = vector.broadcast %c64_i32 : i32 to vector<64x256xi32>
    %56 = arith.select %54, %32, %55 : vector<64x256xi1>, vector<64x256xi32>
    %cst_24 = arith.constant dense<2147483647> : vector<256xi32>
    %57 = vector.multi_reduction <minsi>, %56, %cst_24 [0] : vector<64x256xi32> to vector<256xi32>
    %58 = vector.shape_cast %57 : vector<256xi32> to vector<1x256xi32>
    %59 = vector.broadcast %58 : vector<1x256xi32> to vector<64x256xi32>
    %60 = arith.cmpi eq, %32, %59 : vector<64x256xi32>
    %61 = arith.extui %60 : vector<64x256xi1> to vector<64x256xi32>
    %62 = arith.sitofp %61 : vector<64x256xi32> to vector<64x256xf32>
    %63 = arith.truncf %62 : vector<64x256xf32> to vector<64x256xbf16>
    %cst_25 = arith.constant dense<0.000000e+00> : vector<64x17xf32>
    %64 = tpu.matmul %63, %42, %cst_25 {dimension_numbers = #tpu.dot_dimension_numbers<[1], [1], [0], [0], [0, 0, 1, 0], [], []>} : vector<64x256xbf16>, vector<17x256xbf16>, vector<64x17xf32> -> vector<64x17xf32>
    %65 = vector.extract_strided_slice %64 {offsets = [0, 0], sizes = [64, 16], strides = [1, 1]} : vector<64x17xf32> to vector<64x16xf32>
    %66 = vector.extract_strided_slice %64 {offsets = [0, 16], sizes = [64, 1], strides = [1, 1]} : vector<64x17xf32> to vector<64x1xf32>
    %cst_26 = arith.constant 5.000000e-01 : f32
    %67 = vector.broadcast %cst_26 : f32 to vector<64x1xf32>
    %68 = arith.cmpf ogt, %66, %67 : vector<64x1xf32>
    %cst_27 = arith.constant 1.000000e+00 : f32
    %69 = vector.broadcast %cst_27 : f32 to vector<64x1xf32>
    %70 = arith.maximumf %66, %69 : vector<64x1xf32>
    %71 = vector.broadcast %70 : vector<64x1xf32> to vector<64x16xf32>
    %72 = arith.divf %65, %71 : vector<64x16xf32>
    %73 = vector.shape_cast %68 : vector<64x1xi1> to vector<64x1xi1>
    %74 = vector.broadcast %73 : vector<64x1xi1> to vector<64x16xi1>
    %75 = arith.select %74, %72, %40 : vector<64x16xi1>, vector<64x16xf32>
    %c1_i32 = arith.constant 1 : i32
    %76 = arith.mulf %75, %75 : vector<64x16xf32>
    %cst_28 = arith.constant dense<0.000000e+00> : vector<64xf32>
    %77 = vector.multi_reduction <add>, %76, %cst_28 [1] : vector<64x16xf32> to vector<64xf32>
    %78 = vector.shape_cast %77 : vector<64xf32> to vector<64x1xf32>
    %cst_29 = arith.constant dense<0.000000e+00> : vector<64x256xf32>
    %79 = tpu.matmul %75, %9, %cst_29 {dimension_numbers = #tpu.dot_dimension_numbers<[1], [0], [0], [1], [0, 0, 1, 1], [], []>} : vector<64x16xf32>, vector<16x256xf32>, vector<64x256xf32> -> vector<64x256xf32>
    %cst_30 = arith.constant 2.000000e+00 : f32
    %80 = vector.broadcast %cst_30 : f32 to vector<64x256xf32>
    %81 = arith.mulf %80, %79 : vector<64x256xf32>
    %82 = vector.broadcast %78 : vector<64x1xf32> to vector<64x256xf32>
    %83 = arith.subf %82, %81 : vector<64x256xf32>
    %cst_31 = arith.constant dense<0x7F800000> : vector<256xf32>
    %84 = vector.multi_reduction <minimumf>, %83, %cst_31 [0] : vector<64x256xf32> to vector<256xf32>
    %85 = vector.shape_cast %84 : vector<256xf32> to vector<1x256xf32>
    %86 = vector.broadcast %85 : vector<1x256xf32> to vector<64x256xf32>
    %87 = arith.cmpf ole, %83, %86 : vector<64x256xf32>
    %c64_i32_32 = arith.constant 64 : i32
    %88 = vector.broadcast %c64_i32_32 : i32 to vector<64x256xi32>
    %89 = arith.select %87, %32, %88 : vector<64x256xi1>, vector<64x256xi32>
    %cst_33 = arith.constant dense<2147483647> : vector<256xi32>
    %90 = vector.multi_reduction <minsi>, %89, %cst_33 [0] : vector<64x256xi32> to vector<256xi32>
    %91 = vector.shape_cast %90 : vector<256xi32> to vector<1x256xi32>
    %92 = vector.broadcast %91 : vector<1x256xi32> to vector<64x256xi32>
    %93 = arith.cmpi eq, %32, %92 : vector<64x256xi32>
    %94 = arith.extui %93 : vector<64x256xi1> to vector<64x256xi32>
    %95 = arith.sitofp %94 : vector<64x256xi32> to vector<64x256xf32>
    %96 = arith.truncf %95 : vector<64x256xf32> to vector<64x256xbf16>
    %cst_34 = arith.constant dense<0.000000e+00> : vector<64x17xf32>
    %97 = tpu.matmul %96, %42, %cst_34 {dimension_numbers = #tpu.dot_dimension_numbers<[1], [1], [0], [0], [0, 0, 1, 0], [], []>} : vector<64x256xbf16>, vector<17x256xbf16>, vector<64x17xf32> -> vector<64x17xf32>
    %98 = vector.extract_strided_slice %97 {offsets = [0, 0], sizes = [64, 16], strides = [1, 1]} : vector<64x17xf32> to vector<64x16xf32>
    %99 = vector.extract_strided_slice %97 {offsets = [0, 16], sizes = [64, 1], strides = [1, 1]} : vector<64x17xf32> to vector<64x1xf32>
    %cst_35 = arith.constant 5.000000e-01 : f32
    %100 = vector.broadcast %cst_35 : f32 to vector<64x1xf32>
    %101 = arith.cmpf ogt, %99, %100 : vector<64x1xf32>
    %cst_36 = arith.constant 1.000000e+00 : f32
    %102 = vector.broadcast %cst_36 : f32 to vector<64x1xf32>
    %103 = arith.maximumf %99, %102 : vector<64x1xf32>
    %104 = vector.broadcast %103 : vector<64x1xf32> to vector<64x16xf32>
    %105 = arith.divf %98, %104 : vector<64x16xf32>
    %106 = vector.shape_cast %101 : vector<64x1xi1> to vector<64x1xi1>
    %107 = vector.broadcast %106 : vector<64x1xi1> to vector<64x16xi1>
    %108 = arith.select %107, %105, %75 : vector<64x16xi1>, vector<64x16xf32>
    %c2_i32 = arith.constant 2 : i32
    %109 = arith.mulf %108, %108 : vector<64x16xf32>
    %cst_37 = arith.constant dense<0.000000e+00> : vector<64xf32>
    %110 = vector.multi_reduction <add>, %109, %cst_37 [1] : vector<64x16xf32> to vector<64xf32>
    %111 = vector.shape_cast %110 : vector<64xf32> to vector<64x1xf32>
    %cst_38 = arith.constant dense<0.000000e+00> : vector<64x256xf32>
    %112 = tpu.matmul %108, %9, %cst_38 {dimension_numbers = #tpu.dot_dimension_numbers<[1], [0], [0], [1], [0, 0, 1, 1], [], []>} : vector<64x16xf32>, vector<16x256xf32>, vector<64x256xf32> -> vector<64x256xf32>
    %cst_39 = arith.constant 2.000000e+00 : f32
    %113 = vector.broadcast %cst_39 : f32 to vector<64x256xf32>
    %114 = arith.mulf %113, %112 : vector<64x256xf32>
    %115 = vector.broadcast %111 : vector<64x1xf32> to vector<64x256xf32>
    %116 = arith.subf %115, %114 : vector<64x256xf32>
    %cst_40 = arith.constant dense<0x7F800000> : vector<256xf32>
    %117 = vector.multi_reduction <minimumf>, %116, %cst_40 [0] : vector<64x256xf32> to vector<256xf32>
    %118 = vector.shape_cast %117 : vector<256xf32> to vector<1x256xf32>
    %119 = vector.broadcast %118 : vector<1x256xf32> to vector<64x256xf32>
    %120 = arith.cmpf ole, %116, %119 : vector<64x256xf32>
    %c64_i32_41 = arith.constant 64 : i32
    %121 = vector.broadcast %c64_i32_41 : i32 to vector<64x256xi32>
    %122 = arith.select %120, %32, %121 : vector<64x256xi1>, vector<64x256xi32>
    %cst_42 = arith.constant dense<2147483647> : vector<256xi32>
    %123 = vector.multi_reduction <minsi>, %122, %cst_42 [0] : vector<64x256xi32> to vector<256xi32>
    %124 = vector.shape_cast %123 : vector<256xi32> to vector<1x256xi32>
    %125 = vector.broadcast %124 : vector<1x256xi32> to vector<64x256xi32>
    %126 = arith.cmpi eq, %32, %125 : vector<64x256xi32>
    %127 = arith.extui %126 : vector<64x256xi1> to vector<64x256xi32>
    %128 = arith.sitofp %127 : vector<64x256xi32> to vector<64x256xf32>
    %129 = arith.truncf %128 : vector<64x256xf32> to vector<64x256xbf16>
    %cst_43 = arith.constant dense<0.000000e+00> : vector<64x17xf32>
    %130 = tpu.matmul %129, %42, %cst_43 {dimension_numbers = #tpu.dot_dimension_numbers<[1], [1], [0], [0], [0, 0, 1, 0], [], []>} : vector<64x256xbf16>, vector<17x256xbf16>, vector<64x17xf32> -> vector<64x17xf32>
    %131 = vector.extract_strided_slice %130 {offsets = [0, 0], sizes = [64, 16], strides = [1, 1]} : vector<64x17xf32> to vector<64x16xf32>
    %132 = vector.extract_strided_slice %130 {offsets = [0, 16], sizes = [64, 1], strides = [1, 1]} : vector<64x17xf32> to vector<64x1xf32>
    %cst_44 = arith.constant 5.000000e-01 : f32
    %133 = vector.broadcast %cst_44 : f32 to vector<64x1xf32>
    %134 = arith.cmpf ogt, %132, %133 : vector<64x1xf32>
    %cst_45 = arith.constant 1.000000e+00 : f32
    %135 = vector.broadcast %cst_45 : f32 to vector<64x1xf32>
    %136 = arith.maximumf %132, %135 : vector<64x1xf32>
    %137 = vector.broadcast %136 : vector<64x1xf32> to vector<64x16xf32>
    %138 = arith.divf %131, %137 : vector<64x16xf32>
    %139 = vector.shape_cast %134 : vector<64x1xi1> to vector<64x1xi1>
    %140 = vector.broadcast %139 : vector<64x1xi1> to vector<64x16xi1>
    %141 = arith.select %140, %138, %108 : vector<64x16xi1>, vector<64x16xf32>
    %c3_i32 = arith.constant 3 : i32
    %142 = arith.mulf %141, %141 : vector<64x16xf32>
    %cst_46 = arith.constant dense<0.000000e+00> : vector<64xf32>
    %143 = vector.multi_reduction <add>, %142, %cst_46 [1] : vector<64x16xf32> to vector<64xf32>
    %144 = vector.shape_cast %143 : vector<64xf32> to vector<64x1xf32>
    %cst_47 = arith.constant dense<0.000000e+00> : vector<64x256xf32>
    %145 = tpu.matmul %141, %9, %cst_47 {dimension_numbers = #tpu.dot_dimension_numbers<[1], [0], [0], [1], [0, 0, 1, 1], [], []>} : vector<64x16xf32>, vector<16x256xf32>, vector<64x256xf32> -> vector<64x256xf32>
    %cst_48 = arith.constant 2.000000e+00 : f32
    %146 = vector.broadcast %cst_48 : f32 to vector<64x256xf32>
    %147 = arith.mulf %146, %145 : vector<64x256xf32>
    %148 = vector.broadcast %144 : vector<64x1xf32> to vector<64x256xf32>
    %149 = arith.subf %148, %147 : vector<64x256xf32>
    %cst_49 = arith.constant dense<0x7F800000> : vector<256xf32>
    %150 = vector.multi_reduction <minimumf>, %149, %cst_49 [0] : vector<64x256xf32> to vector<256xf32>
    %151 = vector.shape_cast %150 : vector<256xf32> to vector<1x256xf32>
    %152 = vector.broadcast %151 : vector<1x256xf32> to vector<64x256xf32>
    %153 = arith.cmpf ole, %149, %152 : vector<64x256xf32>
    %c64_i32_50 = arith.constant 64 : i32
    %154 = vector.broadcast %c64_i32_50 : i32 to vector<64x256xi32>
    %155 = arith.select %153, %32, %154 : vector<64x256xi1>, vector<64x256xi32>
    %cst_51 = arith.constant dense<2147483647> : vector<256xi32>
    %156 = vector.multi_reduction <minsi>, %155, %cst_51 [0] : vector<64x256xi32> to vector<256xi32>
    %157 = vector.shape_cast %156 : vector<256xi32> to vector<1x256xi32>
    %158 = vector.broadcast %157 : vector<1x256xi32> to vector<64x256xi32>
    %159 = arith.cmpi eq, %32, %158 : vector<64x256xi32>
    %160 = arith.extui %159 : vector<64x256xi1> to vector<64x256xi32>
    %161 = arith.sitofp %160 : vector<64x256xi32> to vector<64x256xf32>
    %162 = arith.truncf %161 : vector<64x256xf32> to vector<64x256xbf16>
    %cst_52 = arith.constant dense<0.000000e+00> : vector<64x17xf32>
    %163 = tpu.matmul %162, %42, %cst_52 {dimension_numbers = #tpu.dot_dimension_numbers<[1], [1], [0], [0], [0, 0, 1, 0], [], []>} : vector<64x256xbf16>, vector<17x256xbf16>, vector<64x17xf32> -> vector<64x17xf32>
    %164 = vector.extract_strided_slice %163 {offsets = [0, 0], sizes = [64, 16], strides = [1, 1]} : vector<64x17xf32> to vector<64x16xf32>
    %165 = vector.extract_strided_slice %163 {offsets = [0, 16], sizes = [64, 1], strides = [1, 1]} : vector<64x17xf32> to vector<64x1xf32>
    %cst_53 = arith.constant 5.000000e-01 : f32
    %166 = vector.broadcast %cst_53 : f32 to vector<64x1xf32>
    %167 = arith.cmpf ogt, %165, %166 : vector<64x1xf32>
    %cst_54 = arith.constant 1.000000e+00 : f32
    %168 = vector.broadcast %cst_54 : f32 to vector<64x1xf32>
    %169 = arith.maximumf %165, %168 : vector<64x1xf32>
    %170 = vector.broadcast %169 : vector<64x1xf32> to vector<64x16xf32>
    %171 = arith.divf %164, %170 : vector<64x16xf32>
    %172 = vector.shape_cast %167 : vector<64x1xi1> to vector<64x1xi1>
    %173 = vector.broadcast %172 : vector<64x1xi1> to vector<64x16xi1>
    %174 = arith.select %173, %171, %141 : vector<64x16xi1>, vector<64x16xf32>
    %c4_i32_55 = arith.constant 4 : i32
    %175 = arith.mulf %174, %174 : vector<64x16xf32>
    %cst_56 = arith.constant dense<0.000000e+00> : vector<64xf32>
    %176 = vector.multi_reduction <add>, %175, %cst_56 [1] : vector<64x16xf32> to vector<64xf32>
    %177 = vector.shape_cast %176 : vector<64xf32> to vector<64x1xf32>
    %cst_57 = arith.constant dense<0.000000e+00> : vector<64x256xf32>
    %178 = tpu.matmul %174, %9, %cst_57 {dimension_numbers = #tpu.dot_dimension_numbers<[1], [0], [0], [1], [0, 0, 1, 1], [], []>} : vector<64x16xf32>, vector<16x256xf32>, vector<64x256xf32> -> vector<64x256xf32>
    %cst_58 = arith.constant 2.000000e+00 : f32
    %179 = vector.broadcast %cst_58 : f32 to vector<64x256xf32>
    %180 = arith.mulf %179, %178 : vector<64x256xf32>
    %181 = vector.broadcast %177 : vector<64x1xf32> to vector<64x256xf32>
    %182 = arith.subf %181, %180 : vector<64x256xf32>
    %cst_59 = arith.constant dense<0x7F800000> : vector<256xf32>
    %183 = vector.multi_reduction <minimumf>, %182, %cst_59 [0] : vector<64x256xf32> to vector<256xf32>
    %184 = vector.shape_cast %183 : vector<256xf32> to vector<1x256xf32>
    %185 = vector.broadcast %184 : vector<1x256xf32> to vector<64x256xf32>
    %186 = arith.cmpf ole, %182, %185 : vector<64x256xf32>
    %c64_i32_60 = arith.constant 64 : i32
    %187 = vector.broadcast %c64_i32_60 : i32 to vector<64x256xi32>
    %188 = arith.select %186, %32, %187 : vector<64x256xi1>, vector<64x256xi32>
    %cst_61 = arith.constant dense<2147483647> : vector<256xi32>
    %189 = vector.multi_reduction <minsi>, %188, %cst_61 [0] : vector<64x256xi32> to vector<256xi32>
    %190 = vector.shape_cast %189 : vector<256xi32> to vector<1x256xi32>
    %191 = vector.broadcast %190 : vector<1x256xi32> to vector<64x256xi32>
    %192 = arith.cmpi eq, %32, %191 : vector<64x256xi32>
    %193 = arith.extui %192 : vector<64x256xi1> to vector<64x256xi32>
    %194 = arith.sitofp %193 : vector<64x256xi32> to vector<64x256xf32>
    %195 = arith.truncf %194 : vector<64x256xf32> to vector<64x256xbf16>
    %cst_62 = arith.constant dense<0.000000e+00> : vector<64x17xf32>
    %196 = tpu.matmul %195, %42, %cst_62 {dimension_numbers = #tpu.dot_dimension_numbers<[1], [1], [0], [0], [0, 0, 1, 0], [], []>} : vector<64x256xbf16>, vector<17x256xbf16>, vector<64x17xf32> -> vector<64x17xf32>
    %197 = vector.extract_strided_slice %196 {offsets = [0, 0], sizes = [64, 16], strides = [1, 1]} : vector<64x17xf32> to vector<64x16xf32>
    %198 = vector.extract_strided_slice %196 {offsets = [0, 16], sizes = [64, 1], strides = [1, 1]} : vector<64x17xf32> to vector<64x1xf32>
    %cst_63 = arith.constant 5.000000e-01 : f32
    %199 = vector.broadcast %cst_63 : f32 to vector<64x1xf32>
    %200 = arith.cmpf ogt, %198, %199 : vector<64x1xf32>
    %cst_64 = arith.constant 1.000000e+00 : f32
    %201 = vector.broadcast %cst_64 : f32 to vector<64x1xf32>
    %202 = arith.maximumf %198, %201 : vector<64x1xf32>
    %203 = vector.broadcast %202 : vector<64x1xf32> to vector<64x16xf32>
    %204 = arith.divf %197, %203 : vector<64x16xf32>
    %205 = vector.shape_cast %200 : vector<64x1xi1> to vector<64x1xi1>
    %206 = vector.broadcast %205 : vector<64x1xi1> to vector<64x16xi1>
    %207 = arith.select %206, %204, %174 : vector<64x16xi1>, vector<64x16xf32>
    %c5_i32 = arith.constant 5 : i32
    %208 = arith.mulf %207, %207 : vector<64x16xf32>
    %cst_65 = arith.constant dense<0.000000e+00> : vector<64xf32>
    %209 = vector.multi_reduction <add>, %208, %cst_65 [1] : vector<64x16xf32> to vector<64xf32>
    %210 = vector.shape_cast %209 : vector<64xf32> to vector<64x1xf32>
    %cst_66 = arith.constant dense<0.000000e+00> : vector<64x256xf32>
    %211 = tpu.matmul %207, %9, %cst_66 {dimension_numbers = #tpu.dot_dimension_numbers<[1], [0], [0], [1], [0, 0, 1, 1], [], []>} : vector<64x16xf32>, vector<16x256xf32>, vector<64x256xf32> -> vector<64x256xf32>
    %cst_67 = arith.constant 2.000000e+00 : f32
    %212 = vector.broadcast %cst_67 : f32 to vector<64x256xf32>
    %213 = arith.mulf %212, %211 : vector<64x256xf32>
    %214 = vector.broadcast %210 : vector<64x1xf32> to vector<64x256xf32>
    %215 = arith.subf %214, %213 : vector<64x256xf32>
    %cst_68 = arith.constant dense<0x7F800000> : vector<256xf32>
    %216 = vector.multi_reduction <minimumf>, %215, %cst_68 [0] : vector<64x256xf32> to vector<256xf32>
    %217 = vector.shape_cast %216 : vector<256xf32> to vector<1x256xf32>
    %218 = vector.broadcast %217 : vector<1x256xf32> to vector<64x256xf32>
    %219 = arith.cmpf ole, %215, %218 : vector<64x256xf32>
    %c64_i32_69 = arith.constant 64 : i32
    %220 = vector.broadcast %c64_i32_69 : i32 to vector<64x256xi32>
    %221 = arith.select %219, %32, %220 : vector<64x256xi1>, vector<64x256xi32>
    %cst_70 = arith.constant dense<2147483647> : vector<256xi32>
    %222 = vector.multi_reduction <minsi>, %221, %cst_70 [0] : vector<64x256xi32> to vector<256xi32>
    %223 = vector.shape_cast %222 : vector<256xi32> to vector<1x256xi32>
    %224 = vector.broadcast %223 : vector<1x256xi32> to vector<64x256xi32>
    %225 = arith.cmpi eq, %32, %224 : vector<64x256xi32>
    %226 = arith.extui %225 : vector<64x256xi1> to vector<64x256xi32>
    %227 = arith.sitofp %226 : vector<64x256xi32> to vector<64x256xf32>
    %228 = arith.truncf %227 : vector<64x256xf32> to vector<64x256xbf16>
    %cst_71 = arith.constant dense<0.000000e+00> : vector<64x17xf32>
    %229 = tpu.matmul %228, %42, %cst_71 {dimension_numbers = #tpu.dot_dimension_numbers<[1], [1], [0], [0], [0, 0, 1, 0], [], []>} : vector<64x256xbf16>, vector<17x256xbf16>, vector<64x17xf32> -> vector<64x17xf32>
    %230 = vector.extract_strided_slice %229 {offsets = [0, 0], sizes = [64, 16], strides = [1, 1]} : vector<64x17xf32> to vector<64x16xf32>
    %231 = vector.extract_strided_slice %229 {offsets = [0, 16], sizes = [64, 1], strides = [1, 1]} : vector<64x17xf32> to vector<64x1xf32>
    %cst_72 = arith.constant 5.000000e-01 : f32
    %232 = vector.broadcast %cst_72 : f32 to vector<64x1xf32>
    %233 = arith.cmpf ogt, %231, %232 : vector<64x1xf32>
    %cst_73 = arith.constant 1.000000e+00 : f32
    %234 = vector.broadcast %cst_73 : f32 to vector<64x1xf32>
    %235 = arith.maximumf %231, %234 : vector<64x1xf32>
    %236 = vector.broadcast %235 : vector<64x1xf32> to vector<64x16xf32>
    %237 = arith.divf %230, %236 : vector<64x16xf32>
    %238 = vector.shape_cast %233 : vector<64x1xi1> to vector<64x1xi1>
    %239 = vector.broadcast %238 : vector<64x1xi1> to vector<64x16xi1>
    %240 = arith.select %239, %237, %207 : vector<64x16xi1>, vector<64x16xf32>
    %c6_i32 = arith.constant 6 : i32
    %241 = arith.mulf %240, %240 : vector<64x16xf32>
    %cst_74 = arith.constant dense<0.000000e+00> : vector<64xf32>
    %242 = vector.multi_reduction <add>, %241, %cst_74 [1] : vector<64x16xf32> to vector<64xf32>
    %243 = vector.shape_cast %242 : vector<64xf32> to vector<64x1xf32>
    %cst_75 = arith.constant dense<0.000000e+00> : vector<64x256xf32>
    %244 = tpu.matmul %240, %9, %cst_75 {dimension_numbers = #tpu.dot_dimension_numbers<[1], [0], [0], [1], [0, 0, 1, 1], [], []>} : vector<64x16xf32>, vector<16x256xf32>, vector<64x256xf32> -> vector<64x256xf32>
    %cst_76 = arith.constant 2.000000e+00 : f32
    %245 = vector.broadcast %cst_76 : f32 to vector<64x256xf32>
    %246 = arith.mulf %245, %244 : vector<64x256xf32>
    %247 = vector.broadcast %243 : vector<64x1xf32> to vector<64x256xf32>
    %248 = arith.subf %247, %246 : vector<64x256xf32>
    %cst_77 = arith.constant dense<0x7F800000> : vector<256xf32>
    %249 = vector.multi_reduction <minimumf>, %248, %cst_77 [0] : vector<64x256xf32> to vector<256xf32>
    %250 = vector.shape_cast %249 : vector<256xf32> to vector<1x256xf32>
    %251 = vector.broadcast %250 : vector<1x256xf32> to vector<64x256xf32>
    %252 = arith.cmpf ole, %248, %251 : vector<64x256xf32>
    %c64_i32_78 = arith.constant 64 : i32
    %253 = vector.broadcast %c64_i32_78 : i32 to vector<64x256xi32>
    %254 = arith.select %252, %32, %253 : vector<64x256xi1>, vector<64x256xi32>
    %cst_79 = arith.constant dense<2147483647> : vector<256xi32>
    %255 = vector.multi_reduction <minsi>, %254, %cst_79 [0] : vector<64x256xi32> to vector<256xi32>
    %256 = vector.shape_cast %255 : vector<256xi32> to vector<1x256xi32>
    %257 = vector.broadcast %256 : vector<1x256xi32> to vector<64x256xi32>
    %258 = arith.cmpi eq, %32, %257 : vector<64x256xi32>
    %259 = arith.extui %258 : vector<64x256xi1> to vector<64x256xi32>
    %260 = arith.sitofp %259 : vector<64x256xi32> to vector<64x256xf32>
    %261 = arith.truncf %260 : vector<64x256xf32> to vector<64x256xbf16>
    %cst_80 = arith.constant dense<0.000000e+00> : vector<64x17xf32>
    %262 = tpu.matmul %261, %42, %cst_80 {dimension_numbers = #tpu.dot_dimension_numbers<[1], [1], [0], [0], [0, 0, 1, 0], [], []>} : vector<64x256xbf16>, vector<17x256xbf16>, vector<64x17xf32> -> vector<64x17xf32>
    %263 = vector.extract_strided_slice %262 {offsets = [0, 0], sizes = [64, 16], strides = [1, 1]} : vector<64x17xf32> to vector<64x16xf32>
    %264 = vector.extract_strided_slice %262 {offsets = [0, 16], sizes = [64, 1], strides = [1, 1]} : vector<64x17xf32> to vector<64x1xf32>
    %cst_81 = arith.constant 5.000000e-01 : f32
    %265 = vector.broadcast %cst_81 : f32 to vector<64x1xf32>
    %266 = arith.cmpf ogt, %264, %265 : vector<64x1xf32>
    %cst_82 = arith.constant 1.000000e+00 : f32
    %267 = vector.broadcast %cst_82 : f32 to vector<64x1xf32>
    %268 = arith.maximumf %264, %267 : vector<64x1xf32>
    %269 = vector.broadcast %268 : vector<64x1xf32> to vector<64x16xf32>
    %270 = arith.divf %263, %269 : vector<64x16xf32>
    %271 = vector.shape_cast %266 : vector<64x1xi1> to vector<64x1xi1>
    %272 = vector.broadcast %271 : vector<64x1xi1> to vector<64x16xi1>
    %273 = arith.select %272, %270, %240 : vector<64x16xi1>, vector<64x16xf32>
    %c7_i32 = arith.constant 7 : i32
    %274 = arith.mulf %273, %273 : vector<64x16xf32>
    %cst_83 = arith.constant dense<0.000000e+00> : vector<64xf32>
    %275 = vector.multi_reduction <add>, %274, %cst_83 [1] : vector<64x16xf32> to vector<64xf32>
    %276 = vector.shape_cast %275 : vector<64xf32> to vector<64x1xf32>
    %cst_84 = arith.constant dense<0.000000e+00> : vector<64x256xf32>
    %277 = tpu.matmul %273, %9, %cst_84 {dimension_numbers = #tpu.dot_dimension_numbers<[1], [0], [0], [1], [0, 0, 1, 1], [], []>} : vector<64x16xf32>, vector<16x256xf32>, vector<64x256xf32> -> vector<64x256xf32>
    %cst_85 = arith.constant 2.000000e+00 : f32
    %278 = vector.broadcast %cst_85 : f32 to vector<64x256xf32>
    %279 = arith.mulf %278, %277 : vector<64x256xf32>
    %280 = vector.broadcast %276 : vector<64x1xf32> to vector<64x256xf32>
    %281 = arith.subf %280, %279 : vector<64x256xf32>
    %cst_86 = arith.constant dense<0x7F800000> : vector<256xf32>
    %282 = vector.multi_reduction <minimumf>, %281, %cst_86 [0] : vector<64x256xf32> to vector<256xf32>
    %283 = vector.shape_cast %282 : vector<256xf32> to vector<1x256xf32>
    %284 = vector.broadcast %283 : vector<1x256xf32> to vector<64x256xf32>
    %285 = arith.cmpf ole, %281, %284 : vector<64x256xf32>
    %c64_i32_87 = arith.constant 64 : i32
    %286 = vector.broadcast %c64_i32_87 : i32 to vector<64x256xi32>
    %287 = arith.select %285, %32, %286 : vector<64x256xi1>, vector<64x256xi32>
    %cst_88 = arith.constant dense<2147483647> : vector<256xi32>
    %288 = vector.multi_reduction <minsi>, %287, %cst_88 [0] : vector<64x256xi32> to vector<256xi32>
    %289 = vector.shape_cast %288 : vector<256xi32> to vector<1x256xi32>
    %290 = vector.broadcast %289 : vector<1x256xi32> to vector<64x256xi32>
    %291 = arith.cmpi eq, %32, %290 : vector<64x256xi32>
    %292 = arith.extui %291 : vector<64x256xi1> to vector<64x256xi32>
    %293 = arith.sitofp %292 : vector<64x256xi32> to vector<64x256xf32>
    %294 = arith.truncf %293 : vector<64x256xf32> to vector<64x256xbf16>
    %cst_89 = arith.constant dense<0.000000e+00> : vector<64x17xf32>
    %295 = tpu.matmul %294, %42, %cst_89 {dimension_numbers = #tpu.dot_dimension_numbers<[1], [1], [0], [0], [0, 0, 1, 0], [], []>} : vector<64x256xbf16>, vector<17x256xbf16>, vector<64x17xf32> -> vector<64x17xf32>
    %296 = vector.extract_strided_slice %295 {offsets = [0, 0], sizes = [64, 16], strides = [1, 1]} : vector<64x17xf32> to vector<64x16xf32>
    %297 = vector.extract_strided_slice %295 {offsets = [0, 16], sizes = [64, 1], strides = [1, 1]} : vector<64x17xf32> to vector<64x1xf32>
    %cst_90 = arith.constant 5.000000e-01 : f32
    %298 = vector.broadcast %cst_90 : f32 to vector<64x1xf32>
    %299 = arith.cmpf ogt, %297, %298 : vector<64x1xf32>
    %cst_91 = arith.constant 1.000000e+00 : f32
    %300 = vector.broadcast %cst_91 : f32 to vector<64x1xf32>
    %301 = arith.maximumf %297, %300 : vector<64x1xf32>
    %302 = vector.broadcast %301 : vector<64x1xf32> to vector<64x16xf32>
    %303 = arith.divf %296, %302 : vector<64x16xf32>
    %304 = vector.shape_cast %299 : vector<64x1xi1> to vector<64x1xi1>
    %305 = vector.broadcast %304 : vector<64x1xi1> to vector<64x16xi1>
    %306 = arith.select %305, %303, %273 : vector<64x16xi1>, vector<64x16xf32>
    %c8_i32 = arith.constant 8 : i32
    %307 = arith.mulf %306, %306 : vector<64x16xf32>
    %cst_92 = arith.constant dense<0.000000e+00> : vector<64xf32>
    %308 = vector.multi_reduction <add>, %307, %cst_92 [1] : vector<64x16xf32> to vector<64xf32>
    %309 = vector.shape_cast %308 : vector<64xf32> to vector<64x1xf32>
    %cst_93 = arith.constant dense<0.000000e+00> : vector<64x256xf32>
    %310 = tpu.matmul %306, %9, %cst_93 {dimension_numbers = #tpu.dot_dimension_numbers<[1], [0], [0], [1], [0, 0, 1, 1], [], []>} : vector<64x16xf32>, vector<16x256xf32>, vector<64x256xf32> -> vector<64x256xf32>
    %cst_94 = arith.constant 2.000000e+00 : f32
    %311 = vector.broadcast %cst_94 : f32 to vector<64x256xf32>
    %312 = arith.mulf %311, %310 : vector<64x256xf32>
    %313 = vector.broadcast %309 : vector<64x1xf32> to vector<64x256xf32>
    %314 = arith.subf %313, %312 : vector<64x256xf32>
    %cst_95 = arith.constant dense<0x7F800000> : vector<256xf32>
    %315 = vector.multi_reduction <minimumf>, %314, %cst_95 [0] : vector<64x256xf32> to vector<256xf32>
    %316 = vector.shape_cast %315 : vector<256xf32> to vector<1x256xf32>
    %317 = vector.broadcast %316 : vector<1x256xf32> to vector<64x256xf32>
    %318 = arith.cmpf ole, %314, %317 : vector<64x256xf32>
    %c64_i32_96 = arith.constant 64 : i32
    %319 = vector.broadcast %c64_i32_96 : i32 to vector<64x256xi32>
    %320 = arith.select %318, %32, %319 : vector<64x256xi1>, vector<64x256xi32>
    %cst_97 = arith.constant dense<2147483647> : vector<256xi32>
    %321 = vector.multi_reduction <minsi>, %320, %cst_97 [0] : vector<64x256xi32> to vector<256xi32>
    %322 = vector.shape_cast %321 : vector<256xi32> to vector<1x256xi32>
    %323 = vector.broadcast %322 : vector<1x256xi32> to vector<64x256xi32>
    %324 = arith.cmpi eq, %32, %323 : vector<64x256xi32>
    %325 = arith.extui %324 : vector<64x256xi1> to vector<64x256xi32>
    %326 = arith.sitofp %325 : vector<64x256xi32> to vector<64x256xf32>
    %327 = arith.truncf %326 : vector<64x256xf32> to vector<64x256xbf16>
    %cst_98 = arith.constant dense<0.000000e+00> : vector<64x17xf32>
    %328 = tpu.matmul %327, %42, %cst_98 {dimension_numbers = #tpu.dot_dimension_numbers<[1], [1], [0], [0], [0, 0, 1, 0], [], []>} : vector<64x256xbf16>, vector<17x256xbf16>, vector<64x17xf32> -> vector<64x17xf32>
    %329 = vector.extract_strided_slice %328 {offsets = [0, 0], sizes = [64, 16], strides = [1, 1]} : vector<64x17xf32> to vector<64x16xf32>
    %330 = vector.extract_strided_slice %328 {offsets = [0, 16], sizes = [64, 1], strides = [1, 1]} : vector<64x17xf32> to vector<64x1xf32>
    %cst_99 = arith.constant 5.000000e-01 : f32
    %331 = vector.broadcast %cst_99 : f32 to vector<64x1xf32>
    %332 = arith.cmpf ogt, %330, %331 : vector<64x1xf32>
    %cst_100 = arith.constant 1.000000e+00 : f32
    %333 = vector.broadcast %cst_100 : f32 to vector<64x1xf32>
    %334 = arith.maximumf %330, %333 : vector<64x1xf32>
    %335 = vector.broadcast %334 : vector<64x1xf32> to vector<64x16xf32>
    %336 = arith.divf %329, %335 : vector<64x16xf32>
    %337 = vector.shape_cast %332 : vector<64x1xi1> to vector<64x1xi1>
    %338 = vector.broadcast %337 : vector<64x1xi1> to vector<64x16xi1>
    %339 = arith.select %338, %336, %306 : vector<64x16xi1>, vector<64x16xf32>
    %c9_i32 = arith.constant 9 : i32
    %340 = arith.mulf %339, %339 : vector<64x16xf32>
    %cst_101 = arith.constant dense<0.000000e+00> : vector<64xf32>
    %341 = vector.multi_reduction <add>, %340, %cst_101 [1] : vector<64x16xf32> to vector<64xf32>
    %342 = vector.shape_cast %341 : vector<64xf32> to vector<64x1xf32>
    %cst_102 = arith.constant dense<0.000000e+00> : vector<64x256xf32>
    %343 = tpu.matmul %339, %9, %cst_102 {dimension_numbers = #tpu.dot_dimension_numbers<[1], [0], [0], [1], [0, 0, 1, 1], [], []>} : vector<64x16xf32>, vector<16x256xf32>, vector<64x256xf32> -> vector<64x256xf32>
    %cst_103 = arith.constant 2.000000e+00 : f32
    %344 = vector.broadcast %cst_103 : f32 to vector<64x256xf32>
    %345 = arith.mulf %344, %343 : vector<64x256xf32>
    %346 = vector.broadcast %342 : vector<64x1xf32> to vector<64x256xf32>
    %347 = arith.subf %346, %345 : vector<64x256xf32>
    %cst_104 = arith.constant dense<0x7F800000> : vector<256xf32>
    %348 = vector.multi_reduction <minimumf>, %347, %cst_104 [0] : vector<64x256xf32> to vector<256xf32>
    %349 = vector.shape_cast %348 : vector<256xf32> to vector<1x256xf32>
    %350 = vector.broadcast %349 : vector<1x256xf32> to vector<64x256xf32>
    %351 = arith.cmpf ole, %347, %350 : vector<64x256xf32>
    %c64_i32_105 = arith.constant 64 : i32
    %352 = vector.broadcast %c64_i32_105 : i32 to vector<64x256xi32>
    %353 = arith.select %351, %32, %352 : vector<64x256xi1>, vector<64x256xi32>
    %cst_106 = arith.constant dense<2147483647> : vector<256xi32>
    %354 = vector.multi_reduction <minsi>, %353, %cst_106 [0] : vector<64x256xi32> to vector<256xi32>
    %355 = vector.shape_cast %354 : vector<256xi32> to vector<1x256xi32>
    %356 = vector.broadcast %355 : vector<1x256xi32> to vector<64x256xi32>
    %357 = arith.cmpi eq, %32, %356 : vector<64x256xi32>
    %358 = arith.extui %357 : vector<64x256xi1> to vector<64x256xi32>
    %359 = arith.sitofp %358 : vector<64x256xi32> to vector<64x256xf32>
    %360 = arith.truncf %359 : vector<64x256xf32> to vector<64x256xbf16>
    %cst_107 = arith.constant dense<0.000000e+00> : vector<64x17xf32>
    %361 = tpu.matmul %360, %42, %cst_107 {dimension_numbers = #tpu.dot_dimension_numbers<[1], [1], [0], [0], [0, 0, 1, 0], [], []>} : vector<64x256xbf16>, vector<17x256xbf16>, vector<64x17xf32> -> vector<64x17xf32>
    %362 = vector.extract_strided_slice %361 {offsets = [0, 0], sizes = [64, 16], strides = [1, 1]} : vector<64x17xf32> to vector<64x16xf32>
    %363 = vector.extract_strided_slice %361 {offsets = [0, 16], sizes = [64, 1], strides = [1, 1]} : vector<64x17xf32> to vector<64x1xf32>
    %cst_108 = arith.constant 5.000000e-01 : f32
    %364 = vector.broadcast %cst_108 : f32 to vector<64x1xf32>
    %365 = arith.cmpf ogt, %363, %364 : vector<64x1xf32>
    %cst_109 = arith.constant 1.000000e+00 : f32
    %366 = vector.broadcast %cst_109 : f32 to vector<64x1xf32>
    %367 = arith.maximumf %363, %366 : vector<64x1xf32>
    %368 = vector.broadcast %367 : vector<64x1xf32> to vector<64x16xf32>
    %369 = arith.divf %362, %368 : vector<64x16xf32>
    %370 = vector.shape_cast %365 : vector<64x1xi1> to vector<64x1xi1>
    %371 = vector.broadcast %370 : vector<64x1xi1> to vector<64x16xi1>
    %372 = arith.select %371, %369, %339 : vector<64x16xi1>, vector<64x16xf32>
    %373 = arith.mulf %372, %372 : vector<64x16xf32>
    %cst_110 = arith.constant dense<0.000000e+00> : vector<64xf32>
    %374 = vector.multi_reduction <add>, %373, %cst_110 [1] : vector<64x16xf32> to vector<64xf32>
    %375 = vector.shape_cast %374 : vector<64xf32> to vector<64x1xf32>
    %cst_111 = arith.constant dense<0.000000e+00> : vector<64x256xf32>
    %376 = tpu.matmul %372, %9, %cst_111 {dimension_numbers = #tpu.dot_dimension_numbers<[1], [0], [0], [1], [0, 0, 1, 1], [], []>} : vector<64x16xf32>, vector<16x256xf32>, vector<64x256xf32> -> vector<64x256xf32>
    %cst_112 = arith.constant 2.000000e+00 : f32
    %377 = vector.broadcast %cst_112 : f32 to vector<64x256xf32>
    %378 = arith.mulf %377, %376 : vector<64x256xf32>
    %379 = vector.broadcast %375 : vector<64x1xf32> to vector<64x256xf32>
    %380 = arith.subf %379, %378 : vector<64x256xf32>
    %cst_113 = arith.constant dense<0x7F800000> : vector<256xf32>
    %381 = vector.multi_reduction <minimumf>, %380, %cst_113 [0] : vector<64x256xf32> to vector<256xf32>
    %382 = vector.shape_cast %381 : vector<256xf32> to vector<1x256xf32>
    %383 = vector.broadcast %382 : vector<1x256xf32> to vector<64x256xf32>
    %384 = arith.cmpf ole, %380, %383 : vector<64x256xf32>
    %c64_i32_114 = arith.constant 64 : i32
    %385 = vector.broadcast %c64_i32_114 : i32 to vector<64x256xi32>
    %386 = arith.select %384, %32, %385 : vector<64x256xi1>, vector<64x256xi32>
    %cst_115 = arith.constant dense<2147483647> : vector<256xi32>
    %387 = vector.multi_reduction <minsi>, %386, %cst_115 [0] : vector<64x256xi32> to vector<256xi32>
    %388 = vector.shape_cast %387 : vector<256xi32> to vector<1x256xi32>
    %389 = vector.broadcast %388 : vector<1x256xi32> to vector<64x256xi32>
    %390 = arith.cmpi eq, %32, %389 : vector<64x256xi32>
    %391 = arith.extui %390 : vector<64x256xi1> to vector<64x256xi32>
    %392 = arith.sitofp %391 : vector<64x256xi32> to vector<64x256xf32>
    %393 = arith.truncf %392 : vector<64x256xf32> to vector<64x256xbf16>
    %cst_116 = arith.constant dense<0.000000e+00> : vector<64x16xf32>
    %394 = tpu.matmul %393, %14, %cst_116 {dimension_numbers = #tpu.dot_dimension_numbers<[1], [1], [0], [0], [0, 0, 1, 0], [], []>} : vector<64x256xbf16>, vector<16x256xbf16>, vector<64x16xf32> -> vector<64x16xf32>
    %c0_117 = arith.constant 0 : index
    %c0_118 = arith.constant 0 : index
    %c0_119 = arith.constant 0 : index
    %c0_120 = arith.constant 0 : index
    %395 = vector.load %arg2[%c0_117, %c0_118, %c0_119, %c0_120] : memref<1x2x8x256xbf16, #tpu.memory_space<vmem>>, vector<1x1x8x256xbf16>
    %396 = vector.shape_cast %395 : vector<1x1x8x256xbf16> to vector<8x256xbf16>
    %cst_121 = arith.constant dense<0.000000e+00> : vector<16x256xf32>
    %397 = tpu.matmul %2, %396, %cst_121 {dimension_numbers = #tpu.dot_dimension_numbers<[1], [0], [0], [1], [0, 0, 1, 1], [], []>} : vector<16x8xbf16>, vector<8x256xbf16>, vector<16x256xf32> -> vector<16x256xf32>
    %398 = vector.broadcast %3 : vector<16x1xf32> to vector<16x256xf32>
    %399 = arith.addf %397, %398 : vector<16x256xf32>
    %cst_122 = arith.constant dense<0xFF800000> : vector<16xf32>
    %400 = vector.multi_reduction <maximumf>, %399, %cst_122 [1] : vector<16x256xf32> to vector<16xf32>
    %401 = vector.shape_cast %400 : vector<16xf32> to vector<16x1xf32>
    %402 = vector.broadcast %401 : vector<16x1xf32> to vector<16x256xf32>
    %403 = arith.subf %399, %402 : vector<16x256xf32>
    %404 = math.exp %403 : vector<16x256xf32>
    %cst_123 = arith.constant dense<0.000000e+00> : vector<16xf32>
    %405 = vector.multi_reduction <add>, %404, %cst_123 [1] : vector<16x256xf32> to vector<16xf32>
    %406 = vector.shape_cast %405 : vector<16xf32> to vector<16x1xf32>
    %407 = vector.broadcast %406 : vector<16x1xf32> to vector<16x256xf32>
    %408 = arith.divf %404, %407 : vector<16x256xf32>
    %409 = arith.truncf %408 : vector<16x256xf32> to vector<16x256xbf16>
    %410 = arith.truncf %399 : vector<16x256xf32> to vector<16x256xbf16>
    %cst_124 = arith.constant dense<0.000000e+00> : vector<16x16xf32>
    %411 = tpu.matmul %409, %410, %cst_124 {dimension_numbers = #tpu.dot_dimension_numbers<[1], [1], [0], [0], [0, 0, 1, 0], [], []>} : vector<16x256xbf16>, vector<16x256xbf16>, vector<16x16xf32> -> vector<16x16xf32>
    %c0_125 = arith.constant 0 : index
    %c0_126 = arith.constant 0 : index
    %c0_127 = arith.constant 0 : index
    %c0_128 = arith.constant 0 : index
    %412 = vector.load %arg8[%c0_125, %c0_126, %c0_127, %c0_128] : memref<1x2x16x16xf32, #tpu.memory_space<vmem>>, vector<1x1x16x16xf32>
    %413 = vector.shape_cast %412 : vector<1x1x16x16xf32> to vector<16x16xf32>
    %414 = vector.shape_cast %411 : vector<16x16xf32> to vector<1x1x16x16xf32>
    tpu.vector_store %arg8[%c0_125, %c0_126, %c0_127, %c0_128], %414 {strides = array<i32>} : memref<1x2x16x16xf32, #tpu.memory_space<vmem>>, vector<1x1x16x16xf32>,
    %c0_129 = arith.constant 0 : index
    %c1 = arith.constant 1 : index
    %c0_130 = arith.constant 0 : index
    %c0_131 = arith.constant 0 : index
    %415 = vector.load %arg2[%c0_129, %c1, %c0_130, %c0_131] : memref<1x2x8x256xbf16, #tpu.memory_space<vmem>>, vector<1x1x8x256xbf16>
    %416 = vector.shape_cast %415 : vector<1x1x8x256xbf16> to vector<8x256xbf16>
    %cst_132 = arith.constant dense<0.000000e+00> : vector<16x256xf32>
    %417 = tpu.matmul %2, %416, %cst_132 {dimension_numbers = #tpu.dot_dimension_numbers<[1], [0], [0], [1], [0, 0, 1, 1], [], []>} : vector<16x8xbf16>, vector<8x256xbf16>, vector<16x256xf32> -> vector<16x256xf32>
    %418 = vector.broadcast %3 : vector<16x1xf32> to vector<16x256xf32>
    %419 = arith.addf %417, %418 : vector<16x256xf32>
    %cst_133 = arith.constant dense<0xFF800000> : vector<16xf32>
    %420 = vector.multi_reduction <maximumf>, %419, %cst_133 [1] : vector<16x256xf32> to vector<16xf32>
    %421 = vector.shape_cast %420 : vector<16xf32> to vector<16x1xf32>
    %422 = vector.broadcast %421 : vector<16x1xf32> to vector<16x256xf32>
    %423 = arith.subf %419, %422 : vector<16x256xf32>
    %424 = math.exp %423 : vector<16x256xf32>
    %cst_134 = arith.constant dense<0.000000e+00> : vector<16xf32>
    %425 = vector.multi_reduction <add>, %424, %cst_134 [1] : vector<16x256xf32> to vector<16xf32>
    %426 = vector.shape_cast %425 : vector<16xf32> to vector<16x1xf32>
    %427 = vector.broadcast %426 : vector<16x1xf32> to vector<16x256xf32>
    %428 = arith.divf %424, %427 : vector<16x256xf32>
    %429 = arith.truncf %428 : vector<16x256xf32> to vector<16x256xbf16>
    %430 = arith.truncf %419 : vector<16x256xf32> to vector<16x256xbf16>
    %cst_135 = arith.constant dense<0.000000e+00> : vector<16x16xf32>
    %431 = tpu.matmul %429, %430, %cst_135 {dimension_numbers = #tpu.dot_dimension_numbers<[1], [1], [0], [0], [0, 0, 1, 0], [], []>} : vector<16x256xbf16>, vector<16x256xbf16>, vector<16x16xf32> -> vector<16x16xf32>
    %c0_136 = arith.constant 0 : index
    %c1_137 = arith.constant 1 : index
    %c0_138 = arith.constant 0 : index
    %c0_139 = arith.constant 0 : index
    %432 = vector.load %arg8[%c0_136, %c1_137, %c0_138, %c0_139] : memref<1x2x16x16xf32, #tpu.memory_space<vmem>>, vector<1x1x16x16xf32>
    %433 = vector.shape_cast %432 : vector<1x1x16x16xf32> to vector<16x16xf32>
    %434 = vector.shape_cast %431 : vector<16x16xf32> to vector<1x1x16x16xf32>
    tpu.vector_store %arg8[%c0_136, %c1_137, %c0_138, %c0_139], %434 {strides = array<i32>} : memref<1x2x16x16xf32, #tpu.memory_space<vmem>>, vector<1x1x16x16xf32>,
    %435 = tpu.concatenate %411, %431 in 0 : vector<16x16xf32>, vector<16x16xf32> -> vector<32x16xf32>
    %c0_140 = arith.constant 0 : index
    %c0_141 = arith.constant 0 : index
    %436 = vector.load %arg5[%c0_140, %c0_141] : memref<48x16xbf16, #tpu.memory_space<vmem>>, vector<48x16xbf16>
    %437 = arith.truncf %394 : vector<64x16xf32> to vector<64x16xbf16>
    %cst_142 = arith.constant dense<0.000000e+00> : vector<48x64xf32>
    %438 = tpu.matmul %436, %437, %cst_142 {dimension_numbers = #tpu.dot_dimension_numbers<[1], [1], [0], [0], [0, 0, 1, 0], [], []>} : vector<48x16xbf16>, vector<64x16xbf16>, vector<48x64xf32> -> vector<48x64xf32>
    %439 = arith.truncf %435 : vector<32x16xf32> to vector<32x16xbf16>
    %cst_143 = arith.constant dense<0.000000e+00> : vector<48x32xf32>
    %440 = tpu.matmul %436, %439, %cst_143 {dimension_numbers = #tpu.dot_dimension_numbers<[1], [1], [0], [0], [0, 0, 1, 0], [], []>} : vector<48x16xbf16>, vector<32x16xbf16>, vector<48x32xf32> -> vector<48x32xf32>
    %441 = vector.extract_strided_slice %438 {offsets = [0, 0], sizes = [16, 64], strides = [1, 1]} : vector<48x64xf32> to vector<16x64xf32>
    %442 = vector.extract_strided_slice %440 {offsets = [16, 0], sizes = [16, 32], strides = [1, 1]} : vector<48x32xf32> to vector<16x32xf32>
    %443 = vector.extract_strided_slice %440 {offsets = [32, 0], sizes = [16, 32], strides = [1, 1]} : vector<48x32xf32> to vector<16x32xf32>
    %cst_144 = arith.constant dense<0.000000e+00> : vector<64x32xf32>
    %444 = tpu.matmul %441, %442, %cst_144 {dimension_numbers = #tpu.dot_dimension_numbers<[0], [0], [1], [1], [0, 1, 1, 1], [], []>} : vector<16x64xf32>, vector<16x32xf32>, vector<64x32xf32> -> vector<64x32xf32>
    %cst_145 = arith.constant dense<0xFF800000> : vector<64xf32>
    %445 = vector.multi_reduction <maximumf>, %444, %cst_145 [1] : vector<64x32xf32> to vector<64xf32>
    %446 = vector.shape_cast %445 : vector<64xf32> to vector<64x1xf32>
    %447 = vector.broadcast %446 : vector<64x1xf32> to vector<64x32xf32>
    %448 = arith.subf %444, %447 : vector<64x32xf32>
    %449 = math.exp %448 : vector<64x32xf32>
    %cst_146 = arith.constant dense<0.000000e+00> : vector<64xf32>
    %450 = vector.multi_reduction <add>, %449, %cst_146 [1] : vector<64x32xf32> to vector<64xf32>
    %451 = vector.shape_cast %450 : vector<64xf32> to vector<64x1xf32>
    %452 = tpu.reciprocal %451 {approx = true} : vector<64x1xf32> -> vector<64x1xf32>
    %453 = vector.broadcast %452 : vector<64x1xf32> to vector<64x32xf32>
    %454 = arith.mulf %449, %453 : vector<64x32xf32>
    %cst_147 = arith.constant dense<0.000000e+00> : vector<64x16xf32>
    %455 = tpu.matmul %454, %443, %cst_147 {dimension_numbers = #tpu.dot_dimension_numbers<[1], [1], [0], [0], [0, 0, 1, 0], [], []>} : vector<64x32xf32>, vector<16x32xf32>, vector<64x16xf32> -> vector<64x16xf32>
    %456 = arith.addf %394, %455 : vector<64x16xf32>
    %c0_148 = arith.constant 0 : index
    %c0_149 = arith.constant 0 : index
    %c0_150 = arith.constant 0 : index
    %457 = vector.load %arg7[%c0_148, %c0_149, %c0_150] : memref<1x64x16xf32, #tpu.memory_space<vmem>>, vector<1x64x16xf32>
    %458 = vector.shape_cast %457 : vector<1x64x16xf32> to vector<64x16xf32>
    %459 = vector.shape_cast %456 : vector<64x16xf32> to vector<1x64x16xf32>
    tpu.vector_store %arg7[%c0_148, %c0_149, %c0_150], %459 {strides = array<i32>} : memref<1x64x16xf32, #tpu.memory_space<vmem>>, vector<1x64x16xf32>,
    return
  }
  func.func @transform_0(%arg0: i32) -> (i32, i32, i32) {
    %c0_i32 = arith.constant 0 : i32
    %c0_i32_0 = arith.constant 0 : i32
    %c0_i32_1 = arith.constant 0 : i32
    return %arg0, %c0_i32, %c0_i32_0 : i32, i32, i32
  }
  func.func @transform_1(%arg0: i32) -> (i32, i32, i32, i32) {
    %c0_i32 = arith.constant 0 : i32
    %c0_i32_0 = arith.constant 0 : i32
    %c0_i32_1 = arith.constant 0 : i32
    %c0_i32_2 = arith.constant 0 : i32
    return %arg0, %c0_i32, %c0_i32_0, %c0_i32_1 : i32, i32, i32, i32
  }
  func.func @transform_2(%arg0: i32) -> (i32, i32) {
    %c0_i32 = arith.constant 0 : i32
    %c0_i32_0 = arith.constant 0 : i32
    %c0_i32_1 = arith.constant 0 : i32
    return %c0_i32, %c0_i32_0 : i32, i32
  }
  func.func @transform_3(%arg0: i32) -> (i32, i32) {
    %c0_i32 = arith.constant 0 : i32
    %c0_i32_0 = arith.constant 0 : i32
    %c0_i32_1 = arith.constant 0 : i32
    return %c0_i32, %c0_i32_0 : i32, i32
  }
  func.func @transform_4(%arg0: i32) -> (i32, i32) {
    %c0_i32 = arith.constant 0 : i32
    %c0_i32_0 = arith.constant 0 : i32
    %c0_i32_1 = arith.constant 0 : i32
    return %c0_i32, %c0_i32_0 : i32, i32
  }
  func.func @transform_5(%arg0: i32) -> (i32, i32, i32) {
    %c0_i32 = arith.constant 0 : i32
    %c0_i32_0 = arith.constant 0 : i32
    %c0_i32_1 = arith.constant 0 : i32
    return %arg0, %c0_i32, %c0_i32_0 : i32, i32, i32
  }
  func.func @transform_6(%arg0: i32) -> (i32, i32, i32) {
    %c0_i32 = arith.constant 0 : i32
    %c0_i32_0 = arith.constant 0 : i32
    %c0_i32_1 = arith.constant 0 : i32
    return %arg0, %c0_i32, %c0_i32_0 : i32, i32, i32
  }
  func.func @transform_7(%arg0: i32) -> (i32, i32, i32, i32) {
    %c0_i32 = arith.constant 0 : i32
    %c0_i32_0 = arith.constant 0 : i32
    %c0_i32_1 = arith.constant 0 : i32
    %c0_i32_2 = arith.constant 0 : i32
    return %arg0, %c0_i32, %c0_i32_0, %c0_i32_1 : i32, i32, i32, i32
  }
  func.func @transform_8(%arg0: i32) -> (i32, i32, i32) {
    %c0_i32 = arith.constant 0 : i32
    %c0_i32_0 = arith.constant 0 : i32
    %c0_i32_1 = arith.constant 0 : i32
    return %arg0, %c0_i32, %c0_i32_0 : i32, i32, i32
  }
  func.func @transform_9(%arg0: i32) -> (i32, i32, i32) {
    %c0_i32 = arith.constant 0 : i32
    %c0_i32_0 = arith.constant 0 : i32
    %c0_i32_1 = arith.constant 0 : i32
    return %arg0, %c0_i32, %c0_i32_0 : i32, i32, i32
  }
}

</mosaic_0001>

<llo_original>
// kernel: slot_generator_forward.1
$region0: #{slot_generator_forward.1}
  #allocation0 [shape = 'u32[]', space=smem, size = 0x4, offset = 0x4, fixed_abs, tag = 'smem constant byte address 0x4 - core index']
  #allocation1 [shape = 'u32[144,128]{1,0:T(1,128)}', space=vmem, size = 0x12000, scoped, tag = 'internal scratch']
  %s0 = inlined_call_operand.vmem [shape: bf16[2,8,256], index: 0, kind: input, shape index: {}]
  %s1 = inlined_call_operand.vmem [shape: bf16[2,2,8,256], index: 1, kind: input, shape index: {}]
  %s2 = inlined_call_operand.vmem [shape: bf16[24,8], index: 2, kind: input, shape index: {}]
  %s3 = inlined_call_operand.vmem [shape: f32[24,1], index: 3, kind: input, shape index: {}]
  %s4 = inlined_call_operand.vmem [shape: bf16[48,16], index: 4, kind: input, shape index: {}]
  %s5 = inlined_call_operand.vmem [shape: f32[2,16,256], index: 5, kind: output, shape index: {0}]
  %s6 = inlined_call_operand.vmem [shape: f32[2,64,16], index: 6, kind: output, shape index: {1}]
  %s7 = inlined_call_operand.vmem [shape: f32[2,2,16,16], index: 7, kind: output, shape index: {2}]
  %s8 = inlined_call_operand.hbm [shape: f32[2,8,16], index: 8, kind: output, shape index: {3}]
  %s9 = inlined_call_operand.vmem [shape: f32[2,8,256], index: 9, kind: output, shape index: {4}]
  %10 = xla_tuple %s5, %s6, %s7, %s8, %s9
  %s11 = sld [smem:[#allocation0]]
  $region85: #{slot_generator_forward.1} parent=0
    _
  %s13 = ssub.s32 1, %s11
  %s14 = scalar_select 0, %s13, %s11
  $region1: #{slot_generator_forward.1} parent=0
    #allocation2 [shape = 'u8[8192]{0}', space=vmem, size = 0x2000, scoped, tag = 'output window, operand 3']
    #allocation3 [shape = 's32[2]{0}', space=sflag, size = 0x8, scoped, tag = 'scoped memory for slot_generator_forward.1']
    %15 = vsyncpa [#allocation3], 0
    %s16 = scalar_lea.sflag [#allocation3], 1
    %17 = vsyncpa %s16, 0
    loop: start=0, step=1, limit=4
    $region2: #{slot_generator_forward.1} parent=1 // loop_pre_header
      _
    $region3: #{slot_generator_forward.1} parent=1 // loop_header
      %s19 = sphi 0, %s23
      %p20 = scmp.ge.s32.totalorder %s19, 4
      %s29 = sphi 0, %s31
      %s32 = sphi 0, %s29
      %s33 = sphi 0, %s32
      %s49 = sphi 0, %s33
      %s55 = sphi 0, %s57
      %s58 = sphi 0, %s55
      %s59 = sphi 0, %s58
      %s75 = sphi 0, %s59
      %s79 = sphi 0, %s79
      %s81 = sphi 0, %s79
      %s82 = sphi 0, %s81
      %s96 = sphi 0, %s82
      %s100 = sphi 0, %s100
      %s102 = sphi 0, %s100
      %s103 = sphi 0, %s102
      %s117 = sphi 0, %s103
      %s121 = sphi 0, %s121
      %s123 = sphi 0, %s121
      %s124 = sphi 0, %s123
      %s138 = sphi 0, %s124
      %s144 = sphi 0, %s146
      %s147 = sphi 0, %s144
      %s148 = sphi 0, %s147
      %s164 = sphi 0, %s148
      %s170 = sphi 0, %s172
      %s173 = sphi 0, %s170
      %s174 = sphi 0, %s173
      %s190 = sphi 0, %s174
      %s196 = sphi 0, %s198
      %s199 = sphi 0, %s196
      %s200 = sphi 0, %s199
      %s216 = sphi 0, %s200
      %s222 = sphi 0, %s224
      %s225 = sphi 0, %s222
      %s226 = sphi 0, %s225
      %s242 = sphi 0, %s226
      %s248 = sphi 0, %s250
      %s251 = sphi 0, %s248
      %s252 = sphi 0, %s251
      %s268 = sphi 0, %s252
    $region4: #{slot_generator_forward.1} parent=1 // loop_header_branch
      %22 = sbr.rel (%p20) target = $region8
    $region5: #{slot_generator_forward.1} parent=1 // loop_body
      %s24 = ssub.s32 %s19, 1
      %s25 = ssub.s32 %s19, 2
      %s26 = sadd.s32 %s19, 1
      %s27 = ssub.s32 %s19, %s26
      %p28 = scmp.eq.s32.totalorder %s27, 0
      %s30 = sadd.s32 %s29, 1
      %s31 = scalar_select %p28, %s29, %s30
      %p34 = pneg %p28
      %p35 = scmp.eq.s32.totalorder %s19, 1
      %p36 = por %p34, %p35
      %p37 = scmp.ne.s32.totalorder %s29, %s32
      %p38 = scmp.eq.s32.totalorder %s19, 0
      %p39 = por %p37, %p38
      %p40 = scmp.ne.s32.totalorder %s29, %s32
      %p41 = scmp.eq.s32.totalorder %s24, 1
      %p42 = por %p40, %p41
      %p43 = scmp.ne.s32.totalorder %s32, %s33
      %p44 = scmp.eq.s32.totalorder %s24, 0
      %p45 = por %p43, %p44
      %p46 = scmp.ne.s32.totalorder %s32, %s33
      %p47 = scmp.eq.s32.totalorder %s25, 1
      %p48 = por %p46, %p47
      %p50 = scmp.ne.s32.totalorder %s33, %s49
      %p51 = scmp.eq.s32.totalorder %s25, 0
      %p52 = por %p50, %p51
      %s53 = ssub.s32 %s19, %s26
      %p54 = scmp.eq.s32.totalorder %s53, 0
      %s56 = sadd.s32 %s55, 1
      %s57 = scalar_select %p54, %s55, %s56
      %p60 = pneg %p54
      %p61 = scmp.eq.s32.totalorder %s19, 1
      %p62 = por %p60, %p61
      %p63 = scmp.ne.s32.totalorder %s55, %s58
      %p64 = scmp.eq.s32.totalorder %s19, 0
      %p65 = por %p63, %p64
      %p66 = scmp.ne.s32.totalorder %s55, %s58
      %p67 = scmp.eq.s32.totalorder %s24, 1
      %p68 = por %p66, %p67
      %p69 = scmp.ne.s32.totalorder %s58, %s59
      %p70 = scmp.eq.s32.totalorder %s24, 0
      %p71 = por %p69, %p70
      %p72 = scmp.ne.s32.totalorder %s58, %s59
      %p73 = scmp.eq.s32.totalorder %s25, 1
      %p74 = por %p72, %p73
      %p76 = scmp.ne.s32.totalorder %s59, %s75
      %p77 = scmp.eq.s32.totalorder %s25, 0
      %p78 = por %p76, %p77
      %s80 = sadd.s32 %s79, 1
      %p83 = scmp.eq.s32.totalorder %s19, 1
      %p84 = scmp.ne.s32.totalorder %s79, %s81
      %p85 = scmp.eq.s32.totalorder %s19, 0
      %p86 = por %p84, %p85
      %p87 = scmp.ne.s32.totalorder %s79, %s81
      %p88 = scmp.eq.s32.totalorder %s24, 1
      %p89 = por %p87, %p88
      %p90 = scmp.ne.s32.totalorder %s81, %s82
      %p91 = scmp.eq.s32.totalorder %s24, 0
      %p92 = por %p90, %p91
      %p93 = scmp.ne.s32.totalorder %s81, %s82
      %p94 = scmp.eq.s32.totalorder %s25, 1
      %p95 = por %p93, %p94
      %p97 = scmp.ne.s32.totalorder %s82, %s96
      %p98 = scmp.eq.s32.totalorder %s25, 0
      %p99 = por %p97, %p98
      %s101 = sadd.s32 %s100, 1
      %p104 = scmp.eq.s32.totalorder %s19, 1
      %p105 = scmp.ne.s32.totalorder %s100, %s102
      %p106 = scmp.eq.s32.totalorder %s19, 0
      %p107 = por %p105, %p106
      %p108 = scmp.ne.s32.totalorder %s100, %s102
      %p109 = scmp.eq.s32.totalorder %s24, 1
      %p110 = por %p108, %p109
      %p111 = scmp.ne.s32.totalorder %s102, %s103
      %p112 = scmp.eq.s32.totalorder %s24, 0
      %p113 = por %p111, %p112
      %p114 = scmp.ne.s32.totalorder %s102, %s103
      %p115 = scmp.eq.s32.totalorder %s25, 1
      %p116 = por %p114, %p115
      %p118 = scmp.ne.s32.totalorder %s103, %s117
      %p119 = scmp.eq.s32.totalorder %s25, 0
      %p120 = por %p118, %p119
      %s122 = sadd.s32 %s121, 1
      %p125 = scmp.eq.s32.totalorder %s19, 1
      %p126 = scmp.ne.s32.totalorder %s121, %s123
      %p127 = scmp.eq.s32.totalorder %s19, 0
      %p128 = por %p126, %p127
      %p129 = scmp.ne.s32.totalorder %s121, %s123
      %p130 = scmp.eq.s32.totalorder %s24, 1
      %p131 = por %p129, %p130
      %p132 = scmp.ne.s32.totalorder %s123, %s124
      %p133 = scmp.eq.s32.totalorder %s24, 0
      %p134 = por %p132, %p133
      %p135 = scmp.ne.s32.totalorder %s123, %s124
      %p136 = scmp.eq.s32.totalorder %s25, 1
      %p137 = por %p135, %p136
      %p139 = scmp.ne.s32.totalorder %s124, %s138
      %p140 = scmp.eq.s32.totalorder %s25, 0
      %p141 = por %p139, %p140
      %s142 = ssub.s32 %s19, %s26
      %p143 = scmp.eq.s32.totalorder %s142, 0
      %s145 = sadd.s32 %s144, 1
      %s146 = scalar_select %p143, %s144, %s145
      %p149 = pneg %p143
      %p150 = scmp.eq.s32.totalorder %s19, 1
      %p151 = por %p149, %p150
      %p152 = scmp.ne.s32.totalorder %s144, %s147
      %p153 = scmp.eq.s32.totalorder %s19, 0
      %p154 = por %p152, %p153
      %p155 = scmp.ne.s32.totalorder %s144, %s147
      %p156 = scmp.eq.s32.totalorder %s24, 1
      %p157 = por %p155, %p156
      %p158 = scmp.ne.s32.totalorder %s147, %s148
      %p159 = scmp.eq.s32.totalorder %s24, 0
      %p160 = por %p158, %p159
      %p161 = scmp.ne.s32.totalorder %s147, %s148
      %p162 = scmp.eq.s32.totalorder %s25, 1
      %p163 = por %p161, %p162
      %p165 = scmp.ne.s32.totalorder %s148, %s164
      %p166 = scmp.eq.s32.totalorder %s25, 0
      %p167 = por %p165, %p166
      %s168 = ssub.s32 %s19, %s26
      %p169 = scmp.eq.s32.totalorder %s168, 0
      %s171 = sadd.s32 %s170, 1
      %s172 = scalar_select %p169, %s170, %s171
      %p175 = pneg %p169
      %p176 = scmp.eq.s32.totalorder %s19, 1
      %p177 = por %p175, %p176
      %p178 = scmp.ne.s32.totalorder %s170, %s173
      %p179 = scmp.eq.s32.totalorder %s19, 0
      %p180 = por %p178, %p179
      %p181 = scmp.ne.s32.totalorder %s170, %s173
      %p182 = scmp.eq.s32.totalorder %s24, 1
      %p183 = por %p181, %p182
      %p184 = scmp.ne.s32.totalorder %s173, %s174
      %p185 = scmp.eq.s32.totalorder %s24, 0
      %p186 = por %p184, %p185
      %p187 = scmp.ne.s32.totalorder %s173, %s174
      %p188 = scmp.eq.s32.totalorder %s25, 1
      %p189 = por %p187, %p188
      %p191 = scmp.ne.s32.totalorder %s174, %s190
      %p192 = scmp.eq.s32.totalorder %s25, 0
      %p193 = por %p191, %p192
      %s194 = ssub.s32 %s19, %s26
      %p195 = scmp.eq.s32.totalorder %s194, 0
      %s197 = sadd.s32 %s196, 1
      %s198 = scalar_select %p195, %s196, %s197
      %p201 = pneg %p195
      %p202 = scmp.eq.s32.totalorder %s19, 1
      %p203 = por %p201, %p202
      %p204 = scmp.ne.s32.totalorder %s196, %s199
      %p205 = scmp.eq.s32.totalorder %s19, 0
      %p206 = por %p204, %p205
      %p207 = scmp.ne.s32.totalorder %s196, %s199
      %p208 = scmp.eq.s32.totalorder %s24, 1
      %p209 = por %p207, %p208
      %p210 = scmp.ne.s32.totalorder %s199, %s200
      %p211 = scmp.eq.s32.totalorder %s24, 0
      %p212 = por %p210, %p211
      %p213 = scmp.ne.s32.totalorder %s199, %s200
      %p214 = scmp.eq.s32.totalorder %s25, 1
      %p215 = por %p213, %p214
      %p217 = scmp.ne.s32.totalorder %s200, %s216
      %p218 = scmp.eq.s32.totalorder %s25, 0
      %p219 = por %p217, %p218
      %s220 = ssub.s32 %s19, %s26
      %p221 = scmp.eq.s32.totalorder %s220, 0
      %s223 = sadd.s32 %s222, 1
      %s224 = scalar_select %p221, %s222, %s223
      %p227 = pneg %p221
      %p228 = scmp.eq.s32.totalorder %s19, 1
      %p229 = por %p227, %p228
      %p230 = scmp.ne.s32.totalorder %s222, %s225
      %p231 = scmp.eq.s32.totalorder %s19, 0
      %p232 = por %p230, %p231
      %p233 = scmp.ne.s32.totalorder %s222, %s225
      %p234 = scmp.eq.s32.totalorder %s24, 1
      %p235 = por %p233, %p234
      %p236 = scmp.ne.s32.totalorder %s225, %s226
      %p237 = scmp.eq.s32.totalorder %s24, 0
      %p238 = por %p236, %p237
      %p239 = scmp.ne.s32.totalorder %s225, %s226
      %p240 = scmp.eq.s32.totalorder %s25, 1
      %p241 = por %p239, %p240
      %p243 = scmp.ne.s32.totalorder %s226, %s242
      %p244 = scmp.eq.s32.totalorder %s25, 0
      %p245 = por %p243, %p244
      %s246 = ssub.s32 %s19, %s26
      %p247 = scmp.eq.s32.totalorder %s246, 0
      %s249 = sadd.s32 %s248, 1
      %s250 = scalar_select %p247, %s248, %s249
      %p253 = pneg %p247
      %p254 = scmp.eq.s32.totalorder %s19, 1
      %p255 = por %p253, %p254
      %p256 = scmp.ne.s32.totalorder %s248, %s251
      %p257 = scmp.eq.s32.totalorder %s19, 0
      %p258 = por %p256, %p257
      %p259 = scmp.ne.s32.totalorder %s248, %s251
      %p260 = scmp.eq.s32.totalorder %s24, 1
      %p261 = por %p259, %p260
      %p262 = scmp.ne.s32.totalorder %s251, %s252
      %p263 = scmp.eq.s32.totalorder %s24, 0
      %p264 = por %p262, %p263
      %p265 = scmp.ne.s32.totalorder %s251, %s252
      %p266 = scmp.eq.s32.totalorder %s25, 1
      %p267 = por %p265, %p266
      %p269 = scmp.ne.s32.totalorder %s252, %s268
      %p270 = scmp.eq.s32.totalorder %s25, 0
      %p271 = por %p269, %p270
      %p272 = scmp.le.s32.totalorder 1, %s19
      %p273 = scmp.lt.s32.totalorder %s19, 3
      %p274 = pnand %p272, %p273
      %p275 = pneg %p274
      // Predicated region
      $region9: #{slot_generator_forward.1} parent=5 // pred_check
        _
      $region10: #{slot_generator_forward.1} parent=5 // pred_check_branch
        %277 = sbr.rel (%p274) target = $region12
      $region11: #{slot_generator_forward.1} parent=5 // pred_region
        %s278 = ssub.s32 %s19, 1
        // Predicated region
        $region13: #{slot_generator_forward.1} parent=11 // pred_check
          %p279 = pneg %p92
        $region14: #{slot_generator_forward.1} parent=11 // pred_check_branch
          %281 = sbr.rel (%p279) target = $region16
        $region15: #{slot_generator_forward.1} parent=11 // pred_region
          _
        $region16: #{slot_generator_forward.1} parent=11 // pred_fallthru
          _
        // Predicated region
        $region17: #{slot_generator_forward.1} parent=11 // pred_check
          %p282 = pneg %p113
        $region18: #{slot_generator_forward.1} parent=11 // pred_check_branch
          %284 = sbr.rel (%p282) target = $region20
        $region19: #{slot_generator_forward.1} parent=11 // pred_region
          _
        $region20: #{slot_generator_forward.1} parent=11 // pred_fallthru
          _
        // Predicated region
        $region21: #{slot_generator_forward.1} parent=11 // pred_check
          %p285 = pneg %p134
        $region22: #{slot_generator_forward.1} parent=11 // pred_check_branch
          %287 = sbr.rel (%p285) target = $region24
        $region23: #{slot_generator_forward.1} parent=11 // pred_region
          _
        $region24: #{slot_generator_forward.1} parent=11 // pred_fallthru
          _
      $region12: #{slot_generator_forward.1} parent=5 // pred_fallthru
        _
      %p288 = scmp.lt.s32.totalorder %s19, 2
      // Predicated region
      $region25: #{slot_generator_forward.1} parent=5 // pred_check
        %p289 = pneg %p288
      $region26: #{slot_generator_forward.1} parent=5 // pred_check_branch
        %291 = sbr.rel (%p289) target = $region28
      $region27: #{slot_generator_forward.1} parent=5 // pred_region
        // Predicated region
        $region29: #{slot_generator_forward.1} parent=27 // pred_check
          %p292 = pneg %p39
        $region30: #{slot_generator_forward.1} parent=27 // pred_check_branch
          %294 = sbr.rel (%p292) target = $region32
        $region31: #{slot_generator_forward.1} parent=27 // pred_region
          %p295 = scmp.lt.s32.totalorder %s19, 1
          %s296 = scalar_select %p295, %s19, 1
          %s297 = smul.addr %s296, 2
          %s298 = smul.addr %s297, 4
          %s299 = scalar_lea.vmem %s0, %s298
        $region32: #{slot_generator_forward.1} parent=27 // pred_fallthru
          _
        // Predicated region
        $region33: #{slot_generator_forward.1} parent=27 // pred_check
          %p300 = pneg %p65
        $region34: #{slot_generator_forward.1} parent=27 // pred_check_branch
          %302 = sbr.rel (%p300) target = $region36
        $region35: #{slot_generator_forward.1} parent=27 // pred_region
          %p303 = scmp.lt.s32.totalorder %s19, 1
          %s304 = scalar_select %p303, %s19, 1
          %s305 = smul.addr %s304, 4
          %s306 = smul.addr %s305, 4
          %s307 = scalar_lea.vmem %s1, %s306
        $region36: #{slot_generator_forward.1} parent=27 // pred_fallthru
          _
      $region28: #{slot_generator_forward.1} parent=5 // pred_fallthru
        _
      %p308 = scmp.le.s32.totalorder 1, %s19
      %p309 = scmp.lt.s32.totalorder %s19, 3
      %p310 = pnand %p308, %p309
      %p311 = pneg %p310
      // Predicated region
      $region37: #{slot_generator_forward.1} parent=5 // pred_check
        _
      $region38: #{slot_generator_forward.1} parent=5 // pred_check_branch
        %313 = sbr.rel (%p310) target = $region40
      $region39: #{slot_generator_forward.1} parent=5 // pred_region
        %s314 = ssub.s32 %s19, 1
        %p315 = scmp.lt.s32.totalorder %s24, 1
        %s316 = scalar_select %p315, %s24, 1
        %s317 = smul.addr %s316, 2
        %s318 = smul.addr %s317, 4
        %s319 = scalar_lea.vmem %s0, %s318
        %p320 = pneg %p45
        %p321 = pneg %p42
        %p322 = scmp.lt.s32.totalorder %s24, 1
        %s323 = scalar_select %p322, %s24, 1
        %s324 = smul.addr %s323, 4
        %s325 = smul.addr %s324, 4
        %s326 = scalar_lea.vmem %s1, %s325
        %p327 = pneg %p71
        %p328 = pneg %p68
        %p329 = pneg %p92
        %p330 = pneg %p89
        %p331 = pneg %p113
        %p332 = pneg %p110
        %p333 = pneg %p134
        %p334 = pneg %p131
        %p335 = pneg %p160
        %p336 = pneg %p157
        %p337 = scmp.lt.s32.totalorder %s24, 1
        %s338 = scalar_select %p337, %s24, 1
        %s339 = smul.addr %s338, 4
        %s340 = smul.addr %s339, 8
        %s341 = scalar_lea.vmem %s5, %s340
        %p342 = pneg %p186
        %p343 = pneg %p183
        %p344 = scmp.lt.s32.totalorder %s24, 1
        %s345 = scalar_select %p344, %s24, 1
        %s346 = smul.addr %s345, 8
        %s347 = smul.addr %s346, 8
        %s348 = scalar_lea.vmem %s6, %s347
        %p349 = pneg %p212
        %p350 = pneg %p209
        %p351 = scmp.lt.s32.totalorder %s24, 1
        %s352 = scalar_select %p351, %s24, 1
        %s353 = smul.addr %s352, 4
        %s354 = smul.addr %s353, 8
        %s355 = scalar_lea.vmem %s7, %s354
        %p356 = pneg %p238
        %p357 = pneg %p235
        %s358 = sand.u32 %s225, 1
        %s359 = scalar_lea.sflag [#allocation3], %s358
        %s360 = sand.u32 %s225, 1
        %s361 = smul.addr %s360, 8
        %s362 = scalar_lea.vmem [#allocation2], %s361
        %p363 = pneg %p264
        %p364 = pneg %p261
        %p365 = scmp.lt.s32.totalorder %s24, 1
        %s366 = scalar_select %p365, %s24, 1
        %s367 = smul.addr %s366, 2
        %s368 = smul.addr %s367, 8
        %s369 = scalar_lea.vmem %s9, %s368
        %p370 = scmp.lt.s32.totalorder %s24, 1
        %s371 = scalar_select %p370, %s24, 1
        %s372 = smul.addr %s371, 2
        %s373 = smul.addr %s372, 4
        %s374 = scalar_lea.vmem %s0, %s373
        %p375 = scmp.lt.s32.totalorder %s24, 1
        %s376 = scalar_select %p375, %s24, 1
        %s377 = smul.addr %s376, 4
        %s378 = smul.addr %s377, 4
        %s379 = scalar_lea.vmem %s1, %s378
        %p380 = scmp.lt.s32.totalorder %s24, 1
        %s381 = scalar_select %p380, %s24, 1
        %s382 = smul.addr %s381, 4
        %s383 = smul.addr %s382, 8
        %s384 = scalar_lea.vmem %s5, %s383
        %p385 = scmp.lt.s32.totalorder %s24, 1
        %s386 = scalar_select %p385, %s24, 1
        %s387 = smul.addr %s386, 8
        %s388 = smul.addr %s387, 8
        %s389 = scalar_lea.vmem %s6, %s388
        %p390 = scmp.lt.s32.totalorder %s24, 1
        %s391 = scalar_select %p390, %s24, 1
        %s392 = smul.addr %s391, 4
        %s393 = smul.addr %s392, 8
        %s394 = scalar_lea.vmem %s7, %s393
        %p395 = scmp.lt.s32.totalorder %s24, 1
        %s396 = scalar_select %p395, %s24, 1
        %s397 = smul.addr %s396, 2
        %s398 = smul.addr %s397, 8
        %s399 = scalar_lea.vmem %s9, %s398
        %v402 = vld [vmem:[%s2] sm:$0xf]
        %v403 = vld [vmem:[%s2 + $0x4] sm:$0xf]
        %v404 = vld [vmem:[%s2 + $0x8] sm:$0xf]
        %v405 = vld [vmem:[%s3] sm:$0xff]
        %v406 = vld [vmem:[%s3 + $0x8] sm:$0xff]
        %v407 = vld [vmem:[%s3 + $0x10] sm:$0xff]
        %v408 = vld [vmem:[%s374] sm:$0xff]
        %410 = vset.pattern.permute.xlu0 0
        %411 = vperm.xlu0 %410, %v405
        %v412 = vpop.permute.xlu0 %411
        %415 = vset.pattern.permute.xlu0 0
        %416 = vperm.xlu0 %415, %v406
        %v417 = vpop.permute.xlu0 %416
        %420 = vset.pattern.permute.xlu0 0
        %421 = vperm.xlu0 %420, %v407
        %v422 = vpop.permute.xlu0 %421
        %v427 = vunpack.c.l.b16 %v402
        %v428 = vunpack.c.l.b16 %v403
        %v429 = vunpack.c.l.b16 %v404
        %v430 = vpack.c.b16 %v428, %v427
        %v431 = vpack.c.b16 %v429, %v429
        %v433 = vunpack.c.l.b16 %v408
        %v434 = vunpack.c.h.b16 %v408
        %v435 = vpack.c.b16 %v433, %v433
        %v436 = vpack.c.b16 %v434, %v434
        %vm437 = vcmask 64512
        %v439 = vsel %vm437, %v430, 0
        %v442 = vsel %vm437, %v431, 0
        %vm444 = vcmask 1043456
        %v446 = vsel %vm444, %v435, 0
        %v449 = vsel %vm444, %v436, 0
        %451 = vmatprep.subr.bf16.mxu0 %v449
        %452 = vmatpush1.bf16.msra.mxu0 %v446
        %453 = vmatprep.subr.bf16.mxu0 0
        %454 = vmatpush1.bf16.msra.mxu0 0
        %455 = vmatprep.subr.bf16.mxu0 0
        %456 = vmatpush1.bf16.msra.mxu0 0
        %457 = vmatprep.subr.bf16.mxu0 0
        %458 = vmatpush1.bf16.msra.mxu0 0
        %459 = vmatprep.subr.bf16.mxu0 0
        %460 = vmatpush1.bf16.msra.mxu0 0
        %461 = vmatprep.subr.bf16.mxu0 0
        %462 = vmatpush1.bf16.msra.mxu0 0
        %463 = vmatprep.subr.bf16.mxu0 0
        %464 = vmatpush1.bf16.msra.mxu0 0
        %465 = vmatprep.subr.bf16.mxu0 0
        %466 = vmatpush1.bf16.msra.mxu0 0
        %467 = vmatprep.subr.bf16.mxu0 0
        %468 = vmatpush1.bf16.msra.mxu0 0
        %469 = vmatprep.subr.bf16.mxu0 0
        %470 = vmatpush1.bf16.msra.mxu0 0
        %471 = vmatprep.subr.bf16.mxu0 0
        %472 = vmatpush1.bf16.msra.mxu0 0
        %473 = vmatprep.subr.bf16.mxu0 0
        %474 = vmatpush1.bf16.msra.mxu0 0
        %475 = vmatprep.subr.bf16.mxu0 0
        %476 = vmatpush1.bf16.msra.mxu0 0
        %477 = vmatprep.subr.bf16.mxu0 0
        %478 = vmatpush1.bf16.msra.mxu0 0
        %479 = vmatprep.subr.bf16.mxu0 0
        %480 = vmatpush1.bf16.msra.mxu0 0
        %481 = vmatprep.subr.bf16.mxu0 0
        %482 = vmatpush1.bf16.msra.mxu0 0
        %483 = vmatprep.mubr.bf16.mxu0 0
        %484 = vmatmul.mubr.bf16.gmra.mrb[0].mxu0 %v439
        %v485 = vpop.f32.mrb[0].mxu0
        %v486 = vadd.f32 %v412, %v485
        %v487 = vpop.f32.mrb[0].mxu0
        %v488 = vadd.f32 %v412, %v487
        %v489 = vpop.f32.mrb[0].mxu0
        %v490 = vadd.f32 %v417, %v489
        %v491 = vpop.f32.mrb[0].mxu0
        %v492 = vadd.f32 %v417, %v491
        %493 = vmatprep.mubr.bf16.mxu0 0
        %494 = vmatmul.mubr.bf16.gmra.mrb[0].mxu0 %v442
        %v495 = vpop.f32.mrb[0].mxu0
        %v496 = vadd.f32 %v422, %v495
        %v497 = vpop.f32.mrb[0].mxu0
        %v498 = vadd.f32 %v422, %v497
        %v499 = vpop.f32.mrb[0].mxu0
        %v500 = vpop.f32.mrb[0].mxu0
        %501 = vdwg.mxu0
        %502 = vst [vmem:[%s384] sm:$0xff] %v486
        %503 = vst [vmem:[%s384 + $0x8] sm:$0xff] %v488
        %504 = vst [vmem:[%s384 + $0x10] sm:$0xff] %v490
        %505 = vst [vmem:[%s384 + $0x18] sm:$0xff] %v492
        %v506 = vpack.c.bf16 %v490, %v486
        %v507 = vpack.c.bf16 %v492, %v488
        %v508 = vrot.slane %v496, 4
        %v509 = vmax.f32 %v496, %v508
        %v510 = vrot.slane %v509, 2
        %v511 = vmax.f32 %v509, %v510
        %v512 = vrot.slane %v511, 1
        %v513 = vmax.f32 %v511, %v512
        %v514 = vrot.slane %v498, 4
        %v515 = vmax.f32 %v498, %v514
        %v516 = vrot.slane %v515, 2
        %v517 = vmax.f32 %v515, %v516
        %v518 = vrot.slane %v517, 1
        %v519 = vmax.f32 %v517, %v518
        %v520 = vsub.f32 %v496, %v513
        %v521 = vsub.f32 %v498, %v519
        %v522 = vmul.f32 %v520, 1.442695
        %v523 = vpow.pop %v522
        %v524 = vmul.f32 %v521, 1.442695
        %v525 = vpow.pop %v524
        %v526 = vrot.slane %v523, 4
        %v527 = vadd.f32 %v523, %v526
        %v528 = vrot.slane %v527, 2
        %v529 = vadd.f32 %v527, %v528
        %v530 = vrot.slane %v529, 1
        %v531 = vadd.f32 %v529, %v530
        %v532 = vrot.slane %v525, 4
        %v533 = vadd.f32 %v525, %v532
        %v534 = vrot.slane %v533, 2
        %v535 = vadd.f32 %v533, %v534
        %v536 = vrot.slane %v535, 1
        %v537 = vadd.f32 %v535, %v536
        %v538 = vrcp.pop %v531
        %v539 = vmul.f32 %v523, %v538
        %v540 = vrcp.pop %v537
        %v541 = vmul.f32 %v525, %v540
        %542 = vst [vmem:[%s399] sm:$0xff] %v539
        %543 = vst [vmem:[%s399 + $0x8] sm:$0xff] %v541
        %v544 = vpack.c.bf16 %v539, %v539
        %v545 = vpack.c.bf16 %v541, %v541
        %546 = vmatprep.subr.bf16.mxu0 %v507
        %547 = vmatpush1.bf16.xpose.msra.mxu0 %v506
        %548 = vmatprep.subr.bf16.mxu0 0
        %549 = vmatpush1.bf16.xpose.msra.mxu0 0
        %550 = vmatprep.subr.bf16.mxu0 0
        %551 = vmatpush1.bf16.xpose.msra.mxu0 0
        %552 = vmatprep.subr.bf16.mxu0 0
        %553 = vmatpush1.bf16.xpose.msra.mxu0 0
        %554 = vmatprep.subr.bf16.mxu0 0
        %555 = vmatpush1.bf16.xpose.msra.mxu0 0
        %556 = vmatprep.subr.bf16.mxu0 0
        %557 = vmatpush1.bf16.xpose.msra.mxu0 0
        %558 = vmatprep.subr.bf16.mxu0 0
        %559 = vmatpush1.bf16.xpose.msra.mxu0 0
        %560 = vmatprep.subr.bf16.mxu0 0
        %561 = vmatpush1.bf16.xpose.msra.mxu0 0
        %562 = vmatprep.subr.bf16.mxu0 0
        %563 = vmatpush1.bf16.xpose.msra.mxu0 0
        %564 = vmatprep.subr.bf16.mxu0 0
        %565 = vmatpush1.bf16.xpose.msra.mxu0 0
        %566 = vmatprep.subr.bf16.mxu0 0
        %567 = vmatpush1.bf16.xpose.msra.mxu0 0
        %568 = vmatprep.subr.bf16.mxu0 0
        %569 = vmatpush1.bf16.xpose.msra.mxu0 0
        %570 = vmatprep.subr.bf16.mxu0 0
        %571 = vmatpush1.bf16.xpose.msra.mxu0 0
        %572 = vmatprep.subr.bf16.mxu0 0
        %573 = vmatpush1.bf16.xpose.msra.mxu0 0
        %574 = vmatprep.subr.bf16.mxu0 0
        %575 = vmatpush1.bf16.xpose.msra.mxu0 0
        %576 = vmatprep.subr.bf16.mxu0 0
        %577 = vmatpush1.bf16.xpose.msra.mxu0 0
        %578 = vmatprep.mubr.bf16.mxu0 %v545
        %579 = vmatmul.mubr.bf16.gmra.mrb[0].mxu0 %v544
        %v580 = vpop.f32.mrb[0].mxu0
        %v581 = vadd.f32 0.0, %v580
        %v582 = vpop.f32.mrb[0].mxu0
        %v583 = vpop.f32.mrb[0].mxu0
        %v584 = vpop.f32.mrb[0].mxu0
        %585 = vdwg.mxu0
        %vm586 = vcmask 130048
        %587 = vst.msk [vmem:[%s362] sm:$0xff] %vm586, %v581
        %v588 = vlaneseq
        %v589 = vshrl.u32 %v588, 7
        %v590 = vadd.s32 %v589, 8
        %v591 = vadd.s32 %v589, 16
        %v592 = vadd.s32 %v589, 24
        %v593 = vadd.s32 %v589, 32
        %v594 = vadd.s32 %v589, 40
        %v595 = vadd.s32 %v589, 48
        %v596 = vadd.s32 %v589, 56
        %v597 = vlaneseq
        %v598 = vand.u32 %v597, 127
        %v599 = vadd.s32 %v598, 128
        %v600 = vmul.u32 %v589, 4
        %v601 = vmul.u32 %v590, 4
        %v602 = vmul.u32 %v591, 4
        %v603 = vmul.u32 %v592, 4
        %v604 = vmul.u32 %v593, 4
        %v605 = vmul.u32 %v594, 4
        %v606 = vmul.u32 %v595, 4
        %v607 = vmul.u32 %v596, 4
        %vm608 = vcmp.eq.s32.totalorder %v598, %v600
        %vm609 = vcmp.eq.s32.totalorder %v599, %v600
        %vm610 = vcmp.eq.s32.totalorder %v598, %v601
        %vm611 = vcmp.eq.s32.totalorder %v599, %v601
        %vm612 = vcmp.eq.s32.totalorder %v598, %v602
        %vm613 = vcmp.eq.s32.totalorder %v599, %v602
        %vm614 = vcmp.eq.s32.totalorder %v598, %v603
        %vm615 = vcmp.eq.s32.totalorder %v599, %v603
        %vm616 = vcmp.eq.s32.totalorder %v598, %v604
        %vm617 = vcmp.eq.s32.totalorder %v599, %v604
        %vm618 = vcmp.eq.s32.totalorder %v598, %v605
        %vm619 = vcmp.eq.s32.totalorder %v599, %v605
        %vm620 = vcmp.eq.s32.totalorder %v598, %v606
        %vm621 = vcmp.eq.s32.totalorder %v599, %v606
        %vm622 = vcmp.eq.s32.totalorder %v598, %v607
        %vm623 = vcmp.eq.s32.totalorder %v599, %v607
        %v624 = vsel %vm608, 1, 0
        %v625 = vsel %vm609, 1, 0
        %v626 = vsel %vm610, 1, 0
        %v627 = vsel %vm611, 1, 0
        %v628 = vsel %vm612, 1, 0
        %v629 = vsel %vm613, 1, 0
        %v630 = vsel %vm614, 1, 0
        %v631 = vsel %vm615, 1, 0
        %v632 = vsel %vm616, 1, 0
        %v633 = vsel %vm617, 1, 0
        %v634 = vsel %vm618, 1, 0
        %v635 = vsel %vm619, 1, 0
        %v636 = vsel %vm620, 1, 0
        %v637 = vsel %vm621, 1, 0
        %v638 = vsel %vm622, 1, 0
        %v639 = vsel %vm623, 1, 0
        %v640 = vcvt.s32.f32 %v624
        %v641 = vcvt.s32.f32 %v625
        %v642 = vcvt.s32.f32 %v626
        %v643 = vcvt.s32.f32 %v627
        %v644 = vcvt.s32.f32 %v628
        %v645 = vcvt.s32.f32 %v629
        %v646 = vcvt.s32.f32 %v630
        %v647 = vcvt.s32.f32 %v631
        %v648 = vcvt.s32.f32 %v632
        %v649 = vcvt.s32.f32 %v633
        %v650 = vcvt.s32.f32 %v634
        %v651 = vcvt.s32.f32 %v635
        %v652 = vcvt.s32.f32 %v636
        %v653 = vcvt.s32.f32 %v637
        %v654 = vcvt.s32.f32 %v638
        %v655 = vcvt.s32.f32 %v639
        %v656 = vpack.c.bf16 %v642, %v640
        %v657 = vpack.c.bf16 %v643, %v641
        %v658 = vpack.c.bf16 %v646, %v644
        %v659 = vpack.c.bf16 %v647, %v645
        %v660 = vpack.c.bf16 %v650, %v648
        %v661 = vpack.c.bf16 %v651, %v649
        %v662 = vpack.c.bf16 %v654, %v652
        %v663 = vpack.c.bf16 %v655, %v653
        %664 = vmatprep.subr.bf16.mxu0 %v507
        %665 = vmatpush1.bf16.xpose.msra.mxu0 %v506
        %666 = vmatprep.subr.bf16.mxu0 0
        %667 = vmatpush1.bf16.xpose.msra.mxu0 0
        %668 = vmatprep.subr.bf16.mxu0 0
        %669 = vmatpush1.bf16.xpose.msra.mxu0 0
        %670 = vmatprep.subr.bf16.mxu0 0
        %671 = vmatpush1.bf16.xpose.msra.mxu0 0
        %672 = vmatprep.subr.bf16.mxu0 0
        %673 = vmatpush1.bf16.xpose.msra.mxu0 0
        %674 = vmatprep.subr.bf16.mxu0 0
        %675 = vmatpush1.bf16.xpose.msra.mxu0 0
        %676 = vmatprep.subr.bf16.mxu0 0
        %677 = vmatpush1.bf16.xpose.msra.mxu0 0
        %678 = vmatprep.subr.bf16.mxu0 0
        %679 = vmatpush1.bf16.xpose.msra.mxu0 0
        %680 = vmatprep.subr.bf16.mxu0 0
        %681 = vmatpush1.bf16.xpose.msra.mxu0 0
        %682 = vmatprep.subr.bf16.mxu0 0
        %683 = vmatpush1.bf16.xpose.msra.mxu0 0
        %684 = vmatprep.subr.bf16.mxu0 0
        %685 = vmatpush1.bf16.xpose.msra.mxu0 0
        %686 = vmatprep.subr.bf16.mxu0 0
        %687 = vmatpush1.bf16.xpose.msra.mxu0 0
        %688 = vmatprep.subr.bf16.mxu0 0
        %689 = vmatpush1.bf16.xpose.msra.mxu0 0
        %690 = vmatprep.subr.bf16.mxu0 0
        %691 = vmatpush1.bf16.xpose.msra.mxu0 0
        %692 = vmatprep.subr.bf16.mxu0 0
        %693 = vmatpush1.bf16.xpose.msra.mxu0 0
        %694 = vmatprep.subr.bf16.mxu0 0
        %695 = vmatpush1.bf16.xpose.msra.mxu0 0
        %696 = vmatprep.mubr.bf16.mxu0 %v657
        %697 = vmatmul.mubr.bf16.gmra.mrb[0].mxu0 %v656
        %v698 = vpop.f32.mrb[0].mxu0
        %v699 = vadd.f32 0.0, %v698
        %v700 = vpop.f32.mrb[0].mxu0
        %v701 = vpop.f32.mrb[0].mxu0
        %v702 = vadd.f32 0.0, %v701
        %v703 = vpop.f32.mrb[0].mxu0
        %704 = vmatprep.mubr.bf16.mxu0 %v659
        %705 = vmatmul.mubr.bf16.gmra.mrb[0].mxu0 %v658
        %v706 = vpop.f32.mrb[0].mxu0
        %v707 = vadd.f32 0.0, %v706
        %v708 = vpop.f32.mrb[0].mxu0
        %v709 = vpop.f32.mrb[0].mxu0
        %v710 = vadd.f32 0.0, %v709
        %v711 = vpop.f32.mrb[0].mxu0
        %712 = vmatprep.mubr.bf16.mxu0 %v661
        %713 = vmatmul.mubr.bf16.gmra.mrb[0].mxu0 %v660
        %v714 = vpop.f32.mrb[0].mxu0
        %v715 = vadd.f32 0.0, %v714
        %v716 = vpop.f32.mrb[0].mxu0
        %v717 = vpop.f32.mrb[0].mxu0
        %v718 = vadd.f32 0.0, %v717
        %v719 = vpop.f32.mrb[0].mxu0
        %720 = vmatprep.mubr.bf16.mxu0 %v663
        %721 = vmatmul.mubr.bf16.gmra.mrb[0].mxu0 %v662
        %v722 = vpop.f32.mrb[0].mxu0
        %v723 = vadd.f32 0.0, %v722
        %v724 = vpop.f32.mrb[0].mxu0
        %v725 = vpop.f32.mrb[0].mxu0
        %v726 = vadd.f32 0.0, %v725
        %v727 = vpop.f32.mrb[0].mxu0
        %728 = vdwg.mxu0
        %v729 = vmul.f32 %v699, %v699
        %v730 = vmul.f32 %v702, %v702
        %v731 = vmul.f32 %v707, %v707
        %v732 = vmul.f32 %v710, %v710
        %v733 = vmul.f32 %v715, %v715
        %v734 = vmul.f32 %v718, %v718
        %v735 = vmul.f32 %v723, %v723
        %v736 = vmul.f32 %v726, %v726
        %v737 = vsel %vm586, %v729, 0.0
        %738 = vadd.xlane.f32.xlu0 %v737
        %v739 = vpop.xlane.xlu0 %738
        %v740 = vsel %vm586, %v730, 0.0
        %741 = vadd.xlane.f32.xlu0 %v740
        %v742 = vpop.xlane.xlu0 %741
        %v743 = vsel %vm586, %v731, 0.0
        %744 = vadd.xlane.f32.xlu0 %v743
        %v745 = vpop.xlane.xlu0 %744
        %v746 = vsel %vm586, %v732, 0.0
        %747 = vadd.xlane.f32.xlu0 %v746
        %v748 = vpop.xlane.xlu0 %747
        %v749 = vsel %vm586, %v733, 0.0
        %750 = vadd.xlane.f32.xlu0 %v749
        %v751 = vpop.xlane.xlu0 %750
        %v752 = vsel %vm586, %v734, 0.0
        %753 = vadd.xlane.f32.xlu0 %v752
        %v754 = vpop.xlane.xlu0 %753
        %v755 = vsel %vm586, %v735, 0.0
        %756 = vadd.xlane.f32.xlu0 %v755
        %v757 = vpop.xlane.xlu0 %756
        %v758 = vsel %vm586, %v736, 0.0
        %759 = vadd.xlane.f32.xlu0 %v758
        %v760 = vpop.xlane.xlu0 %759
        %v762 = vsel %vm586, %v699, 0
        %v765 = vsel %vm586, %v702, 0
        %v768 = vsel %vm586, %v707, 0
        %v771 = vsel %vm586, %v710, 0
        %v774 = vsel %vm586, %v715, 0
        %v777 = vsel %vm586, %v718, 0
        %v780 = vsel %vm586, %v723, 0
        %v783 = vsel %vm586, %v726, 0
        %785 = vmatprep.subr.mxu0 %v488
        %786 = vmatpush1.msra.mxu0 %v486
        %787 = vmatprep.subr.mxu0 %v492
        %788 = vmatpush1.msra.mxu0 %v490
        %789 = vmatprep.subr.mxu0 0.0
        %790 = vmatpush1.msra.mxu0 0.0
        %791 = vmatprep.subr.mxu0 0.0
        %792 = vmatpush1.msra.mxu0 0.0
        %793 = vmatprep.subr.mxu0 0.0
        %794 = vmatpush1.msra.mxu0 0.0
        %795 = vmatprep.subr.mxu0 0.0
        %796 = vmatpush1.msra.mxu0 0.0
        %797 = vmatprep.subr.mxu0 0.0
        %798 = vmatpush1.msra.mxu0 0.0
        %799 = vmatprep.subr.mxu0 0.0
        %800 = vmatpush1.msra.mxu0 0.0
        %801 = vmatprep.subr.mxu0 0.0
        %802 = vmatpush1.msra.mxu0 0.0
        %803 = vmatprep.subr.mxu0 0.0
        %804 = vmatpush1.msra.mxu0 0.0
        %805 = vmatprep.subr.mxu0 0.0
        %806 = vmatpush1.msra.mxu0 0.0
        %807 = vmatprep.subr.mxu0 0.0
        %808 = vmatpush1.msra.mxu0 0.0
        %809 = vmatprep.subr.mxu0 0.0
        %810 = vmatpush1.msra.mxu0 0.0
        %811 = vmatprep.subr.mxu0 0.0
        %812 = vmatpush1.msra.mxu0 0.0
        %813 = vmatprep.subr.mxu0 0.0
        %814 = vmatpush1.msra.mxu0 0.0
        %815 = vmatprep.subr.mxu0 0.0
        %816 = vmatpush1.msra.mxu0 0.0
        %817 = vmatprep.subr.mxu0 0.0
        %818 = vmatpush1.msra.mxu0 0.0
        %819 = vmatprep.subr.mxu0 0.0
        %820 = vmatpush1.msra.mxu0 0.0
        %821 = vmatprep.subr.mxu0 0.0
        %822 = vmatpush1.msra.mxu0 0.0
        %823 = vmatprep.subr.mxu0 0.0
        %824 = vmatpush1.msra.mxu0 0.0
        %825 = vmatprep.subr.mxu0 0.0
        %826 = vmatpush1.msra.mxu0 0.0
        %827 = vmatprep.subr.mxu0 0.0
        %828 = vmatpush1.msra.mxu0 0.0
        %829 = vmatprep.subr.mxu0 0.0
        %830 = vmatpush1.msra.mxu0 0.0
        %831 = vmatprep.subr.mxu0 0.0
        %832 = vmatpush1.msra.mxu0 0.0
        %833 = vmatprep.subr.mxu0 0.0
        %834 = vmatpush1.msra.mxu0 0.0
        %835 = vmatprep.subr.mxu0 0.0
        %836 = vmatpush1.msra.mxu0 0.0
        %837 = vmatprep.subr.mxu0 0.0
        %838 = vmatpush1.msra.mxu0 0.0
        %839 = vmatprep.subr.mxu0 0.0
        %840 = vmatpush1.msra.mxu0 0.0
        %841 = vmatprep.subr.mxu0 0.0
        %842 = vmatpush1.msra.mxu0 0.0
        %843 = vmatprep.subr.mxu0 0.0
        %844 = vmatpush1.msra.mxu0 0.0
        %845 = vmatprep.subr.mxu0 0.0
        %846 = vmatpush1.msra.mxu0 0.0
        %847 = vmatprep.subr.mxu0 0.0
        %848 = vmatpush1.msra.mxu0 0.0
        %849 = vmatprep.mubr.f32.mxu0 0.0
        %850 = vmatmul.mubr.f32.gmra.mrb[0].mxu0 %v762
        %v851 = vpop.f32.mrb[0].mxu0
        %v852 = vadd.f32 0.0, %v851
        %v853 = vpop.f32.mrb[0].mxu0
        %v854 = vadd.f32 0.0, %v853
        %855 = vmatprep.mubr.f32.mxu0 0.0
        %856 = vmatmul.mubr.f32.gmra.mrb[0].mxu0 %v765
        %v857 = vpop.f32.mrb[0].mxu0
        %v858 = vadd.f32 0.0, %v857
        %v859 = vpop.f32.mrb[0].mxu0
        %v860 = vadd.f32 0.0, %v859
        %861 = vmatprep.mubr.f32.mxu0 0.0
        %862 = vmatmul.mubr.f32.gmra.mrb[0].mxu0 %v768
        %v863 = vpop.f32.mrb[0].mxu0
        %v864 = vadd.f32 0.0, %v863
        %v865 = vpop.f32.mrb[0].mxu0
        %v866 = vadd.f32 0.0, %v865
        %867 = vmatprep.mubr.f32.mxu0 0.0
        %868 = vmatmul.mubr.f32.gmra.mrb[0].mxu0 %v771
        %v869 = vpop.f32.mrb[0].mxu0
        %v870 = vadd.f32 0.0, %v869
        %v871 = vpop.f32.mrb[0].mxu0
        %v872 = vadd.f32 0.0, %v871
        %873 = vmatprep.mubr.f32.mxu0 0.0
        %874 = vmatmul.mubr.f32.gmra.mrb[0].mxu0 %v774
        %v875 = vpop.f32.mrb[0].mxu0
        %v876 = vadd.f32 0.0, %v875
        %v877 = vpop.f32.mrb[0].mxu0
        %v878 = vadd.f32 0.0, %v877
        %879 = vmatprep.mubr.f32.mxu0 0.0
        %880 = vmatmul.mubr.f32.gmra.mrb[0].mxu0 %v777
        %v881 = vpop.f32.mrb[0].mxu0
        %v882 = vadd.f32 0.0, %v881
        %v883 = vpop.f32.mrb[0].mxu0
        %v884 = vadd.f32 0.0, %v883
        %885 = vmatprep.mubr.f32.mxu0 0.0
        %886 = vmatmul.mubr.f32.gmra.mrb[0].mxu0 %v780
        %v887 = vpop.f32.mrb[0].mxu0
        %v888 = vadd.f32 0.0, %v887
        %v889 = vpop.f32.mrb[0].mxu0
        %v890 = vadd.f32 0.0, %v889
        %891 = vmatprep.mubr.f32.mxu0 0.0
        %892 = vmatmul.mubr.f32.gmra.mrb[0].mxu0 %v783
        %v893 = vpop.f32.mrb[0].mxu0
        %v894 = vadd.f32 0.0, %v893
        %v895 = vpop.f32.mrb[0].mxu0
        %v896 = vadd.f32 0.0, %v895
        %897 = vdwg.mxu0
        %v898 = vmul.f32 %v852, 2.0
        %v899 = vmul.f32 %v854, 2.0
        %v900 = vmul.f32 %v858, 2.0
        %v901 = vmul.f32 %v860, 2.0
        %v902 = vmul.f32 %v864, 2.0
        %v903 = vmul.f32 %v866, 2.0
        %v904 = vmul.f32 %v870, 2.0
        %v905 = vmul.f32 %v872, 2.0
        %v906 = vmul.f32 %v876, 2.0
        %v907 = vmul.f32 %v878, 2.0
        %v908 = vmul.f32 %v882, 2.0
        %v909 = vmul.f32 %v884, 2.0
        %v910 = vmul.f32 %v888, 2.0
        %v911 = vmul.f32 %v890, 2.0
        %v912 = vmul.f32 %v894, 2.0
        %v913 = vmul.f32 %v896, 2.0
        %v914 = vsub.f32 %v739, %v898
        %v915 = vsub.f32 %v739, %v899
        %v916 = vsub.f32 %v742, %v900
        %v917 = vsub.f32 %v742, %v901
        %v918 = vsub.f32 %v745, %v902
        %v919 = vsub.f32 %v745, %v903
        %v920 = vsub.f32 %v748, %v904
        %v921 = vsub.f32 %v748, %v905
        %v922 = vsub.f32 %v751, %v906
        %v923 = vsub.f32 %v751, %v907
        %v924 = vsub.f32 %v754, %v908
        %v925 = vsub.f32 %v754, %v909
        %v926 = vsub.f32 %v757, %v910
        %v927 = vsub.f32 %v757, %v911
        %v928 = vsub.f32 %v760, %v912
        %v929 = vsub.f32 %v760, %v913
        %v930 = vmin.f32 %v914, %v918
        %v931 = vmin.f32 %v916, %v920
        %v932 = vmin.f32 %v930, %v922
        %v933 = vmin.f32 %v931, %v924
        %v934 = vmin.f32 %v932, %v926
        %v935 = vmin.f32 %v933, %v928
        %v936 = vmin.f32 %v934, %v935
        %v937 = vrot.slane %v936, 4
        %v938 = vmin.f32 %v936, %v937
        %v939 = vrot.slane %v938, 2
        %v940 = vmin.f32 %v938, %v939
        %v941 = vrot.slane %v940, 1
        %v942 = vmin.f32 %v940, %v941
        %v943 = vmin.f32 %v915, %v919
        %v944 = vmin.f32 %v917, %v921
        %v945 = vmin.f32 %v943, %v923
        %v946 = vmin.f32 %v944, %v925
        %v947 = vmin.f32 %v945, %v927
        %v948 = vmin.f32 %v946, %v929
        %v949 = vmin.f32 %v947, %v948
        %v950 = vrot.slane %v949, 4
        %v951 = vmin.f32 %v949, %v950
        %v952 = vrot.slane %v951, 2
        %v953 = vmin.f32 %v951, %v952
        %v954 = vrot.slane %v953, 1
        %v955 = vmin.f32 %v953, %v954
        %vm956 = vcmp.le.f32.partialorder %v914, %v942
        %vm957 = vcmp.le.f32.partialorder %v915, %v955
        %vm958 = vcmp.le.f32.partialorder %v916, %v942
        %vm959 = vcmp.le.f32.partialorder %v917, %v955
        %vm960 = vcmp.le.f32.partialorder %v918, %v942
        %vm961 = vcmp.le.f32.partialorder %v919, %v955
        %vm962 = vcmp.le.f32.partialorder %v920, %v942
        %vm963 = vcmp.le.f32.partialorder %v921, %v955
        %vm964 = vcmp.le.f32.partialorder %v922, %v942
        %vm965 = vcmp.le.f32.partialorder %v923, %v955
        %vm966 = vcmp.le.f32.partialorder %v924, %v942
        %vm967 = vcmp.le.f32.partialorder %v925, %v955
        %vm968 = vcmp.le.f32.partialorder %v926, %v942
        %vm969 = vcmp.le.f32.partialorder %v927, %v955
        %vm970 = vcmp.le.f32.partialorder %v928, %v942
        %vm971 = vcmp.le.f32.partialorder %v929, %v955
        %v972 = vsel %vm956, %v589, 64
        %v973 = vsel %vm957, %v589, 64
        %v974 = vsel %vm958, %v590, 64
        %v975 = vsel %vm959, %v590, 64
        %v976 = vsel %vm960, %v591, 64
        %v977 = vsel %vm961, %v591, 64
        %v978 = vsel %vm962, %v592, 64
        %v979 = vsel %vm963, %v592, 64
        %v980 = vsel %vm964, %v593, 64
        %v981 = vsel %vm965, %v593, 64
        %v982 = vsel %vm966, %v594, 64
        %v983 = vsel %vm967, %v594, 64
        %v984 = vsel %vm968, %v595, 64
        %v985 = vsel %vm969, %v595, 64
        %v986 = vsel %vm970, %v596, 64
        %v987 = vsel %vm971, %v596, 64
        %vm988 = vcmp.lt.s32.totalorder %v972, %v976
        %v989 = vsel %vm988, %v972, %v976
        %vm990 = vcmp.lt.s32.totalorder %v974, %v978
        %v991 = vsel %vm990, %v974, %v978
        %vm992 = vcmp.lt.s32.totalorder %v989, %v980
        %v993 = vsel %vm992, %v989, %v980
        %vm994 = vcmp.lt.s32.totalorder %v991, %v982
        %v995 = vsel %vm994, %v991, %v982
        %vm996 = vcmp.lt.s32.totalorder %v993, %v984
        %v997 = vsel %vm996, %v993, %v984
        %vm998 = vcmp.lt.s32.totalorder %v995, %v986
        %v999 = vsel %vm998, %v995, %v986
        %vm1000 = vcmp.lt.s32.totalorder %v997, %v999
        %v1001 = vsel %vm1000, %v997, %v999
        %v1002 = vrot.slane %v1001, 4
        %vm1003 = vcmp.lt.s32.totalorder %v1001, %v1002
        %v1004 = vsel %vm1003, %v1001, %v1002
        %v1005 = vrot.slane %v1004, 2
        %vm1006 = vcmp.lt.s32.totalorder %v1004, %v1005
        %v1007 = vsel %vm1006, %v1004, %v1005
        %v1008 = vrot.slane %v1007, 1
        %vm1009 = vcmp.lt.s32.totalorder %v1007, %v1008
        %v1010 = vsel %vm1009, %v1007, %v1008
        %vm1011 = vcmp.lt.s32.totalorder %v973, %v977
        %v1012 = vsel %vm1011, %v973, %v977
        %vm1013 = vcmp.lt.s32.totalorder %v975, %v979
        %v1014 = vsel %vm1013, %v975, %v979
        %vm1015 = vcmp.lt.s32.totalorder %v1012, %v981
        %v1016 = vsel %vm1015, %v1012, %v981
        %vm1017 = vcmp.lt.s32.totalorder %v1014, %v983
        %v1018 = vsel %vm1017, %v1014, %v983
        %vm1019 = vcmp.lt.s32.totalorder %v1016, %v985
        %v1020 = vsel %vm1019, %v1016, %v985
        %vm1021 = vcmp.lt.s32.totalorder %v1018, %v987
        %v1022 = vsel %vm1021, %v1018, %v987
        %vm1023 = vcmp.lt.s32.totalorder %v1020, %v1022
        %v1024 = vsel %vm1023, %v1020, %v1022
        %v1025 = vrot.slane %v1024, 4
        %vm1026 = vcmp.lt.s32.totalorder %v1024, %v1025
        %v1027 = vsel %vm1026, %v1024, %v1025
        %v1028 = vrot.slane %v1027, 2
        %vm1029 = vcmp.lt.s32.totalorder %v1027, %v1028
        %v1030 = vsel %vm1029, %v1027, %v1028
        %v1031 = vrot.slane %v1030, 1
        %vm1032 = vcmp.lt.s32.totalorder %v1030, %v1031
        %v1033 = vsel %vm1032, %v1030, %v1031
        %vm1034 = vcmp.eq.s32.totalorder %v589, %v1010
        %vm1035 = vcmp.eq.s32.totalorder %v589, %v1033
        %vm1036 = vcmp.eq.s32.totalorder %v590, %v1010
        %vm1037 = vcmp.eq.s32.totalorder %v590, %v1033
        %vm1038 = vcmp.eq.s32.totalorder %v591, %v1010
        %vm1039 = vcmp.eq.s32.totalorder %v591, %v1033
        %vm1040 = vcmp.eq.s32.totalorder %v592, %v1010
        %vm1041 = vcmp.eq.s32.totalorder %v592, %v1033
        %vm1042 = vcmp.eq.s32.totalorder %v593, %v1010
        %vm1043 = vcmp.eq.s32.totalorder %v593, %v1033
        %vm1044 = vcmp.eq.s32.totalorder %v594, %v1010
        %vm1045 = vcmp.eq.s32.totalorder %v594, %v1033
        %vm1046 = vcmp.eq.s32.totalorder %v595, %v1010
        %vm1047 = vcmp.eq.s32.totalorder %v595, %v1033
        %vm1048 = vcmp.eq.s32.totalorder %v596, %v1010
        %vm1049 = vcmp.eq.s32.totalorder %v596, %v1033
        %v1050 = vsel %vm1034, 1, 0
        %v1051 = vsel %vm1035, 1, 0
        %v1052 = vsel %vm1036, 1, 0
        %v1053 = vsel %vm1037, 1, 0
        %v1054 = vsel %vm1038, 1, 0
        %v1055 = vsel %vm1039, 1, 0
        %v1056 = vsel %vm1040, 1, 0
        %v1057 = vsel %vm1041, 1, 0
        %v1058 = vsel %vm1042, 1, 0
        %v1059 = vsel %vm1043, 1, 0
        %v1060 = vsel %vm1044, 1, 0
        %v1061 = vsel %vm1045, 1, 0
        %v1062 = vsel %vm1046, 1, 0
        %v1063 = vsel %vm1047, 1, 0
        %v1064 = vsel %vm1048, 1, 0
        %v1065 = vsel %vm1049, 1, 0
        %v1066 = vcvt.s32.f32 %v1050
        %v1067 = vcvt.s32.f32 %v1051
        %v1068 = vcvt.s32.f32 %v1052
        %v1069 = vcvt.s32.f32 %v1053
        %v1070 = vcvt.s32.f32 %v1054
        %v1071 = vcvt.s32.f32 %v1055
        %v1072 = vcvt.s32.f32 %v1056
        %v1073 = vcvt.s32.f32 %v1057
        %v1074 = vcvt.s32.f32 %v1058
        %v1075 = vcvt.s32.f32 %v1059
        %v1076 = vcvt.s32.f32 %v1060
        %v1077 = vcvt.s32.f32 %v1061
        %v1078 = vcvt.s32.f32 %v1062
        %v1079 = vcvt.s32.f32 %v1063
        %v1080 = vcvt.s32.f32 %v1064
        %v1081 = vcvt.s32.f32 %v1065
        %v1082 = vpack.c.bf16 %v1068, %v1066
        %v1083 = vpack.c.bf16 %v1069, %v1067
        %v1084 = vpack.c.bf16 %v1072, %v1070
        %v1085 = vpack.c.bf16 %v1073, %v1071
        %v1086 = vpack.c.bf16 %v1076, %v1074
        %v1087 = vpack.c.bf16 %v1077, %v1075
        %v1088 = vpack.c.bf16 %v1080, %v1078
        %v1089 = vpack.c.bf16 %v1081, %v1079
        %1090 = vmatprep.subr.bf16.mxu0 %v507
        %1091 = vmatpush1.bf16.xpose.msra.mxu0 %v506
        %1092 = vmatprep.subr.bf16.mxu0 1065369472
        %1093 = vmatpush1.bf16.xpose.msra.mxu0 1065369472
        %1094 = vmatprep.subr.bf16.mxu0 0
        %1095 = vmatpush1.bf16.xpose.msra.mxu0 0
        %1096 = vmatprep.subr.bf16.mxu0 0
        %1097 = vmatpush1.bf16.xpose.msra.mxu0 0
        %1098 = vmatprep.subr.bf16.mxu0 0
        %1099 = vmatpush1.bf16.xpose.msra.mxu0 0
        %1100 = vmatprep.subr.bf16.mxu0 0
        %1101 = vmatpush1.bf16.xpose.msra.mxu0 0
        %1102 = vmatprep.subr.bf16.mxu0 0
        %1103 = vmatpush1.bf16.xpose.msra.mxu0 0
        %1104 = vmatprep.subr.bf16.mxu0 0
        %1105 = vmatpush1.bf16.xpose.msra.mxu0 0
        %1106 = vmatprep.subr.bf16.mxu0 0
        %1107 = vmatpush1.bf16.xpose.msra.mxu0 0
        %1108 = vmatprep.subr.bf16.mxu0 0
        %1109 = vmatpush1.bf16.xpose.msra.mxu0 0
        %1110 = vmatprep.subr.bf16.mxu0 0
        %1111 = vmatpush1.bf16.xpose.msra.mxu0 0
        %1112 = vmatprep.subr.bf16.mxu0 0
        %1113 = vmatpush1.bf16.xpose.msra.mxu0 0
        %1114 = vmatprep.subr.bf16.mxu0 0
        %1115 = vmatpush1.bf16.xpose.msra.mxu0 0
        %1116 = vmatprep.subr.bf16.mxu0 0
        %1117 = vmatpush1.bf16.xpose.msra.mxu0 0
        %1118 = vmatprep.subr.bf16.mxu0 0
        %1119 = vmatpush1.bf16.xpose.msra.mxu0 0
        %1120 = vmatprep.subr.bf16.mxu0 0
        %1121 = vmatpush1.bf16.xpose.msra.mxu0 0
        %1122 = vmatprep.mubr.bf16.mxu0 %v1083
        %1123 = vmatmul.mubr.bf16.gmra.mrb[0].mxu0 %v1082
        %v1124 = vpop.f32.mrb[0].mxu0
        %v1125 = vadd.f32 0.0, %v1124
        %v1126 = vpop.f32.mrb[0].mxu0
        %v1127 = vpop.f32.mrb[0].mxu0
        %v1128 = vadd.f32 0.0, %v1127
        %v1129 = vpop.f32.mrb[0].mxu0
        %1130 = vmatprep.mubr.bf16.mxu0 %v1085
        %1131 = vmatmul.mubr.bf16.gmra.mrb[0].mxu0 %v1084
        %v1132 = vpop.f32.mrb[0].mxu0
        %v1133 = vadd.f32 0.0, %v1132
        %v1134 = vpop.f32.mrb[0].mxu0
        %v1135 = vpop.f32.mrb[0].mxu0
        %v1136 = vadd.f32 0.0, %v1135
        %v1137 = vpop.f32.mrb[0].mxu0
        %1138 = vmatprep.mubr.bf16.mxu0 %v1087
        %1139 = vmatmul.mubr.bf16.gmra.mrb[0].mxu0 %v1086
        %v1140 = vpop.f32.mrb[0].mxu0
        %v1141 = vadd.f32 0.0, %v1140
        %v1142 = vpop.f32.mrb[0].mxu0
        %v1143 = vpop.f32.mrb[0].mxu0
        %v1144 = vadd.f32 0.0, %v1143
        %v1145 = vpop.f32.mrb[0].mxu0
        %1146 = vmatprep.mubr.bf16.mxu0 %v1089
        %1147 = vmatmul.mubr.bf16.gmra.mrb[0].mxu0 %v1088
        %v1148 = vpop.f32.mrb[0].mxu0
        %v1149 = vadd.f32 0.0, %v1148
        %v1150 = vpop.f32.mrb[0].mxu0
        %v1151 = vpop.f32.mrb[0].mxu0
        %v1152 = vadd.f32 0.0, %v1151
        %v1153 = vpop.f32.mrb[0].mxu0
        %1154 = vdwg.mxu0
        %vm1155 = vcmp.gt.f32.partialorder %v1125, 0.5
        %vm1156 = vcmp.gt.f32.partialorder %v1128, 0.5
        %vm1157 = vcmp.gt.f32.partialorder %v1133, 0.5
        %vm1158 = vcmp.gt.f32.partialorder %v1136, 0.5
        %vm1159 = vcmp.gt.f32.partialorder %v1141, 0.5
        %vm1160 = vcmp.gt.f32.partialorder %v1144, 0.5
        %vm1161 = vcmp.gt.f32.partialorder %v1149, 0.5
        %vm1162 = vcmp.gt.f32.partialorder %v1152, 0.5
        %v1163 = vmax.f32 %v1125, 1.0
        %v1164 = vmax.f32 %v1128, 1.0
        %v1165 = vmax.f32 %v1133, 1.0
        %v1166 = vmax.f32 %v1136, 1.0
        %v1167 = vmax.f32 %v1141, 1.0
        %v1168 = vmax.f32 %v1144, 1.0
        %v1169 = vmax.f32 %v1149, 1.0
        %v1170 = vmax.f32 %v1152, 1.0
        %1172 = vset.pattern.permute.xlu0 16
        %1173 = vperm.xlu0 %1172, %v1163
        %v1174 = vpop.permute.xlu0 %1173
        %1177 = vset.pattern.permute.xlu0 16
        %1178 = vperm.xlu0 %1177, %v1164
        %v1179 = vpop.permute.xlu0 %1178
        %1182 = vset.pattern.permute.xlu0 16
        %1183 = vperm.xlu0 %1182, %v1165
        %v1184 = vpop.permute.xlu0 %1183
        %1187 = vset.pattern.permute.xlu0 16
        %1188 = vperm.xlu0 %1187, %v1166
        %v1189 = vpop.permute.xlu0 %1188
        %1192 = vset.pattern.permute.xlu0 16
        %1193 = vperm.xlu0 %1192, %v1167
        %v1194 = vpop.permute.xlu0 %1193
        %1197 = vset.pattern.permute.xlu0 16
        %1198 = vperm.xlu0 %1197, %v1168
        %v1199 = vpop.permute.xlu0 %1198
        %1202 = vset.pattern.permute.xlu0 16
        %1203 = vperm.xlu0 %1202, %v1169
        %v1204 = vpop.permute.xlu0 %1203
        %1207 = vset.pattern.permute.xlu0 16
        %1208 = vperm.xlu0 %1207, %v1170
        %v1209 = vpop.permute.xlu0 %1208
        %v1211 = vrcp.pop %v1174
        %v1212 = vmul.f32 %v1125, %v1211
        %v1213 = vrcp.pop %v1179
        %v1214 = vmul.f32 %v1128, %v1213
        %v1215 = vrcp.pop %v1184
        %v1216 = vmul.f32 %v1133, %v1215
        %v1217 = vrcp.pop %v1189
        %v1218 = vmul.f32 %v1136, %v1217
        %v1219 = vrcp.pop %v1194
        %v1220 = vmul.f32 %v1141, %v1219
        %v1221 = vrcp.pop %v1199
        %v1222 = vmul.f32 %v1144, %v1221
        %v1223 = vrcp.pop %v1204
        %v1224 = vmul.f32 %v1149, %v1223
        %v1225 = vrcp.pop %v1209
        %v1226 = vmul.f32 %v1152, %v1225
        %v1227 = vsel %vm1155, 1, 0
        %v1228 = vsel %vm1156, 1, 0
        %v1229 = vsel %vm1157, 1, 0
        %v1230 = vsel %vm1158, 1, 0
        %v1231 = vsel %vm1159, 1, 0
        %v1232 = vsel %vm1160, 1, 0
        %v1233 = vsel %vm1161, 1, 0
        %v1234 = vsel %vm1162, 1, 0
        %1235 = vset.pattern.permute.xlu0 16
        %1236 = vperm.xlu0 %1235, %v1227
        %v1237 = vpop.permute.xlu0 %1236
        %1238 = vset.pattern.permute.xlu0 16
        %1239 = vperm.xlu0 %1238, %v1228
        %v1240 = vpop.permute.xlu0 %1239
        %1241 = vset.pattern.permute.xlu0 16
        %1242 = vperm.xlu0 %1241, %v1229
        %v1243 = vpop.permute.xlu0 %1242
        %1244 = vset.pattern.permute.xlu0 16
        %1245 = vperm.xlu0 %1244, %v1230
        %v1246 = vpop.permute.xlu0 %1245
        %1247 = vset.pattern.permute.xlu0 16
        %1248 = vperm.xlu0 %1247, %v1231
        %v1249 = vpop.permute.xlu0 %1248
        %1250 = vset.pattern.permute.xlu0 16
        %1251 = vperm.xlu0 %1250, %v1232
        %v1252 = vpop.permute.xlu0 %1251
        %1253 = vset.pattern.permute.xlu0 16
        %1254 = vperm.xlu0 %1253, %v1233
        %v1255 = vpop.permute.xlu0 %1254
        %1256 = vset.pattern.permute.xlu0 16
        %1257 = vperm.xlu0 %1256, %v1234
        %v1258 = vpop.permute.xlu0 %1257
        %vm1259 = vcmp.eq.s32.totalorder %v1237, 1
        %vm1260 = vcmp.eq.s32.totalorder %v1240, 1
        %vm1261 = vcmp.eq.s32.totalorder %v1243, 1
        %vm1262 = vcmp.eq.s32.totalorder %v1246, 1
        %vm1263 = vcmp.eq.s32.totalorder %v1249, 1
        %vm1264 = vcmp.eq.s32.totalorder %v1252, 1
        %vm1265 = vcmp.eq.s32.totalorder %v1255, 1
        %vm1266 = vcmp.eq.s32.totalorder %v1258, 1
        %v1267 = vsel %vm1259, %v1212, %v699
        %v1268 = vsel %vm1260, %v1214, %v702
        %v1269 = vsel %vm1261, %v1216, %v707
        %v1270 = vsel %vm1262, %v1218, %v710
        %v1271 = vsel %vm1263, %v1220, %v715
        %v1272 = vsel %vm1264, %v1222, %v718
        %v1273 = vsel %vm1265, %v1224, %v723
        %v1274 = vsel %vm1266, %v1226, %v726
        %v1275 = vmul.f32 %v1267, %v1267
        %v1276 = vmul.f32 %v1268, %v1268
        %v1277 = vmul.f32 %v1269, %v1269
        %v1278 = vmul.f32 %v1270, %v1270
        %v1279 = vmul.f32 %v1271, %v1271
        %v1280 = vmul.f32 %v1272, %v1272
        %v1281 = vmul.f32 %v1273, %v1273
        %v1282 = vmul.f32 %v1274, %v1274
        %v1283 = vsel %vm586, %v1275, 0.0
        %1284 = vadd.xlane.f32.xlu0 %v1283
        %v1285 = vpop.xlane.xlu0 %1284
        %v1286 = vsel %vm586, %v1276, 0.0
        %1287 = vadd.xlane.f32.xlu0 %v1286
        %v1288 = vpop.xlane.xlu0 %1287
        %v1289 = vsel %vm586, %v1277, 0.0
        %1290 = vadd.xlane.f32.xlu0 %v1289
        %v1291 = vpop.xlane.xlu0 %1290
        %v1292 = vsel %vm586, %v1278, 0.0
        %1293 = vadd.xlane.f32.xlu0 %v1292
        %v1294 = vpop.xlane.xlu0 %1293
        %v1295 = vsel %vm586, %v1279, 0.0
        %1296 = vadd.xlane.f32.xlu0 %v1295
        %v1297 = vpop.xlane.xlu0 %1296
        %v1298 = vsel %vm586, %v1280, 0.0
        %1299 = vadd.xlane.f32.xlu0 %v1298
        %v1300 = vpop.xlane.xlu0 %1299
        %v1301 = vsel %vm586, %v1281, 0.0
        %1302 = vadd.xlane.f32.xlu0 %v1301
        %v1303 = vpop.xlane.xlu0 %1302
        %v1304 = vsel %vm586, %v1282, 0.0
        %1305 = vadd.xlane.f32.xlu0 %v1304
        %v1306 = vpop.xlane.xlu0 %1305
        %v1308 = vsel %vm586, %v1267, 0
        %v1311 = vsel %vm586, %v1268, 0
        %v1314 = vsel %vm586, %v1269, 0
        %v1317 = vsel %vm586, %v1270, 0
        %v1320 = vsel %vm586, %v1271, 0
        %v1323 = vsel %vm586, %v1272, 0
        %v1326 = vsel %vm586, %v1273, 0
        %v1329 = vsel %vm586, %v1274, 0
        %1331 = vmatprep.subr.mxu0 %v488
        %1332 = vmatpush1.msra.mxu0 %v486
        %1333 = vmatprep.subr.mxu0 %v492
        %1334 = vmatpush1.msra.mxu0 %v490
        %1335 = vmatprep.subr.mxu0 0.0
        %1336 = vmatpush1.msra.mxu0 0.0
        %1337 = vmatprep.subr.mxu0 0.0
        %1338 = vmatpush1.msra.mxu0 0.0
        %1339 = vmatprep.subr.mxu0 0.0
        %1340 = vmatpush1.msra.mxu0 0.0
        %1341 = vmatprep.subr.mxu0 0.0
        %1342 = vmatpush1.msra.mxu0 0.0
        %1343 = vmatprep.subr.mxu0 0.0
        %1344 = vmatpush1.msra.mxu0 0.0
        %1345 = vmatprep.subr.mxu0 0.0
        %1346 = vmatpush1.msra.mxu0 0.0
        %1347 = vmatprep.subr.mxu0 0.0
        %1348 = vmatpush1.msra.mxu0 0.0
        %1349 = vmatprep.subr.mxu0 0.0
        %1350 = vmatpush1.msra.mxu0 0.0
        %1351 = vmatprep.subr.mxu0 0.0
        %1352 = vmatpush1.msra.mxu0 0.0
        %1353 = vmatprep.subr.mxu0 0.0
        %1354 = vmatpush1.msra.mxu0 0.0
        %1355 = vmatprep.subr.mxu0 0.0
        %1356 = vmatpush1.msra.mxu0 0.0
        %1357 = vmatprep.subr.mxu0 0.0
        %1358 = vmatpush1.msra.mxu0 0.0
        %1359 = vmatprep.subr.mxu0 0.0
        %1360 = vmatpush1.msra.mxu0 0.0
        %1361 = vmatprep.subr.mxu0 0.0
        %1362 = vmatpush1.msra.mxu0 0.0
        %1363 = vmatprep.subr.mxu0 0.0
        %1364 = vmatpush1.msra.mxu0 0.0
        %1365 = vmatprep.subr.mxu0 0.0
        %1366 = vmatpush1.msra.mxu0 0.0
        %1367 = vmatprep.subr.mxu0 0.0
        %1368 = vmatpush1.msra.mxu0 0.0
        %1369 = vmatprep.subr.mxu0 0.0
        %1370 = vmatpush1.msra.mxu0 0.0
        %1371 = vmatprep.subr.mxu0 0.0
        %1372 = vmatpush1.msra.mxu0 0.0
        %1373 = vmatprep.subr.mxu0 0.0
        %1374 = vmatpush1.msra.mxu0 0.0
        %1375 = vmatprep.subr.mxu0 0.0
        %1376 = vmatpush1.msra.mxu0 0.0
        %1377 = vmatprep.subr.mxu0 0.0
        %1378 = vmatpush1.msra.mxu0 0.0
        %1379 = vmatprep.subr.mxu0 0.0
        %1380 = vmatpush1.msra.mxu0 0.0
        %1381 = vmatprep.subr.mxu0 0.0
        %1382 = vmatpush1.msra.mxu0 0.0
        %1383 = vmatprep.subr.mxu0 0.0
        %1384 = vmatpush1.msra.mxu0 0.0
        %1385 = vmatprep.subr.mxu0 0.0
        %1386 = vmatpush1.msra.mxu0 0.0
        %1387 = vmatprep.subr.mxu0 0.0
        %1388 = vmatpush1.msra.mxu0 0.0
        %1389 = vmatprep.subr.mxu0 0.0
        %1390 = vmatpush1.msra.mxu0 0.0
        %1391 = vmatprep.subr.mxu0 0.0
        %1392 = vmatpush1.msra.mxu0 0.0
        %1393 = vmatprep.subr.mxu0 0.0
        %1394 = vmatpush1.msra.mxu0 0.0
        %1395 = vmatprep.mubr.f32.mxu0 0.0
        %1396 = vmatmul.mubr.f32.gmra.mrb[0].mxu0 %v1308
        %v1397 = vpop.f32.mrb[0].mxu0
        %v1398 = vadd.f32 0.0, %v1397
        %v1399 = vpop.f32.mrb[0].mxu0
        %v1400 = vadd.f32 0.0, %v1399
        %1401 = vmatprep.mubr.f32.mxu0 0.0
        %1402 = vmatmul.mubr.f32.gmra.mrb[0].mxu0 %v1311
        %v1403 = vpop.f32.mrb[0].mxu0
        %v1404 = vadd.f32 0.0, %v1403
        %v1405 = vpop.f32.mrb[0].mxu0
        %v1406 = vadd.f32 0.0, %v1405
        %1407 = vmatprep.mubr.f32.mxu0 0.0
        %1408 = vmatmul.mubr.f32.gmra.mrb[0].mxu0 %v1314
        %v1409 = vpop.f32.mrb[0].mxu0
        %v1410 = vadd.f32 0.0, %v1409
        %v1411 = vpop.f32.mrb[0].mxu0
        %v1412 = vadd.f32 0.0, %v1411
        %1413 = vmatprep.mubr.f32.mxu0 0.0
        %1414 = vmatmul.mubr.f32.gmra.mrb[0].mxu0 %v1317
        %v1415 = vpop.f32.mrb[0].mxu0
        %v1416 = vadd.f32 0.0, %v1415
        %v1417 = vpop.f32.mrb[0].mxu0
        %v1418 = vadd.f32 0.0, %v1417
        %1419 = vmatprep.mubr.f32.mxu0 0.0
        %1420 = vmatmul.mubr.f32.gmra.mrb[0].mxu0 %v1320
        %v1421 = vpop.f32.mrb[0].mxu0
        %v1422 = vadd.f32 0.0, %v1421
        %v1423 = vpop.f32.mrb[0].mxu0
        %v1424 = vadd.f32 0.0, %v1423
        %1425 = vmatprep.mubr.f32.mxu0 0.0
        %1426 = vmatmul.mubr.f32.gmra.mrb[0].mxu0 %v1323
        %v1427 = vpop.f32.mrb[0].mxu0
        %v1428 = vadd.f32 0.0, %v1427
        %v1429 = vpop.f32.mrb[0].mxu0
        %v1430 = vadd.f32 0.0, %v1429
        %1431 = vmatprep.mubr.f32.mxu0 0.0
        %1432 = vmatmul.mubr.f32.gmra.mrb[0].mxu0 %v1326
        %v1433 = vpop.f32.mrb[0].mxu0
        %v1434 = vadd.f32 0.0, %v1433
        %v1435 = vpop.f32.mrb[0].mxu0
        %v1436 = vadd.f32 0.0, %v1435
        %1437 = vmatprep.mubr.f32.mxu0 0.0
        %1438 = vmatmul.mubr.f32.gmra.mrb[0].mxu0 %v1329
        %v1439 = vpop.f32.mrb[0].mxu0
        %v1440 = vadd.f32 0.0, %v1439
        %v1441 = vpop.f32.mrb[0].mxu0
        %v1442 = vadd.f32 0.0, %v1441
        %1443 = vdwg.mxu0
        %v1444 = vmul.f32 %v1398, 2.0
        %v1445 = vmul.f32 %v1400, 2.0
        %v1446 = vmul.f32 %v1404, 2.0
        %v1447 = vmul.f32 %v1406, 2.0
        %v1448 = vmul.f32 %v1410, 2.0
        %v1449 = vmul.f32 %v1412, 2.0
        %v1450 = vmul.f32 %v1416, 2.0
        %v1451 = vmul.f32 %v1418, 2.0
        %v1452 = vmul.f32 %v1422, 2.0
        %v1453 = vmul.f32 %v1424, 2.0
        %v1454 = vmul.f32 %v1428, 2.0
        %v1455 = vmul.f32 %v1430, 2.0
        %v1456 = vmul.f32 %v1434, 2.0
        %v1457 = vmul.f32 %v1436, 2.0
        %v1458 = vmul.f32 %v1440, 2.0
        %v1459 = vmul.f32 %v1442, 2.0
        %v1460 = vsub.f32 %v1285, %v1444
        %v1461 = vsub.f32 %v1285, %v1445
        %v1462 = vsub.f32 %v1288, %v1446
        %v1463 = vsub.f32 %v1288, %v1447
        %v1464 = vsub.f32 %v1291, %v1448
        %v1465 = vsub.f32 %v1291, %v1449
        %v1466 = vsub.f32 %v1294, %v1450
        %v1467 = vsub.f32 %v1294, %v1451
        %v1468 = vsub.f32 %v1297, %v1452
        %v1469 = vsub.f32 %v1297, %v1453
        %v1470 = vsub.f32 %v1300, %v1454
        %v1471 = vsub.f32 %v1300, %v1455
        %v1472 = vsub.f32 %v1303, %v1456
        %v1473 = vsub.f32 %v1303, %v1457
        %v1474 = vsub.f32 %v1306, %v1458
        %v1475 = vsub.f32 %v1306, %v1459
        %v1476 = vmin.f32 %v1460, %v1464
        %v1477 = vmin.f32 %v1462, %v1466
        %v1478 = vmin.f32 %v1476, %v1468
        %v1479 = vmin.f32 %v1477, %v1470
        %v1480 = vmin.f32 %v1478, %v1472
        %v1481 = vmin.f32 %v1479, %v1474
        %v1482 = vmin.f32 %v1480, %v1481
        %v1483 = vrot.slane %v1482, 4
        %v1484 = vmin.f32 %v1482, %v1483
        %v1485 = vrot.slane %v1484, 2
        %v1486 = vmin.f32 %v1484, %v1485
        %v1487 = vrot.slane %v1486, 1
        %v1488 = vmin.f32 %v1486, %v1487
        %v1489 = vmin.f32 %v1461, %v1465
        %v1490 = vmin.f32 %v1463, %v1467
        %v1491 = vmin.f32 %v1489, %v1469
        %v1492 = vmin.f32 %v1490, %v1471
        %v1493 = vmin.f32 %v1491, %v1473
        %v1494 = vmin.f32 %v1492, %v1475
        %v1495 = vmin.f32 %v1493, %v1494
        %v1496 = vrot.slane %v1495, 4
        %v1497 = vmin.f32 %v1495, %v1496
        %v1498 = vrot.slane %v1497, 2
        %v1499 = vmin.f32 %v1497, %v1498
        %v1500 = vrot.slane %v1499, 1
        %v1501 = vmin.f32 %v1499, %v1500
        %vm1502 = vcmp.le.f32.partialorder %v1460, %v1488
        %vm1503 = vcmp.le.f32.partialorder %v1461, %v1501
        %vm1504 = vcmp.le.f32.partialorder %v1462, %v1488
        %vm1505 = vcmp.le.f32.partialorder %v1463, %v1501
        %vm1506 = vcmp.le.f32.partialorder %v1464, %v1488
        %vm1507 = vcmp.le.f32.partialorder %v1465, %v1501
        %vm1508 = vcmp.le.f32.partialorder %v1466, %v1488
        %vm1509 = vcmp.le.f32.partialorder %v1467, %v1501
        %vm1510 = vcmp.le.f32.partialorder %v1468, %v1488
        %vm1511 = vcmp.le.f32.partialorder %v1469, %v1501
        %vm1512 = vcmp.le.f32.partialorder %v1470, %v1488
        %vm1513 = vcmp.le.f32.partialorder %v1471, %v1501
        %vm1514 = vcmp.le.f32.partialorder %v1472, %v1488
        %vm1515 = vcmp.le.f32.partialorder %v1473, %v1501
        %vm1516 = vcmp.le.f32.partialorder %v1474, %v1488
        %vm1517 = vcmp.le.f32.partialorder %v1475, %v1501
        %v1518 = vsel %vm1502, %v589, 64
        %v1519 = vsel %vm1503, %v589, 64
        %v1520 = vsel %vm1504, %v590, 64
        %v1521 = vsel %vm1505, %v590, 64
        %v1522 = vsel %vm1506, %v591, 64
        %v1523 = vsel %vm1507, %v591, 64
        %v1524 = vsel %vm1508, %v592, 64
        %v1525 = vsel %vm1509, %v592, 64
        %v1526 = vsel %vm1510, %v593, 64
        %v1527 = vsel %vm1511, %v593, 64
        %v1528 = vsel %vm1512, %v594, 64
        %v1529 = vsel %vm1513, %v594, 64
        %v1530 = vsel %vm1514, %v595, 64
        %v1531 = vsel %vm1515, %v595, 64
        %v1532 = vsel %vm1516, %v596, 64
        %v1533 = vsel %vm1517, %v596, 64
        %vm1534 = vcmp.lt.s32.totalorder %v1518, %v1522
        %v1535 = vsel %vm1534, %v1518, %v1522
        %vm1536 = vcmp.lt.s32.totalorder %v1520, %v1524
        %v1537 = vsel %vm1536, %v1520, %v1524
        %vm1538 = vcmp.lt.s32.totalorder %v1535, %v1526
        %v1539 = vsel %vm1538, %v1535, %v1526
        %vm1540 = vcmp.lt.s32.totalorder %v1537, %v1528
        %v1541 = vsel %vm1540, %v1537, %v1528
        %vm1542 = vcmp.lt.s32.totalorder %v1539, %v1530
        %v1543 = vsel %vm1542, %v1539, %v1530
        %vm1544 = vcmp.lt.s32.totalorder %v1541, %v1532
        %v1545 = vsel %vm1544, %v1541, %v1532
        %vm1546 = vcmp.lt.s32.totalorder %v1543, %v1545
        %v1547 = vsel %vm1546, %v1543, %v1545
        %v1548 = vrot.slane %v1547, 4
        %vm1549 = vcmp.lt.s32.totalorder %v1547, %v1548
        %v1550 = vsel %vm1549, %v1547, %v1548
        %v1551 = vrot.slane %v1550, 2
        %vm1552 = vcmp.lt.s32.totalorder %v1550, %v1551
        %v1553 = vsel %vm1552, %v1550, %v1551
        %v1554 = vrot.slane %v1553, 1
        %vm1555 = vcmp.lt.s32.totalorder %v1553, %v1554
        %v1556 = vsel %vm1555, %v1553, %v1554
        %vm1557 = vcmp.lt.s32.totalorder %v1519, %v1523
        %v1558 = vsel %vm1557, %v1519, %v1523
        %vm1559 = vcmp.lt.s32.totalorder %v1521, %v1525
        %v1560 = vsel %vm1559, %v1521, %v1525
        %vm1561 = vcmp.lt.s32.totalorder %v1558, %v1527
        %v1562 = vsel %vm1561, %v1558, %v1527
        %vm1563 = vcmp.lt.s32.totalorder %v1560, %v1529
        %v1564 = vsel %vm1563, %v1560, %v1529
        %vm1565 = vcmp.lt.s32.totalorder %v1562, %v1531
        %v1566 = vsel %vm1565, %v1562, %v1531
        %vm1567 = vcmp.lt.s32.totalorder %v1564, %v1533
        %v1568 = vsel %vm1567, %v1564, %v1533
        %vm1569 = vcmp.lt.s32.totalorder %v1566, %v1568
        %v1570 = vsel %vm1569, %v1566, %v1568
        %v1571 = vrot.slane %v1570, 4
        %vm1572 = vcmp.lt.s32.totalorder %v1570, %v1571
        %v1573 = vsel %vm1572, %v1570, %v1571
        %v1574 = vrot.slane %v1573, 2
        %vm1575 = vcmp.lt.s32.totalorder %v1573, %v1574
        %v1576 = vsel %vm1575, %v1573, %v1574
        %v1577 = vrot.slane %v1576, 1
        %vm1578 = vcmp.lt.s32.totalorder %v1576, %v1577
        %v1579 = vsel %vm1578, %v1576, %v1577
        %vm1580 = vcmp.eq.s32.totalorder %v589, %v1556
        %vm1581 = vcmp.eq.s32.totalorder %v589, %v1579
        %vm1582 = vcmp.eq.s32.totalorder %v590, %v1556
        %vm1583 = vcmp.eq.s32.totalorder %v590, %v1579
        %vm1584 = vcmp.eq.s32.totalorder %v591, %v1556
        %vm1585 = vcmp.eq.s32.totalorder %v591, %v1579
        %vm1586 = vcmp.eq.s32.totalorder %v592, %v1556
        %vm1587 = vcmp.eq.s32.totalorder %v592, %v1579
        %vm1588 = vcmp.eq.s32.totalorder %v593, %v1556
        %vm1589 = vcmp.eq.s32.totalorder %v593, %v1579
        %vm1590 = vcmp.eq.s32.totalorder %v594, %v1556
        %vm1591 = vcmp.eq.s32.totalorder %v594, %v1579
        %vm1592 = vcmp.eq.s32.totalorder %v595, %v1556
        %vm1593 = vcmp.eq.s32.totalorder %v595, %v1579
        %vm1594 = vcmp.eq.s32.totalorder %v596, %v1556
        %vm1595 = vcmp.eq.s32.totalorder %v596, %v1579
        %v1596 = vsel %vm1580, 1, 0
        %v1597 = vsel %vm1581, 1, 0
        %v1598 = vsel %vm1582, 1, 0
        %v1599 = vsel %vm1583, 1, 0
        %v1600 = vsel %vm1584, 1, 0
        %v1601 = vsel %vm1585, 1, 0
        %v1602 = vsel %vm1586, 1, 0
        %v1603 = vsel %vm1587, 1, 0
        %v1604 = vsel %vm1588, 1, 0
        %v1605 = vsel %vm1589, 1, 0
        %v1606 = vsel %vm1590, 1, 0
        %v1607 = vsel %vm1591, 1, 0
        %v1608 = vsel %vm1592, 1, 0
        %v1609 = vsel %vm1593, 1, 0
        %v1610 = vsel %vm1594, 1, 0
        %v1611 = vsel %vm1595, 1, 0
        %v1612 = vcvt.s32.f32 %v1596
        %v1613 = vcvt.s32.f32 %v1597
        %v1614 = vcvt.s32.f32 %v1598
        %v1615 = vcvt.s32.f32 %v1599
        %v1616 = vcvt.s32.f32 %v1600
        %v1617 = vcvt.s32.f32 %v1601
        %v1618 = vcvt.s32.f32 %v1602
        %v1619 = vcvt.s32.f32 %v1603
        %v1620 = vcvt.s32.f32 %v1604
        %v1621 = vcvt.s32.f32 %v1605
        %v1622 = vcvt.s32.f32 %v1606
        %v1623 = vcvt.s32.f32 %v1607
        %v1624 = vcvt.s32.f32 %v1608
        %v1625 = vcvt.s32.f32 %v1609
        %v1626 = vcvt.s32.f32 %v1610
        %v1627 = vcvt.s32.f32 %v1611
        %v1628 = vpack.c.bf16 %v1614, %v1612
        %v1629 = vpack.c.bf16 %v1615, %v1613
        %v1630 = vpack.c.bf16 %v1618, %v1616
        %v1631 = vpack.c.bf16 %v1619, %v1617
        %v1632 = vpack.c.bf16 %v1622, %v1620
        %v1633 = vpack.c.bf16 %v1623, %v1621
        %v1634 = vpack.c.bf16 %v1626, %v1624
        %v1635 = vpack.c.bf16 %v1627, %v1625
        %1636 = vmatprep.subr.bf16.mxu0 %v507
        %1637 = vmatpush1.bf16.xpose.msra.mxu0 %v506
        %1638 = vmatprep.subr.bf16.mxu0 1065369472
        %1639 = vmatpush1.bf16.xpose.msra.mxu0 1065369472
        %1640 = vmatprep.subr.bf16.mxu0 0
        %1641 = vmatpush1.bf16.xpose.msra.mxu0 0
        %1642 = vmatprep.subr.bf16.mxu0 0
        %1643 = vmatpush1.bf16.xpose.msra.mxu0 0
        %1644 = vmatprep.subr.bf16.mxu0 0
        %1645 = vmatpush1.bf16.xpose.msra.mxu0 0
        %1646 = vmatprep.subr.bf16.mxu0 0
        %1647 = vmatpush1.bf16.xpose.msra.mxu0 0
        %1648 = vmatprep.subr.bf16.mxu0 0
        %1649 = vmatpush1.bf16.xpose.msra.mxu0 0
        %1650 = vmatprep.subr.bf16.mxu0 0
        %1651 = vmatpush1.bf16.xpose.msra.mxu0 0
        %1652 = vmatprep.subr.bf16.mxu0 0
        %1653 = vmatpush1.bf16.xpose.msra.mxu0 0
        %1654 = vmatprep.subr.bf16.mxu0 0
        %1655 = vmatpush1.bf16.xpose.msra.mxu0 0
        %1656 = vmatprep.subr.bf16.mxu0 0
        %1657 = vmatpush1.bf16.xpose.msra.mxu0 0
        %1658 = vmatprep.subr.bf16.mxu0 0
        %1659 = vmatpush1.bf16.xpose.msra.mxu0 0
        %1660 = vmatprep.subr.bf16.mxu0 0
        %1661 = vmatpush1.bf16.xpose.msra.mxu0 0
        %1662 = vmatprep.subr.bf16.mxu0 0
        %1663 = vmatpush1.bf16.xpose.msra.mxu0 0
        %1664 = vmatprep.subr.bf16.mxu0 0
        %1665 = vmatpush1.bf16.xpose.msra.mxu0 0
        %1666 = vmatprep.subr.bf16.mxu0 0
        %1667 = vmatpush1.bf16.xpose.msra.mxu0 0
        %1668 = vmatprep.mubr.bf16.mxu0 %v1629
        %1669 = vmatmul.mubr.bf16.gmra.mrb[0].mxu0 %v1628
        %v1670 = vpop.f32.mrb[0].mxu0
        %v1671 = vadd.f32 0.0, %v1670
        %v1672 = vpop.f32.mrb[0].mxu0
        %v1673 = vpop.f32.mrb[0].mxu0
        %v1674 = vadd.f32 0.0, %v1673
        %v1675 = vpop.f32.mrb[0].mxu0
        %1676 = vmatprep.mubr.bf16.mxu0 %v1631
        %1677 = vmatmul.mubr.bf16.gmra.mrb[0].mxu0 %v1630
        %v1678 = vpop.f32.mrb[0].mxu0
        %v1679 = vadd.f32 0.0, %v1678
        %v1680 = vpop.f32.mrb[0].mxu0
        %v1681 = vpop.f32.mrb[0].mxu0
        %v1682 = vadd.f32 0.0, %v1681
        %v1683 = vpop.f32.mrb[0].mxu0
        %1684 = vmatprep.mubr.bf16.mxu0 %v1633
        %1685 = vmatmul.mubr.bf16.gmra.mrb[0].mxu0 %v1632
        %v1686 = vpop.f32.mrb[0].mxu0
        %v1687 = vadd.f32 0.0, %v1686
        %v1688 = vpop.f32.mrb[0].mxu0
        %v1689 = vpop.f32.mrb[0].mxu0
        %v1690 = vadd.f32 0.0, %v1689
        %v1691 = vpop.f32.mrb[0].mxu0
        %1692 = vmatprep.mubr.bf16.mxu0 %v1635
        %1693 = vmatmul.mubr.bf16.gmra.mrb[0].mxu0 %v1634
        %v1694 = vpop.f32.mrb[0].mxu0
        %v1695 = vadd.f32 0.0, %v1694
        %v1696 = vpop.f32.mrb[0].mxu0
        %v1697 = vpop.f32.mrb[0].mxu0
        %v1698 = vadd.f32 0.0, %v1697
        %v1699 = vpop.f32.mrb[0].mxu0
        %1700 = vdwg.mxu0
        %vm1701 = vcmp.gt.f32.partialorder %v1671, 0.5
        %vm1702 = vcmp.gt.f32.partialorder %v1674, 0.5
        %vm1703 = vcmp.gt.f32.partialorder %v1679, 0.5
        %vm1704 = vcmp.gt.f32.partialorder %v1682, 0.5
        %vm1705 = vcmp.gt.f32.partialorder %v1687, 0.5
        %vm1706 = vcmp.gt.f32.partialorder %v1690, 0.5
        %vm1707 = vcmp.gt.f32.partialorder %v1695, 0.5
        %vm1708 = vcmp.gt.f32.partialorder %v1698, 0.5
        %v1709 = vmax.f32 %v1671, 1.0
        %v1710 = vmax.f32 %v1674, 1.0
        %v1711 = vmax.f32 %v1679, 1.0
        %v1712 = vmax.f32 %v1682, 1.0
        %v1713 = vmax.f32 %v1687, 1.0
        %v1714 = vmax.f32 %v1690, 1.0
        %v1715 = vmax.f32 %v1695, 1.0
        %v1716 = vmax.f32 %v1698, 1.0
        %1718 = vset.pattern.permute.xlu0 16
        %1719 = vperm.xlu0 %1718, %v1709
        %v1720 = vpop.permute.xlu0 %1719
        %1723 = vset.pattern.permute.xlu0 16
        %1724 = vperm.xlu0 %1723, %v1710
        %v1725 = vpop.permute.xlu0 %1724
        %1728 = vset.pattern.permute.xlu0 16
        %1729 = vperm.xlu0 %1728, %v1711
        %v1730 = vpop.permute.xlu0 %1729
        %1733 = vset.pattern.permute.xlu0 16
        %1734 = vperm.xlu0 %1733, %v1712
        %v1735 = vpop.permute.xlu0 %1734
        %1738 = vset.pattern.permute.xlu0 16
        %1739 = vperm.xlu0 %1738, %v1713
        %v1740 = vpop.permute.xlu0 %1739
        %1743 = vset.pattern.permute.xlu0 16
        %1744 = vperm.xlu0 %1743, %v1714
        %v1745 = vpop.permute.xlu0 %1744
        %1748 = vset.pattern.permute.xlu0 16
        %1749 = vperm.xlu0 %1748, %v1715
        %v1750 = vpop.permute.xlu0 %1749
        %1753 = vset.pattern.permute.xlu0 16
        %1754 = vperm.xlu0 %1753, %v1716
        %v1755 = vpop.permute.xlu0 %1754
        %v1757 = vrcp.pop %v1720
        %v1758 = vmul.f32 %v1671, %v1757
        %v1759 = vrcp.pop %v1725
        %v1760 = vmul.f32 %v1674, %v1759
        %v1761 = vrcp.pop %v1730
        %v1762 = vmul.f32 %v1679, %v1761
        %v1763 = vrcp.pop %v1735
        %v1764 = vmul.f32 %v1682, %v1763
        %v1765 = vrcp.pop %v1740
        %v1766 = vmul.f32 %v1687, %v1765
        %v1767 = vrcp.pop %v1745
        %v1768 = vmul.f32 %v1690, %v1767
        %v1769 = vrcp.pop %v1750
        %v1770 = vmul.f32 %v1695, %v1769
        %v1771 = vrcp.pop %v1755
        %v1772 = vmul.f32 %v1698, %v1771
        %v1773 = vsel %vm1701, 1, 0
        %v1774 = vsel %vm1702, 1, 0
        %v1775 = vsel %vm1703, 1, 0
        %v1776 = vsel %vm1704, 1, 0
        %v1777 = vsel %vm1705, 1, 0
        %v1778 = vsel %vm1706, 1, 0
        %v1779 = vsel %vm1707, 1, 0
        %v1780 = vsel %vm1708, 1, 0
        %1781 = vset.pattern.permute.xlu0 16
        %1782 = vperm.xlu0 %1781, %v1773
        %v1783 = vpop.permute.xlu0 %1782
        %1784 = vset.pattern.permute.xlu0 16
        %1785 = vperm.xlu0 %1784, %v1774
        %v1786 = vpop.permute.xlu0 %1785
        %1787 = vset.pattern.permute.xlu0 16
        %1788 = vperm.xlu0 %1787, %v1775
        %v1789 = vpop.permute.xlu0 %1788
        %1790 = vset.pattern.permute.xlu0 16
        %1791 = vperm.xlu0 %1790, %v1776
        %v1792 = vpop.permute.xlu0 %1791
        %1793 = vset.pattern.permute.xlu0 16
        %1794 = vperm.xlu0 %1793, %v1777
        %v1795 = vpop.permute.xlu0 %1794
        %1796 = vset.pattern.permute.xlu0 16
        %1797 = vperm.xlu0 %1796, %v1778
        %v1798 = vpop.permute.xlu0 %1797
        %1799 = vset.pattern.permute.xlu0 16
        %1800 = vperm.xlu0 %1799, %v1779
        %v1801 = vpop.permute.xlu0 %1800
        %1802 = vset.pattern.permute.xlu0 16
        %1803 = vperm.xlu0 %1802, %v1780
        %v1804 = vpop.permute.xlu0 %1803
        %vm1805 = vcmp.eq.s32.totalorder %v1783, 1
        %vm1806 = vcmp.eq.s32.totalorder %v1786, 1
        %vm1807 = vcmp.eq.s32.totalorder %v1789, 1
        %vm1808 = vcmp.eq.s32.totalorder %v1792, 1
        %vm1809 = vcmp.eq.s32.totalorder %v1795, 1
        %vm1810 = vcmp.eq.s32.totalorder %v1798, 1
        %vm1811 = vcmp.eq.s32.totalorder %v1801, 1
        %vm1812 = vcmp.eq.s32.totalorder %v1804, 1
        %v1813 = vsel %vm1805, %v1758, %v1267
        %v1814 = vsel %vm1806, %v1760, %v1268
        %v1815 = vsel %vm1807, %v1762, %v1269
        %v1816 = vsel %vm1808, %v1764, %v1270
        %v1817 = vsel %vm1809, %v1766, %v1271
        %v1818 = vsel %vm1810, %v1768, %v1272
        %v1819 = vsel %vm1811, %v1770, %v1273
        %v1820 = vsel %vm1812, %v1772, %v1274
        %v1821 = vmul.f32 %v1813, %v1813
        %v1822 = vmul.f32 %v1814, %v1814
        %v1823 = vmul.f32 %v1815, %v1815
        %v1824 = vmul.f32 %v1816, %v1816
        %v1825 = vmul.f32 %v1817, %v1817
        %v1826 = vmul.f32 %v1818, %v1818
        %v1827 = vmul.f32 %v1819, %v1819
        %v1828 = vmul.f32 %v1820, %v1820
        %v1829 = vsel %vm586, %v1821, 0.0
        %1830 = vadd.xlane.f32.xlu0 %v1829
        %v1831 = vpop.xlane.xlu0 %1830
        %v1832 = vsel %vm586, %v1822, 0.0
        %1833 = vadd.xlane.f32.xlu0 %v1832
        %v1834 = vpop.xlane.xlu0 %1833
        %v1835 = vsel %vm586, %v1823, 0.0
        %1836 = vadd.xlane.f32.xlu0 %v1835
        %v1837 = vpop.xlane.xlu0 %1836
        %v1838 = vsel %vm586, %v1824, 0.0
        %1839 = vadd.xlane.f32.xlu0 %v1838
        %v1840 = vpop.xlane.xlu0 %1839
        %v1841 = vsel %vm586, %v1825, 0.0
        %1842 = vadd.xlane.f32.xlu0 %v1841
        %v1843 = vpop.xlane.xlu0 %1842
        %v1844 = vsel %vm586, %v1826, 0.0
        %1845 = vadd.xlane.f32.xlu0 %v1844
        %v1846 = vpop.xlane.xlu0 %1845
        %v1847 = vsel %vm586, %v1827, 0.0
        %1848 = vadd.xlane.f32.xlu0 %v1847
        %v1849 = vpop.xlane.xlu0 %1848
        %v1850 = vsel %vm586, %v1828, 0.0
        %1851 = vadd.xlane.f32.xlu0 %v1850
        %v1852 = vpop.xlane.xlu0 %1851
        %v1854 = vsel %vm586, %v1813, 0
        %v1857 = vsel %vm586, %v1814, 0
        %v1860 = vsel %vm586, %v1815, 0
        %v1863 = vsel %vm586, %v1816, 0
        %v1866 = vsel %vm586, %v1817, 0
        %v1869 = vsel %vm586, %v1818, 0
        %v1872 = vsel %vm586, %v1819, 0
        %v1875 = vsel %vm586, %v1820, 0
        %1877 = vmatprep.subr.mxu0 %v488
        %1878 = vmatpush1.msra.mxu0 %v486
        %1879 = vmatprep.subr.mxu0 %v492
        %1880 = vmatpush1.msra.mxu0 %v490
        %1881 = vmatprep.subr.mxu0 0.0
        %1882 = vmatpush1.msra.mxu0 0.0
        %1883 = vmatprep.subr.mxu0 0.0
        %1884 = vmatpush1.msra.mxu0 0.0
        %1885 = vmatprep.subr.mxu0 0.0
        %1886 = vmatpush1.msra.mxu0 0.0
        %1887 = vmatprep.subr.mxu0 0.0
        %1888 = vmatpush1.msra.mxu0 0.0
        %1889 = vmatprep.subr.mxu0 0.0
        %1890 = vmatpush1.msra.mxu0 0.0
        %1891 = vmatprep.subr.mxu0 0.0
        %1892 = vmatpush1.msra.mxu0 0.0
        %1893 = vmatprep.subr.mxu0 0.0
        %1894 = vmatpush1.msra.mxu0 0.0
        %1895 = vmatprep.subr.mxu0 0.0
        %1896 = vmatpush1.msra.mxu0 0.0
        %1897 = vmatprep.subr.mxu0 0.0
        %1898 = vmatpush1.msra.mxu0 0.0
        %1899 = vmatprep.subr.mxu0 0.0
        %1900 = vmatpush1.msra.mxu0 0.0
        %1901 = vmatprep.subr.mxu0 0.0
        %1902 = vmatpush1.msra.mxu0 0.0
        %1903 = vmatprep.subr.mxu0 0.0
        %1904 = vmatpush1.msra.mxu0 0.0
        %1905 = vmatprep.subr.mxu0 0.0
        %1906 = vmatpush1.msra.mxu0 0.0
        %1907 = vmatprep.subr.mxu0 0.0
        %1908 = vmatpush1.msra.mxu0 0.0
        %1909 = vmatprep.subr.mxu0 0.0
        %1910 = vmatpush1.msra.mxu0 0.0
        %1911 = vmatprep.subr.mxu0 0.0
        %1912 = vmatpush1.msra.mxu0 0.0
        %1913 = vmatprep.subr.mxu0 0.0
        %1914 = vmatpush1.msra.mxu0 0.0
        %1915 = vmatprep.subr.mxu0 0.0
        %1916 = vmatpush1.msra.mxu0 0.0
        %1917 = vmatprep.subr.mxu0 0.0
        %1918 = vmatpush1.msra.mxu0 0.0
        %1919 = vmatprep.subr.mxu0 0.0
        %1920 = vmatpush1.msra.mxu0 0.0
        %1921 = vmatprep.subr.mxu0 0.0
        %1922 = vmatpush1.msra.mxu0 0.0
        %1923 = vmatprep.subr.mxu0 0.0
        %1924 = vmatpush1.msra.mxu0 0.0
        %1925 = vmatprep.subr.mxu0 0.0
        %1926 = vmatpush1.msra.mxu0 0.0
        %1927 = vmatprep.subr.mxu0 0.0
        %1928 = vmatpush1.msra.mxu0 0.0
        %1929 = vmatprep.subr.mxu0 0.0
        %1930 = vmatpush1.msra.mxu0 0.0
        %1931 = vmatprep.subr.mxu0 0.0
        %1932 = vmatpush1.msra.mxu0 0.0
        %1933 = vmatprep.subr.mxu0 0.0
        %1934 = vmatpush1.msra.mxu0 0.0
        %1935 = vmatprep.subr.mxu0 0.0
        %1936 = vmatpush1.msra.mxu0 0.0
        %1937 = vmatprep.subr.mxu0 0.0
        %1938 = vmatpush1.msra.mxu0 0.0
        %1939 = vmatprep.subr.mxu0 0.0
        %1940 = vmatpush1.msra.mxu0 0.0
        %1941 = vmatprep.mubr.f32.mxu0 0.0
        %1942 = vmatmul.mubr.f32.gmra.mrb[0].mxu0 %v1854
        %v1943 = vpop.f32.mrb[0].mxu0
        %v1944 = vadd.f32 0.0, %v1943
        %v1945 = vpop.f32.mrb[0].mxu0
        %v1946 = vadd.f32 0.0, %v1945
        %1947 = vmatprep.mubr.f32.mxu0 0.0
        %1948 = vmatmul.mubr.f32.gmra.mrb[0].mxu0 %v1857
        %v1949 = vpop.f32.mrb[0].mxu0
        %v1950 = vadd.f32 0.0, %v1949
        %v1951 = vpop.f32.mrb[0].mxu0
        %v1952 = vadd.f32 0.0, %v1951
        %1953 = vmatprep.mubr.f32.mxu0 0.0
        %1954 = vmatmul.mubr.f32.gmra.mrb[0].mxu0 %v1860
        %v1955 = vpop.f32.mrb[0].mxu0
        %v1956 = vadd.f32 0.0, %v1955
        %v1957 = vpop.f32.mrb[0].mxu0
        %v1958 = vadd.f32 0.0, %v1957
        %1959 = vmatprep.mubr.f32.mxu0 0.0
        %1960 = vmatmul.mubr.f32.gmra.mrb[0].mxu0 %v1863
        %v1961 = vpop.f32.mrb[0].mxu0
        %v1962 = vadd.f32 0.0, %v1961
        %v1963 = vpop.f32.mrb[0].mxu0
        %v1964 = vadd.f32 0.0, %v1963
        %1965 = vmatprep.mubr.f32.mxu0 0.0
        %1966 = vmatmul.mubr.f32.gmra.mrb[0].mxu0 %v1866
        %v1967 = vpop.f32.mrb[0].mxu0
        %v1968 = vadd.f32 0.0, %v1967
        %v1969 = vpop.f32.mrb[0].mxu0
        %v1970 = vadd.f32 0.0, %v1969
        %1971 = vmatprep.mubr.f32.mxu0 0.0
        %1972 = vmatmul.mubr.f32.gmra.mrb[0].mxu0 %v1869
        %v1973 = vpop.f32.mrb[0].mxu0
        %v1974 = vadd.f32 0.0, %v1973
        %v1975 = vpop.f32.mrb[0].mxu0
        %v1976 = vadd.f32 0.0, %v1975
        %1977 = vmatprep.mubr.f32.mxu0 0.0
        %1978 = vmatmul.mubr.f32.gmra.mrb[0].mxu0 %v1872
        %v1979 = vpop.f32.mrb[0].mxu0
        %v1980 = vadd.f32 0.0, %v1979
        %v1981 = vpop.f32.mrb[0].mxu0
        %v1982 = vadd.f32 0.0, %v1981
        %1983 = vmatprep.mubr.f32.mxu0 0.0
        %1984 = vmatmul.mubr.f32.gmra.mrb[0].mxu0 %v1875
        %v1985 = vpop.f32.mrb[0].mxu0
        %v1986 = vadd.f32 0.0, %v1985
        %v1987 = vpop.f32.mrb[0].mxu0
        %v1988 = vadd.f32 0.0, %v1987
        %1989 = vdwg.mxu0
        %v1990 = vmul.f32 %v1944, 2.0
        %v1991 = vmul.f32 %v1946, 2.0
        %v1992 = vmul.f32 %v1950, 2.0
        %v1993 = vmul.f32 %v1952, 2.0
        %v1994 = vmul.f32 %v1956, 2.0
        %v1995 = vmul.f32 %v1958, 2.0
        %v1996 = vmul.f32 %v1962, 2.0
        %v1997 = vmul.f32 %v1964, 2.0
        %v1998 = vmul.f32 %v1968, 2.0
        %v1999 = vmul.f32 %v1970, 2.0
        %v2000 = vmul.f32 %v1974, 2.0
        %v2001 = vmul.f32 %v1976, 2.0
        %v2002 = vmul.f32 %v1980, 2.0
        %v2003 = vmul.f32 %v1982, 2.0
        %v2004 = vmul.f32 %v1986, 2.0
        %v2005 = vmul.f32 %v1988, 2.0
        %v2006 = vsub.f32 %v1831, %v1990
        %v2007 = vsub.f32 %v1831, %v1991
        %v2008 = vsub.f32 %v1834, %v1992
        %v2009 = vsub.f32 %v1834, %v1993
        %v2010 = vsub.f32 %v1837, %v1994
        %v2011 = vsub.f32 %v1837, %v1995
        %v2012 = vsub.f32 %v1840, %v1996
        %v2013 = vsub.f32 %v1840, %v1997
        %v2014 = vsub.f32 %v1843, %v1998
        %v2015 = vsub.f32 %v1843, %v1999
        %v2016 = vsub.f32 %v1846, %v2000
        %v2017 = vsub.f32 %v1846, %v2001
        %v2018 = vsub.f32 %v1849, %v2002
        %v2019 = vsub.f32 %v1849, %v2003
        %v2020 = vsub.f32 %v1852, %v2004
        %v2021 = vsub.f32 %v1852, %v2005
        %v2022 = vmin.f32 %v2006, %v2010
        %v2023 = vmin.f32 %v2008, %v2012
        %v2024 = vmin.f32 %v2022, %v2014
        %v2025 = vmin.f32 %v2023, %v2016
        %v2026 = vmin.f32 %v2024, %v2018
        %v2027 = vmin.f32 %v2025, %v2020
        %v2028 = vmin.f32 %v2026, %v2027
        %v2029 = vrot.slane %v2028, 4
        %v2030 = vmin.f32 %v2028, %v2029
        %v2031 = vrot.slane %v2030, 2
        %v2032 = vmin.f32 %v2030, %v2031
        %v2033 = vrot.slane %v2032, 1
        %v2034 = vmin.f32 %v2032, %v2033
        %v2035 = vmin.f32 %v2007, %v2011
        %v2036 = vmin.f32 %v2009, %v2013
        %v2037 = vmin.f32 %v2035, %v2015
        %v2038 = vmin.f32 %v2036, %v2017
        %v2039 = vmin.f32 %v2037, %v2019
        %v2040 = vmin.f32 %v2038, %v2021
        %v2041 = vmin.f32 %v2039, %v2040
        %v2042 = vrot.slane %v2041, 4
        %v2043 = vmin.f32 %v2041, %v2042
        %v2044 = vrot.slane %v2043, 2
        %v2045 = vmin.f32 %v2043, %v2044
        %v2046 = vrot.slane %v2045, 1
        %v2047 = vmin.f32 %v2045, %v2046
        %vm2048 = vcmp.le.f32.partialorder %v2006, %v2034
        %vm2049 = vcmp.le.f32.partialorder %v2007, %v2047
        %vm2050 = vcmp.le.f32.partialorder %v2008, %v2034
        %vm2051 = vcmp.le.f32.partialorder %v2009, %v2047
        %vm2052 = vcmp.le.f32.partialorder %v2010, %v2034
        %vm2053 = vcmp.le.f32.partialorder %v2011, %v2047
        %vm2054 = vcmp.le.f32.partialorder %v2012, %v2034
        %vm2055 = vcmp.le.f32.partialorder %v2013, %v2047
        %vm2056 = vcmp.le.f32.partialorder %v2014, %v2034
        %vm2057 = vcmp.le.f32.partialorder %v2015, %v2047
        %vm2058 = vcmp.le.f32.partialorder %v2016, %v2034
        %vm2059 = vcmp.le.f32.partialorder %v2017, %v2047
        %vm2060 = vcmp.le.f32.partialorder %v2018, %v2034
        %vm2061 = vcmp.le.f32.partialorder %v2019, %v2047
        %vm2062 = vcmp.le.f32.partialorder %v2020, %v2034
        %vm2063 = vcmp.le.f32.partialorder %v2021, %v2047
        %v2064 = vsel %vm2048, %v589, 64
        %v2065 = vsel %vm2049, %v589, 64
        %v2066 = vsel %vm2050, %v590, 64
        %v2067 = vsel %vm2051, %v590, 64
        %v2068 = vsel %vm2052, %v591, 64
        %v2069 = vsel %vm2053, %v591, 64
        %v2070 = vsel %vm2054, %v592, 64
        %v2071 = vsel %vm2055, %v592, 64
        %v2072 = vsel %vm2056, %v593, 64
        %v2073 = vsel %vm2057, %v593, 64
        %v2074 = vsel %vm2058, %v594, 64
        %v2075 = vsel %vm2059, %v594, 64
        %v2076 = vsel %vm2060, %v595, 64
        %v2077 = vsel %vm2061, %v595, 64
        %v2078 = vsel %vm2062, %v596, 64
        %v2079 = vsel %vm2063, %v596, 64
        %vm2080 = vcmp.lt.s32.totalorder %v2064, %v2068
        %v2081 = vsel %vm2080, %v2064, %v2068
        %vm2082 = vcmp.lt.s32.totalorder %v2066, %v2070
        %v2083 = vsel %vm2082, %v2066, %v2070
        %vm2084 = vcmp.lt.s32.totalorder %v2081, %v2072
        %v2085 = vsel %vm2084, %v2081, %v2072
        %vm2086 = vcmp.lt.s32.totalorder %v2083, %v2074
        %v2087 = vsel %vm2086, %v2083, %v2074
        %vm2088 = vcmp.lt.s32.totalorder %v2085, %v2076
        %v2089 = vsel %vm2088, %v2085, %v2076
        %vm2090 = vcmp.lt.s32.totalorder %v2087, %v2078
        %v2091 = vsel %vm2090, %v2087, %v2078
        %vm2092 = vcmp.lt.s32.totalorder %v2089, %v2091
        %v2093 = vsel %vm2092, %v2089, %v2091
        %v2094 = vrot.slane %v2093, 4
        %vm2095 = vcmp.lt.s32.totalorder %v2093, %v2094
        %v2096 = vsel %vm2095, %v2093, %v2094
        %v2097 = vrot.slane %v2096, 2
        %vm2098 = vcmp.lt.s32.totalorder %v2096, %v2097
        %v2099 = vsel %vm2098, %v2096, %v2097
        %v2100 = vrot.slane %v2099, 1
        %vm2101 = vcmp.lt.s32.totalorder %v2099, %v2100
        %v2102 = vsel %vm2101, %v2099, %v2100
        %vm2103 = vcmp.lt.s32.totalorder %v2065, %v2069
        %v2104 = vsel %vm2103, %v2065, %v2069
        %vm2105 = vcmp.lt.s32.totalorder %v2067, %v2071
        %v2106 = vsel %vm2105, %v2067, %v2071
        %vm2107 = vcmp.lt.s32.totalorder %v2104, %v2073
        %v2108 = vsel %vm2107, %v2104, %v2073
        %vm2109 = vcmp.lt.s32.totalorder %v2106, %v2075
        %v2110 = vsel %vm2109, %v2106, %v2075
        %vm2111 = vcmp.lt.s32.totalorder %v2108, %v2077
        %v2112 = vsel %vm2111, %v2108, %v2077
        %vm2113 = vcmp.lt.s32.totalorder %v2110, %v2079
        %v2114 = vsel %vm2113, %v2110, %v2079
        %vm2115 = vcmp.lt.s32.totalorder %v2112, %v2114
        %v2116 = vsel %vm2115, %v2112, %v2114
        %v2117 = vrot.slane %v2116, 4
        %vm2118 = vcmp.lt.s32.totalorder %v2116, %v2117
        %v2119 = vsel %vm2118, %v2116, %v2117
        %v2120 = vrot.slane %v2119, 2
        %vm2121 = vcmp.lt.s32.totalorder %v2119, %v2120
        %v2122 = vsel %vm2121, %v2119, %v2120
        %v2123 = vrot.slane %v2122, 1
        %vm2124 = vcmp.lt.s32.totalorder %v2122, %v2123
        %v2125 = vsel %vm2124, %v2122, %v2123
        %vm2126 = vcmp.eq.s32.totalorder %v589, %v2102
        %vm2127 = vcmp.eq.s32.totalorder %v589, %v2125
        %vm2128 = vcmp.eq.s32.totalorder %v590, %v2102
        %vm2129 = vcmp.eq.s32.totalorder %v590, %v2125
        %vm2130 = vcmp.eq.s32.totalorder %v591, %v2102
        %vm2131 = vcmp.eq.s32.totalorder %v591, %v2125
        %vm2132 = vcmp.eq.s32.totalorder %v592, %v2102
        %vm2133 = vcmp.eq.s32.totalorder %v592, %v2125
        %vm2134 = vcmp.eq.s32.totalorder %v593, %v2102
        %vm2135 = vcmp.eq.s32.totalorder %v593, %v2125
        %vm2136 = vcmp.eq.s32.totalorder %v594, %v2102
        %vm2137 = vcmp.eq.s32.totalorder %v594, %v2125
        %vm2138 = vcmp.eq.s32.totalorder %v595, %v2102
        %vm2139 = vcmp.eq.s32.totalorder %v595, %v2125
        %vm2140 = vcmp.eq.s32.totalorder %v596, %v2102
        %vm2141 = vcmp.eq.s32.totalorder %v596, %v2125
        %v2142 = vsel %vm2126, 1, 0
        %v2143 = vsel %vm2127, 1, 0
        %v2144 = vsel %vm2128, 1, 0
        %v2145 = vsel %vm2129, 1, 0
        %v2146 = vsel %vm2130, 1, 0
        %v2147 = vsel %vm2131, 1, 0
        %v2148 = vsel %vm2132, 1, 0
        %v2149 = vsel %vm2133, 1, 0
        %v2150 = vsel %vm2134, 1, 0
        %v2151 = vsel %vm2135, 1, 0
        %v2152 = vsel %vm2136, 1, 0
        %v2153 = vsel %vm2137, 1, 0
        %v2154 = vsel %vm2138, 1, 0
        %v2155 = vsel %vm2139, 1, 0
        %v2156 = vsel %vm2140, 1, 0
        %v2157 = vsel %vm2141, 1, 0
        %v2158 = vcvt.s32.f32 %v2142
        %v2159 = vcvt.s32.f32 %v2143
        %v2160 = vcvt.s32.f32 %v2144
        %v2161 = vcvt.s32.f32 %v2145
        %v2162 = vcvt.s32.f32 %v2146
        %v2163 = vcvt.s32.f32 %v2147
        %v2164 = vcvt.s32.f32 %v2148
        %v2165 = vcvt.s32.f32 %v2149
        %v2166 = vcvt.s32.f32 %v2150
        %v2167 = vcvt.s32.f32 %v2151
        %v2168 = vcvt.s32.f32 %v2152
        %v2169 = vcvt.s32.f32 %v2153
        %v2170 = vcvt.s32.f32 %v2154
        %v2171 = vcvt.s32.f32 %v2155
        %v2172 = vcvt.s32.f32 %v2156
        %v2173 = vcvt.s32.f32 %v2157
        %v2174 = vpack.c.bf16 %v2160, %v2158
        %v2175 = vpack.c.bf16 %v2161, %v2159
        %v2176 = vpack.c.bf16 %v2164, %v2162
        %v2177 = vpack.c.bf16 %v2165, %v2163
        %v2178 = vpack.c.bf16 %v2168, %v2166
        %v2179 = vpack.c.bf16 %v2169, %v2167
        %v2180 = vpack.c.bf16 %v2172, %v2170
        %v2181 = vpack.c.bf16 %v2173, %v2171
        %2182 = vmatprep.subr.bf16.mxu0 %v507
        %2183 = vmatpush1.bf16.xpose.msra.mxu0 %v506
        %2184 = vmatprep.subr.bf16.mxu0 1065369472
        %2185 = vmatpush1.bf16.xpose.msra.mxu0 1065369472
        %2186 = vmatprep.subr.bf16.mxu0 0
        %2187 = vmatpush1.bf16.xpose.msra.mxu0 0
        %2188 = vmatprep.subr.bf16.mxu0 0
        %2189 = vmatpush1.bf16.xpose.msra.mxu0 0
        %2190 = vmatprep.subr.bf16.mxu0 0
        %2191 = vmatpush1.bf16.xpose.msra.mxu0 0
        %2192 = vmatprep.subr.bf16.mxu0 0
        %2193 = vmatpush1.bf16.xpose.msra.mxu0 0
        %2194 = vmatprep.subr.bf16.mxu0 0
        %2195 = vmatpush1.bf16.xpose.msra.mxu0 0
        %2196 = vmatprep.subr.bf16.mxu0 0
        %2197 = vmatpush1.bf16.xpose.msra.mxu0 0
        %2198 = vmatprep.subr.bf16.mxu0 0
        %2199 = vmatpush1.bf16.xpose.msra.mxu0 0
        %2200 = vmatprep.subr.bf16.mxu0 0
        %2201 = vmatpush1.bf16.xpose.msra.mxu0 0
        %2202 = vmatprep.subr.bf16.mxu0 0
        %2203 = vmatpush1.bf16.xpose.msra.mxu0 0
        %2204 = vmatprep.subr.bf16.mxu0 0
        %2205 = vmatpush1.bf16.xpose.msra.mxu0 0
        %2206 = vmatprep.subr.bf16.mxu0 0
        %2207 = vmatpush1.bf16.xpose.msra.mxu0 0
        %2208 = vmatprep.subr.bf16.mxu0 0
        %2209 = vmatpush1.bf16.xpose.msra.mxu0 0
        %2210 = vmatprep.subr.bf16.mxu0 0
        %2211 = vmatpush1.bf16.xpose.msra.mxu0 0
        %2212 = vmatprep.subr.bf16.mxu0 0
        %2213 = vmatpush1.bf16.xpose.msra.mxu0 0
        %2214 = vmatprep.mubr.bf16.mxu0 %v2175
        %2215 = vmatmul.mubr.bf16.gmra.mrb[0].mxu0 %v2174
        %v2216 = vpop.f32.mrb[0].mxu0
        %v2217 = vadd.f32 0.0, %v2216
        %v2218 = vpop.f32.mrb[0].mxu0
        %v2219 = vpop.f32.mrb[0].mxu0
        %v2220 = vadd.f32 0.0, %v2219
        %v2221 = vpop.f32.mrb[0].mxu0
        %2222 = vmatprep.mubr.bf16.mxu0 %v2177
        %2223 = vmatmul.mubr.bf16.gmra.mrb[0].mxu0 %v2176
        %v2224 = vpop.f32.mrb[0].mxu0
        %v2225 = vadd.f32 0.0, %v2224
        %v2226 = vpop.f32.mrb[0].mxu0
        %v2227 = vpop.f32.mrb[0].mxu0
        %v2228 = vadd.f32 0.0, %v2227
        %v2229 = vpop.f32.mrb[0].mxu0
        %2230 = vmatprep.mubr.bf16.mxu0 %v2179
        %2231 = vmatmul.mubr.bf16.gmra.mrb[0].mxu0 %v2178
        %v2232 = vpop.f32.mrb[0].mxu0
        %v2233 = vadd.f32 0.0, %v2232
        %v2234 = vpop.f32.mrb[0].mxu0
        %v2235 = vpop.f32.mrb[0].mxu0
        %v2236 = vadd.f32 0.0, %v2235
        %v2237 = vpop.f32.mrb[0].mxu0
        %2238 = vmatprep.mubr.bf16.mxu0 %v2181
        %2239 = vmatmul.mubr.bf16.gmra.mrb[0].mxu0 %v2180
        %v2240 = vpop.f32.mrb[0].mxu0
        %v2241 = vadd.f32 0.0, %v2240
        %v2242 = vpop.f32.mrb[0].mxu0
        %v2243 = vpop.f32.mrb[0].mxu0
        %v2244 = vadd.f32 0.0, %v2243
        %v2245 = vpop.f32.mrb[0].mxu0
        %2246 = vdwg.mxu0
        %vm2247 = vcmp.gt.f32.partialorder %v2217, 0.5
        %vm2248 = vcmp.gt.f32.partialorder %v2220, 0.5
        %vm2249 = vcmp.gt.f32.partialorder %v2225, 0.5
        %vm2250 = vcmp.gt.f32.partialorder %v2228, 0.5
        %vm2251 = vcmp.gt.f32.partialorder %v2233, 0.5
        %vm2252 = vcmp.gt.f32.partialorder %v2236, 0.5
        %vm2253 = vcmp.gt.f32.partialorder %v2241, 0.5
        %vm2254 = vcmp.gt.f32.partialorder %v2244, 0.5
        %v2255 = vmax.f32 %v2217, 1.0
        %v2256 = vmax.f32 %v2220, 1.0
        %v2257 = vmax.f32 %v2225, 1.0
        %v2258 = vmax.f32 %v2228, 1.0
        %v2259 = vmax.f32 %v2233, 1.0
        %v2260 = vmax.f32 %v2236, 1.0
        %v2261 = vmax.f32 %v2241, 1.0
        %v2262 = vmax.f32 %v2244, 1.0
        %2264 = vset.pattern.permute.xlu0 16
        %2265 = vperm.xlu0 %2264, %v2255
        %v2266 = vpop.permute.xlu0 %2265
        %2269 = vset.pattern.permute.xlu0 16
        %2270 = vperm.xlu0 %2269, %v2256
        %v2271 = vpop.permute.xlu0 %2270
        %2274 = vset.pattern.permute.xlu0 16
        %2275 = vperm.xlu0 %2274, %v2257
        %v2276 = vpop.permute.xlu0 %2275
        %2279 = vset.pattern.permute.xlu0 16
        %2280 = vperm.xlu0 %2279, %v2258
        %v2281 = vpop.permute.xlu0 %2280
        %2284 = vset.pattern.permute.xlu0 16
        %2285 = vperm.xlu0 %2284, %v2259
        %v2286 = vpop.permute.xlu0 %2285
        %2289 = vset.pattern.permute.xlu0 16
        %2290 = vperm.xlu0 %2289, %v2260
        %v2291 = vpop.permute.xlu0 %2290
        %2294 = vset.pattern.permute.xlu0 16
        %2295 = vperm.xlu0 %2294, %v2261
        %v2296 = vpop.permute.xlu0 %2295
        %2299 = vset.pattern.permute.xlu0 16
        %2300 = vperm.xlu0 %2299, %v2262
        %v2301 = vpop.permute.xlu0 %2300
        %v2303 = vrcp.pop %v2266
        %v2304 = vmul.f32 %v2217, %v2303
        %v2305 = vrcp.pop %v2271
        %v2306 = vmul.f32 %v2220, %v2305
        %v2307 = vrcp.pop %v2276
        %v2308 = vmul.f32 %v2225, %v2307
        %v2309 = vrcp.pop %v2281
        %v2310 = vmul.f32 %v2228, %v2309
        %v2311 = vrcp.pop %v2286
        %v2312 = vmul.f32 %v2233, %v2311
        %v2313 = vrcp.pop %v2291
        %v2314 = vmul.f32 %v2236, %v2313
        %v2315 = vrcp.pop %v2296
        %v2316 = vmul.f32 %v2241, %v2315
        %v2317 = vrcp.pop %v2301
        %v2318 = vmul.f32 %v2244, %v2317
        %v2319 = vsel %vm2247, 1, 0
        %v2320 = vsel %vm2248, 1, 0
        %v2321 = vsel %vm2249, 1, 0
        %v2322 = vsel %vm2250, 1, 0
        %v2323 = vsel %vm2251, 1, 0
        %v2324 = vsel %vm2252, 1, 0
        %v2325 = vsel %vm2253, 1, 0
        %v2326 = vsel %vm2254, 1, 0
        %2327 = vset.pattern.permute.xlu0 16
        %2328 = vperm.xlu0 %2327, %v2319
        %v2329 = vpop.permute.xlu0 %2328
        %2330 = vset.pattern.permute.xlu0 16
        %2331 = vperm.xlu0 %2330, %v2320
        %v2332 = vpop.permute.xlu0 %2331
        %2333 = vset.pattern.permute.xlu0 16
        %2334 = vperm.xlu0 %2333, %v2321
        %v2335 = vpop.permute.xlu0 %2334
        %2336 = vset.pattern.permute.xlu0 16
        %2337 = vperm.xlu0 %2336, %v2322
        %v2338 = vpop.permute.xlu0 %2337
        %2339 = vset.pattern.permute.xlu0 16
        %2340 = vperm.xlu0 %2339, %v2323
        %v2341 = vpop.permute.xlu0 %2340
        %2342 = vset.pattern.permute.xlu0 16
        %2343 = vperm.xlu0 %2342, %v2324
        %v2344 = vpop.permute.xlu0 %2343
        %2345 = vset.pattern.permute.xlu0 16
        %2346 = vperm.xlu0 %2345, %v2325
        %v2347 = vpop.permute.xlu0 %2346
        %2348 = vset.pattern.permute.xlu0 16
        %2349 = vperm.xlu0 %2348, %v2326
        %v2350 = vpop.permute.xlu0 %2349
        %vm2351 = vcmp.eq.s32.totalorder %v2329, 1
        %vm2352 = vcmp.eq.s32.totalorder %v2332, 1
        %vm2353 = vcmp.eq.s32.totalorder %v2335, 1
        %vm2354 = vcmp.eq.s32.totalorder %v2338, 1
        %vm2355 = vcmp.eq.s32.totalorder %v2341, 1
        %vm2356 = vcmp.eq.s32.totalorder %v2344, 1
        %vm2357 = vcmp.eq.s32.totalorder %v2347, 1
        %vm2358 = vcmp.eq.s32.totalorder %v2350, 1
        %v2359 = vsel %vm2351, %v2304, %v1813
        %v2360 = vsel %vm2352, %v2306, %v1814
        %v2361 = vsel %vm2353, %v2308, %v1815
        %v2362 = vsel %vm2354, %v2310, %v1816
        %v2363 = vsel %vm2355, %v2312, %v1817
        %v2364 = vsel %vm2356, %v2314, %v1818
        %v2365 = vsel %vm2357, %v2316, %v1819
        %v2366 = vsel %vm2358, %v2318, %v1820
        %v2367 = vmul.f32 %v2359, %v2359
        %v2368 = vmul.f32 %v2360, %v2360
        %v2369 = vmul.f32 %v2361, %v2361
        %v2370 = vmul.f32 %v2362, %v2362
        %v2371 = vmul.f32 %v2363, %v2363
        %v2372 = vmul.f32 %v2364, %v2364
        %v2373 = vmul.f32 %v2365, %v2365
        %v2374 = vmul.f32 %v2366, %v2366
        %v2375 = vsel %vm586, %v2367, 0.0
        %2376 = vadd.xlane.f32.xlu0 %v2375
        %v2377 = vpop.xlane.xlu0 %2376
        %v2378 = vsel %vm586, %v2368, 0.0
        %2379 = vadd.xlane.f32.xlu0 %v2378
        %v2380 = vpop.xlane.xlu0 %2379
        %v2381 = vsel %vm586, %v2369, 0.0
        %2382 = vadd.xlane.f32.xlu0 %v2381
        %v2383 = vpop.xlane.xlu0 %2382
        %v2384 = vsel %vm586, %v2370, 0.0
        %2385 = vadd.xlane.f32.xlu0 %v2384
        %v2386 = vpop.xlane.xlu0 %2385
        %v2387 = vsel %vm586, %v2371, 0.0
        %2388 = vadd.xlane.f32.xlu0 %v2387
        %v2389 = vpop.xlane.xlu0 %2388
        %v2390 = vsel %vm586, %v2372, 0.0
        %2391 = vadd.xlane.f32.xlu0 %v2390
        %v2392 = vpop.xlane.xlu0 %2391
        %v2393 = vsel %vm586, %v2373, 0.0
        %2394 = vadd.xlane.f32.xlu0 %v2393
        %v2395 = vpop.xlane.xlu0 %2394
        %v2396 = vsel %vm586, %v2374, 0.0
        %2397 = vadd.xlane.f32.xlu0 %v2396
        %v2398 = vpop.xlane.xlu0 %2397
        %v2400 = vsel %vm586, %v2359, 0
        %v2403 = vsel %vm586, %v2360, 0
        %v2406 = vsel %vm586, %v2361, 0
        %v2409 = vsel %vm586, %v2362, 0
        %v2412 = vsel %vm586, %v2363, 0
        %v2415 = vsel %vm586, %v2364, 0
        %v2418 = vsel %vm586, %v2365, 0
        %v2421 = vsel %vm586, %v2366, 0
        %2423 = vmatprep.subr.mxu0 %v488
        %2424 = vmatpush1.msra.mxu0 %v486
        %2425 = vmatprep.subr.mxu0 %v492
        %2426 = vmatpush1.msra.mxu0 %v490
        %2427 = vmatprep.subr.mxu0 0.0
        %2428 = vmatpush1.msra.mxu0 0.0
        %2429 = vmatprep.subr.mxu0 0.0
        %2430 = vmatpush1.msra.mxu0 0.0
        %2431 = vmatprep.subr.mxu0 0.0
        %2432 = vmatpush1.msra.mxu0 0.0
        %2433 = vmatprep.subr.mxu0 0.0
        %2434 = vmatpush1.msra.mxu0 0.0
        %2435 = vmatprep.subr.mxu0 0.0
        %2436 = vmatpush1.msra.mxu0 0.0
        %2437 = vmatprep.subr.mxu0 0.0
        %2438 = vmatpush1.msra.mxu0 0.0
        %2439 = vmatprep.subr.mxu0 0.0
        %2440 = vmatpush1.msra.mxu0 0.0
        %2441 = vmatprep.subr.mxu0 0.0
        %2442 = vmatpush1.msra.mxu0 0.0
        %2443 = vmatprep.subr.mxu0 0.0
        %2444 = vmatpush1.msra.mxu0 0.0
        %2445 = vmatprep.subr.mxu0 0.0
        %2446 = vmatpush1.msra.mxu0 0.0
        %2447 = vmatprep.subr.mxu0 0.0
        %2448 = vmatpush1.msra.mxu0 0.0
        %2449 = vmatprep.subr.mxu0 0.0
        %2450 = vmatpush1.msra.mxu0 0.0
        %2451 = vmatprep.subr.mxu0 0.0
        %2452 = vmatpush1.msra.mxu0 0.0
        %2453 = vmatprep.subr.mxu0 0.0
        %2454 = vmatpush1.msra.mxu0 0.0
        %2455 = vmatprep.subr.mxu0 0.0
        %2456 = vmatpush1.msra.mxu0 0.0
        %2457 = vmatprep.subr.mxu0 0.0
        %2458 = vmatpush1.msra.mxu0 0.0
        %2459 = vmatprep.subr.mxu0 0.0
        %2460 = vmatpush1.msra.mxu0 0.0
        %2461 = vmatprep.subr.mxu0 0.0
        %2462 = vmatpush1.msra.mxu0 0.0
        %2463 = vmatprep.subr.mxu0 0.0
        %2464 = vmatpush1.msra.mxu0 0.0
        %2465 = vmatprep.subr.mxu0 0.0
        %2466 = vmatpush1.msra.mxu0 0.0
        %2467 = vmatprep.subr.mxu0 0.0
        %2468 = vmatpush1.msra.mxu0 0.0
        %2469 = vmatprep.subr.mxu0 0.0
        %2470 = vmatpush1.msra.mxu0 0.0
        %2471 = vmatprep.subr.mxu0 0.0
        %2472 = vmatpush1.msra.mxu0 0.0
        %2473 = vmatprep.subr.mxu0 0.0
        %2474 = vmatpush1.msra.mxu0 0.0
        %2475 = vmatprep.subr.mxu0 0.0
        %2476 = vmatpush1.msra.mxu0 0.0
        %2477 = vmatprep.subr.mxu0 0.0
        %2478 = vmatpush1.msra.mxu0 0.0
        %2479 = vmatprep.subr.mxu0 0.0
        %2480 = vmatpush1.msra.mxu0 0.0
        %2481 = vmatprep.subr.mxu0 0.0
        %2482 = vmatpush1.msra.mxu0 0.0
        %2483 = vmatprep.subr.mxu0 0.0
        %2484 = vmatpush1.msra.mxu0 0.0
        %2485 = vmatprep.subr.mxu0 0.0
        %2486 = vmatpush1.msra.mxu0 0.0
        %2487 = vmatprep.mubr.f32.mxu0 0.0
        %2488 = vmatmul.mubr.f32.gmra.mrb[0].mxu0 %v2400
        %v2489 = vpop.f32.mrb[0].mxu0
        %v2490 = vadd.f32 0.0, %v2489
        %v2491 = vpop.f32.mrb[0].mxu0
        %v2492 = vadd.f32 0.0, %v2491
        %2493 = vmatprep.mubr.f32.mxu0 0.0
        %2494 = vmatmul.mubr.f32.gmra.mrb[0].mxu0 %v2403
        %v2495 = vpop.f32.mrb[0].mxu0
        %v2496 = vadd.f32 0.0, %v2495
        %v2497 = vpop.f32.mrb[0].mxu0
        %v2498 = vadd.f32 0.0, %v2497
        %2499 = vmatprep.mubr.f32.mxu0 0.0
        %2500 = vmatmul.mubr.f32.gmra.mrb[0].mxu0 %v2406
        %v2501 = vpop.f32.mrb[0].mxu0
        %v2502 = vadd.f32 0.0, %v2501
        %v2503 = vpop.f32.mrb[0].mxu0
        %v2504 = vadd.f32 0.0, %v2503
        %2505 = vmatprep.mubr.f32.mxu0 0.0
        %2506 = vmatmul.mubr.f32.gmra.mrb[0].mxu0 %v2409
        %v2507 = vpop.f32.mrb[0].mxu0
        %v2508 = vadd.f32 0.0, %v2507
        %v2509 = vpop.f32.mrb[0].mxu0
        %v2510 = vadd.f32 0.0, %v2509
        %2511 = vmatprep.mubr.f32.mxu0 0.0
        %2512 = vmatmul.mubr.f32.gmra.mrb[0].mxu0 %v2412
        %v2513 = vpop.f32.mrb[0].mxu0
        %v2514 = vadd.f32 0.0, %v2513
        %v2515 = vpop.f32.mrb[0].mxu0
        %v2516 = vadd.f32 0.0, %v2515
        %2517 = vmatprep.mubr.f32.mxu0 0.0
        %2518 = vmatmul.mubr.f32.gmra.mrb[0].mxu0 %v2415
        %v2519 = vpop.f32.mrb[0].mxu0
        %v2520 = vadd.f32 0.0, %v2519
        %v2521 = vpop.f32.mrb[0].mxu0
        %v2522 = vadd.f32 0.0, %v2521
        %2523 = vmatprep.mubr.f32.mxu0 0.0
        %2524 = vmatmul.mubr.f32.gmra.mrb[0].mxu0 %v2418
        %v2525 = vpop.f32.mrb[0].mxu0
        %v2526 = vadd.f32 0.0, %v2525
        %v2527 = vpop.f32.mrb[0].mxu0
        %v2528 = vadd.f32 0.0, %v2527
        %2529 = vmatprep.mubr.f32.mxu0 0.0
        %2530 = vmatmul.mubr.f32.gmra.mrb[0].mxu0 %v2421
        %v2531 = vpop.f32.mrb[0].mxu0
        %v2532 = vadd.f32 0.0, %v2531
        %v2533 = vpop.f32.mrb[0].mxu0
        %v2534 = vadd.f32 0.0, %v2533
        %2535 = vdwg.mxu0
        %v2536 = vmul.f32 %v2490, 2.0
        %v2537 = vmul.f32 %v2492, 2.0
        %v2538 = vmul.f32 %v2496, 2.0
        %v2539 = vmul.f32 %v2498, 2.0
        %v2540 = vmul.f32 %v2502, 2.0
        %v2541 = vmul.f32 %v2504, 2.0
        %v2542 = vmul.f32 %v2508, 2.0
        %v2543 = vmul.f32 %v2510, 2.0
        %v2544 = vmul.f32 %v2514, 2.0
        %v2545 = vmul.f32 %v2516, 2.0
        %v2546 = vmul.f32 %v2520, 2.0
        %v2547 = vmul.f32 %v2522, 2.0
        %v2548 = vmul.f32 %v2526, 2.0
        %v2549 = vmul.f32 %v2528, 2.0
        %v2550 = vmul.f32 %v2532, 2.0
        %v2551 = vmul.f32 %v2534, 2.0
        %v2552 = vsub.f32 %v2377, %v2536
        %v2553 = vsub.f32 %v2377, %v2537
        %v2554 = vsub.f32 %v2380, %v2538
        %v2555 = vsub.f32 %v2380, %v2539
        %v2556 = vsub.f32 %v2383, %v2540
        %v2557 = vsub.f32 %v2383, %v2541
        %v2558 = vsub.f32 %v2386, %v2542
        %v2559 = vsub.f32 %v2386, %v2543
        %v2560 = vsub.f32 %v2389, %v2544
        %v2561 = vsub.f32 %v2389, %v2545
        %v2562 = vsub.f32 %v2392, %v2546
        %v2563 = vsub.f32 %v2392, %v2547
        %v2564 = vsub.f32 %v2395, %v2548
        %v2565 = vsub.f32 %v2395, %v2549
        %v2566 = vsub.f32 %v2398, %v2550
        %v2567 = vsub.f32 %v2398, %v2551
        %v2568 = vmin.f32 %v2552, %v2556
        %v2569 = vmin.f32 %v2554, %v2558
        %v2570 = vmin.f32 %v2568, %v2560
        %v2571 = vmin.f32 %v2569, %v2562
        %v2572 = vmin.f32 %v2570, %v2564
        %v2573 = vmin.f32 %v2571, %v2566
        %v2574 = vmin.f32 %v2572, %v2573
        %v2575 = vrot.slane %v2574, 4
        %v2576 = vmin.f32 %v2574, %v2575
        %v2577 = vrot.slane %v2576, 2
        %v2578 = vmin.f32 %v2576, %v2577
        %v2579 = vrot.slane %v2578, 1
        %v2580 = vmin.f32 %v2578, %v2579
        %v2581 = vmin.f32 %v2553, %v2557
        %v2582 = vmin.f32 %v2555, %v2559
        %v2583 = vmin.f32 %v2581, %v2561
        %v2584 = vmin.f32 %v2582, %v2563
        %v2585 = vmin.f32 %v2583, %v2565
        %v2586 = vmin.f32 %v2584, %v2567
        %v2587 = vmin.f32 %v2585, %v2586
        %v2588 = vrot.slane %v2587, 4
        %v2589 = vmin.f32 %v2587, %v2588
        %v2590 = vrot.slane %v2589, 2
        %v2591 = vmin.f32 %v2589, %v2590
        %v2592 = vrot.slane %v2591, 1
        %v2593 = vmin.f32 %v2591, %v2592
        %vm2594 = vcmp.le.f32.partialorder %v2552, %v2580
        %vm2595 = vcmp.le.f32.partialorder %v2553, %v2593
        %vm2596 = vcmp.le.f32.partialorder %v2554, %v2580
        %vm2597 = vcmp.le.f32.partialorder %v2555, %v2593
        %vm2598 = vcmp.le.f32.partialorder %v2556, %v2580
        %vm2599 = vcmp.le.f32.partialorder %v2557, %v2593
        %vm2600 = vcmp.le.f32.partialorder %v2558, %v2580
        %vm2601 = vcmp.le.f32.partialorder %v2559, %v2593
        %vm2602 = vcmp.le.f32.partialorder %v2560, %v2580
        %vm2603 = vcmp.le.f32.partialorder %v2561, %v2593
        %vm2604 = vcmp.le.f32.partialorder %v2562, %v2580
        %vm2605 = vcmp.le.f32.partialorder %v2563, %v2593
        %vm2606 = vcmp.le.f32.partialorder %v2564, %v2580
        %vm2607 = vcmp.le.f32.partialorder %v2565, %v2593
        %vm2608 = vcmp.le.f32.partialorder %v2566, %v2580
        %vm2609 = vcmp.le.f32.partialorder %v2567, %v2593
        %v2610 = vsel %vm2594, %v589, 64
        %v2611 = vsel %vm2595, %v589, 64
        %v2612 = vsel %vm2596, %v590, 64
        %v2613 = vsel %vm2597, %v590, 64
        %v2614 = vsel %vm2598, %v591, 64
        %v2615 = vsel %vm2599, %v591, 64
        %v2616 = vsel %vm2600, %v592, 64
        %v2617 = vsel %vm2601, %v592, 64
        %v2618 = vsel %vm2602, %v593, 64
        %v2619 = vsel %vm2603, %v593, 64
        %v2620 = vsel %vm2604, %v594, 64
        %v2621 = vsel %vm2605, %v594, 64
        %v2622 = vsel %vm2606, %v595, 64
        %v2623 = vsel %vm2607, %v595, 64
        %v2624 = vsel %vm2608, %v596, 64
        %v2625 = vsel %vm2609, %v596, 64
        %vm2626 = vcmp.lt.s32.totalorder %v2610, %v2614
        %v2627 = vsel %vm2626, %v2610, %v2614
        %vm2628 = vcmp.lt.s32.totalorder %v2612, %v2616
        %v2629 = vsel %vm2628, %v2612, %v2616
        %vm2630 = vcmp.lt.s32.totalorder %v2627, %v2618
        %v2631 = vsel %vm2630, %v2627, %v2618
        %vm2632 = vcmp.lt.s32.totalorder %v2629, %v2620
        %v2633 = vsel %vm2632, %v2629, %v2620
        %vm2634 = vcmp.lt.s32.totalorder %v2631, %v2622
        %v2635 = vsel %vm2634, %v2631, %v2622
        %vm2636 = vcmp.lt.s32.totalorder %v2633, %v2624
        %v2637 = vsel %vm2636, %v2633, %v2624
        %vm2638 = vcmp.lt.s32.totalorder %v2635, %v2637
        %v2639 = vsel %vm2638, %v2635, %v2637
        %v2640 = vrot.slane %v2639, 4
        %vm2641 = vcmp.lt.s32.totalorder %v2639, %v2640
        %v2642 = vsel %vm2641, %v2639, %v2640
        %v2643 = vrot.slane %v2642, 2
        %vm2644 = vcmp.lt.s32.totalorder %v2642, %v2643
        %v2645 = vsel %vm2644, %v2642, %v2643
        %v2646 = vrot.slane %v2645, 1
        %vm2647 = vcmp.lt.s32.totalorder %v2645, %v2646
        %v2648 = vsel %vm2647, %v2645, %v2646
        %vm2649 = vcmp.lt.s32.totalorder %v2611, %v2615
        %v2650 = vsel %vm2649, %v2611, %v2615
        %vm2651 = vcmp.lt.s32.totalorder %v2613, %v2617
        %v2652 = vsel %vm2651, %v2613, %v2617
        %vm2653 = vcmp.lt.s32.totalorder %v2650, %v2619
        %v2654 = vsel %vm2653, %v2650, %v2619
        %vm2655 = vcmp.lt.s32.totalorder %v2652, %v2621
        %v2656 = vsel %vm2655, %v2652, %v2621
        %vm2657 = vcmp.lt.s32.totalorder %v2654, %v2623
        %v2658 = vsel %vm2657, %v2654, %v2623
        %vm2659 = vcmp.lt.s32.totalorder %v2656, %v2625
        %v2660 = vsel %vm2659, %v2656, %v2625
        %vm2661 = vcmp.lt.s32.totalorder %v2658, %v2660
        %v2662 = vsel %vm2661, %v2658, %v2660
        %v2663 = vrot.slane %v2662, 4
        %vm2664 = vcmp.lt.s32.totalorder %v2662, %v2663
        %v2665 = vsel %vm2664, %v2662, %v2663
        %v2666 = vrot.slane %v2665, 2
        %vm2667 = vcmp.lt.s32.totalorder %v2665, %v2666
        %v2668 = vsel %vm2667, %v2665, %v2666
        %v2669 = vrot.slane %v2668, 1
        %vm2670 = vcmp.lt.s32.totalorder %v2668, %v2669
        %v2671 = vsel %vm2670, %v2668, %v2669
        %vm2672 = vcmp.eq.s32.totalorder %v589, %v2648
        %vm2673 = vcmp.eq.s32.totalorder %v589, %v2671
        %vm2674 = vcmp.eq.s32.totalorder %v590, %v2648
        %vm2675 = vcmp.eq.s32.totalorder %v590, %v2671
        %vm2676 = vcmp.eq.s32.totalorder %v591, %v2648
        %vm2677 = vcmp.eq.s32.totalorder %v591, %v2671
        %vm2678 = vcmp.eq.s32.totalorder %v592, %v2648
        %vm2679 = vcmp.eq.s32.totalorder %v592, %v2671
        %vm2680 = vcmp.eq.s32.totalorder %v593, %v2648
        %vm2681 = vcmp.eq.s32.totalorder %v593, %v2671
        %vm2682 = vcmp.eq.s32.totalorder %v594, %v2648
        %vm2683 = vcmp.eq.s32.totalorder %v594, %v2671
        %vm2684 = vcmp.eq.s32.totalorder %v595, %v2648
        %vm2685 = vcmp.eq.s32.totalorder %v595, %v2671
        %vm2686 = vcmp.eq.s32.totalorder %v596, %v2648
        %vm2687 = vcmp.eq.s32.totalorder %v596, %v2671
        %v2688 = vsel %vm2672, 1, 0
        %v2689 = vsel %vm2673, 1, 0
        %v2690 = vsel %vm2674, 1, 0
        %v2691 = vsel %vm2675, 1, 0
        %v2692 = vsel %vm2676, 1, 0
        %v2693 = vsel %vm2677, 1, 0
        %v2694 = vsel %vm2678, 1, 0
        %v2695 = vsel %vm2679, 1, 0
        %v2696 = vsel %vm2680, 1, 0
        %v2697 = vsel %vm2681, 1, 0
        %v2698 = vsel %vm2682, 1, 0
        %v2699 = vsel %vm2683, 1, 0
        %v2700 = vsel %vm2684, 1, 0
        %v2701 = vsel %vm2685, 1, 0
        %v2702 = vsel %vm2686, 1, 0
        %v2703 = vsel %vm2687, 1, 0
        %v2704 = vcvt.s32.f32 %v2688
        %v2705 = vcvt.s32.f32 %v2689
        %v2706 = vcvt.s32.f32 %v2690
        %v2707 = vcvt.s32.f32 %v2691
        %v2708 = vcvt.s32.f32 %v2692
        %v2709 = vcvt.s32.f32 %v2693
        %v2710 = vcvt.s32.f32 %v2694
        %v2711 = vcvt.s32.f32 %v2695
        %v2712 = vcvt.s32.f32 %v2696
        %v2713 = vcvt.s32.f32 %v2697
        %v2714 = vcvt.s32.f32 %v2698
        %v2715 = vcvt.s32.f32 %v2699
        %v2716 = vcvt.s32.f32 %v2700
        %v2717 = vcvt.s32.f32 %v2701
        %v2718 = vcvt.s32.f32 %v2702
        %v2719 = vcvt.s32.f32 %v2703
        %v2720 = vpack.c.bf16 %v2706, %v2704
        %v2721 = vpack.c.bf16 %v2707, %v2705
        %v2722 = vpack.c.bf16 %v2710, %v2708
        %v2723 = vpack.c.bf16 %v2711, %v2709
        %v2724 = vpack.c.bf16 %v2714, %v2712
        %v2725 = vpack.c.bf16 %v2715, %v2713
        %v2726 = vpack.c.bf16 %v2718, %v2716
        %v2727 = vpack.c.bf16 %v2719, %v2717
        %2728 = vmatprep.subr.bf16.mxu0 %v507
        %2729 = vmatpush1.bf16.xpose.msra.mxu0 %v506
        %2730 = vmatprep.subr.bf16.mxu0 1065369472
        %2731 = vmatpush1.bf16.xpose.msra.mxu0 1065369472
        %2732 = vmatprep.subr.bf16.mxu0 0
        %2733 = vmatpush1.bf16.xpose.msra.mxu0 0
        %2734 = vmatprep.subr.bf16.mxu0 0
        %2735 = vmatpush1.bf16.xpose.msra.mxu0 0
        %2736 = vmatprep.subr.bf16.mxu0 0
        %2737 = vmatpush1.bf16.xpose.msra.mxu0 0
        %2738 = vmatprep.subr.bf16.mxu0 0
        %2739 = vmatpush1.bf16.xpose.msra.mxu0 0
        %2740 = vmatprep.subr.bf16.mxu0 0
        %2741 = vmatpush1.bf16.xpose.msra.mxu0 0
        %2742 = vmatprep.subr.bf16.mxu0 0
        %2743 = vmatpush1.bf16.xpose.msra.mxu0 0
        %2744 = vmatprep.subr.bf16.mxu0 0
        %2745 = vmatpush1.bf16.xpose.msra.mxu0 0
        %2746 = vmatprep.subr.bf16.mxu0 0
        %2747 = vmatpush1.bf16.xpose.msra.mxu0 0
        %2748 = vmatprep.subr.bf16.mxu0 0
        %2749 = vmatpush1.bf16.xpose.msra.mxu0 0
        %2750 = vmatprep.subr.bf16.mxu0 0
        %2751 = vmatpush1.bf16.xpose.msra.mxu0 0
        %2752 = vmatprep.subr.bf16.mxu0 0
        %2753 = vmatpush1.bf16.xpose.msra.mxu0 0
        %2754 = vmatprep.subr.bf16.mxu0 0
        %2755 = vmatpush1.bf16.xpose.msra.mxu0 0
        %2756 = vmatprep.subr.bf16.mxu0 0
        %2757 = vmatpush1.bf16.xpose.msra.mxu0 0
        %2758 = vmatprep.subr.bf16.mxu0 0
        %2759 = vmatpush1.bf16.xpose.msra.mxu0 0
        %2760 = vmatprep.mubr.bf16.mxu0 %v2721
        %2761 = vmatmul.mubr.bf16.gmra.mrb[0].mxu0 %v2720
        %v2762 = vpop.f32.mrb[0].mxu0
        %v2763 = vadd.f32 0.0, %v2762
        %v2764 = vpop.f32.mrb[0].mxu0
        %v2765 = vpop.f32.mrb[0].mxu0
        %v2766 = vadd.f32 0.0, %v2765
        %v2767 = vpop.f32.mrb[0].mxu0
        %2768 = vmatprep.mubr.bf16.mxu0 %v2723
        %2769 = vmatmul.mubr.bf16.gmra.mrb[0].mxu0 %v2722
        %v2770 = vpop.f32.mrb[0].mxu0
        %v2771 = vadd.f32 0.0, %v2770
        %v2772 = vpop.f32.mrb[0].mxu0
        %v2773 = vpop.f32.mrb[0].mxu0
        %v2774 = vadd.f32 0.0, %v2773
        %v2775 = vpop.f32.mrb[0].mxu0
        %2776 = vmatprep.mubr.bf16.mxu0 %v2725
        %2777 = vmatmul.mubr.bf16.gmra.mrb[0].mxu0 %v2724
        %v2778 = vpop.f32.mrb[0].mxu0
        %v2779 = vadd.f32 0.0, %v2778
        %v2780 = vpop.f32.mrb[0].mxu0
        %v2781 = vpop.f32.mrb[0].mxu0
        %v2782 = vadd.f32 0.0, %v2781
        %v2783 = vpop.f32.mrb[0].mxu0
        %2784 = vmatprep.mubr.bf16.mxu0 %v2727
        %2785 = vmatmul.mubr.bf16.gmra.mrb[0].mxu0 %v2726
        %v2786 = vpop.f32.mrb[0].mxu0
        %v2787 = vadd.f32 0.0, %v2786
        %v2788 = vpop.f32.mrb[0].mxu0
        %v2789 = vpop.f32.mrb[0].mxu0
        %v2790 = vadd.f32 0.0, %v2789
        %v2791 = vpop.f32.mrb[0].mxu0
        %2792 = vdwg.mxu0
        %vm2793 = vcmp.gt.f32.partialorder %v2763, 0.5
        %vm2794 = vcmp.gt.f32.partialorder %v2766, 0.5
        %vm2795 = vcmp.gt.f32.partialorder %v2771, 0.5
        %vm2796 = vcmp.gt.f32.partialorder %v2774, 0.5
        %vm2797 = vcmp.gt.f32.partialorder %v2779, 0.5
        %vm2798 = vcmp.gt.f32.partialorder %v2782, 0.5
        %vm2799 = vcmp.gt.f32.partialorder %v2787, 0.5
        %vm2800 = vcmp.gt.f32.partialorder %v2790, 0.5
        %v2801 = vmax.f32 %v2763, 1.0
        %v2802 = vmax.f32 %v2766, 1.0
        %v2803 = vmax.f32 %v2771, 1.0
        %v2804 = vmax.f32 %v2774, 1.0
        %v2805 = vmax.f32 %v2779, 1.0
        %v2806 = vmax.f32 %v2782, 1.0
        %v2807 = vmax.f32 %v2787, 1.0
        %v2808 = vmax.f32 %v2790, 1.0
        %2810 = vset.pattern.permute.xlu0 16
        %2811 = vperm.xlu0 %2810, %v2801
        %v2812 = vpop.permute.xlu0 %2811
        %2815 = vset.pattern.permute.xlu0 16
        %2816 = vperm.xlu0 %2815, %v2802
        %v2817 = vpop.permute.xlu0 %2816
        %2820 = vset.pattern.permute.xlu0 16
        %2821 = vperm.xlu0 %2820, %v2803
        %v2822 = vpop.permute.xlu0 %2821
        %2825 = vset.pattern.permute.xlu0 16
        %2826 = vperm.xlu0 %2825, %v2804
        %v2827 = vpop.permute.xlu0 %2826
        %2830 = vset.pattern.permute.xlu0 16
        %2831 = vperm.xlu0 %2830, %v2805
        %v2832 = vpop.permute.xlu0 %2831
        %2835 = vset.pattern.permute.xlu0 16
        %2836 = vperm.xlu0 %2835, %v2806
        %v2837 = vpop.permute.xlu0 %2836
        %2840 = vset.pattern.permute.xlu0 16
        %2841 = vperm.xlu0 %2840, %v2807
        %v2842 = vpop.permute.xlu0 %2841
        %2845 = vset.pattern.permute.xlu0 16
        %2846 = vperm.xlu0 %2845, %v2808
        %v2847 = vpop.permute.xlu0 %2846
        %v2849 = vrcp.pop %v2812
        %v2850 = vmul.f32 %v2763, %v2849
        %v2851 = vrcp.pop %v2817
        %v2852 = vmul.f32 %v2766, %v2851
        %v2853 = vrcp.pop %v2822
        %v2854 = vmul.f32 %v2771, %v2853
        %v2855 = vrcp.pop %v2827
        %v2856 = vmul.f32 %v2774, %v2855
        %v2857 = vrcp.pop %v2832
        %v2858 = vmul.f32 %v2779, %v2857
        %v2859 = vrcp.pop %v2837
        %v2860 = vmul.f32 %v2782, %v2859
        %v2861 = vrcp.pop %v2842
        %v2862 = vmul.f32 %v2787, %v2861
        %v2863 = vrcp.pop %v2847
        %v2864 = vmul.f32 %v2790, %v2863
        %v2865 = vsel %vm2793, 1, 0
        %v2866 = vsel %vm2794, 1, 0
        %v2867 = vsel %vm2795, 1, 0
        %v2868 = vsel %vm2796, 1, 0
        %v2869 = vsel %vm2797, 1, 0
        %v2870 = vsel %vm2798, 1, 0
        %v2871 = vsel %vm2799, 1, 0
        %v2872 = vsel %vm2800, 1, 0
        %2873 = vset.pattern.permute.xlu0 16
        %2874 = vperm.xlu0 %2873, %v2865
        %v2875 = vpop.permute.xlu0 %2874
        %2876 = vset.pattern.permute.xlu0 16
        %2877 = vperm.xlu0 %2876, %v2866
        %v2878 = vpop.permute.xlu0 %2877
        %2879 = vset.pattern.permute.xlu0 16
        %2880 = vperm.xlu0 %2879, %v2867
        %v2881 = vpop.permute.xlu0 %2880
        %2882 = vset.pattern.permute.xlu0 16
        %2883 = vperm.xlu0 %2882, %v2868
        %v2884 = vpop.permute.xlu0 %2883
        %2885 = vset.pattern.permute.xlu0 16
        %2886 = vperm.xlu0 %2885, %v2869
        %v2887 = vpop.permute.xlu0 %2886
        %2888 = vset.pattern.permute.xlu0 16
        %2889 = vperm.xlu0 %2888, %v2870
        %v2890 = vpop.permute.xlu0 %2889
        %2891 = vset.pattern.permute.xlu0 16
        %2892 = vperm.xlu0 %2891, %v2871
        %v2893 = vpop.permute.xlu0 %2892
        %2894 = vset.pattern.permute.xlu0 16
        %2895 = vperm.xlu0 %2894, %v2872
        %v2896 = vpop.permute.xlu0 %2895
        %vm2897 = vcmp.eq.s32.totalorder %v2875, 1
        %vm2898 = vcmp.eq.s32.totalorder %v2878, 1
        %vm2899 = vcmp.eq.s32.totalorder %v2881, 1
        %vm2900 = vcmp.eq.s32.totalorder %v2884, 1
        %vm2901 = vcmp.eq.s32.totalorder %v2887, 1
        %vm2902 = vcmp.eq.s32.totalorder %v2890, 1
        %vm2903 = vcmp.eq.s32.totalorder %v2893, 1
        %vm2904 = vcmp.eq.s32.totalorder %v2896, 1
        %v2905 = vsel %vm2897, %v2850, %v2359
        %v2906 = vsel %vm2898, %v2852, %v2360
        %v2907 = vsel %vm2899, %v2854, %v2361
        %v2908 = vsel %vm2900, %v2856, %v2362
        %v2909 = vsel %vm2901, %v2858, %v2363
        %v2910 = vsel %vm2902, %v2860, %v2364
        %v2911 = vsel %vm2903, %v2862, %v2365
        %v2912 = vsel %vm2904, %v2864, %v2366
        %v2913 = vmul.f32 %v2905, %v2905
        %v2914 = vmul.f32 %v2906, %v2906
        %v2915 = vmul.f32 %v2907, %v2907
        %v2916 = vmul.f32 %v2908, %v2908
        %v2917 = vmul.f32 %v2909, %v2909
        %v2918 = vmul.f32 %v2910, %v2910
        %v2919 = vmul.f32 %v2911, %v2911
        %v2920 = vmul.f32 %v2912, %v2912
        %v2921 = vsel %vm586, %v2913, 0.0
        %2922 = vadd.xlane.f32.xlu0 %v2921
        %v2923 = vpop.xlane.xlu0 %2922
        %v2924 = vsel %vm586, %v2914, 0.0
        %2925 = vadd.xlane.f32.xlu0 %v2924
        %v2926 = vpop.xlane.xlu0 %2925
        %v2927 = vsel %vm586, %v2915, 0.0
        %2928 = vadd.xlane.f32.xlu0 %v2927
        %v2929 = vpop.xlane.xlu0 %2928
        %v2930 = vsel %vm586, %v2916, 0.0
        %2931 = vadd.xlane.f32.xlu0 %v2930
        %v2932 = vpop.xlane.xlu0 %2931
        %v2933 = vsel %vm586, %v2917, 0.0
        %2934 = vadd.xlane.f32.xlu0 %v2933
        %v2935 = vpop.xlane.xlu0 %2934
        %v2936 = vsel %vm586, %v2918, 0.0
        %2937 = vadd.xlane.f32.xlu0 %v2936
        %v2938 = vpop.xlane.xlu0 %2937
        %v2939 = vsel %vm586, %v2919, 0.0
        %2940 = vadd.xlane.f32.xlu0 %v2939
        %v2941 = vpop.xlane.xlu0 %2940
        %v2942 = vsel %vm586, %v2920, 0.0
        %2943 = vadd.xlane.f32.xlu0 %v2942
        %v2944 = vpop.xlane.xlu0 %2943
        %v2946 = vsel %vm586, %v2905, 0
        %v2949 = vsel %vm586, %v2906, 0
        %v2952 = vsel %vm586, %v2907, 0
        %v2955 = vsel %vm586, %v2908, 0
        %v2958 = vsel %vm586, %v2909, 0
        %v2961 = vsel %vm586, %v2910, 0
        %v2964 = vsel %vm586, %v2911, 0
        %v2967 = vsel %vm586, %v2912, 0
        %2969 = vmatprep.subr.mxu0 %v488
        %2970 = vmatpush1.msra.mxu0 %v486
        %2971 = vmatprep.subr.mxu0 %v492
        %2972 = vmatpush1.msra.mxu0 %v490
        %2973 = vmatprep.subr.mxu0 0.0
        %2974 = vmatpush1.msra.mxu0 0.0
        %2975 = vmatprep.subr.mxu0 0.0
        %2976 = vmatpush1.msra.mxu0 0.0
        %2977 = vmatprep.subr.mxu0 0.0
        %2978 = vmatpush1.msra.mxu0 0.0
        %2979 = vmatprep.subr.mxu0 0.0
        %2980 = vmatpush1.msra.mxu0 0.0
        %2981 = vmatprep.subr.mxu0 0.0
        %2982 = vmatpush1.msra.mxu0 0.0
        %2983 = vmatprep.subr.mxu0 0.0
        %2984 = vmatpush1.msra.mxu0 0.0
        %2985 = vmatprep.subr.mxu0 0.0
        %2986 = vmatpush1.msra.mxu0 0.0
        %2987 = vmatprep.subr.mxu0 0.0
        %2988 = vmatpush1.msra.mxu0 0.0
        %2989 = vmatprep.subr.mxu0 0.0
        %2990 = vmatpush1.msra.mxu0 0.0
        %2991 = vmatprep.subr.mxu0 0.0
        %2992 = vmatpush1.msra.mxu0 0.0
        %2993 = vmatprep.subr.mxu0 0.0
        %2994 = vmatpush1.msra.mxu0 0.0
        %2995 = vmatprep.subr.mxu0 0.0
        %2996 = vmatpush1.msra.mxu0 0.0
        %2997 = vmatprep.subr.mxu0 0.0
        %2998 = vmatpush1.msra.mxu0 0.0
        %2999 = vmatprep.subr.mxu0 0.0
        %3000 = vmatpush1.msra.mxu0 0.0
        %3001 = vmatprep.subr.mxu0 0.0
        %3002 = vmatpush1.msra.mxu0 0.0
        %3003 = vmatprep.subr.mxu0 0.0
        %3004 = vmatpush1.msra.mxu0 0.0
        %3005 = vmatprep.subr.mxu0 0.0
        %3006 = vmatpush1.msra.mxu0 0.0
        %3007 = vmatprep.subr.mxu0 0.0
        %3008 = vmatpush1.msra.mxu0 0.0
        %3009 = vmatprep.subr.mxu0 0.0
        %3010 = vmatpush1.msra.mxu0 0.0
        %3011 = vmatprep.subr.mxu0 0.0
        %3012 = vmatpush1.msra.mxu0 0.0
        %3013 = vmatprep.subr.mxu0 0.0
        %3014 = vmatpush1.msra.mxu0 0.0
        %3015 = vmatprep.subr.mxu0 0.0
        %3016 = vmatpush1.msra.mxu0 0.0
        %3017 = vmatprep.subr.mxu0 0.0
        %3018 = vmatpush1.msra.mxu0 0.0
        %3019 = vmatprep.subr.mxu0 0.0
        %3020 = vmatpush1.msra.mxu0 0.0
        %3021 = vmatprep.subr.mxu0 0.0
        %3022 = vmatpush1.msra.mxu0 0.0
        %3023 = vmatprep.subr.mxu0 0.0
        %3024 = vmatpush1.msra.mxu0 0.0
        %3025 = vmatprep.subr.mxu0 0.0
        %3026 = vmatpush1.msra.mxu0 0.0
        %3027 = vmatprep.subr.mxu0 0.0
        %3028 = vmatpush1.msra.mxu0 0.0
        %3029 = vmatprep.subr.mxu0 0.0
        %3030 = vmatpush1.msra.mxu0 0.0
        %3031 = vmatprep.subr.mxu0 0.0
        %3032 = vmatpush1.msra.mxu0 0.0
        %3033 = vmatprep.mubr.f32.mxu0 0.0
        %3034 = vmatmul.mubr.f32.gmra.mrb[0].mxu0 %v2946
        %v3035 = vpop.f32.mrb[0].mxu0
        %v3036 = vadd.f32 0.0, %v3035
        %v3037 = vpop.f32.mrb[0].mxu0
        %v3038 = vadd.f32 0.0, %v3037
        %3039 = vmatprep.mubr.f32.mxu0 0.0
        %3040 = vmatmul.mubr.f32.gmra.mrb[0].mxu0 %v2949
        %v3041 = vpop.f32.mrb[0].mxu0
        %v3042 = vadd.f32 0.0, %v3041
        %v3043 = vpop.f32.mrb[0].mxu0
        %v3044 = vadd.f32 0.0, %v3043
        %3045 = vmatprep.mubr.f32.mxu0 0.0
        %3046 = vmatmul.mubr.f32.gmra.mrb[0].mxu0 %v2952
        %v3047 = vpop.f32.mrb[0].mxu0
        %v3048 = vadd.f32 0.0, %v3047
        %v3049 = vpop.f32.mrb[0].mxu0
        %v3050 = vadd.f32 0.0, %v3049
        %3051 = vmatprep.mubr.f32.mxu0 0.0
        %3052 = vmatmul.mubr.f32.gmra.mrb[0].mxu0 %v2955
        %v3053 = vpop.f32.mrb[0].mxu0
        %v3054 = vadd.f32 0.0, %v3053
        %v3055 = vpop.f32.mrb[0].mxu0
        %v3056 = vadd.f32 0.0, %v3055
        %3057 = vmatprep.mubr.f32.mxu0 0.0
        %3058 = vmatmul.mubr.f32.gmra.mrb[0].mxu0 %v2958
        %v3059 = vpop.f32.mrb[0].mxu0
        %v3060 = vadd.f32 0.0, %v3059
        %v3061 = vpop.f32.mrb[0].mxu0
        %v3062 = vadd.f32 0.0, %v3061
        %3063 = vmatprep.mubr.f32.mxu0 0.0
        %3064 = vmatmul.mubr.f32.gmra.mrb[0].mxu0 %v2961
        %v3065 = vpop.f32.mrb[0].mxu0
        %v3066 = vadd.f32 0.0, %v3065
        %v3067 = vpop.f32.mrb[0].mxu0
        %v3068 = vadd.f32 0.0, %v3067
        %3069 = vmatprep.mubr.f32.mxu0 0.0
        %3070 = vmatmul.mubr.f32.gmra.mrb[0].mxu0 %v2964
        %v3071 = vpop.f32.mrb[0].mxu0
        %v3072 = vadd.f32 0.0, %v3071
        %v3073 = vpop.f32.mrb[0].mxu0
        %v3074 = vadd.f32 0.0, %v3073
        %3075 = vmatprep.mubr.f32.mxu0 0.0
        %3076 = vmatmul.mubr.f32.gmra.mrb[0].mxu0 %v2967
        %v3077 = vpop.f32.mrb[0].mxu0
        %v3078 = vadd.f32 0.0, %v3077
        %v3079 = vpop.f32.mrb[0].mxu0
        %v3080 = vadd.f32 0.0, %v3079
        %3081 = vdwg.mxu0
        %v3082 = vmul.f32 %v3036, 2.0
        %v3083 = vmul.f32 %v3038, 2.0
        %v3084 = vmul.f32 %v3042, 2.0
        %v3085 = vmul.f32 %v3044, 2.0
        %v3086 = vmul.f32 %v3048, 2.0
        %v3087 = vmul.f32 %v3050, 2.0
        %v3088 = vmul.f32 %v3054, 2.0
        %v3089 = vmul.f32 %v3056, 2.0
        %v3090 = vmul.f32 %v3060, 2.0
        %v3091 = vmul.f32 %v3062, 2.0
        %v3092 = vmul.f32 %v3066, 2.0
        %v3093 = vmul.f32 %v3068, 2.0
        %v3094 = vmul.f32 %v3072, 2.0
        %v3095 = vmul.f32 %v3074, 2.0
        %v3096 = vmul.f32 %v3078, 2.0
        %v3097 = vmul.f32 %v3080, 2.0
        %v3098 = vsub.f32 %v2923, %v3082
        %v3099 = vsub.f32 %v2923, %v3083
        %v3100 = vsub.f32 %v2926, %v3084
        %v3101 = vsub.f32 %v2926, %v3085
        %v3102 = vsub.f32 %v2929, %v3086
        %v3103 = vsub.f32 %v2929, %v3087
        %v3104 = vsub.f32 %v2932, %v3088
        %v3105 = vsub.f32 %v2932, %v3089
        %v3106 = vsub.f32 %v2935, %v3090
        %v3107 = vsub.f32 %v2935, %v3091
        %v3108 = vsub.f32 %v2938, %v3092
        %v3109 = vsub.f32 %v2938, %v3093
        %v3110 = vsub.f32 %v2941, %v3094
        %v3111 = vsub.f32 %v2941, %v3095
        %v3112 = vsub.f32 %v2944, %v3096
        %v3113 = vsub.f32 %v2944, %v3097
        %v3114 = vmin.f32 %v3098, %v3102
        %v3115 = vmin.f32 %v3100, %v3104
        %v3116 = vmin.f32 %v3114, %v3106
        %v3117 = vmin.f32 %v3115, %v3108
        %v3118 = vmin.f32 %v3116, %v3110
        %v3119 = vmin.f32 %v3117, %v3112
        %v3120 = vmin.f32 %v3118, %v3119
        %v3121 = vrot.slane %v3120, 4
        %v3122 = vmin.f32 %v3120, %v3121
        %v3123 = vrot.slane %v3122, 2
        %v3124 = vmin.f32 %v3122, %v3123
        %v3125 = vrot.slane %v3124, 1
        %v3126 = vmin.f32 %v3124, %v3125
        %v3127 = vmin.f32 %v3099, %v3103
        %v3128 = vmin.f32 %v3101, %v3105
        %v3129 = vmin.f32 %v3127, %v3107
        %v3130 = vmin.f32 %v3128, %v3109
        %v3131 = vmin.f32 %v3129, %v3111
        %v3132 = vmin.f32 %v3130, %v3113
        %v3133 = vmin.f32 %v3131, %v3132
        %v3134 = vrot.slane %v3133, 4
        %v3135 = vmin.f32 %v3133, %v3134
        %v3136 = vrot.slane %v3135, 2
        %v3137 = vmin.f32 %v3135, %v3136
        %v3138 = vrot.slane %v3137, 1
        %v3139 = vmin.f32 %v3137, %v3138
        %vm3140 = vcmp.le.f32.partialorder %v3098, %v3126
        %vm3141 = vcmp.le.f32.partialorder %v3099, %v3139
        %vm3142 = vcmp.le.f32.partialorder %v3100, %v3126
        %vm3143 = vcmp.le.f32.partialorder %v3101, %v3139
        %vm3144 = vcmp.le.f32.partialorder %v3102, %v3126
        %vm3145 = vcmp.le.f32.partialorder %v3103, %v3139
        %vm3146 = vcmp.le.f32.partialorder %v3104, %v3126
        %vm3147 = vcmp.le.f32.partialorder %v3105, %v3139
        %vm3148 = vcmp.le.f32.partialorder %v3106, %v3126
        %vm3149 = vcmp.le.f32.partialorder %v3107, %v3139
        %vm3150 = vcmp.le.f32.partialorder %v3108, %v3126
        %vm3151 = vcmp.le.f32.partialorder %v3109, %v3139
        %vm3152 = vcmp.le.f32.partialorder %v3110, %v3126
        %vm3153 = vcmp.le.f32.partialorder %v3111, %v3139
        %vm3154 = vcmp.le.f32.partialorder %v3112, %v3126
        %vm3155 = vcmp.le.f32.partialorder %v3113, %v3139
        %v3156 = vsel %vm3140, %v589, 64
        %v3157 = vsel %vm3141, %v589, 64
        %v3158 = vsel %vm3142, %v590, 64
        %v3159 = vsel %vm3143, %v590, 64
        %v3160 = vsel %vm3144, %v591, 64
        %v3161 = vsel %vm3145, %v591, 64
        %v3162 = vsel %vm3146, %v592, 64
        %v3163 = vsel %vm3147, %v592, 64
        %v3164 = vsel %vm3148, %v593, 64
        %v3165 = vsel %vm3149, %v593, 64
        %v3166 = vsel %vm3150, %v594, 64
        %v3167 = vsel %vm3151, %v594, 64
        %v3168 = vsel %vm3152, %v595, 64
        %v3169 = vsel %vm3153, %v595, 64
        %v3170 = vsel %vm3154, %v596, 64
        %v3171 = vsel %vm3155, %v596, 64
        %vm3172 = vcmp.lt.s32.totalorder %v3156, %v3160
        %v3173 = vsel %vm3172, %v3156, %v3160
        %vm3174 = vcmp.lt.s32.totalorder %v3158, %v3162
        %v3175 = vsel %vm3174, %v3158, %v3162
        %vm3176 = vcmp.lt.s32.totalorder %v3173, %v3164
        %v3177 = vsel %vm3176, %v3173, %v3164
        %vm3178 = vcmp.lt.s32.totalorder %v3175, %v3166
        %v3179 = vsel %vm3178, %v3175, %v3166
        %vm3180 = vcmp.lt.s32.totalorder %v3177, %v3168
        %v3181 = vsel %vm3180, %v3177, %v3168
        %vm3182 = vcmp.lt.s32.totalorder %v3179, %v3170
        %v3183 = vsel %vm3182, %v3179, %v3170
        %vm3184 = vcmp.lt.s32.totalorder %v3181, %v3183
        %v3185 = vsel %vm3184, %v3181, %v3183
        %v3186 = vrot.slane %v3185, 4
        %vm3187 = vcmp.lt.s32.totalorder %v3185, %v3186
        %v3188 = vsel %vm3187, %v3185, %v3186
        %v3189 = vrot.slane %v3188, 2
        %vm3190 = vcmp.lt.s32.totalorder %v3188, %v3189
        %v3191 = vsel %vm3190, %v3188, %v3189
        %v3192 = vrot.slane %v3191, 1
        %vm3193 = vcmp.lt.s32.totalorder %v3191, %v3192
        %v3194 = vsel %vm3193, %v3191, %v3192
        %vm3195 = vcmp.lt.s32.totalorder %v3157, %v3161
        %v3196 = vsel %vm3195, %v3157, %v3161
        %vm3197 = vcmp.lt.s32.totalorder %v3159, %v3163
        %v3198 = vsel %vm3197, %v3159, %v3163
        %vm3199 = vcmp.lt.s32.totalorder %v3196, %v3165
        %v3200 = vsel %vm3199, %v3196, %v3165
        %vm3201 = vcmp.lt.s32.totalorder %v3198, %v3167
        %v3202 = vsel %vm3201, %v3198, %v3167
        %vm3203 = vcmp.lt.s32.totalorder %v3200, %v3169
        %v3204 = vsel %vm3203, %v3200, %v3169
        %vm3205 = vcmp.lt.s32.totalorder %v3202, %v3171
        %v3206 = vsel %vm3205, %v3202, %v3171
        %vm3207 = vcmp.lt.s32.totalorder %v3204, %v3206
        %v3208 = vsel %vm3207, %v3204, %v3206
        %v3209 = vrot.slane %v3208, 4
        %vm3210 = vcmp.lt.s32.totalorder %v3208, %v3209
        %v3211 = vsel %vm3210, %v3208, %v3209
        %v3212 = vrot.slane %v3211, 2
        %vm3213 = vcmp.lt.s32.totalorder %v3211, %v3212
        %v3214 = vsel %vm3213, %v3211, %v3212
        %v3215 = vrot.slane %v3214, 1
        %vm3216 = vcmp.lt.s32.totalorder %v3214, %v3215
        %v3217 = vsel %vm3216, %v3214, %v3215
        %vm3218 = vcmp.eq.s32.totalorder %v589, %v3194
        %vm3219 = vcmp.eq.s32.totalorder %v589, %v3217
        %vm3220 = vcmp.eq.s32.totalorder %v590, %v3194
        %vm3221 = vcmp.eq.s32.totalorder %v590, %v3217
        %vm3222 = vcmp.eq.s32.totalorder %v591, %v3194
        %vm3223 = vcmp.eq.s32.totalorder %v591, %v3217
        %vm3224 = vcmp.eq.s32.totalorder %v592, %v3194
        %vm3225 = vcmp.eq.s32.totalorder %v592, %v3217
        %vm3226 = vcmp.eq.s32.totalorder %v593, %v3194
        %vm3227 = vcmp.eq.s32.totalorder %v593, %v3217
        %vm3228 = vcmp.eq.s32.totalorder %v594, %v3194
        %vm3229 = vcmp.eq.s32.totalorder %v594, %v3217
        %vm3230 = vcmp.eq.s32.totalorder %v595, %v3194
        %vm3231 = vcmp.eq.s32.totalorder %v595, %v3217
        %vm3232 = vcmp.eq.s32.totalorder %v596, %v3194
        %vm3233 = vcmp.eq.s32.totalorder %v596, %v3217
        %v3234 = vsel %vm3218, 1, 0
        %v3235 = vsel %vm3219, 1, 0
        %v3236 = vsel %vm3220, 1, 0
        %v3237 = vsel %vm3221, 1, 0
        %v3238 = vsel %vm3222, 1, 0
        %v3239 = vsel %vm3223, 1, 0
        %v3240 = vsel %vm3224, 1, 0
        %v3241 = vsel %vm3225, 1, 0
        %v3242 = vsel %vm3226, 1, 0
        %v3243 = vsel %vm3227, 1, 0
        %v3244 = vsel %vm3228, 1, 0
        %v3245 = vsel %vm3229, 1, 0
        %v3246 = vsel %vm3230, 1, 0
        %v3247 = vsel %vm3231, 1, 0
        %v3248 = vsel %vm3232, 1, 0
        %v3249 = vsel %vm3233, 1, 0
        %v3250 = vcvt.s32.f32 %v3234
        %v3251 = vcvt.s32.f32 %v3235
        %v3252 = vcvt.s32.f32 %v3236
        %v3253 = vcvt.s32.f32 %v3237
        %v3254 = vcvt.s32.f32 %v3238
        %v3255 = vcvt.s32.f32 %v3239
        %v3256 = vcvt.s32.f32 %v3240
        %v3257 = vcvt.s32.f32 %v3241
        %v3258 = vcvt.s32.f32 %v3242
        %v3259 = vcvt.s32.f32 %v3243
        %v3260 = vcvt.s32.f32 %v3244
        %v3261 = vcvt.s32.f32 %v3245
        %v3262 = vcvt.s32.f32 %v3246
        %v3263 = vcvt.s32.f32 %v3247
        %v3264 = vcvt.s32.f32 %v3248
        %v3265 = vcvt.s32.f32 %v3249
        %v3266 = vpack.c.bf16 %v3252, %v3250
        %v3267 = vpack.c.bf16 %v3253, %v3251
        %v3268 = vpack.c.bf16 %v3256, %v3254
        %v3269 = vpack.c.bf16 %v3257, %v3255
        %v3270 = vpack.c.bf16 %v3260, %v3258
        %v3271 = vpack.c.bf16 %v3261, %v3259
        %v3272 = vpack.c.bf16 %v3264, %v3262
        %v3273 = vpack.c.bf16 %v3265, %v3263
        %3274 = vmatprep.subr.bf16.mxu0 %v507
        %3275 = vmatpush1.bf16.xpose.msra.mxu0 %v506
        %3276 = vmatprep.subr.bf16.mxu0 1065369472
        %3277 = vmatpush1.bf16.xpose.msra.mxu0 1065369472
        %3278 = vmatprep.subr.bf16.mxu0 0
        %3279 = vmatpush1.bf16.xpose.msra.mxu0 0
        %3280 = vmatprep.subr.bf16.mxu0 0
        %3281 = vmatpush1.bf16.xpose.msra.mxu0 0
        %3282 = vmatprep.subr.bf16.mxu0 0
        %3283 = vmatpush1.bf16.xpose.msra.mxu0 0
        %3284 = vmatprep.subr.bf16.mxu0 0
        %3285 = vmatpush1.bf16.xpose.msra.mxu0 0
        %3286 = vmatprep.subr.bf16.mxu0 0
        %3287 = vmatpush1.bf16.xpose.msra.mxu0 0
        %3288 = vmatprep.subr.bf16.mxu0 0
        %3289 = vmatpush1.bf16.xpose.msra.mxu0 0
        %3290 = vmatprep.subr.bf16.mxu0 0
        %3291 = vmatpush1.bf16.xpose.msra.mxu0 0
        %3292 = vmatprep.subr.bf16.mxu0 0
        %3293 = vmatpush1.bf16.xpose.msra.mxu0 0
        %3294 = vmatprep.subr.bf16.mxu0 0
        %3295 = vmatpush1.bf16.xpose.msra.mxu0 0
        %3296 = vmatprep.subr.bf16.mxu0 0
        %3297 = vmatpush1.bf16.xpose.msra.mxu0 0
        %3298 = vmatprep.subr.bf16.mxu0 0
        %3299 = vmatpush1.bf16.xpose.msra.mxu0 0
        %3300 = vmatprep.subr.bf16.mxu0 0
        %3301 = vmatpush1.bf16.xpose.msra.mxu0 0
        %3302 = vmatprep.subr.bf16.mxu0 0
        %3303 = vmatpush1.bf16.xpose.msra.mxu0 0
        %3304 = vmatprep.subr.bf16.mxu0 0
        %3305 = vmatpush1.bf16.xpose.msra.mxu0 0
        %3306 = vmatprep.mubr.bf16.mxu0 %v3267
        %3307 = vmatmul.mubr.bf16.gmra.mrb[0].mxu0 %v3266
        %v3308 = vpop.f32.mrb[0].mxu0
        %v3309 = vadd.f32 0.0, %v3308
        %v3310 = vpop.f32.mrb[0].mxu0
        %v3311 = vpop.f32.mrb[0].mxu0
        %v3312 = vadd.f32 0.0, %v3311
        %v3313 = vpop.f32.mrb[0].mxu0
        %3314 = vmatprep.mubr.bf16.mxu0 %v3269
        %3315 = vmatmul.mubr.bf16.gmra.mrb[0].mxu0 %v3268
        %v3316 = vpop.f32.mrb[0].mxu0
        %v3317 = vadd.f32 0.0, %v3316
        %v3318 = vpop.f32.mrb[0].mxu0
        %v3319 = vpop.f32.mrb[0].mxu0
        %v3320 = vadd.f32 0.0, %v3319
        %v3321 = vpop.f32.mrb[0].mxu0
        %3322 = vmatprep.mubr.bf16.mxu0 %v3271
        %3323 = vmatmul.mubr.bf16.gmra.mrb[0].mxu0 %v3270
        %v3324 = vpop.f32.mrb[0].mxu0
        %v3325 = vadd.f32 0.0, %v3324
        %v3326 = vpop.f32.mrb[0].mxu0
        %v3327 = vpop.f32.mrb[0].mxu0
        %v3328 = vadd.f32 0.0, %v3327
        %v3329 = vpop.f32.mrb[0].mxu0
        %3330 = vmatprep.mubr.bf16.mxu0 %v3273
        %3331 = vmatmul.mubr.bf16.gmra.mrb[0].mxu0 %v3272
        %v3332 = vpop.f32.mrb[0].mxu0
        %v3333 = vadd.f32 0.0, %v3332
        %v3334 = vpop.f32.mrb[0].mxu0
        %v3335 = vpop.f32.mrb[0].mxu0
        %v3336 = vadd.f32 0.0, %v3335
        %v3337 = vpop.f32.mrb[0].mxu0
        %3338 = vdwg.mxu0
        %vm3339 = vcmp.gt.f32.partialorder %v3309, 0.5
        %vm3340 = vcmp.gt.f32.partialorder %v3312, 0.5
        %vm3341 = vcmp.gt.f32.partialorder %v3317, 0.5
        %vm3342 = vcmp.gt.f32.partialorder %v3320, 0.5
        %vm3343 = vcmp.gt.f32.partialorder %v3325, 0.5
        %vm3344 = vcmp.gt.f32.partialorder %v3328, 0.5
        %vm3345 = vcmp.gt.f32.partialorder %v3333, 0.5
        %vm3346 = vcmp.gt.f32.partialorder %v3336, 0.5
        %v3347 = vmax.f32 %v3309, 1.0
        %v3348 = vmax.f32 %v3312, 1.0
        %v3349 = vmax.f32 %v3317, 1.0
        %v3350 = vmax.f32 %v3320, 1.0
        %v3351 = vmax.f32 %v3325, 1.0
        %v3352 = vmax.f32 %v3328, 1.0
        %v3353 = vmax.f32 %v3333, 1.0
        %v3354 = vmax.f32 %v3336, 1.0
        %3356 = vset.pattern.permute.xlu0 16
        %3357 = vperm.xlu0 %3356, %v3347
        %v3358 = vpop.permute.xlu0 %3357
        %3361 = vset.pattern.permute.xlu0 16
        %3362 = vperm.xlu0 %3361, %v3348
        %v3363 = vpop.permute.xlu0 %3362
        %3366 = vset.pattern.permute.xlu0 16
        %3367 = vperm.xlu0 %3366, %v3349
        %v3368 = vpop.permute.xlu0 %3367
        %3371 = vset.pattern.permute.xlu0 16
        %3372 = vperm.xlu0 %3371, %v3350
        %v3373 = vpop.permute.xlu0 %3372
        %3376 = vset.pattern.permute.xlu0 16
        %3377 = vperm.xlu0 %3376, %v3351
        %v3378 = vpop.permute.xlu0 %3377
        %3381 = vset.pattern.permute.xlu0 16
        %3382 = vperm.xlu0 %3381, %v3352
        %v3383 = vpop.permute.xlu0 %3382
        %3386 = vset.pattern.permute.xlu0 16
        %3387 = vperm.xlu0 %3386, %v3353
        %v3388 = vpop.permute.xlu0 %3387
        %3391 = vset.pattern.permute.xlu0 16
        %3392 = vperm.xlu0 %3391, %v3354
        %v3393 = vpop.permute.xlu0 %3392
        %v3395 = vrcp.pop %v3358
        %v3396 = vmul.f32 %v3309, %v3395
        %v3397 = vrcp.pop %v3363
        %v3398 = vmul.f32 %v3312, %v3397
        %v3399 = vrcp.pop %v3368
        %v3400 = vmul.f32 %v3317, %v3399
        %v3401 = vrcp.pop %v3373
        %v3402 = vmul.f32 %v3320, %v3401
        %v3403 = vrcp.pop %v3378
        %v3404 = vmul.f32 %v3325, %v3403
        %v3405 = vrcp.pop %v3383
        %v3406 = vmul.f32 %v3328, %v3405
        %v3407 = vrcp.pop %v3388
        %v3408 = vmul.f32 %v3333, %v3407
        %v3409 = vrcp.pop %v3393
        %v3410 = vmul.f32 %v3336, %v3409
        %v3411 = vsel %vm3339, 1, 0
        %v3412 = vsel %vm3340, 1, 0
        %v3413 = vsel %vm3341, 1, 0
        %v3414 = vsel %vm3342, 1, 0
        %v3415 = vsel %vm3343, 1, 0
        %v3416 = vsel %vm3344, 1, 0
        %v3417 = vsel %vm3345, 1, 0
        %v3418 = vsel %vm3346, 1, 0
        %3419 = vset.pattern.permute.xlu0 16
        %3420 = vperm.xlu0 %3419, %v3411
        %v3421 = vpop.permute.xlu0 %3420
        %3422 = vset.pattern.permute.xlu0 16
        %3423 = vperm.xlu0 %3422, %v3412
        %v3424 = vpop.permute.xlu0 %3423
        %3425 = vset.pattern.permute.xlu0 16
        %3426 = vperm.xlu0 %3425, %v3413
        %v3427 = vpop.permute.xlu0 %3426
        %3428 = vset.pattern.permute.xlu0 16
        %3429 = vperm.xlu0 %3428, %v3414
        %v3430 = vpop.permute.xlu0 %3429
        %3431 = vset.pattern.permute.xlu0 16
        %3432 = vperm.xlu0 %3431, %v3415
        %v3433 = vpop.permute.xlu0 %3432
        %3434 = vset.pattern.permute.xlu0 16
        %3435 = vperm.xlu0 %3434, %v3416
        %v3436 = vpop.permute.xlu0 %3435
        %3437 = vset.pattern.permute.xlu0 16
        %3438 = vperm.xlu0 %3437, %v3417
        %v3439 = vpop.permute.xlu0 %3438
        %3440 = vset.pattern.permute.xlu0 16
        %3441 = vperm.xlu0 %3440, %v3418
        %v3442 = vpop.permute.xlu0 %3441
        %vm3443 = vcmp.eq.s32.totalorder %v3421, 1
        %vm3444 = vcmp.eq.s32.totalorder %v3424, 1
        %vm3445 = vcmp.eq.s32.totalorder %v3427, 1
        %vm3446 = vcmp.eq.s32.totalorder %v3430, 1
        %vm3447 = vcmp.eq.s32.totalorder %v3433, 1
        %vm3448 = vcmp.eq.s32.totalorder %v3436, 1
        %vm3449 = vcmp.eq.s32.totalorder %v3439, 1
        %vm3450 = vcmp.eq.s32.totalorder %v3442, 1
        %v3451 = vsel %vm3443, %v3396, %v2905
        %v3452 = vsel %vm3444, %v3398, %v2906
        %v3453 = vsel %vm3445, %v3400, %v2907
        %v3454 = vsel %vm3446, %v3402, %v2908
        %v3455 = vsel %vm3447, %v3404, %v2909
        %v3456 = vsel %vm3448, %v3406, %v2910
        %v3457 = vsel %vm3449, %v3408, %v2911
        %v3458 = vsel %vm3450, %v3410, %v2912
        %v3459 = vmul.f32 %v3451, %v3451
        %v3460 = vmul.f32 %v3452, %v3452
        %v3461 = vmul.f32 %v3453, %v3453
        %v3462 = vmul.f32 %v3454, %v3454
        %v3463 = vmul.f32 %v3455, %v3455
        %v3464 = vmul.f32 %v3456, %v3456
        %v3465 = vmul.f32 %v3457, %v3457
        %v3466 = vmul.f32 %v3458, %v3458
        %v3467 = vsel %vm586, %v3459, 0.0
        %3468 = vadd.xlane.f32.xlu0 %v3467
        %v3469 = vpop.xlane.xlu0 %3468
        %v3470 = vsel %vm586, %v3460, 0.0
        %3471 = vadd.xlane.f32.xlu0 %v3470
        %v3472 = vpop.xlane.xlu0 %3471
        %v3473 = vsel %vm586, %v3461, 0.0
        %3474 = vadd.xlane.f32.xlu0 %v3473
        %v3475 = vpop.xlane.xlu0 %3474
        %v3476 = vsel %vm586, %v3462, 0.0
        %3477 = vadd.xlane.f32.xlu0 %v3476
        %v3478 = vpop.xlane.xlu0 %3477
        %v3479 = vsel %vm586, %v3463, 0.0
        %3480 = vadd.xlane.f32.xlu0 %v3479
        %v3481 = vpop.xlane.xlu0 %3480
        %v3482 = vsel %vm586, %v3464, 0.0
        %3483 = vadd.xlane.f32.xlu0 %v3482
        %v3484 = vpop.xlane.xlu0 %3483
        %v3485 = vsel %vm586, %v3465, 0.0
        %3486 = vadd.xlane.f32.xlu0 %v3485
        %v3487 = vpop.xlane.xlu0 %3486
        %v3488 = vsel %vm586, %v3466, 0.0
        %3489 = vadd.xlane.f32.xlu0 %v3488
        %v3490 = vpop.xlane.xlu0 %3489
        %v3492 = vsel %vm586, %v3451, 0
        %v3495 = vsel %vm586, %v3452, 0
        %v3498 = vsel %vm586, %v3453, 0
        %v3501 = vsel %vm586, %v3454, 0
        %v3504 = vsel %vm586, %v3455, 0
        %v3507 = vsel %vm586, %v3456, 0
        %v3510 = vsel %vm586, %v3457, 0
        %v3513 = vsel %vm586, %v3458, 0
        %3515 = vmatprep.subr.mxu0 %v488
        %3516 = vmatpush1.msra.mxu0 %v486
        %3517 = vmatprep.subr.mxu0 %v492
        %3518 = vmatpush1.msra.mxu0 %v490
        %3519 = vmatprep.subr.mxu0 0.0
        %3520 = vmatpush1.msra.mxu0 0.0
        %3521 = vmatprep.subr.mxu0 0.0
        %3522 = vmatpush1.msra.mxu0 0.0
        %3523 = vmatprep.subr.mxu0 0.0
        %3524 = vmatpush1.msra.mxu0 0.0
        %3525 = vmatprep.subr.mxu0 0.0
        %3526 = vmatpush1.msra.mxu0 0.0
        %3527 = vmatprep.subr.mxu0 0.0
        %3528 = vmatpush1.msra.mxu0 0.0
        %3529 = vmatprep.subr.mxu0 0.0
        %3530 = vmatpush1.msra.mxu0 0.0
        %3531 = vmatprep.subr.mxu0 0.0
        %3532 = vmatpush1.msra.mxu0 0.0
        %3533 = vmatprep.subr.mxu0 0.0
        %3534 = vmatpush1.msra.mxu0 0.0
        %3535 = vmatprep.subr.mxu0 0.0
        %3536 = vmatpush1.msra.mxu0 0.0
        %3537 = vmatprep.subr.mxu0 0.0
        %3538 = vmatpush1.msra.mxu0 0.0
        %3539 = vmatprep.subr.mxu0 0.0
        %3540 = vmatpush1.msra.mxu0 0.0
        %3541 = vmatprep.subr.mxu0 0.0
        %3542 = vmatpush1.msra.mxu0 0.0
        %3543 = vmatprep.subr.mxu0 0.0
        %3544 = vmatpush1.msra.mxu0 0.0
        %3545 = vmatprep.subr.mxu0 0.0
        %3546 = vmatpush1.msra.mxu0 0.0
        %3547 = vmatprep.subr.mxu0 0.0
        %3548 = vmatpush1.msra.mxu0 0.0
        %3549 = vmatprep.subr.mxu0 0.0
        %3550 = vmatpush1.msra.mxu0 0.0
        %3551 = vmatprep.subr.mxu0 0.0
        %3552 = vmatpush1.msra.mxu0 0.0
        %3553 = vmatprep.subr.mxu0 0.0
        %3554 = vmatpush1.msra.mxu0 0.0
        %3555 = vmatprep.subr.mxu0 0.0
        %3556 = vmatpush1.msra.mxu0 0.0
        %3557 = vmatprep.subr.mxu0 0.0
        %3558 = vmatpush1.msra.mxu0 0.0
        %3559 = vmatprep.subr.mxu0 0.0
        %3560 = vmatpush1.msra.mxu0 0.0
        %3561 = vmatprep.subr.mxu0 0.0
        %3562 = vmatpush1.msra.mxu0 0.0
        %3563 = vmatprep.subr.mxu0 0.0
        %3564 = vmatpush1.msra.mxu0 0.0
        %3565 = vmatprep.subr.mxu0 0.0
        %3566 = vmatpush1.msra.mxu0 0.0
        %3567 = vmatprep.subr.mxu0 0.0
        %3568 = vmatpush1.msra.mxu0 0.0
        %3569 = vmatprep.subr.mxu0 0.0
        %3570 = vmatpush1.msra.mxu0 0.0
        %3571 = vmatprep.subr.mxu0 0.0
        %3572 = vmatpush1.msra.mxu0 0.0
        %3573 = vmatprep.subr.mxu0 0.0
        %3574 = vmatpush1.msra.mxu0 0.0
        %3575 = vmatprep.subr.mxu0 0.0
        %3576 = vmatpush1.msra.mxu0 0.0
        %3577 = vmatprep.subr.mxu0 0.0
        %3578 = vmatpush1.msra.mxu0 0.0
        %3579 = vmatprep.mubr.f32.mxu0 0.0
        %3580 = vmatmul.mubr.f32.gmra.mrb[0].mxu0 %v3492
        %v3581 = vpop.f32.mrb[0].mxu0
        %v3582 = vadd.f32 0.0, %v3581
        %v3583 = vpop.f32.mrb[0].mxu0
        %v3584 = vadd.f32 0.0, %v3583
        %3585 = vmatprep.mubr.f32.mxu0 0.0
        %3586 = vmatmul.mubr.f32.gmra.mrb[0].mxu0 %v3495
        %v3587 = vpop.f32.mrb[0].mxu0
        %v3588 = vadd.f32 0.0, %v3587
        %v3589 = vpop.f32.mrb[0].mxu0
        %v3590 = vadd.f32 0.0, %v3589
        %3591 = vmatprep.mubr.f32.mxu0 0.0
        %3592 = vmatmul.mubr.f32.gmra.mrb[0].mxu0 %v3498
        %v3593 = vpop.f32.mrb[0].mxu0
        %v3594 = vadd.f32 0.0, %v3593
        %v3595 = vpop.f32.mrb[0].mxu0
        %v3596 = vadd.f32 0.0, %v3595
        %3597 = vmatprep.mubr.f32.mxu0 0.0
        %3598 = vmatmul.mubr.f32.gmra.mrb[0].mxu0 %v3501
        %v3599 = vpop.f32.mrb[0].mxu0
        %v3600 = vadd.f32 0.0, %v3599
        %v3601 = vpop.f32.mrb[0].mxu0
        %v3602 = vadd.f32 0.0, %v3601
        %3603 = vmatprep.mubr.f32.mxu0 0.0
        %3604 = vmatmul.mubr.f32.gmra.mrb[0].mxu0 %v3504
        %v3605 = vpop.f32.mrb[0].mxu0
        %v3606 = vadd.f32 0.0, %v3605
        %v3607 = vpop.f32.mrb[0].mxu0
        %v3608 = vadd.f32 0.0, %v3607
        %3609 = vmatprep.mubr.f32.mxu0 0.0
        %3610 = vmatmul.mubr.f32.gmra.mrb[0].mxu0 %v3507
        %v3611 = vpop.f32.mrb[0].mxu0
        %v3612 = vadd.f32 0.0, %v3611
        %v3613 = vpop.f32.mrb[0].mxu0
        %v3614 = vadd.f32 0.0, %v3613
        %3615 = vmatprep.mubr.f32.mxu0 0.0
        %3616 = vmatmul.mubr.f32.gmra.mrb[0].mxu0 %v3510
        %v3617 = vpop.f32.mrb[0].mxu0
        %v3618 = vadd.f32 0.0, %v3617
        %v3619 = vpop.f32.mrb[0].mxu0
        %v3620 = vadd.f32 0.0, %v3619
        %3621 = vmatprep.mubr.f32.mxu0 0.0
        %3622 = vmatmul.mubr.f32.gmra.mrb[0].mxu0 %v3513
        %v3623 = vpop.f32.mrb[0].mxu0
        %v3624 = vadd.f32 0.0, %v3623
        %v3625 = vpop.f32.mrb[0].mxu0
        %v3626 = vadd.f32 0.0, %v3625
        %3627 = vdwg.mxu0
        %v3628 = vmul.f32 %v3582, 2.0
        %v3629 = vmul.f32 %v3584, 2.0
        %v3630 = vmul.f32 %v3588, 2.0
        %v3631 = vmul.f32 %v3590, 2.0
        %v3632 = vmul.f32 %v3594, 2.0
        %v3633 = vmul.f32 %v3596, 2.0
        %v3634 = vmul.f32 %v3600, 2.0
        %v3635 = vmul.f32 %v3602, 2.0
        %v3636 = vmul.f32 %v3606, 2.0
        %v3637 = vmul.f32 %v3608, 2.0
        %v3638 = vmul.f32 %v3612, 2.0
        %v3639 = vmul.f32 %v3614, 2.0
        %v3640 = vmul.f32 %v3618, 2.0
        %v3641 = vmul.f32 %v3620, 2.0
        %v3642 = vmul.f32 %v3624, 2.0
        %v3643 = vmul.f32 %v3626, 2.0
        %v3644 = vsub.f32 %v3469, %v3628
        %v3645 = vsub.f32 %v3469, %v3629
        %v3646 = vsub.f32 %v3472, %v3630
        %v3647 = vsub.f32 %v3472, %v3631
        %v3648 = vsub.f32 %v3475, %v3632
        %v3649 = vsub.f32 %v3475, %v3633
        %v3650 = vsub.f32 %v3478, %v3634
        %v3651 = vsub.f32 %v3478, %v3635
        %v3652 = vsub.f32 %v3481, %v3636
        %v3653 = vsub.f32 %v3481, %v3637
        %v3654 = vsub.f32 %v3484, %v3638
        %v3655 = vsub.f32 %v3484, %v3639
        %v3656 = vsub.f32 %v3487, %v3640
        %v3657 = vsub.f32 %v3487, %v3641
        %v3658 = vsub.f32 %v3490, %v3642
        %v3659 = vsub.f32 %v3490, %v3643
        %v3660 = vmin.f32 %v3644, %v3648
        %v3661 = vmin.f32 %v3646, %v3650
        %v3662 = vmin.f32 %v3660, %v3652
        %v3663 = vmin.f32 %v3661, %v3654
        %v3664 = vmin.f32 %v3662, %v3656
        %v3665 = vmin.f32 %v3663, %v3658
        %v3666 = vmin.f32 %v3664, %v3665
        %v3667 = vrot.slane %v3666, 4
        %v3668 = vmin.f32 %v3666, %v3667
        %v3669 = vrot.slane %v3668, 2
        %v3670 = vmin.f32 %v3668, %v3669
        %v3671 = vrot.slane %v3670, 1
        %v3672 = vmin.f32 %v3670, %v3671
        %v3673 = vmin.f32 %v3645, %v3649
        %v3674 = vmin.f32 %v3647, %v3651
        %v3675 = vmin.f32 %v3673, %v3653
        %v3676 = vmin.f32 %v3674, %v3655
        %v3677 = vmin.f32 %v3675, %v3657
        %v3678 = vmin.f32 %v3676, %v3659
        %v3679 = vmin.f32 %v3677, %v3678
        %v3680 = vrot.slane %v3679, 4
        %v3681 = vmin.f32 %v3679, %v3680
        %v3682 = vrot.slane %v3681, 2
        %v3683 = vmin.f32 %v3681, %v3682
        %v3684 = vrot.slane %v3683, 1
        %v3685 = vmin.f32 %v3683, %v3684
        %vm3686 = vcmp.le.f32.partialorder %v3644, %v3672
        %vm3687 = vcmp.le.f32.partialorder %v3645, %v3685
        %vm3688 = vcmp.le.f32.partialorder %v3646, %v3672
        %vm3689 = vcmp.le.f32.partialorder %v3647, %v3685
        %vm3690 = vcmp.le.f32.partialorder %v3648, %v3672
        %vm3691 = vcmp.le.f32.partialorder %v3649, %v3685
        %vm3692 = vcmp.le.f32.partialorder %v3650, %v3672
        %vm3693 = vcmp.le.f32.partialorder %v3651, %v3685
        %vm3694 = vcmp.le.f32.partialorder %v3652, %v3672
        %vm3695 = vcmp.le.f32.partialorder %v3653, %v3685
        %vm3696 = vcmp.le.f32.partialorder %v3654, %v3672
        %vm3697 = vcmp.le.f32.partialorder %v3655, %v3685
        %vm3698 = vcmp.le.f32.partialorder %v3656, %v3672
        %vm3699 = vcmp.le.f32.partialorder %v3657, %v3685
        %vm3700 = vcmp.le.f32.partialorder %v3658, %v3672
        %vm3701 = vcmp.le.f32.partialorder %v3659, %v3685
        %v3702 = vsel %vm3686, %v589, 64
        %v3703 = vsel %vm3687, %v589, 64
        %v3704 = vsel %vm3688, %v590, 64
        %v3705 = vsel %vm3689, %v590, 64
        %v3706 = vsel %vm3690, %v591, 64
        %v3707 = vsel %vm3691, %v591, 64
        %v3708 = vsel %vm3692, %v592, 64
        %v3709 = vsel %vm3693, %v592, 64
        %v3710 = vsel %vm3694, %v593, 64
        %v3711 = vsel %vm3695, %v593, 64
        %v3712 = vsel %vm3696, %v594, 64
        %v3713 = vsel %vm3697, %v594, 64
        %v3714 = vsel %vm3698, %v595, 64
        %v3715 = vsel %vm3699, %v595, 64
        %v3716 = vsel %vm3700, %v596, 64
        %v3717 = vsel %vm3701, %v596, 64
        %vm3718 = vcmp.lt.s32.totalorder %v3702, %v3706
        %v3719 = vsel %vm3718, %v3702, %v3706
        %vm3720 = vcmp.lt.s32.totalorder %v3704, %v3708
        %v3721 = vsel %vm3720, %v3704, %v3708
        %vm3722 = vcmp.lt.s32.totalorder %v3719, %v3710
        %v3723 = vsel %vm3722, %v3719, %v3710
        %vm3724 = vcmp.lt.s32.totalorder %v3721, %v3712
        %v3725 = vsel %vm3724, %v3721, %v3712
        %vm3726 = vcmp.lt.s32.totalorder %v3723, %v3714
        %v3727 = vsel %vm3726, %v3723, %v3714
        %vm3728 = vcmp.lt.s32.totalorder %v3725, %v3716
        %v3729 = vsel %vm3728, %v3725, %v3716
        %vm3730 = vcmp.lt.s32.totalorder %v3727, %v3729
        %v3731 = vsel %vm3730, %v3727, %v3729
        %v3732 = vrot.slane %v3731, 4
        %vm3733 = vcmp.lt.s32.totalorder %v3731, %v3732
        %v3734 = vsel %vm3733, %v3731, %v3732
        %v3735 = vrot.slane %v3734, 2
        %vm3736 = vcmp.lt.s32.totalorder %v3734, %v3735
        %v3737 = vsel %vm3736, %v3734, %v3735
        %v3738 = vrot.slane %v3737, 1
        %vm3739 = vcmp.lt.s32.totalorder %v3737, %v3738
        %v3740 = vsel %vm3739, %v3737, %v3738
        %vm3741 = vcmp.lt.s32.totalorder %v3703, %v3707
        %v3742 = vsel %vm3741, %v3703, %v3707
        %vm3743 = vcmp.lt.s32.totalorder %v3705, %v3709
        %v3744 = vsel %vm3743, %v3705, %v3709
        %vm3745 = vcmp.lt.s32.totalorder %v3742, %v3711
        %v3746 = vsel %vm3745, %v3742, %v3711
        %vm3747 = vcmp.lt.s32.totalorder %v3744, %v3713
        %v3748 = vsel %vm3747, %v3744, %v3713
        %vm3749 = vcmp.lt.s32.totalorder %v3746, %v3715
        %v3750 = vsel %vm3749, %v3746, %v3715
        %vm3751 = vcmp.lt.s32.totalorder %v3748, %v3717
        %v3752 = vsel %vm3751, %v3748, %v3717
        %vm3753 = vcmp.lt.s32.totalorder %v3750, %v3752
        %v3754 = vsel %vm3753, %v3750, %v3752
        %v3755 = vrot.slane %v3754, 4
        %vm3756 = vcmp.lt.s32.totalorder %v3754, %v3755
        %v3757 = vsel %vm3756, %v3754, %v3755
        %v3758 = vrot.slane %v3757, 2
        %vm3759 = vcmp.lt.s32.totalorder %v3757, %v3758
        %v3760 = vsel %vm3759, %v3757, %v3758
        %v3761 = vrot.slane %v3760, 1
        %vm3762 = vcmp.lt.s32.totalorder %v3760, %v3761
        %v3763 = vsel %vm3762, %v3760, %v3761
        %vm3764 = vcmp.eq.s32.totalorder %v589, %v3740
        %vm3765 = vcmp.eq.s32.totalorder %v589, %v3763
        %vm3766 = vcmp.eq.s32.totalorder %v590, %v3740
        %vm3767 = vcmp.eq.s32.totalorder %v590, %v3763
        %vm3768 = vcmp.eq.s32.totalorder %v591, %v3740
        %vm3769 = vcmp.eq.s32.totalorder %v591, %v3763
        %vm3770 = vcmp.eq.s32.totalorder %v592, %v3740
        %vm3771 = vcmp.eq.s32.totalorder %v592, %v3763
        %vm3772 = vcmp.eq.s32.totalorder %v593, %v3740
        %vm3773 = vcmp.eq.s32.totalorder %v593, %v3763
        %vm3774 = vcmp.eq.s32.totalorder %v594, %v3740
        %vm3775 = vcmp.eq.s32.totalorder %v594, %v3763
        %vm3776 = vcmp.eq.s32.totalorder %v595, %v3740
        %vm3777 = vcmp.eq.s32.totalorder %v595, %v3763
        %vm3778 = vcmp.eq.s32.totalorder %v596, %v3740
        %vm3779 = vcmp.eq.s32.totalorder %v596, %v3763
        %v3780 = vsel %vm3764, 1, 0
        %v3781 = vsel %vm3765, 1, 0
        %v3782 = vsel %vm3766, 1, 0
        %v3783 = vsel %vm3767, 1, 0
        %v3784 = vsel %vm3768, 1, 0
        %v3785 = vsel %vm3769, 1, 0
        %v3786 = vsel %vm3770, 1, 0
        %v3787 = vsel %vm3771, 1, 0
        %v3788 = vsel %vm3772, 1, 0
        %v3789 = vsel %vm3773, 1, 0
        %v3790 = vsel %vm3774, 1, 0
        %v3791 = vsel %vm3775, 1, 0
        %v3792 = vsel %vm3776, 1, 0
        %v3793 = vsel %vm3777, 1, 0
        %v3794 = vsel %vm3778, 1, 0
        %v3795 = vsel %vm3779, 1, 0
        %v3796 = vcvt.s32.f32 %v3780
        %v3797 = vcvt.s32.f32 %v3781
        %v3798 = vcvt.s32.f32 %v3782
        %v3799 = vcvt.s32.f32 %v3783
        %v3800 = vcvt.s32.f32 %v3784
        %v3801 = vcvt.s32.f32 %v3785
        %v3802 = vcvt.s32.f32 %v3786
        %v3803 = vcvt.s32.f32 %v3787
        %v3804 = vcvt.s32.f32 %v3788
        %v3805 = vcvt.s32.f32 %v3789
        %v3806 = vcvt.s32.f32 %v3790
        %v3807 = vcvt.s32.f32 %v3791
        %v3808 = vcvt.s32.f32 %v3792
        %v3809 = vcvt.s32.f32 %v3793
        %v3810 = vcvt.s32.f32 %v3794
        %v3811 = vcvt.s32.f32 %v3795
        %v3812 = vpack.c.bf16 %v3798, %v3796
        %v3813 = vpack.c.bf16 %v3799, %v3797
        %v3814 = vpack.c.bf16 %v3802, %v3800
        %v3815 = vpack.c.bf16 %v3803, %v3801
        %v3816 = vpack.c.bf16 %v3806, %v3804
        %v3817 = vpack.c.bf16 %v3807, %v3805
        %v3818 = vpack.c.bf16 %v3810, %v3808
        %v3819 = vpack.c.bf16 %v3811, %v3809
        %3820 = vmatprep.subr.bf16.mxu0 %v507
        %3821 = vmatpush1.bf16.xpose.msra.mxu0 %v506
        %3822 = vmatprep.subr.bf16.mxu0 1065369472
        %3823 = vmatpush1.bf16.xpose.msra.mxu0 1065369472
        %3824 = vmatprep.subr.bf16.mxu0 0
        %3825 = vmatpush1.bf16.xpose.msra.mxu0 0
        %3826 = vmatprep.subr.bf16.mxu0 0
        %3827 = vmatpush1.bf16.xpose.msra.mxu0 0
        %3828 = vmatprep.subr.bf16.mxu0 0
        %3829 = vmatpush1.bf16.xpose.msra.mxu0 0
        %3830 = vmatprep.subr.bf16.mxu0 0
        %3831 = vmatpush1.bf16.xpose.msra.mxu0 0
        %3832 = vmatprep.subr.bf16.mxu0 0
        %3833 = vmatpush1.bf16.xpose.msra.mxu0 0
        %3834 = vmatprep.subr.bf16.mxu0 0
        %3835 = vmatpush1.bf16.xpose.msra.mxu0 0
        %3836 = vmatprep.subr.bf16.mxu0 0
        %3837 = vmatpush1.bf16.xpose.msra.mxu0 0
        %3838 = vmatprep.subr.bf16.mxu0 0
        %3839 = vmatpush1.bf16.xpose.msra.mxu0 0
        %3840 = vmatprep.subr.bf16.mxu0 0
        %3841 = vmatpush1.bf16.xpose.msra.mxu0 0
        %3842 = vmatprep.subr.bf16.mxu0 0
        %3843 = vmatpush1.bf16.xpose.msra.mxu0 0
        %3844 = vmatprep.subr.bf16.mxu0 0
        %3845 = vmatpush1.bf16.xpose.msra.mxu0 0
        %3846 = vmatprep.subr.bf16.mxu0 0
        %3847 = vmatpush1.bf16.xpose.msra.mxu0 0
        %3848 = vmatprep.subr.bf16.mxu0 0
        %3849 = vmatpush1.bf16.xpose.msra.mxu0 0
        %3850 = vmatprep.subr.bf16.mxu0 0
        %3851 = vmatpush1.bf16.xpose.msra.mxu0 0
        %3852 = vmatprep.mubr.bf16.mxu0 %v3813
        %3853 = vmatmul.mubr.bf16.gmra.mrb[0].mxu0 %v3812
        %v3854 = vpop.f32.mrb[0].mxu0
        %v3855 = vadd.f32 0.0, %v3854
        %v3856 = vpop.f32.mrb[0].mxu0
        %v3857 = vpop.f32.mrb[0].mxu0
        %v3858 = vadd.f32 0.0, %v3857
        %v3859 = vpop.f32.mrb[0].mxu0
        %3860 = vmatprep.mubr.bf16.mxu0 %v3815
        %3861 = vmatmul.mubr.bf16.gmra.mrb[0].mxu0 %v3814
        %v3862 = vpop.f32.mrb[0].mxu0
        %v3863 = vadd.f32 0.0, %v3862
        %v3864 = vpop.f32.mrb[0].mxu0
        %v3865 = vpop.f32.mrb[0].mxu0
        %v3866 = vadd.f32 0.0, %v3865
        %v3867 = vpop.f32.mrb[0].mxu0
        %3868 = vmatprep.mubr.bf16.mxu0 %v3817
        %3869 = vmatmul.mubr.bf16.gmra.mrb[0].mxu0 %v3816
        %v3870 = vpop.f32.mrb[0].mxu0
        %v3871 = vadd.f32 0.0, %v3870
        %v3872 = vpop.f32.mrb[0].mxu0
        %v3873 = vpop.f32.mrb[0].mxu0
        %v3874 = vadd.f32 0.0, %v3873
        %v3875 = vpop.f32.mrb[0].mxu0
        %3876 = vmatprep.mubr.bf16.mxu0 %v3819
        %3877 = vmatmul.mubr.bf16.gmra.mrb[0].mxu0 %v3818
        %v3878 = vpop.f32.mrb[0].mxu0
        %v3879 = vadd.f32 0.0, %v3878
        %v3880 = vpop.f32.mrb[0].mxu0
        %v3881 = vpop.f32.mrb[0].mxu0
        %v3882 = vadd.f32 0.0, %v3881
        %v3883 = vpop.f32.mrb[0].mxu0
        %3884 = vdwg.mxu0
        %vm3885 = vcmp.gt.f32.partialorder %v3855, 0.5
        %vm3886 = vcmp.gt.f32.partialorder %v3858, 0.5
        %vm3887 = vcmp.gt.f32.partialorder %v3863, 0.5
        %vm3888 = vcmp.gt.f32.partialorder %v3866, 0.5
        %vm3889 = vcmp.gt.f32.partialorder %v3871, 0.5
        %vm3890 = vcmp.gt.f32.partialorder %v3874, 0.5
        %vm3891 = vcmp.gt.f32.partialorder %v3879, 0.5
        %vm3892 = vcmp.gt.f32.partialorder %v3882, 0.5
        %v3893 = vmax.f32 %v3855, 1.0
        %v3894 = vmax.f32 %v3858, 1.0
        %v3895 = vmax.f32 %v3863, 1.0
        %v3896 = vmax.f32 %v3866, 1.0
        %v3897 = vmax.f32 %v3871, 1.0
        %v3898 = vmax.f32 %v3874, 1.0
        %v3899 = vmax.f32 %v3879, 1.0
        %v3900 = vmax.f32 %v3882, 1.0
        %3902 = vset.pattern.permute.xlu0 16
        %3903 = vperm.xlu0 %3902, %v3893
        %v3904 = vpop.permute.xlu0 %3903
        %3907 = vset.pattern.permute.xlu0 16
        %3908 = vperm.xlu0 %3907, %v3894
        %v3909 = vpop.permute.xlu0 %3908
        %3912 = vset.pattern.permute.xlu0 16
        %3913 = vperm.xlu0 %3912, %v3895
        %v3914 = vpop.permute.xlu0 %3913
        %3917 = vset.pattern.permute.xlu0 16
        %3918 = vperm.xlu0 %3917, %v3896
        %v3919 = vpop.permute.xlu0 %3918
        %3922 = vset.pattern.permute.xlu0 16
        %3923 = vperm.xlu0 %3922, %v3897
        %v3924 = vpop.permute.xlu0 %3923
        %3927 = vset.pattern.permute.xlu0 16
        %3928 = vperm.xlu0 %3927, %v3898
        %v3929 = vpop.permute.xlu0 %3928
        %3932 = vset.pattern.permute.xlu0 16
        %3933 = vperm.xlu0 %3932, %v3899
        %v3934 = vpop.permute.xlu0 %3933
        %3937 = vset.pattern.permute.xlu0 16
        %3938 = vperm.xlu0 %3937, %v3900
        %v3939 = vpop.permute.xlu0 %3938
        %v3941 = vrcp.pop %v3904
        %v3942 = vmul.f32 %v3855, %v3941
        %v3943 = vrcp.pop %v3909
        %v3944 = vmul.f32 %v3858, %v3943
        %v3945 = vrcp.pop %v3914
        %v3946 = vmul.f32 %v3863, %v3945
        %v3947 = vrcp.pop %v3919
        %v3948 = vmul.f32 %v3866, %v3947
        %v3949 = vrcp.pop %v3924
        %v3950 = vmul.f32 %v3871, %v3949
        %v3951 = vrcp.pop %v3929
        %v3952 = vmul.f32 %v3874, %v3951
        %v3953 = vrcp.pop %v3934
        %v3954 = vmul.f32 %v3879, %v3953
        %v3955 = vrcp.pop %v3939
        %v3956 = vmul.f32 %v3882, %v3955
        %v3957 = vsel %vm3885, 1, 0
        %v3958 = vsel %vm3886, 1, 0
        %v3959 = vsel %vm3887, 1, 0
        %v3960 = vsel %vm3888, 1, 0
        %v3961 = vsel %vm3889, 1, 0
        %v3962 = vsel %vm3890, 1, 0
        %v3963 = vsel %vm3891, 1, 0
        %v3964 = vsel %vm3892, 1, 0
        %3965 = vset.pattern.permute.xlu0 16
        %3966 = vperm.xlu0 %3965, %v3957
        %v3967 = vpop.permute.xlu0 %3966
        %3968 = vset.pattern.permute.xlu0 16
        %3969 = vperm.xlu0 %3968, %v3958
        %v3970 = vpop.permute.xlu0 %3969
        %3971 = vset.pattern.permute.xlu0 16
        %3972 = vperm.xlu0 %3971, %v3959
        %v3973 = vpop.permute.xlu0 %3972
        %3974 = vset.pattern.permute.xlu0 16
        %3975 = vperm.xlu0 %3974, %v3960
        %v3976 = vpop.permute.xlu0 %3975
        %3977 = vset.pattern.permute.xlu0 16
        %3978 = vperm.xlu0 %3977, %v3961
        %v3979 = vpop.permute.xlu0 %3978
        %3980 = vset.pattern.permute.xlu0 16
        %3981 = vperm.xlu0 %3980, %v3962
        %v3982 = vpop.permute.xlu0 %3981
        %3983 = vset.pattern.permute.xlu0 16
        %3984 = vperm.xlu0 %3983, %v3963
        %v3985 = vpop.permute.xlu0 %3984
        %3986 = vset.pattern.permute.xlu0 16
        %3987 = vperm.xlu0 %3986, %v3964
        %v3988 = vpop.permute.xlu0 %3987
        %vm3989 = vcmp.eq.s32.totalorder %v3967, 1
        %vm3990 = vcmp.eq.s32.totalorder %v3970, 1
        %vm3991 = vcmp.eq.s32.totalorder %v3973, 1
        %vm3992 = vcmp.eq.s32.totalorder %v3976, 1
        %vm3993 = vcmp.eq.s32.totalorder %v3979, 1
        %vm3994 = vcmp.eq.s32.totalorder %v3982, 1
        %vm3995 = vcmp.eq.s32.totalorder %v3985, 1
        %vm3996 = vcmp.eq.s32.totalorder %v3988, 1
        %v3997 = vsel %vm3989, %v3942, %v3451
        %v3998 = vsel %vm3990, %v3944, %v3452
        %v3999 = vsel %vm3991, %v3946, %v3453
        %v4000 = vsel %vm3992, %v3948, %v3454
        %v4001 = vsel %vm3993, %v3950, %v3455
        %v4002 = vsel %vm3994, %v3952, %v3456
        %v4003 = vsel %vm3995, %v3954, %v3457
        %v4004 = vsel %vm3996, %v3956, %v3458
        %v4005 = vmul.f32 %v3997, %v3997
        %v4006 = vmul.f32 %v3998, %v3998
        %v4007 = vmul.f32 %v3999, %v3999
        %v4008 = vmul.f32 %v4000, %v4000
        %v4009 = vmul.f32 %v4001, %v4001
        %v4010 = vmul.f32 %v4002, %v4002
        %v4011 = vmul.f32 %v4003, %v4003
        %v4012 = vmul.f32 %v4004, %v4004
        %v4013 = vsel %vm586, %v4005, 0.0
        %4014 = vadd.xlane.f32.xlu0 %v4013
        %v4015 = vpop.xlane.xlu0 %4014
        %v4016 = vsel %vm586, %v4006, 0.0
        %4017 = vadd.xlane.f32.xlu0 %v4016
        %v4018 = vpop.xlane.xlu0 %4017
        %v4019 = vsel %vm586, %v4007, 0.0
        %4020 = vadd.xlane.f32.xlu0 %v4019
        %v4021 = vpop.xlane.xlu0 %4020
        %v4022 = vsel %vm586, %v4008, 0.0
        %4023 = vadd.xlane.f32.xlu0 %v4022
        %v4024 = vpop.xlane.xlu0 %4023
        %v4025 = vsel %vm586, %v4009, 0.0
        %4026 = vadd.xlane.f32.xlu0 %v4025
        %v4027 = vpop.xlane.xlu0 %4026
        %v4028 = vsel %vm586, %v4010, 0.0
        %4029 = vadd.xlane.f32.xlu0 %v4028
        %v4030 = vpop.xlane.xlu0 %4029
        %v4031 = vsel %vm586, %v4011, 0.0
        %4032 = vadd.xlane.f32.xlu0 %v4031
        %v4033 = vpop.xlane.xlu0 %4032
        %v4034 = vsel %vm586, %v4012, 0.0
        %4035 = vadd.xlane.f32.xlu0 %v4034
        %v4036 = vpop.xlane.xlu0 %4035
        %v4038 = vsel %vm586, %v3997, 0
        %v4041 = vsel %vm586, %v3998, 0
        %v4044 = vsel %vm586, %v3999, 0
        %v4047 = vsel %vm586, %v4000, 0
        %v4050 = vsel %vm586, %v4001, 0
        %v4053 = vsel %vm586, %v4002, 0
        %v4056 = vsel %vm586, %v4003, 0
        %v4059 = vsel %vm586, %v4004, 0
        %4061 = vmatprep.subr.mxu0 %v488
        %4062 = vmatpush1.msra.mxu0 %v486
        %4063 = vmatprep.subr.mxu0 %v492
        %4064 = vmatpush1.msra.mxu0 %v490
        %4065 = vmatprep.subr.mxu0 0.0
        %4066 = vmatpush1.msra.mxu0 0.0
        %4067 = vmatprep.subr.mxu0 0.0
        %4068 = vmatpush1.msra.mxu0 0.0
        %4069 = vmatprep.subr.mxu0 0.0
        %4070 = vmatpush1.msra.mxu0 0.0
        %4071 = vmatprep.subr.mxu0 0.0
        %4072 = vmatpush1.msra.mxu0 0.0
        %4073 = vmatprep.subr.mxu0 0.0
        %4074 = vmatpush1.msra.mxu0 0.0
        %4075 = vmatprep.subr.mxu0 0.0
        %4076 = vmatpush1.msra.mxu0 0.0
        %4077 = vmatprep.subr.mxu0 0.0
        %4078 = vmatpush1.msra.mxu0 0.0
        %4079 = vmatprep.subr.mxu0 0.0
        %4080 = vmatpush1.msra.mxu0 0.0
        %4081 = vmatprep.subr.mxu0 0.0
        %4082 = vmatpush1.msra.mxu0 0.0
        %4083 = vmatprep.subr.mxu0 0.0
        %4084 = vmatpush1.msra.mxu0 0.0
        %4085 = vmatprep.subr.mxu0 0.0
        %4086 = vmatpush1.msra.mxu0 0.0
        %4087 = vmatprep.subr.mxu0 0.0
        %4088 = vmatpush1.msra.mxu0 0.0
        %4089 = vmatprep.subr.mxu0 0.0
        %4090 = vmatpush1.msra.mxu0 0.0
        %4091 = vmatprep.subr.mxu0 0.0
        %4092 = vmatpush1.msra.mxu0 0.0
        %4093 = vmatprep.subr.mxu0 0.0
        %4094 = vmatpush1.msra.mxu0 0.0
        %4095 = vmatprep.subr.mxu0 0.0
        %4096 = vmatpush1.msra.mxu0 0.0
        %4097 = vmatprep.subr.mxu0 0.0
        %4098 = vmatpush1.msra.mxu0 0.0
        %4099 = vmatprep.subr.mxu0 0.0
        %4100 = vmatpush1.msra.mxu0 0.0
        %4101 = vmatprep.subr.mxu0 0.0
        %4102 = vmatpush1.msra.mxu0 0.0
        %4103 = vmatprep.subr.mxu0 0.0
        %4104 = vmatpush1.msra.mxu0 0.0
        %4105 = vmatprep.subr.mxu0 0.0
        %4106 = vmatpush1.msra.mxu0 0.0
        %4107 = vmatprep.subr.mxu0 0.0
        %4108 = vmatpush1.msra.mxu0 0.0
        %4109 = vmatprep.subr.mxu0 0.0
        %4110 = vmatpush1.msra.mxu0 0.0
        %4111 = vmatprep.subr.mxu0 0.0
        %4112 = vmatpush1.msra.mxu0 0.0
        %4113 = vmatprep.subr.mxu0 0.0
        %4114 = vmatpush1.msra.mxu0 0.0
        %4115 = vmatprep.subr.mxu0 0.0
        %4116 = vmatpush1.msra.mxu0 0.0
        %4117 = vmatprep.subr.mxu0 0.0
        %4118 = vmatpush1.msra.mxu0 0.0
        %4119 = vmatprep.subr.mxu0 0.0
        %4120 = vmatpush1.msra.mxu0 0.0
        %4121 = vmatprep.subr.mxu0 0.0
        %4122 = vmatpush1.msra.mxu0 0.0
        %4123 = vmatprep.subr.mxu0 0.0
        %4124 = vmatpush1.msra.mxu0 0.0
        %4125 = vmatprep.mubr.f32.mxu0 0.0
        %4126 = vmatmul.mubr.f32.gmra.mrb[0].mxu0 %v4038
        %v4127 = vpop.f32.mrb[0].mxu0
        %v4128 = vadd.f32 0.0, %v4127
        %v4129 = vpop.f32.mrb[0].mxu0
        %v4130 = vadd.f32 0.0, %v4129
        %4131 = vmatprep.mubr.f32.mxu0 0.0
        %4132 = vmatmul.mubr.f32.gmra.mrb[0].mxu0 %v4041
        %v4133 = vpop.f32.mrb[0].mxu0
        %v4134 = vadd.f32 0.0, %v4133
        %v4135 = vpop.f32.mrb[0].mxu0
        %v4136 = vadd.f32 0.0, %v4135
        %4137 = vmatprep.mubr.f32.mxu0 0.0
        %4138 = vmatmul.mubr.f32.gmra.mrb[0].mxu0 %v4044
        %v4139 = vpop.f32.mrb[0].mxu0
        %v4140 = vadd.f32 0.0, %v4139
        %v4141 = vpop.f32.mrb[0].mxu0
        %v4142 = vadd.f32 0.0, %v4141
        %4143 = vmatprep.mubr.f32.mxu0 0.0
        %4144 = vmatmul.mubr.f32.gmra.mrb[0].mxu0 %v4047
        %v4145 = vpop.f32.mrb[0].mxu0
        %v4146 = vadd.f32 0.0, %v4145
        %v4147 = vpop.f32.mrb[0].mxu0
        %v4148 = vadd.f32 0.0, %v4147
        %4149 = vmatprep.mubr.f32.mxu0 0.0
        %4150 = vmatmul.mubr.f32.gmra.mrb[0].mxu0 %v4050
        %v4151 = vpop.f32.mrb[0].mxu0
        %v4152 = vadd.f32 0.0, %v4151
        %v4153 = vpop.f32.mrb[0].mxu0
        %v4154 = vadd.f32 0.0, %v4153
        %4155 = vmatprep.mubr.f32.mxu0 0.0
        %4156 = vmatmul.mubr.f32.gmra.mrb[0].mxu0 %v4053
        %v4157 = vpop.f32.mrb[0].mxu0
        %v4158 = vadd.f32 0.0, %v4157
        %v4159 = vpop.f32.mrb[0].mxu0
        %v4160 = vadd.f32 0.0, %v4159
        %4161 = vmatprep.mubr.f32.mxu0 0.0
        %4162 = vmatmul.mubr.f32.gmra.mrb[0].mxu0 %v4056
        %v4163 = vpop.f32.mrb[0].mxu0
        %v4164 = vadd.f32 0.0, %v4163
        %v4165 = vpop.f32.mrb[0].mxu0
        %v4166 = vadd.f32 0.0, %v4165
        %4167 = vmatprep.mubr.f32.mxu0 0.0
        %4168 = vmatmul.mubr.f32.gmra.mrb[0].mxu0 %v4059
        %v4169 = vpop.f32.mrb[0].mxu0
        %v4170 = vadd.f32 0.0, %v4169
        %v4171 = vpop.f32.mrb[0].mxu0
        %v4172 = vadd.f32 0.0, %v4171
        %4173 = vdwg.mxu0
        %v4174 = vmul.f32 %v4128, 2.0
        %v4175 = vmul.f32 %v4130, 2.0
        %v4176 = vmul.f32 %v4134, 2.0
        %v4177 = vmul.f32 %v4136, 2.0
        %v4178 = vmul.f32 %v4140, 2.0
        %v4179 = vmul.f32 %v4142, 2.0
        %v4180 = vmul.f32 %v4146, 2.0
        %v4181 = vmul.f32 %v4148, 2.0
        %v4182 = vmul.f32 %v4152, 2.0
        %v4183 = vmul.f32 %v4154, 2.0
        %v4184 = vmul.f32 %v4158, 2.0
        %v4185 = vmul.f32 %v4160, 2.0
        %v4186 = vmul.f32 %v4164, 2.0
        %v4187 = vmul.f32 %v4166, 2.0
        %v4188 = vmul.f32 %v4170, 2.0
        %v4189 = vmul.f32 %v4172, 2.0
        %v4190 = vsub.f32 %v4015, %v4174
        %v4191 = vsub.f32 %v4015, %v4175
        %v4192 = vsub.f32 %v4018, %v4176
        %v4193 = vsub.f32 %v4018, %v4177
        %v4194 = vsub.f32 %v4021, %v4178
        %v4195 = vsub.f32 %v4021, %v4179
        %v4196 = vsub.f32 %v4024, %v4180
        %v4197 = vsub.f32 %v4024, %v4181
        %v4198 = vsub.f32 %v4027, %v4182
        %v4199 = vsub.f32 %v4027, %v4183
        %v4200 = vsub.f32 %v4030, %v4184
        %v4201 = vsub.f32 %v4030, %v4185
        %v4202 = vsub.f32 %v4033, %v4186
        %v4203 = vsub.f32 %v4033, %v4187
        %v4204 = vsub.f32 %v4036, %v4188
        %v4205 = vsub.f32 %v4036, %v4189
        %v4206 = vmin.f32 %v4190, %v4194
        %v4207 = vmin.f32 %v4192, %v4196
        %v4208 = vmin.f32 %v4206, %v4198
        %v4209 = vmin.f32 %v4207, %v4200
        %v4210 = vmin.f32 %v4208, %v4202
        %v4211 = vmin.f32 %v4209, %v4204
        %v4212 = vmin.f32 %v4210, %v4211
        %v4213 = vrot.slane %v4212, 4
        %v4214 = vmin.f32 %v4212, %v4213
        %v4215 = vrot.slane %v4214, 2
        %v4216 = vmin.f32 %v4214, %v4215
        %v4217 = vrot.slane %v4216, 1
        %v4218 = vmin.f32 %v4216, %v4217
        %v4219 = vmin.f32 %v4191, %v4195
        %v4220 = vmin.f32 %v4193, %v4197
        %v4221 = vmin.f32 %v4219, %v4199
        %v4222 = vmin.f32 %v4220, %v4201
        %v4223 = vmin.f32 %v4221, %v4203
        %v4224 = vmin.f32 %v4222, %v4205
        %v4225 = vmin.f32 %v4223, %v4224
        %v4226 = vrot.slane %v4225, 4
        %v4227 = vmin.f32 %v4225, %v4226
        %v4228 = vrot.slane %v4227, 2
        %v4229 = vmin.f32 %v4227, %v4228
        %v4230 = vrot.slane %v4229, 1
        %v4231 = vmin.f32 %v4229, %v4230
        %vm4232 = vcmp.le.f32.partialorder %v4190, %v4218
        %vm4233 = vcmp.le.f32.partialorder %v4191, %v4231
        %vm4234 = vcmp.le.f32.partialorder %v4192, %v4218
        %vm4235 = vcmp.le.f32.partialorder %v4193, %v4231
        %vm4236 = vcmp.le.f32.partialorder %v4194, %v4218
        %vm4237 = vcmp.le.f32.partialorder %v4195, %v4231
        %vm4238 = vcmp.le.f32.partialorder %v4196, %v4218
        %vm4239 = vcmp.le.f32.partialorder %v4197, %v4231
        %vm4240 = vcmp.le.f32.partialorder %v4198, %v4218
        %vm4241 = vcmp.le.f32.partialorder %v4199, %v4231
        %vm4242 = vcmp.le.f32.partialorder %v4200, %v4218
        %vm4243 = vcmp.le.f32.partialorder %v4201, %v4231
        %vm4244 = vcmp.le.f32.partialorder %v4202, %v4218
        %vm4245 = vcmp.le.f32.partialorder %v4203, %v4231
        %vm4246 = vcmp.le.f32.partialorder %v4204, %v4218
        %vm4247 = vcmp.le.f32.partialorder %v4205, %v4231
        %v4248 = vsel %vm4232, %v589, 64
        %v4249 = vsel %vm4233, %v589, 64
        %v4250 = vsel %vm4234, %v590, 64
        %v4251 = vsel %vm4235, %v590, 64
        %v4252 = vsel %vm4236, %v591, 64
        %v4253 = vsel %vm4237, %v591, 64
        %v4254 = vsel %vm4238, %v592, 64
        %v4255 = vsel %vm4239, %v592, 64
        %v4256 = vsel %vm4240, %v593, 64
        %v4257 = vsel %vm4241, %v593, 64
        %v4258 = vsel %vm4242, %v594, 64
        %v4259 = vsel %vm4243, %v594, 64
        %v4260 = vsel %vm4244, %v595, 64
        %v4261 = vsel %vm4245, %v595, 64
        %v4262 = vsel %vm4246, %v596, 64
        %v4263 = vsel %vm4247, %v596, 64
        %vm4264 = vcmp.lt.s32.totalorder %v4248, %v4252
        %v4265 = vsel %vm4264, %v4248, %v4252
        %vm4266 = vcmp.lt.s32.totalorder %v4250, %v4254
        %v4267 = vsel %vm4266, %v4250, %v4254
        %vm4268 = vcmp.lt.s32.totalorder %v4265, %v4256
        %v4269 = vsel %vm4268, %v4265, %v4256
        %vm4270 = vcmp.lt.s32.totalorder %v4267, %v4258
        %v4271 = vsel %vm4270, %v4267, %v4258
        %vm4272 = vcmp.lt.s32.totalorder %v4269, %v4260
        %v4273 = vsel %vm4272, %v4269, %v4260
        %vm4274 = vcmp.lt.s32.totalorder %v4271, %v4262
        %v4275 = vsel %vm4274, %v4271, %v4262
        %vm4276 = vcmp.lt.s32.totalorder %v4273, %v4275
        %v4277 = vsel %vm4276, %v4273, %v4275
        %v4278 = vrot.slane %v4277, 4
        %vm4279 = vcmp.lt.s32.totalorder %v4277, %v4278
        %v4280 = vsel %vm4279, %v4277, %v4278
        %v4281 = vrot.slane %v4280, 2
        %vm4282 = vcmp.lt.s32.totalorder %v4280, %v4281
        %v4283 = vsel %vm4282, %v4280, %v4281
        %v4284 = vrot.slane %v4283, 1
        %vm4285 = vcmp.lt.s32.totalorder %v4283, %v4284
        %v4286 = vsel %vm4285, %v4283, %v4284
        %vm4287 = vcmp.lt.s32.totalorder %v4249, %v4253
        %v4288 = vsel %vm4287, %v4249, %v4253
        %vm4289 = vcmp.lt.s32.totalorder %v4251, %v4255
        %v4290 = vsel %vm4289, %v4251, %v4255
        %vm4291 = vcmp.lt.s32.totalorder %v4288, %v4257
        %v4292 = vsel %vm4291, %v4288, %v4257
        %vm4293 = vcmp.lt.s32.totalorder %v4290, %v4259
        %v4294 = vsel %vm4293, %v4290, %v4259
        %vm4295 = vcmp.lt.s32.totalorder %v4292, %v4261
        %v4296 = vsel %vm4295, %v4292, %v4261
        %vm4297 = vcmp.lt.s32.totalorder %v4294, %v4263
        %v4298 = vsel %vm4297, %v4294, %v4263
        %vm4299 = vcmp.lt.s32.totalorder %v4296, %v4298
        %v4300 = vsel %vm4299, %v4296, %v4298
        %v4301 = vrot.slane %v4300, 4
        %vm4302 = vcmp.lt.s32.totalorder %v4300, %v4301
        %v4303 = vsel %vm4302, %v4300, %v4301
        %v4304 = vrot.slane %v4303, 2
        %vm4305 = vcmp.lt.s32.totalorder %v4303, %v4304
        %v4306 = vsel %vm4305, %v4303, %v4304
        %v4307 = vrot.slane %v4306, 1
        %vm4308 = vcmp.lt.s32.totalorder %v4306, %v4307
        %v4309 = vsel %vm4308, %v4306, %v4307
        %vm4310 = vcmp.eq.s32.totalorder %v589, %v4286
        %vm4311 = vcmp.eq.s32.totalorder %v589, %v4309
        %vm4312 = vcmp.eq.s32.totalorder %v590, %v4286
        %vm4313 = vcmp.eq.s32.totalorder %v590, %v4309
        %vm4314 = vcmp.eq.s32.totalorder %v591, %v4286
        %vm4315 = vcmp.eq.s32.totalorder %v591, %v4309
        %vm4316 = vcmp.eq.s32.totalorder %v592, %v4286
        %vm4317 = vcmp.eq.s32.totalorder %v592, %v4309
        %vm4318 = vcmp.eq.s32.totalorder %v593, %v4286
        %vm4319 = vcmp.eq.s32.totalorder %v593, %v4309
        %vm4320 = vcmp.eq.s32.totalorder %v594, %v4286
        %vm4321 = vcmp.eq.s32.totalorder %v594, %v4309
        %vm4322 = vcmp.eq.s32.totalorder %v595, %v4286
        %vm4323 = vcmp.eq.s32.totalorder %v595, %v4309
        %vm4324 = vcmp.eq.s32.totalorder %v596, %v4286
        %vm4325 = vcmp.eq.s32.totalorder %v596, %v4309
        %v4326 = vsel %vm4310, 1, 0
        %v4327 = vsel %vm4311, 1, 0
        %v4328 = vsel %vm4312, 1, 0
        %v4329 = vsel %vm4313, 1, 0
        %v4330 = vsel %vm4314, 1, 0
        %v4331 = vsel %vm4315, 1, 0
        %v4332 = vsel %vm4316, 1, 0
        %v4333 = vsel %vm4317, 1, 0
        %v4334 = vsel %vm4318, 1, 0
        %v4335 = vsel %vm4319, 1, 0
        %v4336 = vsel %vm4320, 1, 0
        %v4337 = vsel %vm4321, 1, 0
        %v4338 = vsel %vm4322, 1, 0
        %v4339 = vsel %vm4323, 1, 0
        %v4340 = vsel %vm4324, 1, 0
        %v4341 = vsel %vm4325, 1, 0
        %v4342 = vcvt.s32.f32 %v4326
        %v4343 = vcvt.s32.f32 %v4327
        %v4344 = vcvt.s32.f32 %v4328
        %v4345 = vcvt.s32.f32 %v4329
        %v4346 = vcvt.s32.f32 %v4330
        %v4347 = vcvt.s32.f32 %v4331
        %v4348 = vcvt.s32.f32 %v4332
        %v4349 = vcvt.s32.f32 %v4333
        %v4350 = vcvt.s32.f32 %v4334
        %v4351 = vcvt.s32.f32 %v4335
        %v4352 = vcvt.s32.f32 %v4336
        %v4353 = vcvt.s32.f32 %v4337
        %v4354 = vcvt.s32.f32 %v4338
        %v4355 = vcvt.s32.f32 %v4339
        %v4356 = vcvt.s32.f32 %v4340
        %v4357 = vcvt.s32.f32 %v4341
        %v4358 = vpack.c.bf16 %v4344, %v4342
        %v4359 = vpack.c.bf16 %v4345, %v4343
        %v4360 = vpack.c.bf16 %v4348, %v4346
        %v4361 = vpack.c.bf16 %v4349, %v4347
        %v4362 = vpack.c.bf16 %v4352, %v4350
        %v4363 = vpack.c.bf16 %v4353, %v4351
        %v4364 = vpack.c.bf16 %v4356, %v4354
        %v4365 = vpack.c.bf16 %v4357, %v4355
        %4366 = vmatprep.subr.bf16.mxu0 %v507
        %4367 = vmatpush1.bf16.xpose.msra.mxu0 %v506
        %4368 = vmatprep.subr.bf16.mxu0 1065369472
        %4369 = vmatpush1.bf16.xpose.msra.mxu0 1065369472
        %4370 = vmatprep.subr.bf16.mxu0 0
        %4371 = vmatpush1.bf16.xpose.msra.mxu0 0
        %4372 = vmatprep.subr.bf16.mxu0 0
        %4373 = vmatpush1.bf16.xpose.msra.mxu0 0
        %4374 = vmatprep.subr.bf16.mxu0 0
        %4375 = vmatpush1.bf16.xpose.msra.mxu0 0
        %4376 = vmatprep.subr.bf16.mxu0 0
        %4377 = vmatpush1.bf16.xpose.msra.mxu0 0
        %4378 = vmatprep.subr.bf16.mxu0 0
        %4379 = vmatpush1.bf16.xpose.msra.mxu0 0
        %4380 = vmatprep.subr.bf16.mxu0 0
        %4381 = vmatpush1.bf16.xpose.msra.mxu0 0
        %4382 = vmatprep.subr.bf16.mxu0 0
        %4383 = vmatpush1.bf16.xpose.msra.mxu0 0
        %4384 = vmatprep.subr.bf16.mxu0 0
        %4385 = vmatpush1.bf16.xpose.msra.mxu0 0
        %4386 = vmatprep.subr.bf16.mxu0 0
        %4387 = vmatpush1.bf16.xpose.msra.mxu0 0
        %4388 = vmatprep.subr.bf16.mxu0 0
        %4389 = vmatpush1.bf16.xpose.msra.mxu0 0
        %4390 = vmatprep.subr.bf16.mxu0 0
        %4391 = vmatpush1.bf16.xpose.msra.mxu0 0
        %4392 = vmatprep.subr.bf16.mxu0 0
        %4393 = vmatpush1.bf16.xpose.msra.mxu0 0
        %4394 = vmatprep.subr.bf16.mxu0 0
        %4395 = vmatpush1.bf16.xpose.msra.mxu0 0
        %4396 = vmatprep.subr.bf16.mxu0 0
        %4397 = vmatpush1.bf16.xpose.msra.mxu0 0
        %4398 = vmatprep.mubr.bf16.mxu0 %v4359
        %4399 = vmatmul.mubr.bf16.gmra.mrb[0].mxu0 %v4358
        %v4400 = vpop.f32.mrb[0].mxu0
        %v4401 = vadd.f32 0.0, %v4400
        %v4402 = vpop.f32.mrb[0].mxu0
        %v4403 = vpop.f32.mrb[0].mxu0
        %v4404 = vadd.f32 0.0, %v4403
        %v4405 = vpop.f32.mrb[0].mxu0
        %4406 = vmatprep.mubr.bf16.mxu0 %v4361
        %4407 = vmatmul.mubr.bf16.gmra.mrb[0].mxu0 %v4360
        %v4408 = vpop.f32.mrb[0].mxu0
        %v4409 = vadd.f32 0.0, %v4408
        %v4410 = vpop.f32.mrb[0].mxu0
        %v4411 = vpop.f32.mrb[0].mxu0
        %v4412 = vadd.f32 0.0, %v4411
        %v4413 = vpop.f32.mrb[0].mxu0
        %4414 = vmatprep.mubr.bf16.mxu0 %v4363
        %4415 = vmatmul.mubr.bf16.gmra.mrb[0].mxu0 %v4362
        %v4416 = vpop.f32.mrb[0].mxu0
        %v4417 = vadd.f32 0.0, %v4416
        %v4418 = vpop.f32.mrb[0].mxu0
        %v4419 = vpop.f32.mrb[0].mxu0
        %v4420 = vadd.f32 0.0, %v4419
        %v4421 = vpop.f32.mrb[0].mxu0
        %4422 = vmatprep.mubr.bf16.mxu0 %v4365
        %4423 = vmatmul.mubr.bf16.gmra.mrb[0].mxu0 %v4364
        %v4424 = vpop.f32.mrb[0].mxu0
        %v4425 = vadd.f32 0.0, %v4424
        %v4426 = vpop.f32.mrb[0].mxu0
        %v4427 = vpop.f32.mrb[0].mxu0
        %v4428 = vadd.f32 0.0, %v4427
        %v4429 = vpop.f32.mrb[0].mxu0
        %4430 = vdwg.mxu0
        %vm4431 = vcmp.gt.f32.partialorder %v4401, 0.5
        %vm4432 = vcmp.gt.f32.partialorder %v4404, 0.5
        %vm4433 = vcmp.gt.f32.partialorder %v4409, 0.5
        %vm4434 = vcmp.gt.f32.partialorder %v4412, 0.5
        %vm4435 = vcmp.gt.f32.partialorder %v4417, 0.5
        %vm4436 = vcmp.gt.f32.partialorder %v4420, 0.5
        %vm4437 = vcmp.gt.f32.partialorder %v4425, 0.5
        %vm4438 = vcmp.gt.f32.partialorder %v4428, 0.5
        %v4439 = vmax.f32 %v4401, 1.0
        %v4440 = vmax.f32 %v4404, 1.0
        %v4441 = vmax.f32 %v4409, 1.0
        %v4442 = vmax.f32 %v4412, 1.0
        %v4443 = vmax.f32 %v4417, 1.0
        %v4444 = vmax.f32 %v4420, 1.0
        %v4445 = vmax.f32 %v4425, 1.0
        %v4446 = vmax.f32 %v4428, 1.0
        %4448 = vset.pattern.permute.xlu0 16
        %4449 = vperm.xlu0 %4448, %v4439
        %v4450 = vpop.permute.xlu0 %4449
        %4453 = vset.pattern.permute.xlu0 16
        %4454 = vperm.xlu0 %4453, %v4440
        %v4455 = vpop.permute.xlu0 %4454
        %4458 = vset.pattern.permute.xlu0 16
        %4459 = vperm.xlu0 %4458, %v4441
        %v4460 = vpop.permute.xlu0 %4459
        %4463 = vset.pattern.permute.xlu0 16
        %4464 = vperm.xlu0 %4463, %v4442
        %v4465 = vpop.permute.xlu0 %4464
        %4468 = vset.pattern.permute.xlu0 16
        %4469 = vperm.xlu0 %4468, %v4443
        %v4470 = vpop.permute.xlu0 %4469
        %4473 = vset.pattern.permute.xlu0 16
        %4474 = vperm.xlu0 %4473, %v4444
        %v4475 = vpop.permute.xlu0 %4474
        %4478 = vset.pattern.permute.xlu0 16
        %4479 = vperm.xlu0 %4478, %v4445
        %v4480 = vpop.permute.xlu0 %4479
        %4483 = vset.pattern.permute.xlu0 16
        %4484 = vperm.xlu0 %4483, %v4446
        %v4485 = vpop.permute.xlu0 %4484
        %v4487 = vrcp.pop %v4450
        %v4488 = vmul.f32 %v4401, %v4487
        %v4489 = vrcp.pop %v4455
        %v4490 = vmul.f32 %v4404, %v4489
        %v4491 = vrcp.pop %v4460
        %v4492 = vmul.f32 %v4409, %v4491
        %v4493 = vrcp.pop %v4465
        %v4494 = vmul.f32 %v4412, %v4493
        %v4495 = vrcp.pop %v4470
        %v4496 = vmul.f32 %v4417, %v4495
        %v4497 = vrcp.pop %v4475
        %v4498 = vmul.f32 %v4420, %v4497
        %v4499 = vrcp.pop %v4480
        %v4500 = vmul.f32 %v4425, %v4499
        %v4501 = vrcp.pop %v4485
        %v4502 = vmul.f32 %v4428, %v4501
        %v4503 = vsel %vm4431, 1, 0
        %v4504 = vsel %vm4432, 1, 0
        %v4505 = vsel %vm4433, 1, 0
        %v4506 = vsel %vm4434, 1, 0
        %v4507 = vsel %vm4435, 1, 0
        %v4508 = vsel %vm4436, 1, 0
        %v4509 = vsel %vm4437, 1, 0
        %v4510 = vsel %vm4438, 1, 0
        %4511 = vset.pattern.permute.xlu0 16
        %4512 = vperm.xlu0 %4511, %v4503
        %v4513 = vpop.permute.xlu0 %4512
        %4514 = vset.pattern.permute.xlu0 16
        %4515 = vperm.xlu0 %4514, %v4504
        %v4516 = vpop.permute.xlu0 %4515
        %4517 = vset.pattern.permute.xlu0 16
        %4518 = vperm.xlu0 %4517, %v4505
        %v4519 = vpop.permute.xlu0 %4518
        %4520 = vset.pattern.permute.xlu0 16
        %4521 = vperm.xlu0 %4520, %v4506
        %v4522 = vpop.permute.xlu0 %4521
        %4523 = vset.pattern.permute.xlu0 16
        %4524 = vperm.xlu0 %4523, %v4507
        %v4525 = vpop.permute.xlu0 %4524
        %4526 = vset.pattern.permute.xlu0 16
        %4527 = vperm.xlu0 %4526, %v4508
        %v4528 = vpop.permute.xlu0 %4527
        %4529 = vset.pattern.permute.xlu0 16
        %4530 = vperm.xlu0 %4529, %v4509
        %v4531 = vpop.permute.xlu0 %4530
        %4532 = vset.pattern.permute.xlu0 16
        %4533 = vperm.xlu0 %4532, %v4510
        %v4534 = vpop.permute.xlu0 %4533
        %vm4535 = vcmp.eq.s32.totalorder %v4513, 1
        %vm4536 = vcmp.eq.s32.totalorder %v4516, 1
        %vm4537 = vcmp.eq.s32.totalorder %v4519, 1
        %vm4538 = vcmp.eq.s32.totalorder %v4522, 1
        %vm4539 = vcmp.eq.s32.totalorder %v4525, 1
        %vm4540 = vcmp.eq.s32.totalorder %v4528, 1
        %vm4541 = vcmp.eq.s32.totalorder %v4531, 1
        %vm4542 = vcmp.eq.s32.totalorder %v4534, 1
        %v4543 = vsel %vm4535, %v4488, %v3997
        %v4544 = vsel %vm4536, %v4490, %v3998
        %v4545 = vsel %vm4537, %v4492, %v3999
        %v4546 = vsel %vm4538, %v4494, %v4000
        %v4547 = vsel %vm4539, %v4496, %v4001
        %v4548 = vsel %vm4540, %v4498, %v4002
        %v4549 = vsel %vm4541, %v4500, %v4003
        %v4550 = vsel %vm4542, %v4502, %v4004
        %v4551 = vmul.f32 %v4543, %v4543
        %v4552 = vmul.f32 %v4544, %v4544
        %v4553 = vmul.f32 %v4545, %v4545
        %v4554 = vmul.f32 %v4546, %v4546
        %v4555 = vmul.f32 %v4547, %v4547
        %v4556 = vmul.f32 %v4548, %v4548
        %v4557 = vmul.f32 %v4549, %v4549
        %v4558 = vmul.f32 %v4550, %v4550
        %v4559 = vsel %vm586, %v4551, 0.0
        %4560 = vadd.xlane.f32.xlu0 %v4559
        %v4561 = vpop.xlane.xlu0 %4560
        %v4562 = vsel %vm586, %v4552, 0.0
        %4563 = vadd.xlane.f32.xlu0 %v4562
        %v4564 = vpop.xlane.xlu0 %4563
        %v4565 = vsel %vm586, %v4553, 0.0
        %4566 = vadd.xlane.f32.xlu0 %v4565
        %v4567 = vpop.xlane.xlu0 %4566
        %v4568 = vsel %vm586, %v4554, 0.0
        %4569 = vadd.xlane.f32.xlu0 %v4568
        %v4570 = vpop.xlane.xlu0 %4569
        %v4571 = vsel %vm586, %v4555, 0.0
        %4572 = vadd.xlane.f32.xlu0 %v4571
        %v4573 = vpop.xlane.xlu0 %4572
        %v4574 = vsel %vm586, %v4556, 0.0
        %4575 = vadd.xlane.f32.xlu0 %v4574
        %v4576 = vpop.xlane.xlu0 %4575
        %v4577 = vsel %vm586, %v4557, 0.0
        %4578 = vadd.xlane.f32.xlu0 %v4577
        %v4579 = vpop.xlane.xlu0 %4578
        %v4580 = vsel %vm586, %v4558, 0.0
        %4581 = vadd.xlane.f32.xlu0 %v4580
        %v4582 = vpop.xlane.xlu0 %4581
        %v4584 = vsel %vm586, %v4543, 0
        %v4587 = vsel %vm586, %v4544, 0
        %v4590 = vsel %vm586, %v4545, 0
        %v4593 = vsel %vm586, %v4546, 0
        %v4596 = vsel %vm586, %v4547, 0
        %v4599 = vsel %vm586, %v4548, 0
        %v4602 = vsel %vm586, %v4549, 0
        %v4605 = vsel %vm586, %v4550, 0
        %4607 = vmatprep.subr.mxu0 %v488
        %4608 = vmatpush1.msra.mxu0 %v486
        %4609 = vmatprep.subr.mxu0 %v492
        %4610 = vmatpush1.msra.mxu0 %v490
        %4611 = vmatprep.subr.mxu0 0.0
        %4612 = vmatpush1.msra.mxu0 0.0
        %4613 = vmatprep.subr.mxu0 0.0
        %4614 = vmatpush1.msra.mxu0 0.0
        %4615 = vmatprep.subr.mxu0 0.0
        %4616 = vmatpush1.msra.mxu0 0.0
        %4617 = vmatprep.subr.mxu0 0.0
        %4618 = vmatpush1.msra.mxu0 0.0
        %4619 = vmatprep.subr.mxu0 0.0
        %4620 = vmatpush1.msra.mxu0 0.0
        %4621 = vmatprep.subr.mxu0 0.0
        %4622 = vmatpush1.msra.mxu0 0.0
        %4623 = vmatprep.subr.mxu0 0.0
        %4624 = vmatpush1.msra.mxu0 0.0
        %4625 = vmatprep.subr.mxu0 0.0
        %4626 = vmatpush1.msra.mxu0 0.0
        %4627 = vmatprep.subr.mxu0 0.0
        %4628 = vmatpush1.msra.mxu0 0.0
        %4629 = vmatprep.subr.mxu0 0.0
        %4630 = vmatpush1.msra.mxu0 0.0
        %4631 = vmatprep.subr.mxu0 0.0
        %4632 = vmatpush1.msra.mxu0 0.0
        %4633 = vmatprep.subr.mxu0 0.0
        %4634 = vmatpush1.msra.mxu0 0.0
        %4635 = vmatprep.subr.mxu0 0.0
        %4636 = vmatpush1.msra.mxu0 0.0
        %4637 = vmatprep.subr.mxu0 0.0
        %4638 = vmatpush1.msra.mxu0 0.0
        %4639 = vmatprep.subr.mxu0 0.0
        %4640 = vmatpush1.msra.mxu0 0.0
        %4641 = vmatprep.subr.mxu0 0.0
        %4642 = vmatpush1.msra.mxu0 0.0
        %4643 = vmatprep.subr.mxu0 0.0
        %4644 = vmatpush1.msra.mxu0 0.0
        %4645 = vmatprep.subr.mxu0 0.0
        %4646 = vmatpush1.msra.mxu0 0.0
        %4647 = vmatprep.subr.mxu0 0.0
        %4648 = vmatpush1.msra.mxu0 0.0
        %4649 = vmatprep.subr.mxu0 0.0
        %4650 = vmatpush1.msra.mxu0 0.0
        %4651 = vmatprep.subr.mxu0 0.0
        %4652 = vmatpush1.msra.mxu0 0.0
        %4653 = vmatprep.subr.mxu0 0.0
        %4654 = vmatpush1.msra.mxu0 0.0
        %4655 = vmatprep.subr.mxu0 0.0
        %4656 = vmatpush1.msra.mxu0 0.0
        %4657 = vmatprep.subr.mxu0 0.0
        %4658 = vmatpush1.msra.mxu0 0.0
        %4659 = vmatprep.subr.mxu0 0.0
        %4660 = vmatpush1.msra.mxu0 0.0
        %4661 = vmatprep.subr.mxu0 0.0
        %4662 = vmatpush1.msra.mxu0 0.0
        %4663 = vmatprep.subr.mxu0 0.0
        %4664 = vmatpush1.msra.mxu0 0.0
        %4665 = vmatprep.subr.mxu0 0.0
        %4666 = vmatpush1.msra.mxu0 0.0
        %4667 = vmatprep.subr.mxu0 0.0
        %4668 = vmatpush1.msra.mxu0 0.0
        %4669 = vmatprep.subr.mxu0 0.0
        %4670 = vmatpush1.msra.mxu0 0.0
        %4671 = vmatprep.mubr.f32.mxu0 0.0
        %4672 = vmatmul.mubr.f32.gmra.mrb[0].mxu0 %v4584
        %v4673 = vpop.f32.mrb[0].mxu0
        %v4674 = vadd.f32 0.0, %v4673
        %v4675 = vpop.f32.mrb[0].mxu0
        %v4676 = vadd.f32 0.0, %v4675
        %4677 = vmatprep.mubr.f32.mxu0 0.0
        %4678 = vmatmul.mubr.f32.gmra.mrb[0].mxu0 %v4587
        %v4679 = vpop.f32.mrb[0].mxu0
        %v4680 = vadd.f32 0.0, %v4679
        %v4681 = vpop.f32.mrb[0].mxu0
        %v4682 = vadd.f32 0.0, %v4681
        %4683 = vmatprep.mubr.f32.mxu0 0.0
        %4684 = vmatmul.mubr.f32.gmra.mrb[0].mxu0 %v4590
        %v4685 = vpop.f32.mrb[0].mxu0
        %v4686 = vadd.f32 0.0, %v4685
        %v4687 = vpop.f32.mrb[0].mxu0
        %v4688 = vadd.f32 0.0, %v4687
        %4689 = vmatprep.mubr.f32.mxu0 0.0
        %4690 = vmatmul.mubr.f32.gmra.mrb[0].mxu0 %v4593
        %v4691 = vpop.f32.mrb[0].mxu0
        %v4692 = vadd.f32 0.0, %v4691
        %v4693 = vpop.f32.mrb[0].mxu0
        %v4694 = vadd.f32 0.0, %v4693
        %4695 = vmatprep.mubr.f32.mxu0 0.0
        %4696 = vmatmul.mubr.f32.gmra.mrb[0].mxu0 %v4596
        %v4697 = vpop.f32.mrb[0].mxu0
        %v4698 = vadd.f32 0.0, %v4697
        %v4699 = vpop.f32.mrb[0].mxu0
        %v4700 = vadd.f32 0.0, %v4699
        %4701 = vmatprep.mubr.f32.mxu0 0.0
        %4702 = vmatmul.mubr.f32.gmra.mrb[0].mxu0 %v4599
        %v4703 = vpop.f32.mrb[0].mxu0
        %v4704 = vadd.f32 0.0, %v4703
        %v4705 = vpop.f32.mrb[0].mxu0
        %v4706 = vadd.f32 0.0, %v4705
        %4707 = vmatprep.mubr.f32.mxu0 0.0
        %4708 = vmatmul.mubr.f32.gmra.mrb[0].mxu0 %v4602
        %v4709 = vpop.f32.mrb[0].mxu0
        %v4710 = vadd.f32 0.0, %v4709
        %v4711 = vpop.f32.mrb[0].mxu0
        %v4712 = vadd.f32 0.0, %v4711
        %4713 = vmatprep.mubr.f32.mxu0 0.0
        %4714 = vmatmul.mubr.f32.gmra.mrb[0].mxu0 %v4605
        %v4715 = vpop.f32.mrb[0].mxu0
        %v4716 = vadd.f32 0.0, %v4715
        %v4717 = vpop.f32.mrb[0].mxu0
        %v4718 = vadd.f32 0.0, %v4717
        %4719 = vdwg.mxu0
        %v4720 = vmul.f32 %v4674, 2.0
        %v4721 = vmul.f32 %v4676, 2.0
        %v4722 = vmul.f32 %v4680, 2.0
        %v4723 = vmul.f32 %v4682, 2.0
        %v4724 = vmul.f32 %v4686, 2.0
        %v4725 = vmul.f32 %v4688, 2.0
        %v4726 = vmul.f32 %v4692, 2.0
        %v4727 = vmul.f32 %v4694, 2.0
        %v4728 = vmul.f32 %v4698, 2.0
        %v4729 = vmul.f32 %v4700, 2.0
        %v4730 = vmul.f32 %v4704, 2.0
        %v4731 = vmul.f32 %v4706, 2.0
        %v4732 = vmul.f32 %v4710, 2.0
        %v4733 = vmul.f32 %v4712, 2.0
        %v4734 = vmul.f32 %v4716, 2.0
        %v4735 = vmul.f32 %v4718, 2.0
        %v4736 = vsub.f32 %v4561, %v4720
        %v4737 = vsub.f32 %v4561, %v4721
        %v4738 = vsub.f32 %v4564, %v4722
        %v4739 = vsub.f32 %v4564, %v4723
        %v4740 = vsub.f32 %v4567, %v4724
        %v4741 = vsub.f32 %v4567, %v4725
        %v4742 = vsub.f32 %v4570, %v4726
        %v4743 = vsub.f32 %v4570, %v4727
        %v4744 = vsub.f32 %v4573, %v4728
        %v4745 = vsub.f32 %v4573, %v4729
        %v4746 = vsub.f32 %v4576, %v4730
        %v4747 = vsub.f32 %v4576, %v4731
        %v4748 = vsub.f32 %v4579, %v4732
        %v4749 = vsub.f32 %v4579, %v4733
        %v4750 = vsub.f32 %v4582, %v4734
        %v4751 = vsub.f32 %v4582, %v4735
        %v4752 = vmin.f32 %v4736, %v4740
        %v4753 = vmin.f32 %v4738, %v4742
        %v4754 = vmin.f32 %v4752, %v4744
        %v4755 = vmin.f32 %v4753, %v4746
        %v4756 = vmin.f32 %v4754, %v4748
        %v4757 = vmin.f32 %v4755, %v4750
        %v4758 = vmin.f32 %v4756, %v4757
        %v4759 = vrot.slane %v4758, 4
        %v4760 = vmin.f32 %v4758, %v4759
        %v4761 = vrot.slane %v4760, 2
        %v4762 = vmin.f32 %v4760, %v4761
        %v4763 = vrot.slane %v4762, 1
        %v4764 = vmin.f32 %v4762, %v4763
        %v4765 = vmin.f32 %v4737, %v4741
        %v4766 = vmin.f32 %v4739, %v4743
        %v4767 = vmin.f32 %v4765, %v4745
        %v4768 = vmin.f32 %v4766, %v4747
        %v4769 = vmin.f32 %v4767, %v4749
        %v4770 = vmin.f32 %v4768, %v4751
        %v4771 = vmin.f32 %v4769, %v4770
        %v4772 = vrot.slane %v4771, 4
        %v4773 = vmin.f32 %v4771, %v4772
        %v4774 = vrot.slane %v4773, 2
        %v4775 = vmin.f32 %v4773, %v4774
        %v4776 = vrot.slane %v4775, 1
        %v4777 = vmin.f32 %v4775, %v4776
        %vm4778 = vcmp.le.f32.partialorder %v4736, %v4764
        %vm4779 = vcmp.le.f32.partialorder %v4737, %v4777
        %vm4780 = vcmp.le.f32.partialorder %v4738, %v4764
        %vm4781 = vcmp.le.f32.partialorder %v4739, %v4777
        %vm4782 = vcmp.le.f32.partialorder %v4740, %v4764
        %vm4783 = vcmp.le.f32.partialorder %v4741, %v4777
        %vm4784 = vcmp.le.f32.partialorder %v4742, %v4764
        %vm4785 = vcmp.le.f32.partialorder %v4743, %v4777
        %vm4786 = vcmp.le.f32.partialorder %v4744, %v4764
        %vm4787 = vcmp.le.f32.partialorder %v4745, %v4777
        %vm4788 = vcmp.le.f32.partialorder %v4746, %v4764
        %vm4789 = vcmp.le.f32.partialorder %v4747, %v4777
        %vm4790 = vcmp.le.f32.partialorder %v4748, %v4764
        %vm4791 = vcmp.le.f32.partialorder %v4749, %v4777
        %vm4792 = vcmp.le.f32.partialorder %v4750, %v4764
        %vm4793 = vcmp.le.f32.partialorder %v4751, %v4777
        %v4794 = vsel %vm4778, %v589, 64
        %v4795 = vsel %vm4779, %v589, 64
        %v4796 = vsel %vm4780, %v590, 64
        %v4797 = vsel %vm4781, %v590, 64
        %v4798 = vsel %vm4782, %v591, 64
        %v4799 = vsel %vm4783, %v591, 64
        %v4800 = vsel %vm4784, %v592, 64
        %v4801 = vsel %vm4785, %v592, 64
        %v4802 = vsel %vm4786, %v593, 64
        %v4803 = vsel %vm4787, %v593, 64
        %v4804 = vsel %vm4788, %v594, 64
        %v4805 = vsel %vm4789, %v594, 64
        %v4806 = vsel %vm4790, %v595, 64
        %v4807 = vsel %vm4791, %v595, 64
        %v4808 = vsel %vm4792, %v596, 64
        %v4809 = vsel %vm4793, %v596, 64
        %vm4810 = vcmp.lt.s32.totalorder %v4794, %v4798
        %v4811 = vsel %vm4810, %v4794, %v4798
        %vm4812 = vcmp.lt.s32.totalorder %v4796, %v4800
        %v4813 = vsel %vm4812, %v4796, %v4800
        %vm4814 = vcmp.lt.s32.totalorder %v4811, %v4802
        %v4815 = vsel %vm4814, %v4811, %v4802
        %vm4816 = vcmp.lt.s32.totalorder %v4813, %v4804
        %v4817 = vsel %vm4816, %v4813, %v4804
        %vm4818 = vcmp.lt.s32.totalorder %v4815, %v4806
        %v4819 = vsel %vm4818, %v4815, %v4806
        %vm4820 = vcmp.lt.s32.totalorder %v4817, %v4808
        %v4821 = vsel %vm4820, %v4817, %v4808
        %vm4822 = vcmp.lt.s32.totalorder %v4819, %v4821
        %v4823 = vsel %vm4822, %v4819, %v4821
        %v4824 = vrot.slane %v4823, 4
        %vm4825 = vcmp.lt.s32.totalorder %v4823, %v4824
        %v4826 = vsel %vm4825, %v4823, %v4824
        %v4827 = vrot.slane %v4826, 2
        %vm4828 = vcmp.lt.s32.totalorder %v4826, %v4827
        %v4829 = vsel %vm4828, %v4826, %v4827
        %v4830 = vrot.slane %v4829, 1
        %vm4831 = vcmp.lt.s32.totalorder %v4829, %v4830
        %v4832 = vsel %vm4831, %v4829, %v4830
        %vm4833 = vcmp.lt.s32.totalorder %v4795, %v4799
        %v4834 = vsel %vm4833, %v4795, %v4799
        %vm4835 = vcmp.lt.s32.totalorder %v4797, %v4801
        %v4836 = vsel %vm4835, %v4797, %v4801
        %vm4837 = vcmp.lt.s32.totalorder %v4834, %v4803
        %v4838 = vsel %vm4837, %v4834, %v4803
        %vm4839 = vcmp.lt.s32.totalorder %v4836, %v4805
        %v4840 = vsel %vm4839, %v4836, %v4805
        %vm4841 = vcmp.lt.s32.totalorder %v4838, %v4807
        %v4842 = vsel %vm4841, %v4838, %v4807
        %vm4843 = vcmp.lt.s32.totalorder %v4840, %v4809
        %v4844 = vsel %vm4843, %v4840, %v4809
        %vm4845 = vcmp.lt.s32.totalorder %v4842, %v4844
        %v4846 = vsel %vm4845, %v4842, %v4844
        %v4847 = vrot.slane %v4846, 4
        %vm4848 = vcmp.lt.s32.totalorder %v4846, %v4847
        %v4849 = vsel %vm4848, %v4846, %v4847
        %v4850 = vrot.slane %v4849, 2
        %vm4851 = vcmp.lt.s32.totalorder %v4849, %v4850
        %v4852 = vsel %vm4851, %v4849, %v4850
        %v4853 = vrot.slane %v4852, 1
        %vm4854 = vcmp.lt.s32.totalorder %v4852, %v4853
        %v4855 = vsel %vm4854, %v4852, %v4853
        %vm4856 = vcmp.eq.s32.totalorder %v589, %v4832
        %vm4857 = vcmp.eq.s32.totalorder %v589, %v4855
        %vm4858 = vcmp.eq.s32.totalorder %v590, %v4832
        %vm4859 = vcmp.eq.s32.totalorder %v590, %v4855
        %vm4860 = vcmp.eq.s32.totalorder %v591, %v4832
        %vm4861 = vcmp.eq.s32.totalorder %v591, %v4855
        %vm4862 = vcmp.eq.s32.totalorder %v592, %v4832
        %vm4863 = vcmp.eq.s32.totalorder %v592, %v4855
        %vm4864 = vcmp.eq.s32.totalorder %v593, %v4832
        %vm4865 = vcmp.eq.s32.totalorder %v593, %v4855
        %vm4866 = vcmp.eq.s32.totalorder %v594, %v4832
        %vm4867 = vcmp.eq.s32.totalorder %v594, %v4855
        %vm4868 = vcmp.eq.s32.totalorder %v595, %v4832
        %vm4869 = vcmp.eq.s32.totalorder %v595, %v4855
        %vm4870 = vcmp.eq.s32.totalorder %v596, %v4832
        %vm4871 = vcmp.eq.s32.totalorder %v596, %v4855
        %v4872 = vsel %vm4856, 1, 0
        %v4873 = vsel %vm4857, 1, 0
        %v4874 = vsel %vm4858, 1, 0
        %v4875 = vsel %vm4859, 1, 0
        %v4876 = vsel %vm4860, 1, 0
        %v4877 = vsel %vm4861, 1, 0
        %v4878 = vsel %vm4862, 1, 0
        %v4879 = vsel %vm4863, 1, 0
        %v4880 = vsel %vm4864, 1, 0
        %v4881 = vsel %vm4865, 1, 0
        %v4882 = vsel %vm4866, 1, 0
        %v4883 = vsel %vm4867, 1, 0
        %v4884 = vsel %vm4868, 1, 0
        %v4885 = vsel %vm4869, 1, 0
        %v4886 = vsel %vm4870, 1, 0
        %v4887 = vsel %vm4871, 1, 0
        %v4888 = vcvt.s32.f32 %v4872
        %v4889 = vcvt.s32.f32 %v4873
        %v4890 = vcvt.s32.f32 %v4874
        %v4891 = vcvt.s32.f32 %v4875
        %v4892 = vcvt.s32.f32 %v4876
        %v4893 = vcvt.s32.f32 %v4877
        %v4894 = vcvt.s32.f32 %v4878
        %v4895 = vcvt.s32.f32 %v4879
        %v4896 = vcvt.s32.f32 %v4880
        %v4897 = vcvt.s32.f32 %v4881
        %v4898 = vcvt.s32.f32 %v4882
        %v4899 = vcvt.s32.f32 %v4883
        %v4900 = vcvt.s32.f32 %v4884
        %v4901 = vcvt.s32.f32 %v4885
        %v4902 = vcvt.s32.f32 %v4886
        %v4903 = vcvt.s32.f32 %v4887
        %v4904 = vpack.c.bf16 %v4890, %v4888
        %v4905 = vpack.c.bf16 %v4891, %v4889
        %v4906 = vpack.c.bf16 %v4894, %v4892
        %v4907 = vpack.c.bf16 %v4895, %v4893
        %v4908 = vpack.c.bf16 %v4898, %v4896
        %v4909 = vpack.c.bf16 %v4899, %v4897
        %v4910 = vpack.c.bf16 %v4902, %v4900
        %v4911 = vpack.c.bf16 %v4903, %v4901
        %4912 = vmatprep.subr.bf16.mxu0 %v507
        %4913 = vmatpush1.bf16.xpose.msra.mxu0 %v506
        %4914 = vmatprep.subr.bf16.mxu0 1065369472
        %4915 = vmatpush1.bf16.xpose.msra.mxu0 1065369472
        %4916 = vmatprep.subr.bf16.mxu0 0
        %4917 = vmatpush1.bf16.xpose.msra.mxu0 0
        %4918 = vmatprep.subr.bf16.mxu0 0
        %4919 = vmatpush1.bf16.xpose.msra.mxu0 0
        %4920 = vmatprep.subr.bf16.mxu0 0
        %4921 = vmatpush1.bf16.xpose.msra.mxu0 0
        %4922 = vmatprep.subr.bf16.mxu0 0
        %4923 = vmatpush1.bf16.xpose.msra.mxu0 0
        %4924 = vmatprep.subr.bf16.mxu0 0
        %4925 = vmatpush1.bf16.xpose.msra.mxu0 0
        %4926 = vmatprep.subr.bf16.mxu0 0
        %4927 = vmatpush1.bf16.xpose.msra.mxu0 0
        %4928 = vmatprep.subr.bf16.mxu0 0
        %4929 = vmatpush1.bf16.xpose.msra.mxu0 0
        %4930 = vmatprep.subr.bf16.mxu0 0
        %4931 = vmatpush1.bf16.xpose.msra.mxu0 0
        %4932 = vmatprep.subr.bf16.mxu0 0
        %4933 = vmatpush1.bf16.xpose.msra.mxu0 0
        %4934 = vmatprep.subr.bf16.mxu0 0
        %4935 = vmatpush1.bf16.xpose.msra.mxu0 0
        %4936 = vmatprep.subr.bf16.mxu0 0
        %4937 = vmatpush1.bf16.xpose.msra.mxu0 0
        %4938 = vmatprep.subr.bf16.mxu0 0
        %4939 = vmatpush1.bf16.xpose.msra.mxu0 0
        %4940 = vmatprep.subr.bf16.mxu0 0
        %4941 = vmatpush1.bf16.xpose.msra.mxu0 0
        %4942 = vmatprep.subr.bf16.mxu0 0
        %4943 = vmatpush1.bf16.xpose.msra.mxu0 0
        %4944 = vmatprep.mubr.bf16.mxu0 %v4905
        %4945 = vmatmul.mubr.bf16.gmra.mrb[0].mxu0 %v4904
        %v4946 = vpop.f32.mrb[0].mxu0
        %v4947 = vadd.f32 0.0, %v4946
        %v4948 = vpop.f32.mrb[0].mxu0
        %v4949 = vpop.f32.mrb[0].mxu0
        %v4950 = vadd.f32 0.0, %v4949
        %v4951 = vpop.f32.mrb[0].mxu0
        %4952 = vmatprep.mubr.bf16.mxu0 %v4907
        %4953 = vmatmul.mubr.bf16.gmra.mrb[0].mxu0 %v4906
        %v4954 = vpop.f32.mrb[0].mxu0
        %v4955 = vadd.f32 0.0, %v4954
        %v4956 = vpop.f32.mrb[0].mxu0
        %v4957 = vpop.f32.mrb[0].mxu0
        %v4958 = vadd.f32 0.0, %v4957
        %v4959 = vpop.f32.mrb[0].mxu0
        %4960 = vmatprep.mubr.bf16.mxu0 %v4909
        %4961 = vmatmul.mubr.bf16.gmra.mrb[0].mxu0 %v4908
        %v4962 = vpop.f32.mrb[0].mxu0
        %v4963 = vadd.f32 0.0, %v4962
        %v4964 = vpop.f32.mrb[0].mxu0
        %v4965 = vpop.f32.mrb[0].mxu0
        %v4966 = vadd.f32 0.0, %v4965
        %v4967 = vpop.f32.mrb[0].mxu0
        %4968 = vmatprep.mubr.bf16.mxu0 %v4911
        %4969 = vmatmul.mubr.bf16.gmra.mrb[0].mxu0 %v4910
        %v4970 = vpop.f32.mrb[0].mxu0
        %v4971 = vadd.f32 0.0, %v4970
        %v4972 = vpop.f32.mrb[0].mxu0
        %v4973 = vpop.f32.mrb[0].mxu0
        %v4974 = vadd.f32 0.0, %v4973
        %v4975 = vpop.f32.mrb[0].mxu0
        %4976 = vdwg.mxu0
        %vm4977 = vcmp.gt.f32.partialorder %v4947, 0.5
        %vm4978 = vcmp.gt.f32.partialorder %v4950, 0.5
        %vm4979 = vcmp.gt.f32.partialorder %v4955, 0.5
        %vm4980 = vcmp.gt.f32.partialorder %v4958, 0.5
        %vm4981 = vcmp.gt.f32.partialorder %v4963, 0.5
        %vm4982 = vcmp.gt.f32.partialorder %v4966, 0.5
        %vm4983 = vcmp.gt.f32.partialorder %v4971, 0.5
        %vm4984 = vcmp.gt.f32.partialorder %v4974, 0.5
        %v4985 = vmax.f32 %v4947, 1.0
        %v4986 = vmax.f32 %v4950, 1.0
        %v4987 = vmax.f32 %v4955, 1.0
        %v4988 = vmax.f32 %v4958, 1.0
        %v4989 = vmax.f32 %v4963, 1.0
        %v4990 = vmax.f32 %v4966, 1.0
        %v4991 = vmax.f32 %v4971, 1.0
        %v4992 = vmax.f32 %v4974, 1.0
        %4994 = vset.pattern.permute.xlu0 16
        %4995 = vperm.xlu0 %4994, %v4985
        %v4996 = vpop.permute.xlu0 %4995
        %4999 = vset.pattern.permute.xlu0 16
        %5000 = vperm.xlu0 %4999, %v4986
        %v5001 = vpop.permute.xlu0 %5000
        %5004 = vset.pattern.permute.xlu0 16
        %5005 = vperm.xlu0 %5004, %v4987
        %v5006 = vpop.permute.xlu0 %5005
        %5009 = vset.pattern.permute.xlu0 16
        %5010 = vperm.xlu0 %5009, %v4988
        %v5011 = vpop.permute.xlu0 %5010
        %5014 = vset.pattern.permute.xlu0 16
        %5015 = vperm.xlu0 %5014, %v4989
        %v5016 = vpop.permute.xlu0 %5015
        %5019 = vset.pattern.permute.xlu0 16
        %5020 = vperm.xlu0 %5019, %v4990
        %v5021 = vpop.permute.xlu0 %5020
        %5024 = vset.pattern.permute.xlu0 16
        %5025 = vperm.xlu0 %5024, %v4991
        %v5026 = vpop.permute.xlu0 %5025
        %5029 = vset.pattern.permute.xlu0 16
        %5030 = vperm.xlu0 %5029, %v4992
        %v5031 = vpop.permute.xlu0 %5030
        %v5033 = vrcp.pop %v4996
        %v5034 = vmul.f32 %v4947, %v5033
        %v5035 = vrcp.pop %v5001
        %v5036 = vmul.f32 %v4950, %v5035
        %v5037 = vrcp.pop %v5006
        %v5038 = vmul.f32 %v4955, %v5037
        %v5039 = vrcp.pop %v5011
        %v5040 = vmul.f32 %v4958, %v5039
        %v5041 = vrcp.pop %v5016
        %v5042 = vmul.f32 %v4963, %v5041
        %v5043 = vrcp.pop %v5021
        %v5044 = vmul.f32 %v4966, %v5043
        %v5045 = vrcp.pop %v5026
        %v5046 = vmul.f32 %v4971, %v5045
        %v5047 = vrcp.pop %v5031
        %v5048 = vmul.f32 %v4974, %v5047
        %v5049 = vsel %vm4977, 1, 0
        %v5050 = vsel %vm4978, 1, 0
        %v5051 = vsel %vm4979, 1, 0
        %v5052 = vsel %vm4980, 1, 0
        %v5053 = vsel %vm4981, 1, 0
        %v5054 = vsel %vm4982, 1, 0
        %v5055 = vsel %vm4983, 1, 0
        %v5056 = vsel %vm4984, 1, 0
        %5057 = vset.pattern.permute.xlu0 16
        %5058 = vperm.xlu0 %5057, %v5049
        %v5059 = vpop.permute.xlu0 %5058
        %5060 = vset.pattern.permute.xlu0 16
        %5061 = vperm.xlu0 %5060, %v5050
        %v5062 = vpop.permute.xlu0 %5061
        %5063 = vset.pattern.permute.xlu0 16
        %5064 = vperm.xlu0 %5063, %v5051
        %v5065 = vpop.permute.xlu0 %5064
        %5066 = vset.pattern.permute.xlu0 16
        %5067 = vperm.xlu0 %5066, %v5052
        %v5068 = vpop.permute.xlu0 %5067
        %5069 = vset.pattern.permute.xlu0 16
        %5070 = vperm.xlu0 %5069, %v5053
        %v5071 = vpop.permute.xlu0 %5070
        %5072 = vset.pattern.permute.xlu0 16
        %5073 = vperm.xlu0 %5072, %v5054
        %v5074 = vpop.permute.xlu0 %5073
        %5075 = vset.pattern.permute.xlu0 16
        %5076 = vperm.xlu0 %5075, %v5055
        %v5077 = vpop.permute.xlu0 %5076
        %5078 = vset.pattern.permute.xlu0 16
        %5079 = vperm.xlu0 %5078, %v5056
        %v5080 = vpop.permute.xlu0 %5079
        %vm5081 = vcmp.eq.s32.totalorder %v5059, 1
        %vm5082 = vcmp.eq.s32.totalorder %v5062, 1
        %vm5083 = vcmp.eq.s32.totalorder %v5065, 1
        %vm5084 = vcmp.eq.s32.totalorder %v5068, 1
        %vm5085 = vcmp.eq.s32.totalorder %v5071, 1
        %vm5086 = vcmp.eq.s32.totalorder %v5074, 1
        %vm5087 = vcmp.eq.s32.totalorder %v5077, 1
        %vm5088 = vcmp.eq.s32.totalorder %v5080, 1
        %v5089 = vsel %vm5081, %v5034, %v4543
        %v5090 = vsel %vm5082, %v5036, %v4544
        %v5091 = vsel %vm5083, %v5038, %v4545
        %v5092 = vsel %vm5084, %v5040, %v4546
        %v5093 = vsel %vm5085, %v5042, %v4547
        %v5094 = vsel %vm5086, %v5044, %v4548
        %v5095 = vsel %vm5087, %v5046, %v4549
        %v5096 = vsel %vm5088, %v5048, %v4550
        %v5097 = vmul.f32 %v5089, %v5089
        %v5098 = vmul.f32 %v5090, %v5090
        %v5099 = vmul.f32 %v5091, %v5091
        %v5100 = vmul.f32 %v5092, %v5092
        %v5101 = vmul.f32 %v5093, %v5093
        %v5102 = vmul.f32 %v5094, %v5094
        %v5103 = vmul.f32 %v5095, %v5095
        %v5104 = vmul.f32 %v5096, %v5096
        %v5105 = vsel %vm586, %v5097, 0.0
        %5106 = vadd.xlane.f32.xlu0 %v5105
        %v5107 = vpop.xlane.xlu0 %5106
        %v5108 = vsel %vm586, %v5098, 0.0
        %5109 = vadd.xlane.f32.xlu0 %v5108
        %v5110 = vpop.xlane.xlu0 %5109
        %v5111 = vsel %vm586, %v5099, 0.0
        %5112 = vadd.xlane.f32.xlu0 %v5111
        %v5113 = vpop.xlane.xlu0 %5112
        %v5114 = vsel %vm586, %v5100, 0.0
        %5115 = vadd.xlane.f32.xlu0 %v5114
        %v5116 = vpop.xlane.xlu0 %5115
        %v5117 = vsel %vm586, %v5101, 0.0
        %5118 = vadd.xlane.f32.xlu0 %v5117
        %v5119 = vpop.xlane.xlu0 %5118
        %v5120 = vsel %vm586, %v5102, 0.0
        %5121 = vadd.xlane.f32.xlu0 %v5120
        %v5122 = vpop.xlane.xlu0 %5121
        %v5123 = vsel %vm586, %v5103, 0.0
        %5124 = vadd.xlane.f32.xlu0 %v5123
        %v5125 = vpop.xlane.xlu0 %5124
        %v5126 = vsel %vm586, %v5104, 0.0
        %5127 = vadd.xlane.f32.xlu0 %v5126
        %v5128 = vpop.xlane.xlu0 %5127
        %v5130 = vsel %vm586, %v5089, 0
        %v5133 = vsel %vm586, %v5090, 0
        %v5136 = vsel %vm586, %v5091, 0
        %v5139 = vsel %vm586, %v5092, 0
        %v5142 = vsel %vm586, %v5093, 0
        %v5145 = vsel %vm586, %v5094, 0
        %v5148 = vsel %vm586, %v5095, 0
        %v5151 = vsel %vm586, %v5096, 0
        %5153 = vmatprep.subr.mxu0 %v488
        %5154 = vmatpush1.msra.mxu0 %v486
        %5155 = vmatprep.subr.mxu0 %v492
        %5156 = vmatpush1.msra.mxu0 %v490
        %5157 = vmatprep.subr.mxu0 0.0
        %5158 = vmatpush1.msra.mxu0 0.0
        %5159 = vmatprep.subr.mxu0 0.0
        %5160 = vmatpush1.msra.mxu0 0.0
        %5161 = vmatprep.subr.mxu0 0.0
        %5162 = vmatpush1.msra.mxu0 0.0
        %5163 = vmatprep.subr.mxu0 0.0
        %5164 = vmatpush1.msra.mxu0 0.0
        %5165 = vmatprep.subr.mxu0 0.0
        %5166 = vmatpush1.msra.mxu0 0.0
        %5167 = vmatprep.subr.mxu0 0.0
        %5168 = vmatpush1.msra.mxu0 0.0
        %5169 = vmatprep.subr.mxu0 0.0
        %5170 = vmatpush1.msra.mxu0 0.0
        %5171 = vmatprep.subr.mxu0 0.0
        %5172 = vmatpush1.msra.mxu0 0.0
        %5173 = vmatprep.subr.mxu0 0.0
        %5174 = vmatpush1.msra.mxu0 0.0
        %5175 = vmatprep.subr.mxu0 0.0
        %5176 = vmatpush1.msra.mxu0 0.0
        %5177 = vmatprep.subr.mxu0 0.0
        %5178 = vmatpush1.msra.mxu0 0.0
        %5179 = vmatprep.subr.mxu0 0.0
        %5180 = vmatpush1.msra.mxu0 0.0
        %5181 = vmatprep.subr.mxu0 0.0
        %5182 = vmatpush1.msra.mxu0 0.0
        %5183 = vmatprep.subr.mxu0 0.0
        %5184 = vmatpush1.msra.mxu0 0.0
        %5185 = vmatprep.subr.mxu0 0.0
        %5186 = vmatpush1.msra.mxu0 0.0
        %5187 = vmatprep.subr.mxu0 0.0
        %5188 = vmatpush1.msra.mxu0 0.0
        %5189 = vmatprep.subr.mxu0 0.0
        %5190 = vmatpush1.msra.mxu0 0.0
        %5191 = vmatprep.subr.mxu0 0.0
        %5192 = vmatpush1.msra.mxu0 0.0
        %5193 = vmatprep.subr.mxu0 0.0
        %5194 = vmatpush1.msra.mxu0 0.0
        %5195 = vmatprep.subr.mxu0 0.0
        %5196 = vmatpush1.msra.mxu0 0.0
        %5197 = vmatprep.subr.mxu0 0.0
        %5198 = vmatpush1.msra.mxu0 0.0
        %5199 = vmatprep.subr.mxu0 0.0
        %5200 = vmatpush1.msra.mxu0 0.0
        %5201 = vmatprep.subr.mxu0 0.0
        %5202 = vmatpush1.msra.mxu0 0.0
        %5203 = vmatprep.subr.mxu0 0.0
        %5204 = vmatpush1.msra.mxu0 0.0
        %5205 = vmatprep.subr.mxu0 0.0
        %5206 = vmatpush1.msra.mxu0 0.0
        %5207 = vmatprep.subr.mxu0 0.0
        %5208 = vmatpush1.msra.mxu0 0.0
        %5209 = vmatprep.subr.mxu0 0.0
        %5210 = vmatpush1.msra.mxu0 0.0
        %5211 = vmatprep.subr.mxu0 0.0
        %5212 = vmatpush1.msra.mxu0 0.0
        %5213 = vmatprep.subr.mxu0 0.0
        %5214 = vmatpush1.msra.mxu0 0.0
        %5215 = vmatprep.subr.mxu0 0.0
        %5216 = vmatpush1.msra.mxu0 0.0
        %5217 = vmatprep.mubr.f32.mxu0 0.0
        %5218 = vmatmul.mubr.f32.gmra.mrb[0].mxu0 %v5130
        %v5219 = vpop.f32.mrb[0].mxu0
        %v5220 = vadd.f32 0.0, %v5219
        %v5221 = vpop.f32.mrb[0].mxu0
        %v5222 = vadd.f32 0.0, %v5221
        %5223 = vmatprep.mubr.f32.mxu0 0.0
        %5224 = vmatmul.mubr.f32.gmra.mrb[0].mxu0 %v5133
        %v5225 = vpop.f32.mrb[0].mxu0
        %v5226 = vadd.f32 0.0, %v5225
        %v5227 = vpop.f32.mrb[0].mxu0
        %v5228 = vadd.f32 0.0, %v5227
        %5229 = vmatprep.mubr.f32.mxu0 0.0
        %5230 = vmatmul.mubr.f32.gmra.mrb[0].mxu0 %v5136
        %v5231 = vpop.f32.mrb[0].mxu0
        %v5232 = vadd.f32 0.0, %v5231
        %v5233 = vpop.f32.mrb[0].mxu0
        %v5234 = vadd.f32 0.0, %v5233
        %5235 = vmatprep.mubr.f32.mxu0 0.0
        %5236 = vmatmul.mubr.f32.gmra.mrb[0].mxu0 %v5139
        %v5237 = vpop.f32.mrb[0].mxu0
        %v5238 = vadd.f32 0.0, %v5237
        %v5239 = vpop.f32.mrb[0].mxu0
        %v5240 = vadd.f32 0.0, %v5239
        %5241 = vmatprep.mubr.f32.mxu0 0.0
        %5242 = vmatmul.mubr.f32.gmra.mrb[0].mxu0 %v5142
        %v5243 = vpop.f32.mrb[0].mxu0
        %v5244 = vadd.f32 0.0, %v5243
        %v5245 = vpop.f32.mrb[0].mxu0
        %v5246 = vadd.f32 0.0, %v5245
        %5247 = vmatprep.mubr.f32.mxu0 0.0
        %5248 = vmatmul.mubr.f32.gmra.mrb[0].mxu0 %v5145
        %v5249 = vpop.f32.mrb[0].mxu0
        %v5250 = vadd.f32 0.0, %v5249
        %v5251 = vpop.f32.mrb[0].mxu0
        %v5252 = vadd.f32 0.0, %v5251
        %5253 = vmatprep.mubr.f32.mxu0 0.0
        %5254 = vmatmul.mubr.f32.gmra.mrb[0].mxu0 %v5148
        %v5255 = vpop.f32.mrb[0].mxu0
        %v5256 = vadd.f32 0.0, %v5255
        %v5257 = vpop.f32.mrb[0].mxu0
        %v5258 = vadd.f32 0.0, %v5257
        %5259 = vmatprep.mubr.f32.mxu0 0.0
        %5260 = vmatmul.mubr.f32.gmra.mrb[0].mxu0 %v5151
        %v5261 = vpop.f32.mrb[0].mxu0
        %v5262 = vadd.f32 0.0, %v5261
        %v5263 = vpop.f32.mrb[0].mxu0
        %v5264 = vadd.f32 0.0, %v5263
        %5265 = vdwg.mxu0
        %v5266 = vmul.f32 %v5220, 2.0
        %v5267 = vmul.f32 %v5222, 2.0
        %v5268 = vmul.f32 %v5226, 2.0
        %v5269 = vmul.f32 %v5228, 2.0
        %v5270 = vmul.f32 %v5232, 2.0
        %v5271 = vmul.f32 %v5234, 2.0
        %v5272 = vmul.f32 %v5238, 2.0
        %v5273 = vmul.f32 %v5240, 2.0
        %v5274 = vmul.f32 %v5244, 2.0
        %v5275 = vmul.f32 %v5246, 2.0
        %v5276 = vmul.f32 %v5250, 2.0
        %v5277 = vmul.f32 %v5252, 2.0
        %v5278 = vmul.f32 %v5256, 2.0
        %v5279 = vmul.f32 %v5258, 2.0
        %v5280 = vmul.f32 %v5262, 2.0
        %v5281 = vmul.f32 %v5264, 2.0
        %v5282 = vsub.f32 %v5107, %v5266
        %v5283 = vsub.f32 %v5107, %v5267
        %v5284 = vsub.f32 %v5110, %v5268
        %v5285 = vsub.f32 %v5110, %v5269
        %v5286 = vsub.f32 %v5113, %v5270
        %v5287 = vsub.f32 %v5113, %v5271
        %v5288 = vsub.f32 %v5116, %v5272
        %v5289 = vsub.f32 %v5116, %v5273
        %v5290 = vsub.f32 %v5119, %v5274
        %v5291 = vsub.f32 %v5119, %v5275
        %v5292 = vsub.f32 %v5122, %v5276
        %v5293 = vsub.f32 %v5122, %v5277
        %v5294 = vsub.f32 %v5125, %v5278
        %v5295 = vsub.f32 %v5125, %v5279
        %v5296 = vsub.f32 %v5128, %v5280
        %v5297 = vsub.f32 %v5128, %v5281
        %v5298 = vmin.f32 %v5282, %v5286
        %v5299 = vmin.f32 %v5284, %v5288
        %v5300 = vmin.f32 %v5298, %v5290
        %v5301 = vmin.f32 %v5299, %v5292
        %v5302 = vmin.f32 %v5300, %v5294
        %v5303 = vmin.f32 %v5301, %v5296
        %v5304 = vmin.f32 %v5302, %v5303
        %v5305 = vrot.slane %v5304, 4
        %v5306 = vmin.f32 %v5304, %v5305
        %v5307 = vrot.slane %v5306, 2
        %v5308 = vmin.f32 %v5306, %v5307
        %v5309 = vrot.slane %v5308, 1
        %v5310 = vmin.f32 %v5308, %v5309
        %v5311 = vmin.f32 %v5283, %v5287
        %v5312 = vmin.f32 %v5285, %v5289
        %v5313 = vmin.f32 %v5311, %v5291
        %v5314 = vmin.f32 %v5312, %v5293
        %v5315 = vmin.f32 %v5313, %v5295
        %v5316 = vmin.f32 %v5314, %v5297
        %v5317 = vmin.f32 %v5315, %v5316
        %v5318 = vrot.slane %v5317, 4
        %v5319 = vmin.f32 %v5317, %v5318
        %v5320 = vrot.slane %v5319, 2
        %v5321 = vmin.f32 %v5319, %v5320
        %v5322 = vrot.slane %v5321, 1
        %v5323 = vmin.f32 %v5321, %v5322
        %vm5324 = vcmp.le.f32.partialorder %v5282, %v5310
        %vm5325 = vcmp.le.f32.partialorder %v5283, %v5323
        %vm5326 = vcmp.le.f32.partialorder %v5284, %v5310
        %vm5327 = vcmp.le.f32.partialorder %v5285, %v5323
        %vm5328 = vcmp.le.f32.partialorder %v5286, %v5310
        %vm5329 = vcmp.le.f32.partialorder %v5287, %v5323
        %vm5330 = vcmp.le.f32.partialorder %v5288, %v5310
        %vm5331 = vcmp.le.f32.partialorder %v5289, %v5323
        %vm5332 = vcmp.le.f32.partialorder %v5290, %v5310
        %vm5333 = vcmp.le.f32.partialorder %v5291, %v5323
        %vm5334 = vcmp.le.f32.partialorder %v5292, %v5310
        %vm5335 = vcmp.le.f32.partialorder %v5293, %v5323
        %vm5336 = vcmp.le.f32.partialorder %v5294, %v5310
        %vm5337 = vcmp.le.f32.partialorder %v5295, %v5323
        %vm5338 = vcmp.le.f32.partialorder %v5296, %v5310
        %vm5339 = vcmp.le.f32.partialorder %v5297, %v5323
        %v5340 = vsel %vm5324, %v589, 64
        %v5341 = vsel %vm5325, %v589, 64
        %v5342 = vsel %vm5326, %v590, 64
        %v5343 = vsel %vm5327, %v590, 64
        %v5344 = vsel %vm5328, %v591, 64
        %v5345 = vsel %vm5329, %v591, 64
        %v5346 = vsel %vm5330, %v592, 64
        %v5347 = vsel %vm5331, %v592, 64
        %v5348 = vsel %vm5332, %v593, 64
        %v5349 = vsel %vm5333, %v593, 64
        %v5350 = vsel %vm5334, %v594, 64
        %v5351 = vsel %vm5335, %v594, 64
        %v5352 = vsel %vm5336, %v595, 64
        %v5353 = vsel %vm5337, %v595, 64
        %v5354 = vsel %vm5338, %v596, 64
        %v5355 = vsel %vm5339, %v596, 64
        %vm5356 = vcmp.lt.s32.totalorder %v5340, %v5344
        %v5357 = vsel %vm5356, %v5340, %v5344
        %vm5358 = vcmp.lt.s32.totalorder %v5342, %v5346
        %v5359 = vsel %vm5358, %v5342, %v5346
        %vm5360 = vcmp.lt.s32.totalorder %v5357, %v5348
        %v5361 = vsel %vm5360, %v5357, %v5348
        %vm5362 = vcmp.lt.s32.totalorder %v5359, %v5350
        %v5363 = vsel %vm5362, %v5359, %v5350
        %vm5364 = vcmp.lt.s32.totalorder %v5361, %v5352
        %v5365 = vsel %vm5364, %v5361, %v5352
        %vm5366 = vcmp.lt.s32.totalorder %v5363, %v5354
        %v5367 = vsel %vm5366, %v5363, %v5354
        %vm5368 = vcmp.lt.s32.totalorder %v5365, %v5367
        %v5369 = vsel %vm5368, %v5365, %v5367
        %v5370 = vrot.slane %v5369, 4
        %vm5371 = vcmp.lt.s32.totalorder %v5369, %v5370
        %v5372 = vsel %vm5371, %v5369, %v5370
        %v5373 = vrot.slane %v5372, 2
        %vm5374 = vcmp.lt.s32.totalorder %v5372, %v5373
        %v5375 = vsel %vm5374, %v5372, %v5373
        %v5376 = vrot.slane %v5375, 1
        %vm5377 = vcmp.lt.s32.totalorder %v5375, %v5376
        %v5378 = vsel %vm5377, %v5375, %v5376
        %vm5379 = vcmp.lt.s32.totalorder %v5341, %v5345
        %v5380 = vsel %vm5379, %v5341, %v5345
        %vm5381 = vcmp.lt.s32.totalorder %v5343, %v5347
        %v5382 = vsel %vm5381, %v5343, %v5347
        %vm5383 = vcmp.lt.s32.totalorder %v5380, %v5349
        %v5384 = vsel %vm5383, %v5380, %v5349
        %vm5385 = vcmp.lt.s32.totalorder %v5382, %v5351
        %v5386 = vsel %vm5385, %v5382, %v5351
        %vm5387 = vcmp.lt.s32.totalorder %v5384, %v5353
        %v5388 = vsel %vm5387, %v5384, %v5353
        %vm5389 = vcmp.lt.s32.totalorder %v5386, %v5355
        %v5390 = vsel %vm5389, %v5386, %v5355
        %vm5391 = vcmp.lt.s32.totalorder %v5388, %v5390
        %v5392 = vsel %vm5391, %v5388, %v5390
        %v5393 = vrot.slane %v5392, 4
        %vm5394 = vcmp.lt.s32.totalorder %v5392, %v5393
        %v5395 = vsel %vm5394, %v5392, %v5393
        %v5396 = vrot.slane %v5395, 2
        %vm5397 = vcmp.lt.s32.totalorder %v5395, %v5396
        %v5398 = vsel %vm5397, %v5395, %v5396
        %v5399 = vrot.slane %v5398, 1
        %vm5400 = vcmp.lt.s32.totalorder %v5398, %v5399
        %v5401 = vsel %vm5400, %v5398, %v5399
        %vm5402 = vcmp.eq.s32.totalorder %v589, %v5378
        %vm5403 = vcmp.eq.s32.totalorder %v589, %v5401
        %vm5404 = vcmp.eq.s32.totalorder %v590, %v5378
        %vm5405 = vcmp.eq.s32.totalorder %v590, %v5401
        %vm5406 = vcmp.eq.s32.totalorder %v591, %v5378
        %vm5407 = vcmp.eq.s32.totalorder %v591, %v5401
        %vm5408 = vcmp.eq.s32.totalorder %v592, %v5378
        %vm5409 = vcmp.eq.s32.totalorder %v592, %v5401
        %vm5410 = vcmp.eq.s32.totalorder %v593, %v5378
        %vm5411 = vcmp.eq.s32.totalorder %v593, %v5401
        %vm5412 = vcmp.eq.s32.totalorder %v594, %v5378
        %vm5413 = vcmp.eq.s32.totalorder %v594, %v5401
        %vm5414 = vcmp.eq.s32.totalorder %v595, %v5378
        %vm5415 = vcmp.eq.s32.totalorder %v595, %v5401
        %vm5416 = vcmp.eq.s32.totalorder %v596, %v5378
        %vm5417 = vcmp.eq.s32.totalorder %v596, %v5401
        %v5418 = vsel %vm5402, 1, 0
        %v5419 = vsel %vm5403, 1, 0
        %v5420 = vsel %vm5404, 1, 0
        %v5421 = vsel %vm5405, 1, 0
        %v5422 = vsel %vm5406, 1, 0
        %v5423 = vsel %vm5407, 1, 0
        %v5424 = vsel %vm5408, 1, 0
        %v5425 = vsel %vm5409, 1, 0
        %v5426 = vsel %vm5410, 1, 0
        %v5427 = vsel %vm5411, 1, 0
        %v5428 = vsel %vm5412, 1, 0
        %v5429 = vsel %vm5413, 1, 0
        %v5430 = vsel %vm5414, 1, 0
        %v5431 = vsel %vm5415, 1, 0
        %v5432 = vsel %vm5416, 1, 0
        %v5433 = vsel %vm5417, 1, 0
        %v5434 = vcvt.s32.f32 %v5418
        %v5435 = vcvt.s32.f32 %v5419
        %v5436 = vcvt.s32.f32 %v5420
        %v5437 = vcvt.s32.f32 %v5421
        %v5438 = vcvt.s32.f32 %v5422
        %v5439 = vcvt.s32.f32 %v5423
        %v5440 = vcvt.s32.f32 %v5424
        %v5441 = vcvt.s32.f32 %v5425
        %v5442 = vcvt.s32.f32 %v5426
        %v5443 = vcvt.s32.f32 %v5427
        %v5444 = vcvt.s32.f32 %v5428
        %v5445 = vcvt.s32.f32 %v5429
        %v5446 = vcvt.s32.f32 %v5430
        %v5447 = vcvt.s32.f32 %v5431
        %v5448 = vcvt.s32.f32 %v5432
        %v5449 = vcvt.s32.f32 %v5433
        %v5450 = vpack.c.bf16 %v5436, %v5434
        %v5451 = vpack.c.bf16 %v5437, %v5435
        %v5452 = vpack.c.bf16 %v5440, %v5438
        %v5453 = vpack.c.bf16 %v5441, %v5439
        %v5454 = vpack.c.bf16 %v5444, %v5442
        %v5455 = vpack.c.bf16 %v5445, %v5443
        %v5456 = vpack.c.bf16 %v5448, %v5446
        %v5457 = vpack.c.bf16 %v5449, %v5447
        %5458 = vmatprep.subr.bf16.mxu0 %v507
        %5459 = vmatpush1.bf16.xpose.msra.mxu0 %v506
        %5460 = vmatprep.subr.bf16.mxu0 1065369472
        %5461 = vmatpush1.bf16.xpose.msra.mxu0 1065369472
        %5462 = vmatprep.subr.bf16.mxu0 0
        %5463 = vmatpush1.bf16.xpose.msra.mxu0 0
        %5464 = vmatprep.subr.bf16.mxu0 0
        %5465 = vmatpush1.bf16.xpose.msra.mxu0 0
        %5466 = vmatprep.subr.bf16.mxu0 0
        %5467 = vmatpush1.bf16.xpose.msra.mxu0 0
        %5468 = vmatprep.subr.bf16.mxu0 0
        %5469 = vmatpush1.bf16.xpose.msra.mxu0 0
        %5470 = vmatprep.subr.bf16.mxu0 0
        %5471 = vmatpush1.bf16.xpose.msra.mxu0 0
        %5472 = vmatprep.subr.bf16.mxu0 0
        %5473 = vmatpush1.bf16.xpose.msra.mxu0 0
        %5474 = vmatprep.subr.bf16.mxu0 0
        %5475 = vmatpush1.bf16.xpose.msra.mxu0 0
        %5476 = vmatprep.subr.bf16.mxu0 0
        %5477 = vmatpush1.bf16.xpose.msra.mxu0 0
        %5478 = vmatprep.subr.bf16.mxu0 0
        %5479 = vmatpush1.bf16.xpose.msra.mxu0 0
        %5480 = vmatprep.subr.bf16.mxu0 0
        %5481 = vmatpush1.bf16.xpose.msra.mxu0 0
        %5482 = vmatprep.subr.bf16.mxu0 0
        %5483 = vmatpush1.bf16.xpose.msra.mxu0 0
        %5484 = vmatprep.subr.bf16.mxu0 0
        %5485 = vmatpush1.bf16.xpose.msra.mxu0 0
        %5486 = vmatprep.subr.bf16.mxu0 0
        %5487 = vmatpush1.bf16.xpose.msra.mxu0 0
        %5488 = vmatprep.subr.bf16.mxu0 0
        %5489 = vmatpush1.bf16.xpose.msra.mxu0 0
        %5490 = vmatprep.mubr.bf16.mxu0 %v5451
        %5491 = vmatmul.mubr.bf16.gmra.mrb[0].mxu0 %v5450
        %v5492 = vpop.f32.mrb[0].mxu0
        %v5493 = vadd.f32 0.0, %v5492
        %v5494 = vpop.f32.mrb[0].mxu0
        %v5495 = vpop.f32.mrb[0].mxu0
        %v5496 = vadd.f32 0.0, %v5495
        %v5497 = vpop.f32.mrb[0].mxu0
        %5498 = vmatprep.mubr.bf16.mxu0 %v5453
        %5499 = vmatmul.mubr.bf16.gmra.mrb[0].mxu0 %v5452
        %v5500 = vpop.f32.mrb[0].mxu0
        %v5501 = vadd.f32 0.0, %v5500
        %v5502 = vpop.f32.mrb[0].mxu0
        %v5503 = vpop.f32.mrb[0].mxu0
        %v5504 = vadd.f32 0.0, %v5503
        %v5505 = vpop.f32.mrb[0].mxu0
        %5506 = vmatprep.mubr.bf16.mxu0 %v5455
        %5507 = vmatmul.mubr.bf16.gmra.mrb[0].mxu0 %v5454
        %v5508 = vpop.f32.mrb[0].mxu0
        %v5509 = vadd.f32 0.0, %v5508
        %v5510 = vpop.f32.mrb[0].mxu0
        %v5511 = vpop.f32.mrb[0].mxu0
        %v5512 = vadd.f32 0.0, %v5511
        %v5513 = vpop.f32.mrb[0].mxu0
        %5514 = vmatprep.mubr.bf16.mxu0 %v5457
        %5515 = vmatmul.mubr.bf16.gmra.mrb[0].mxu0 %v5456
        %v5516 = vpop.f32.mrb[0].mxu0
        %v5517 = vadd.f32 0.0, %v5516
        %v5518 = vpop.f32.mrb[0].mxu0
        %v5519 = vpop.f32.mrb[0].mxu0
        %v5520 = vadd.f32 0.0, %v5519
        %v5521 = vpop.f32.mrb[0].mxu0
        %5522 = vdwg.mxu0
        %vm5523 = vcmp.gt.f32.partialorder %v5493, 0.5
        %vm5524 = vcmp.gt.f32.partialorder %v5496, 0.5
        %vm5525 = vcmp.gt.f32.partialorder %v5501, 0.5
        %vm5526 = vcmp.gt.f32.partialorder %v5504, 0.5
        %vm5527 = vcmp.gt.f32.partialorder %v5509, 0.5
        %vm5528 = vcmp.gt.f32.partialorder %v5512, 0.5
        %vm5529 = vcmp.gt.f32.partialorder %v5517, 0.5
        %vm5530 = vcmp.gt.f32.partialorder %v5520, 0.5
        %v5531 = vmax.f32 %v5493, 1.0
        %v5532 = vmax.f32 %v5496, 1.0
        %v5533 = vmax.f32 %v5501, 1.0
        %v5534 = vmax.f32 %v5504, 1.0
        %v5535 = vmax.f32 %v5509, 1.0
        %v5536 = vmax.f32 %v5512, 1.0
        %v5537 = vmax.f32 %v5517, 1.0
        %v5538 = vmax.f32 %v5520, 1.0
        %5540 = vset.pattern.permute.xlu0 16
        %5541 = vperm.xlu0 %5540, %v5531
        %v5542 = vpop.permute.xlu0 %5541
        %5545 = vset.pattern.permute.xlu0 16
        %5546 = vperm.xlu0 %5545, %v5532
        %v5547 = vpop.permute.xlu0 %5546
        %5550 = vset.pattern.permute.xlu0 16
        %5551 = vperm.xlu0 %5550, %v5533
        %v5552 = vpop.permute.xlu0 %5551
        %5555 = vset.pattern.permute.xlu0 16
        %5556 = vperm.xlu0 %5555, %v5534
        %v5557 = vpop.permute.xlu0 %5556
        %5560 = vset.pattern.permute.xlu0 16
        %5561 = vperm.xlu0 %5560, %v5535
        %v5562 = vpop.permute.xlu0 %5561
        %5565 = vset.pattern.permute.xlu0 16
        %5566 = vperm.xlu0 %5565, %v5536
        %v5567 = vpop.permute.xlu0 %5566
        %5570 = vset.pattern.permute.xlu0 16
        %5571 = vperm.xlu0 %5570, %v5537
        %v5572 = vpop.permute.xlu0 %5571
        %5575 = vset.pattern.permute.xlu0 16
        %5576 = vperm.xlu0 %5575, %v5538
        %v5577 = vpop.permute.xlu0 %5576
        %v5579 = vrcp.pop %v5542
        %v5580 = vmul.f32 %v5493, %v5579
        %v5581 = vrcp.pop %v5547
        %v5582 = vmul.f32 %v5496, %v5581
        %v5583 = vrcp.pop %v5552
        %v5584 = vmul.f32 %v5501, %v5583
        %v5585 = vrcp.pop %v5557
        %v5586 = vmul.f32 %v5504, %v5585
        %v5587 = vrcp.pop %v5562
        %v5588 = vmul.f32 %v5509, %v5587
        %v5589 = vrcp.pop %v5567
        %v5590 = vmul.f32 %v5512, %v5589
        %v5591 = vrcp.pop %v5572
        %v5592 = vmul.f32 %v5517, %v5591
        %v5593 = vrcp.pop %v5577
        %v5594 = vmul.f32 %v5520, %v5593
        %v5595 = vsel %vm5523, 1, 0
        %v5596 = vsel %vm5524, 1, 0
        %v5597 = vsel %vm5525, 1, 0
        %v5598 = vsel %vm5526, 1, 0
        %v5599 = vsel %vm5527, 1, 0
        %v5600 = vsel %vm5528, 1, 0
        %v5601 = vsel %vm5529, 1, 0
        %v5602 = vsel %vm5530, 1, 0
        %5603 = vset.pattern.permute.xlu0 16
        %5604 = vperm.xlu0 %5603, %v5595
        %v5605 = vpop.permute.xlu0 %5604
        %5606 = vset.pattern.permute.xlu0 16
        %5607 = vperm.xlu0 %5606, %v5596
        %v5608 = vpop.permute.xlu0 %5607
        %5609 = vset.pattern.permute.xlu0 16
        %5610 = vperm.xlu0 %5609, %v5597
        %v5611 = vpop.permute.xlu0 %5610
        %5612 = vset.pattern.permute.xlu0 16
        %5613 = vperm.xlu0 %5612, %v5598
        %v5614 = vpop.permute.xlu0 %5613
        %5615 = vset.pattern.permute.xlu0 16
        %5616 = vperm.xlu0 %5615, %v5599
        %v5617 = vpop.permute.xlu0 %5616
        %5618 = vset.pattern.permute.xlu0 16
        %5619 = vperm.xlu0 %5618, %v5600
        %v5620 = vpop.permute.xlu0 %5619
        %5621 = vset.pattern.permute.xlu0 16
        %5622 = vperm.xlu0 %5621, %v5601
        %v5623 = vpop.permute.xlu0 %5622
        %5624 = vset.pattern.permute.xlu0 16
        %5625 = vperm.xlu0 %5624, %v5602
        %v5626 = vpop.permute.xlu0 %5625
        %vm5627 = vcmp.eq.s32.totalorder %v5605, 1
        %vm5628 = vcmp.eq.s32.totalorder %v5608, 1
        %vm5629 = vcmp.eq.s32.totalorder %v5611, 1
        %vm5630 = vcmp.eq.s32.totalorder %v5614, 1
        %vm5631 = vcmp.eq.s32.totalorder %v5617, 1
        %vm5632 = vcmp.eq.s32.totalorder %v5620, 1
        %vm5633 = vcmp.eq.s32.totalorder %v5623, 1
        %vm5634 = vcmp.eq.s32.totalorder %v5626, 1
        %v5635 = vsel %vm5627, %v5580, %v5089
        %v5636 = vsel %vm5628, %v5582, %v5090
        %v5637 = vsel %vm5629, %v5584, %v5091
        %v5638 = vsel %vm5630, %v5586, %v5092
        %v5639 = vsel %vm5631, %v5588, %v5093
        %v5640 = vsel %vm5632, %v5590, %v5094
        %v5641 = vsel %vm5633, %v5592, %v5095
        %v5642 = vsel %vm5634, %v5594, %v5096
        %v5643 = vmul.f32 %v5635, %v5635
        %v5644 = vmul.f32 %v5636, %v5636
        %v5645 = vmul.f32 %v5637, %v5637
        %v5646 = vmul.f32 %v5638, %v5638
        %v5647 = vmul.f32 %v5639, %v5639
        %v5648 = vmul.f32 %v5640, %v5640
        %v5649 = vmul.f32 %v5641, %v5641
        %v5650 = vmul.f32 %v5642, %v5642
        %v5651 = vsel %vm586, %v5643, 0.0
        %5652 = vadd.xlane.f32.xlu0 %v5651
        %v5653 = vpop.xlane.xlu0 %5652
        %v5654 = vsel %vm586, %v5644, 0.0
        %5655 = vadd.xlane.f32.xlu0 %v5654
        %v5656 = vpop.xlane.xlu0 %5655
        %v5657 = vsel %vm586, %v5645, 0.0
        %5658 = vadd.xlane.f32.xlu0 %v5657
        %v5659 = vpop.xlane.xlu0 %5658
        %v5660 = vsel %vm586, %v5646, 0.0
        %5661 = vadd.xlane.f32.xlu0 %v5660
        %v5662 = vpop.xlane.xlu0 %5661
        %v5663 = vsel %vm586, %v5647, 0.0
        %5664 = vadd.xlane.f32.xlu0 %v5663
        %v5665 = vpop.xlane.xlu0 %5664
        %v5666 = vsel %vm586, %v5648, 0.0
        %5667 = vadd.xlane.f32.xlu0 %v5666
        %v5668 = vpop.xlane.xlu0 %5667
        %v5669 = vsel %vm586, %v5649, 0.0
        %5670 = vadd.xlane.f32.xlu0 %v5669
        %v5671 = vpop.xlane.xlu0 %5670
        %v5672 = vsel %vm586, %v5650, 0.0
        %5673 = vadd.xlane.f32.xlu0 %v5672
        %v5674 = vpop.xlane.xlu0 %5673
        %v5676 = vsel %vm586, %v5635, 0
        %v5679 = vsel %vm586, %v5636, 0
        %v5682 = vsel %vm586, %v5637, 0
        %v5685 = vsel %vm586, %v5638, 0
        %v5688 = vsel %vm586, %v5639, 0
        %v5691 = vsel %vm586, %v5640, 0
        %v5694 = vsel %vm586, %v5641, 0
        %v5697 = vsel %vm586, %v5642, 0
        %5699 = vmatprep.subr.mxu0 %v488
        %5700 = vmatpush1.msra.mxu0 %v486
        %5701 = vmatprep.subr.mxu0 %v492
        %5702 = vmatpush1.msra.mxu0 %v490
        %5703 = vmatprep.subr.mxu0 0.0
        %5704 = vmatpush1.msra.mxu0 0.0
        %5705 = vmatprep.subr.mxu0 0.0
        %5706 = vmatpush1.msra.mxu0 0.0
        %5707 = vmatprep.subr.mxu0 0.0
        %5708 = vmatpush1.msra.mxu0 0.0
        %5709 = vmatprep.subr.mxu0 0.0
        %5710 = vmatpush1.msra.mxu0 0.0
        %5711 = vmatprep.subr.mxu0 0.0
        %5712 = vmatpush1.msra.mxu0 0.0
        %5713 = vmatprep.subr.mxu0 0.0
        %5714 = vmatpush1.msra.mxu0 0.0
        %5715 = vmatprep.subr.mxu0 0.0
        %5716 = vmatpush1.msra.mxu0 0.0
        %5717 = vmatprep.subr.mxu0 0.0
        %5718 = vmatpush1.msra.mxu0 0.0
        %5719 = vmatprep.subr.mxu0 0.0
        %5720 = vmatpush1.msra.mxu0 0.0
        %5721 = vmatprep.subr.mxu0 0.0
        %5722 = vmatpush1.msra.mxu0 0.0
        %5723 = vmatprep.subr.mxu0 0.0
        %5724 = vmatpush1.msra.mxu0 0.0
        %5725 = vmatprep.subr.mxu0 0.0
        %5726 = vmatpush1.msra.mxu0 0.0
        %5727 = vmatprep.subr.mxu0 0.0
        %5728 = vmatpush1.msra.mxu0 0.0
        %5729 = vmatprep.subr.mxu0 0.0
        %5730 = vmatpush1.msra.mxu0 0.0
        %5731 = vmatprep.subr.mxu0 0.0
        %5732 = vmatpush1.msra.mxu0 0.0
        %5733 = vmatprep.subr.mxu0 0.0
        %5734 = vmatpush1.msra.mxu0 0.0
        %5735 = vmatprep.subr.mxu0 0.0
        %5736 = vmatpush1.msra.mxu0 0.0
        %5737 = vmatprep.subr.mxu0 0.0
        %5738 = vmatpush1.msra.mxu0 0.0
        %5739 = vmatprep.subr.mxu0 0.0
        %5740 = vmatpush1.msra.mxu0 0.0
        %5741 = vmatprep.subr.mxu0 0.0
        %5742 = vmatpush1.msra.mxu0 0.0
        %5743 = vmatprep.subr.mxu0 0.0
        %5744 = vmatpush1.msra.mxu0 0.0
        %5745 = vmatprep.subr.mxu0 0.0
        %5746 = vmatpush1.msra.mxu0 0.0
        %5747 = vmatprep.subr.mxu0 0.0
        %5748 = vmatpush1.msra.mxu0 0.0
        %5749 = vmatprep.subr.mxu0 0.0
        %5750 = vmatpush1.msra.mxu0 0.0
        %5751 = vmatprep.subr.mxu0 0.0
        %5752 = vmatpush1.msra.mxu0 0.0
        %5753 = vmatprep.subr.mxu0 0.0
        %5754 = vmatpush1.msra.mxu0 0.0
        %5755 = vmatprep.subr.mxu0 0.0
        %5756 = vmatpush1.msra.mxu0 0.0
        %5757 = vmatprep.subr.mxu0 0.0
        %5758 = vmatpush1.msra.mxu0 0.0
        %5759 = vmatprep.subr.mxu0 0.0
        %5760 = vmatpush1.msra.mxu0 0.0
        %5761 = vmatprep.subr.mxu0 0.0
        %5762 = vmatpush1.msra.mxu0 0.0
        %5763 = vmatprep.mubr.f32.mxu0 0.0
        %5764 = vmatmul.mubr.f32.gmra.mrb[0].mxu0 %v5676
        %v5765 = vpop.f32.mrb[0].mxu0
        %v5766 = vadd.f32 0.0, %v5765
        %v5767 = vpop.f32.mrb[0].mxu0
        %v5768 = vadd.f32 0.0, %v5767
        %5769 = vmatprep.mubr.f32.mxu0 0.0
        %5770 = vmatmul.mubr.f32.gmra.mrb[0].mxu0 %v5679
        %v5771 = vpop.f32.mrb[0].mxu0
        %v5772 = vadd.f32 0.0, %v5771
        %v5773 = vpop.f32.mrb[0].mxu0
        %v5774 = vadd.f32 0.0, %v5773
        %5775 = vmatprep.mubr.f32.mxu0 0.0
        %5776 = vmatmul.mubr.f32.gmra.mrb[0].mxu0 %v5682
        %v5777 = vpop.f32.mrb[0].mxu0
        %v5778 = vadd.f32 0.0, %v5777
        %v5779 = vpop.f32.mrb[0].mxu0
        %v5780 = vadd.f32 0.0, %v5779
        %5781 = vmatprep.mubr.f32.mxu0 0.0
        %5782 = vmatmul.mubr.f32.gmra.mrb[0].mxu0 %v5685
        %v5783 = vpop.f32.mrb[0].mxu0
        %v5784 = vadd.f32 0.0, %v5783
        %v5785 = vpop.f32.mrb[0].mxu0
        %v5786 = vadd.f32 0.0, %v5785
        %5787 = vmatprep.mubr.f32.mxu0 0.0
        %5788 = vmatmul.mubr.f32.gmra.mrb[0].mxu0 %v5688
        %v5789 = vpop.f32.mrb[0].mxu0
        %v5790 = vadd.f32 0.0, %v5789
        %v5791 = vpop.f32.mrb[0].mxu0
        %v5792 = vadd.f32 0.0, %v5791
        %5793 = vmatprep.mubr.f32.mxu0 0.0
        %5794 = vmatmul.mubr.f32.gmra.mrb[0].mxu0 %v5691
        %v5795 = vpop.f32.mrb[0].mxu0
        %v5796 = vadd.f32 0.0, %v5795
        %v5797 = vpop.f32.mrb[0].mxu0
        %v5798 = vadd.f32 0.0, %v5797
        %5799 = vmatprep.mubr.f32.mxu0 0.0
        %5800 = vmatmul.mubr.f32.gmra.mrb[0].mxu0 %v5694
        %v5801 = vpop.f32.mrb[0].mxu0
        %v5802 = vadd.f32 0.0, %v5801
        %v5803 = vpop.f32.mrb[0].mxu0
        %v5804 = vadd.f32 0.0, %v5803
        %5805 = vmatprep.mubr.f32.mxu0 0.0
        %5806 = vmatmul.mubr.f32.gmra.mrb[0].mxu0 %v5697
        %v5807 = vpop.f32.mrb[0].mxu0
        %v5808 = vadd.f32 0.0, %v5807
        %v5809 = vpop.f32.mrb[0].mxu0
        %v5810 = vadd.f32 0.0, %v5809
        %5811 = vdwg.mxu0
        %v5812 = vmul.f32 %v5766, 2.0
        %v5813 = vmul.f32 %v5768, 2.0
        %v5814 = vmul.f32 %v5772, 2.0
        %v5815 = vmul.f32 %v5774, 2.0
        %v5816 = vmul.f32 %v5778, 2.0
        %v5817 = vmul.f32 %v5780, 2.0
        %v5818 = vmul.f32 %v5784, 2.0
        %v5819 = vmul.f32 %v5786, 2.0
        %v5820 = vmul.f32 %v5790, 2.0
        %v5821 = vmul.f32 %v5792, 2.0
        %v5822 = vmul.f32 %v5796, 2.0
        %v5823 = vmul.f32 %v5798, 2.0
        %v5824 = vmul.f32 %v5802, 2.0
        %v5825 = vmul.f32 %v5804, 2.0
        %v5826 = vmul.f32 %v5808, 2.0
        %v5827 = vmul.f32 %v5810, 2.0
        %v5828 = vsub.f32 %v5653, %v5812
        %v5829 = vsub.f32 %v5653, %v5813
        %v5830 = vsub.f32 %v5656, %v5814
        %v5831 = vsub.f32 %v5656, %v5815
        %v5832 = vsub.f32 %v5659, %v5816
        %v5833 = vsub.f32 %v5659, %v5817
        %v5834 = vsub.f32 %v5662, %v5818
        %v5835 = vsub.f32 %v5662, %v5819
        %v5836 = vsub.f32 %v5665, %v5820
        %v5837 = vsub.f32 %v5665, %v5821
        %v5838 = vsub.f32 %v5668, %v5822
        %v5839 = vsub.f32 %v5668, %v5823
        %v5840 = vsub.f32 %v5671, %v5824
        %v5841 = vsub.f32 %v5671, %v5825
        %v5842 = vsub.f32 %v5674, %v5826
        %v5843 = vsub.f32 %v5674, %v5827
        %v5844 = vmin.f32 %v5828, %v5832
        %v5845 = vmin.f32 %v5830, %v5834
        %v5846 = vmin.f32 %v5844, %v5836
        %v5847 = vmin.f32 %v5845, %v5838
        %v5848 = vmin.f32 %v5846, %v5840
        %v5849 = vmin.f32 %v5847, %v5842
        %v5850 = vmin.f32 %v5848, %v5849
        %v5851 = vrot.slane %v5850, 4
        %v5852 = vmin.f32 %v5850, %v5851
        %v5853 = vrot.slane %v5852, 2
        %v5854 = vmin.f32 %v5852, %v5853
        %v5855 = vrot.slane %v5854, 1
        %v5856 = vmin.f32 %v5854, %v5855
        %v5857 = vmin.f32 %v5829, %v5833
        %v5858 = vmin.f32 %v5831, %v5835
        %v5859 = vmin.f32 %v5857, %v5837
        %v5860 = vmin.f32 %v5858, %v5839
        %v5861 = vmin.f32 %v5859, %v5841
        %v5862 = vmin.f32 %v5860, %v5843
        %v5863 = vmin.f32 %v5861, %v5862
        %v5864 = vrot.slane %v5863, 4
        %v5865 = vmin.f32 %v5863, %v5864
        %v5866 = vrot.slane %v5865, 2
        %v5867 = vmin.f32 %v5865, %v5866
        %v5868 = vrot.slane %v5867, 1
        %v5869 = vmin.f32 %v5867, %v5868
        %vm5870 = vcmp.le.f32.partialorder %v5828, %v5856
        %vm5871 = vcmp.le.f32.partialorder %v5829, %v5869
        %vm5872 = vcmp.le.f32.partialorder %v5830, %v5856
        %vm5873 = vcmp.le.f32.partialorder %v5831, %v5869
        %vm5874 = vcmp.le.f32.partialorder %v5832, %v5856
        %vm5875 = vcmp.le.f32.partialorder %v5833, %v5869
        %vm5876 = vcmp.le.f32.partialorder %v5834, %v5856
        %vm5877 = vcmp.le.f32.partialorder %v5835, %v5869
        %vm5878 = vcmp.le.f32.partialorder %v5836, %v5856
        %vm5879 = vcmp.le.f32.partialorder %v5837, %v5869
        %vm5880 = vcmp.le.f32.partialorder %v5838, %v5856
        %vm5881 = vcmp.le.f32.partialorder %v5839, %v5869
        %vm5882 = vcmp.le.f32.partialorder %v5840, %v5856
        %vm5883 = vcmp.le.f32.partialorder %v5841, %v5869
        %vm5884 = vcmp.le.f32.partialorder %v5842, %v5856
        %vm5885 = vcmp.le.f32.partialorder %v5843, %v5869
        %v5886 = vsel %vm5870, %v589, 64
        %v5887 = vsel %vm5871, %v589, 64
        %v5888 = vsel %vm5872, %v590, 64
        %v5889 = vsel %vm5873, %v590, 64
        %v5890 = vsel %vm5874, %v591, 64
        %v5891 = vsel %vm5875, %v591, 64
        %v5892 = vsel %vm5876, %v592, 64
        %v5893 = vsel %vm5877, %v592, 64
        %v5894 = vsel %vm5878, %v593, 64
        %v5895 = vsel %vm5879, %v593, 64
        %v5896 = vsel %vm5880, %v594, 64
        %v5897 = vsel %vm5881, %v594, 64
        %v5898 = vsel %vm5882, %v595, 64
        %v5899 = vsel %vm5883, %v595, 64
        %v5900 = vsel %vm5884, %v596, 64
        %v5901 = vsel %vm5885, %v596, 64
        %vm5902 = vcmp.lt.s32.totalorder %v5886, %v5890
        %v5903 = vsel %vm5902, %v5886, %v5890
        %vm5904 = vcmp.lt.s32.totalorder %v5888, %v5892
        %v5905 = vsel %vm5904, %v5888, %v5892
        %vm5906 = vcmp.lt.s32.totalorder %v5903, %v5894
        %v5907 = vsel %vm5906, %v5903, %v5894
        %vm5908 = vcmp.lt.s32.totalorder %v5905, %v5896
        %v5909 = vsel %vm5908, %v5905, %v5896
        %vm5910 = vcmp.lt.s32.totalorder %v5907, %v5898
        %v5911 = vsel %vm5910, %v5907, %v5898
        %vm5912 = vcmp.lt.s32.totalorder %v5909, %v5900
        %v5913 = vsel %vm5912, %v5909, %v5900
        %vm5914 = vcmp.lt.s32.totalorder %v5911, %v5913
        %v5915 = vsel %vm5914, %v5911, %v5913
        %v5916 = vrot.slane %v5915, 4
        %vm5917 = vcmp.lt.s32.totalorder %v5915, %v5916
        %v5918 = vsel %vm5917, %v5915, %v5916
        %v5919 = vrot.slane %v5918, 2
        %vm5920 = vcmp.lt.s32.totalorder %v5918, %v5919
        %v5921 = vsel %vm5920, %v5918, %v5919
        %v5922 = vrot.slane %v5921, 1
        %vm5923 = vcmp.lt.s32.totalorder %v5921, %v5922
        %v5924 = vsel %vm5923, %v5921, %v5922
        %vm5925 = vcmp.lt.s32.totalorder %v5887, %v5891
        %v5926 = vsel %vm5925, %v5887, %v5891
        %vm5927 = vcmp.lt.s32.totalorder %v5889, %v5893
        %v5928 = vsel %vm5927, %v5889, %v5893
        %vm5929 = vcmp.lt.s32.totalorder %v5926, %v5895
        %v5930 = vsel %vm5929, %v5926, %v5895
        %vm5931 = vcmp.lt.s32.totalorder %v5928, %v5897
        %v5932 = vsel %vm5931, %v5928, %v5897
        %vm5933 = vcmp.lt.s32.totalorder %v5930, %v5899
        %v5934 = vsel %vm5933, %v5930, %v5899
        %vm5935 = vcmp.lt.s32.totalorder %v5932, %v5901
        %v5936 = vsel %vm5935, %v5932, %v5901
        %vm5937 = vcmp.lt.s32.totalorder %v5934, %v5936
        %v5938 = vsel %vm5937, %v5934, %v5936
        %v5939 = vrot.slane %v5938, 4
        %vm5940 = vcmp.lt.s32.totalorder %v5938, %v5939
        %v5941 = vsel %vm5940, %v5938, %v5939
        %v5942 = vrot.slane %v5941, 2
        %vm5943 = vcmp.lt.s32.totalorder %v5941, %v5942
        %v5944 = vsel %vm5943, %v5941, %v5942
        %v5945 = vrot.slane %v5944, 1
        %vm5946 = vcmp.lt.s32.totalorder %v5944, %v5945
        %v5947 = vsel %vm5946, %v5944, %v5945
        %vm5948 = vcmp.eq.s32.totalorder %v589, %v5924
        %vm5949 = vcmp.eq.s32.totalorder %v589, %v5947
        %vm5950 = vcmp.eq.s32.totalorder %v590, %v5924
        %vm5951 = vcmp.eq.s32.totalorder %v590, %v5947
        %vm5952 = vcmp.eq.s32.totalorder %v591, %v5924
        %vm5953 = vcmp.eq.s32.totalorder %v591, %v5947
        %vm5954 = vcmp.eq.s32.totalorder %v592, %v5924
        %vm5955 = vcmp.eq.s32.totalorder %v592, %v5947
        %vm5956 = vcmp.eq.s32.totalorder %v593, %v5924
        %vm5957 = vcmp.eq.s32.totalorder %v593, %v5947
        %vm5958 = vcmp.eq.s32.totalorder %v594, %v5924
        %vm5959 = vcmp.eq.s32.totalorder %v594, %v5947
        %vm5960 = vcmp.eq.s32.totalorder %v595, %v5924
        %vm5961 = vcmp.eq.s32.totalorder %v595, %v5947
        %vm5962 = vcmp.eq.s32.totalorder %v596, %v5924
        %vm5963 = vcmp.eq.s32.totalorder %v596, %v5947
        %v5964 = vsel %vm5948, 1, 0
        %v5965 = vsel %vm5949, 1, 0
        %v5966 = vsel %vm5950, 1, 0
        %v5967 = vsel %vm5951, 1, 0
        %v5968 = vsel %vm5952, 1, 0
        %v5969 = vsel %vm5953, 1, 0
        %v5970 = vsel %vm5954, 1, 0
        %v5971 = vsel %vm5955, 1, 0
        %v5972 = vsel %vm5956, 1, 0
        %v5973 = vsel %vm5957, 1, 0
        %v5974 = vsel %vm5958, 1, 0
        %v5975 = vsel %vm5959, 1, 0
        %v5976 = vsel %vm5960, 1, 0
        %v5977 = vsel %vm5961, 1, 0
        %v5978 = vsel %vm5962, 1, 0
        %v5979 = vsel %vm5963, 1, 0
        %v5980 = vcvt.s32.f32 %v5964
        %v5981 = vcvt.s32.f32 %v5965
        %v5982 = vcvt.s32.f32 %v5966
        %v5983 = vcvt.s32.f32 %v5967
        %v5984 = vcvt.s32.f32 %v5968
        %v5985 = vcvt.s32.f32 %v5969
        %v5986 = vcvt.s32.f32 %v5970
        %v5987 = vcvt.s32.f32 %v5971
        %v5988 = vcvt.s32.f32 %v5972
        %v5989 = vcvt.s32.f32 %v5973
        %v5990 = vcvt.s32.f32 %v5974
        %v5991 = vcvt.s32.f32 %v5975
        %v5992 = vcvt.s32.f32 %v5976
        %v5993 = vcvt.s32.f32 %v5977
        %v5994 = vcvt.s32.f32 %v5978
        %v5995 = vcvt.s32.f32 %v5979
        %v5996 = vpack.c.bf16 %v5982, %v5980
        %v5997 = vpack.c.bf16 %v5983, %v5981
        %v5998 = vpack.c.bf16 %v5986, %v5984
        %v5999 = vpack.c.bf16 %v5987, %v5985
        %v6000 = vpack.c.bf16 %v5990, %v5988
        %v6001 = vpack.c.bf16 %v5991, %v5989
        %v6002 = vpack.c.bf16 %v5994, %v5992
        %v6003 = vpack.c.bf16 %v5995, %v5993
        %6004 = vmatprep.subr.bf16.mxu0 %v507
        %6005 = vmatpush1.bf16.xpose.msra.mxu0 %v506
        %6006 = vmatprep.subr.bf16.mxu0 1065369472
        %6007 = vmatpush1.bf16.xpose.msra.mxu0 1065369472
        %6008 = vmatprep.subr.bf16.mxu0 0
        %6009 = vmatpush1.bf16.xpose.msra.mxu0 0
        %6010 = vmatprep.subr.bf16.mxu0 0
        %6011 = vmatpush1.bf16.xpose.msra.mxu0 0
        %6012 = vmatprep.subr.bf16.mxu0 0
        %6013 = vmatpush1.bf16.xpose.msra.mxu0 0
        %6014 = vmatprep.subr.bf16.mxu0 0
        %6015 = vmatpush1.bf16.xpose.msra.mxu0 0
        %6016 = vmatprep.subr.bf16.mxu0 0
        %6017 = vmatpush1.bf16.xpose.msra.mxu0 0
        %6018 = vmatprep.subr.bf16.mxu0 0
        %6019 = vmatpush1.bf16.xpose.msra.mxu0 0
        %6020 = vmatprep.subr.bf16.mxu0 0
        %6021 = vmatpush1.bf16.xpose.msra.mxu0 0
        %6022 = vmatprep.subr.bf16.mxu0 0
        %6023 = vmatpush1.bf16.xpose.msra.mxu0 0
        %6024 = vmatprep.subr.bf16.mxu0 0
        %6025 = vmatpush1.bf16.xpose.msra.mxu0 0
        %6026 = vmatprep.subr.bf16.mxu0 0
        %6027 = vmatpush1.bf16.xpose.msra.mxu0 0
        %6028 = vmatprep.subr.bf16.mxu0 0
        %6029 = vmatpush1.bf16.xpose.msra.mxu0 0
        %6030 = vmatprep.subr.bf16.mxu0 0
        %6031 = vmatpush1.bf16.xpose.msra.mxu0 0
        %6032 = vmatprep.subr.bf16.mxu0 0
        %6033 = vmatpush1.bf16.xpose.msra.mxu0 0
        %6034 = vmatprep.subr.bf16.mxu0 0
        %6035 = vmatpush1.bf16.xpose.msra.mxu0 0
        %6036 = vmatprep.mubr.bf16.mxu0 %v5997
        %6037 = vmatmul.mubr.bf16.gmra.mrb[0].mxu0 %v5996
        %v6038 = vpop.f32.mrb[0].mxu0
        %v6039 = vadd.f32 0.0, %v6038
        %v6040 = vpop.f32.mrb[0].mxu0
        %v6041 = vpop.f32.mrb[0].mxu0
        %v6042 = vadd.f32 0.0, %v6041
        %v6043 = vpop.f32.mrb[0].mxu0
        %6044 = vmatprep.mubr.bf16.mxu0 %v5999
        %6045 = vmatmul.mubr.bf16.gmra.mrb[0].mxu0 %v5998
        %v6046 = vpop.f32.mrb[0].mxu0
        %v6047 = vadd.f32 0.0, %v6046
        %v6048 = vpop.f32.mrb[0].mxu0
        %v6049 = vpop.f32.mrb[0].mxu0
        %v6050 = vadd.f32 0.0, %v6049
        %v6051 = vpop.f32.mrb[0].mxu0
        %6052 = vmatprep.mubr.bf16.mxu0 %v6001
        %6053 = vmatmul.mubr.bf16.gmra.mrb[0].mxu0 %v6000
        %v6054 = vpop.f32.mrb[0].mxu0
        %v6055 = vadd.f32 0.0, %v6054
        %v6056 = vpop.f32.mrb[0].mxu0
        %v6057 = vpop.f32.mrb[0].mxu0
        %v6058 = vadd.f32 0.0, %v6057
        %v6059 = vpop.f32.mrb[0].mxu0
        %6060 = vmatprep.mubr.bf16.mxu0 %v6003
        %6061 = vmatmul.mubr.bf16.gmra.mrb[0].mxu0 %v6002
        %v6062 = vpop.f32.mrb[0].mxu0
        %v6063 = vadd.f32 0.0, %v6062
        %v6064 = vpop.f32.mrb[0].mxu0
        %v6065 = vpop.f32.mrb[0].mxu0
        %v6066 = vadd.f32 0.0, %v6065
        %v6067 = vpop.f32.mrb[0].mxu0
        %6068 = vdwg.mxu0
        %vm6069 = vcmp.gt.f32.partialorder %v6039, 0.5
        %vm6070 = vcmp.gt.f32.partialorder %v6042, 0.5
        %vm6071 = vcmp.gt.f32.partialorder %v6047, 0.5
        %vm6072 = vcmp.gt.f32.partialorder %v6050, 0.5
        %vm6073 = vcmp.gt.f32.partialorder %v6055, 0.5
        %vm6074 = vcmp.gt.f32.partialorder %v6058, 0.5
        %vm6075 = vcmp.gt.f32.partialorder %v6063, 0.5
        %vm6076 = vcmp.gt.f32.partialorder %v6066, 0.5
        %v6077 = vmax.f32 %v6039, 1.0
        %v6078 = vmax.f32 %v6042, 1.0
        %v6079 = vmax.f32 %v6047, 1.0
        %v6080 = vmax.f32 %v6050, 1.0
        %v6081 = vmax.f32 %v6055, 1.0
        %v6082 = vmax.f32 %v6058, 1.0
        %v6083 = vmax.f32 %v6063, 1.0
        %v6084 = vmax.f32 %v6066, 1.0
        %6086 = vset.pattern.permute.xlu0 16
        %6087 = vperm.xlu0 %6086, %v6077
        %v6088 = vpop.permute.xlu0 %6087
        %6091 = vset.pattern.permute.xlu0 16
        %6092 = vperm.xlu0 %6091, %v6078
        %v6093 = vpop.permute.xlu0 %6092
        %6096 = vset.pattern.permute.xlu0 16
        %6097 = vperm.xlu0 %6096, %v6079
        %v6098 = vpop.permute.xlu0 %6097
        %6101 = vset.pattern.permute.xlu0 16
        %6102 = vperm.xlu0 %6101, %v6080
        %v6103 = vpop.permute.xlu0 %6102
        %6106 = vset.pattern.permute.xlu0 16
        %6107 = vperm.xlu0 %6106, %v6081
        %v6108 = vpop.permute.xlu0 %6107
        %6111 = vset.pattern.permute.xlu0 16
        %6112 = vperm.xlu0 %6111, %v6082
        %v6113 = vpop.permute.xlu0 %6112
        %6116 = vset.pattern.permute.xlu0 16
        %6117 = vperm.xlu0 %6116, %v6083
        %v6118 = vpop.permute.xlu0 %6117
        %6121 = vset.pattern.permute.xlu0 16
        %6122 = vperm.xlu0 %6121, %v6084
        %v6123 = vpop.permute.xlu0 %6122
        %v6125 = vrcp.pop %v6088
        %v6126 = vmul.f32 %v6039, %v6125
        %v6127 = vrcp.pop %v6093
        %v6128 = vmul.f32 %v6042, %v6127
        %v6129 = vrcp.pop %v6098
        %v6130 = vmul.f32 %v6047, %v6129
        %v6131 = vrcp.pop %v6103
        %v6132 = vmul.f32 %v6050, %v6131
        %v6133 = vrcp.pop %v6108
        %v6134 = vmul.f32 %v6055, %v6133
        %v6135 = vrcp.pop %v6113
        %v6136 = vmul.f32 %v6058, %v6135
        %v6137 = vrcp.pop %v6118
        %v6138 = vmul.f32 %v6063, %v6137
        %v6139 = vrcp.pop %v6123
        %v6140 = vmul.f32 %v6066, %v6139
        %v6141 = vsel %vm6069, 1, 0
        %v6142 = vsel %vm6070, 1, 0
        %v6143 = vsel %vm6071, 1, 0
        %v6144 = vsel %vm6072, 1, 0
        %v6145 = vsel %vm6073, 1, 0
        %v6146 = vsel %vm6074, 1, 0
        %v6147 = vsel %vm6075, 1, 0
        %v6148 = vsel %vm6076, 1, 0
        %6149 = vset.pattern.permute.xlu0 16
        %6150 = vperm.xlu0 %6149, %v6141
        %v6151 = vpop.permute.xlu0 %6150
        %6152 = vset.pattern.permute.xlu0 16
        %6153 = vperm.xlu0 %6152, %v6142
        %v6154 = vpop.permute.xlu0 %6153
        %6155 = vset.pattern.permute.xlu0 16
        %6156 = vperm.xlu0 %6155, %v6143
        %v6157 = vpop.permute.xlu0 %6156
        %6158 = vset.pattern.permute.xlu0 16
        %6159 = vperm.xlu0 %6158, %v6144
        %v6160 = vpop.permute.xlu0 %6159
        %6161 = vset.pattern.permute.xlu0 16
        %6162 = vperm.xlu0 %6161, %v6145
        %v6163 = vpop.permute.xlu0 %6162
        %6164 = vset.pattern.permute.xlu0 16
        %6165 = vperm.xlu0 %6164, %v6146
        %v6166 = vpop.permute.xlu0 %6165
        %6167 = vset.pattern.permute.xlu0 16
        %6168 = vperm.xlu0 %6167, %v6147
        %v6169 = vpop.permute.xlu0 %6168
        %6170 = vset.pattern.permute.xlu0 16
        %6171 = vperm.xlu0 %6170, %v6148
        %v6172 = vpop.permute.xlu0 %6171
        %vm6173 = vcmp.eq.s32.totalorder %v6151, 1
        %vm6174 = vcmp.eq.s32.totalorder %v6154, 1
        %vm6175 = vcmp.eq.s32.totalorder %v6157, 1
        %vm6176 = vcmp.eq.s32.totalorder %v6160, 1
        %vm6177 = vcmp.eq.s32.totalorder %v6163, 1
        %vm6178 = vcmp.eq.s32.totalorder %v6166, 1
        %vm6179 = vcmp.eq.s32.totalorder %v6169, 1
        %vm6180 = vcmp.eq.s32.totalorder %v6172, 1
        %v6181 = vsel %vm6173, %v6126, %v5635
        %v6182 = vsel %vm6174, %v6128, %v5636
        %v6183 = vsel %vm6175, %v6130, %v5637
        %v6184 = vsel %vm6176, %v6132, %v5638
        %v6185 = vsel %vm6177, %v6134, %v5639
        %v6186 = vsel %vm6178, %v6136, %v5640
        %v6187 = vsel %vm6179, %v6138, %v5641
        %v6188 = vsel %vm6180, %v6140, %v5642
        %v6189 = vmul.f32 %v6181, %v6181
        %v6190 = vmul.f32 %v6182, %v6182
        %v6191 = vmul.f32 %v6183, %v6183
        %v6192 = vmul.f32 %v6184, %v6184
        %v6193 = vmul.f32 %v6185, %v6185
        %v6194 = vmul.f32 %v6186, %v6186
        %v6195 = vmul.f32 %v6187, %v6187
        %v6196 = vmul.f32 %v6188, %v6188
        %v6197 = vsel %vm586, %v6189, 0.0
        %6198 = vadd.xlane.f32.xlu0 %v6197
        %v6199 = vpop.xlane.xlu0 %6198
        %v6200 = vsel %vm586, %v6190, 0.0
        %6201 = vadd.xlane.f32.xlu0 %v6200
        %v6202 = vpop.xlane.xlu0 %6201
        %v6203 = vsel %vm586, %v6191, 0.0
        %6204 = vadd.xlane.f32.xlu0 %v6203
        %v6205 = vpop.xlane.xlu0 %6204
        %v6206 = vsel %vm586, %v6192, 0.0
        %6207 = vadd.xlane.f32.xlu0 %v6206
        %v6208 = vpop.xlane.xlu0 %6207
        %v6209 = vsel %vm586, %v6193, 0.0
        %6210 = vadd.xlane.f32.xlu0 %v6209
        %v6211 = vpop.xlane.xlu0 %6210
        %v6212 = vsel %vm586, %v6194, 0.0
        %6213 = vadd.xlane.f32.xlu0 %v6212
        %v6214 = vpop.xlane.xlu0 %6213
        %v6215 = vsel %vm586, %v6195, 0.0
        %6216 = vadd.xlane.f32.xlu0 %v6215
        %v6217 = vpop.xlane.xlu0 %6216
        %v6218 = vsel %vm586, %v6196, 0.0
        %6219 = vadd.xlane.f32.xlu0 %v6218
        %v6220 = vpop.xlane.xlu0 %6219
        %v6222 = vsel %vm586, %v6181, 0
        %v6225 = vsel %vm586, %v6182, 0
        %v6228 = vsel %vm586, %v6183, 0
        %v6231 = vsel %vm586, %v6184, 0
        %v6234 = vsel %vm586, %v6185, 0
        %v6237 = vsel %vm586, %v6186, 0
        %v6240 = vsel %vm586, %v6187, 0
        %v6243 = vsel %vm586, %v6188, 0
        %6245 = vmatprep.subr.mxu0 %v488
        %6246 = vmatpush1.msra.mxu0 %v486
        %6247 = vmatprep.subr.mxu0 %v492
        %6248 = vmatpush1.msra.mxu0 %v490
        %6249 = vmatprep.subr.mxu0 0.0
        %6250 = vmatpush1.msra.mxu0 0.0
        %6251 = vmatprep.subr.mxu0 0.0
        %6252 = vmatpush1.msra.mxu0 0.0
        %6253 = vmatprep.subr.mxu0 0.0
        %6254 = vmatpush1.msra.mxu0 0.0
        %6255 = vmatprep.subr.mxu0 0.0
        %6256 = vmatpush1.msra.mxu0 0.0
        %6257 = vmatprep.subr.mxu0 0.0
        %6258 = vmatpush1.msra.mxu0 0.0
        %6259 = vmatprep.subr.mxu0 0.0
        %6260 = vmatpush1.msra.mxu0 0.0
        %6261 = vmatprep.subr.mxu0 0.0
        %6262 = vmatpush1.msra.mxu0 0.0
        %6263 = vmatprep.subr.mxu0 0.0
        %6264 = vmatpush1.msra.mxu0 0.0
        %6265 = vmatprep.subr.mxu0 0.0
        %6266 = vmatpush1.msra.mxu0 0.0
        %6267 = vmatprep.subr.mxu0 0.0
        %6268 = vmatpush1.msra.mxu0 0.0
        %6269 = vmatprep.subr.mxu0 0.0
        %6270 = vmatpush1.msra.mxu0 0.0
        %6271 = vmatprep.subr.mxu0 0.0
        %6272 = vmatpush1.msra.mxu0 0.0
        %6273 = vmatprep.subr.mxu0 0.0
        %6274 = vmatpush1.msra.mxu0 0.0
        %6275 = vmatprep.subr.mxu0 0.0
        %6276 = vmatpush1.msra.mxu0 0.0
        %6277 = vmatprep.subr.mxu0 0.0
        %6278 = vmatpush1.msra.mxu0 0.0
        %6279 = vmatprep.subr.mxu0 0.0
        %6280 = vmatpush1.msra.mxu0 0.0
        %6281 = vmatprep.subr.mxu0 0.0
        %6282 = vmatpush1.msra.mxu0 0.0
        %6283 = vmatprep.subr.mxu0 0.0
        %6284 = vmatpush1.msra.mxu0 0.0
        %6285 = vmatprep.subr.mxu0 0.0
        %6286 = vmatpush1.msra.mxu0 0.0
        %6287 = vmatprep.subr.mxu0 0.0
        %6288 = vmatpush1.msra.mxu0 0.0
        %6289 = vmatprep.subr.mxu0 0.0
        %6290 = vmatpush1.msra.mxu0 0.0
        %6291 = vmatprep.subr.mxu0 0.0
        %6292 = vmatpush1.msra.mxu0 0.0
        %6293 = vmatprep.subr.mxu0 0.0
        %6294 = vmatpush1.msra.mxu0 0.0
        %6295 = vmatprep.subr.mxu0 0.0
        %6296 = vmatpush1.msra.mxu0 0.0
        %6297 = vmatprep.subr.mxu0 0.0
        %6298 = vmatpush1.msra.mxu0 0.0
        %6299 = vmatprep.subr.mxu0 0.0
        %6300 = vmatpush1.msra.mxu0 0.0
        %6301 = vmatprep.subr.mxu0 0.0
        %6302 = vmatpush1.msra.mxu0 0.0
        %6303 = vmatprep.subr.mxu0 0.0
        %6304 = vmatpush1.msra.mxu0 0.0
        %6305 = vmatprep.subr.mxu0 0.0
        %6306 = vmatpush1.msra.mxu0 0.0
        %6307 = vmatprep.subr.mxu0 0.0
        %6308 = vmatpush1.msra.mxu0 0.0
        %6309 = vmatprep.mubr.f32.mxu0 0.0
        %6310 = vmatmul.mubr.f32.gmra.mrb[0].mxu0 %v6222
        %v6311 = vpop.f32.mrb[0].mxu0
        %v6312 = vadd.f32 0.0, %v6311
        %v6313 = vpop.f32.mrb[0].mxu0
        %v6314 = vadd.f32 0.0, %v6313
        %6315 = vmatprep.mubr.f32.mxu0 0.0
        %6316 = vmatmul.mubr.f32.gmra.mrb[0].mxu0 %v6225
        %v6317 = vpop.f32.mrb[0].mxu0
        %v6318 = vadd.f32 0.0, %v6317
        %v6319 = vpop.f32.mrb[0].mxu0
        %v6320 = vadd.f32 0.0, %v6319
        %6321 = vmatprep.mubr.f32.mxu0 0.0
        %6322 = vmatmul.mubr.f32.gmra.mrb[0].mxu0 %v6228
        %v6323 = vpop.f32.mrb[0].mxu0
        %v6324 = vadd.f32 0.0, %v6323
        %v6325 = vpop.f32.mrb[0].mxu0
        %v6326 = vadd.f32 0.0, %v6325
        %6327 = vmatprep.mubr.f32.mxu0 0.0
        %6328 = vmatmul.mubr.f32.gmra.mrb[0].mxu0 %v6231
        %v6329 = vpop.f32.mrb[0].mxu0
        %v6330 = vadd.f32 0.0, %v6329
        %v6331 = vpop.f32.mrb[0].mxu0
        %v6332 = vadd.f32 0.0, %v6331
        %6333 = vmatprep.mubr.f32.mxu0 0.0
        %6334 = vmatmul.mubr.f32.gmra.mrb[0].mxu0 %v6234
        %v6335 = vpop.f32.mrb[0].mxu0
        %v6336 = vadd.f32 0.0, %v6335
        %v6337 = vpop.f32.mrb[0].mxu0
        %v6338 = vadd.f32 0.0, %v6337
        %6339 = vmatprep.mubr.f32.mxu0 0.0
        %6340 = vmatmul.mubr.f32.gmra.mrb[0].mxu0 %v6237
        %v6341 = vpop.f32.mrb[0].mxu0
        %v6342 = vadd.f32 0.0, %v6341
        %v6343 = vpop.f32.mrb[0].mxu0
        %v6344 = vadd.f32 0.0, %v6343
        %6345 = vmatprep.mubr.f32.mxu0 0.0
        %6346 = vmatmul.mubr.f32.gmra.mrb[0].mxu0 %v6240
        %v6347 = vpop.f32.mrb[0].mxu0
        %v6348 = vadd.f32 0.0, %v6347
        %v6349 = vpop.f32.mrb[0].mxu0
        %v6350 = vadd.f32 0.0, %v6349
        %6351 = vmatprep.mubr.f32.mxu0 0.0
        %6352 = vmatmul.mubr.f32.gmra.mrb[0].mxu0 %v6243
        %v6353 = vpop.f32.mrb[0].mxu0
        %v6354 = vadd.f32 0.0, %v6353
        %v6355 = vpop.f32.mrb[0].mxu0
        %v6356 = vadd.f32 0.0, %v6355
        %6357 = vdwg.mxu0
        %v6358 = vmul.f32 %v6312, 2.0
        %v6359 = vmul.f32 %v6314, 2.0
        %v6360 = vmul.f32 %v6318, 2.0
        %v6361 = vmul.f32 %v6320, 2.0
        %v6362 = vmul.f32 %v6324, 2.0
        %v6363 = vmul.f32 %v6326, 2.0
        %v6364 = vmul.f32 %v6330, 2.0
        %v6365 = vmul.f32 %v6332, 2.0
        %v6366 = vmul.f32 %v6336, 2.0
        %v6367 = vmul.f32 %v6338, 2.0
        %v6368 = vmul.f32 %v6342, 2.0
        %v6369 = vmul.f32 %v6344, 2.0
        %v6370 = vmul.f32 %v6348, 2.0
        %v6371 = vmul.f32 %v6350, 2.0
        %v6372 = vmul.f32 %v6354, 2.0
        %v6373 = vmul.f32 %v6356, 2.0
        %v6374 = vsub.f32 %v6199, %v6358
        %v6375 = vsub.f32 %v6199, %v6359
        %v6376 = vsub.f32 %v6202, %v6360
        %v6377 = vsub.f32 %v6202, %v6361
        %v6378 = vsub.f32 %v6205, %v6362
        %v6379 = vsub.f32 %v6205, %v6363
        %v6380 = vsub.f32 %v6208, %v6364
        %v6381 = vsub.f32 %v6208, %v6365
        %v6382 = vsub.f32 %v6211, %v6366
        %v6383 = vsub.f32 %v6211, %v6367
        %v6384 = vsub.f32 %v6214, %v6368
        %v6385 = vsub.f32 %v6214, %v6369
        %v6386 = vsub.f32 %v6217, %v6370
        %v6387 = vsub.f32 %v6217, %v6371
        %v6388 = vsub.f32 %v6220, %v6372
        %v6389 = vsub.f32 %v6220, %v6373
        %v6390 = vmin.f32 %v6374, %v6378
        %v6391 = vmin.f32 %v6376, %v6380
        %v6392 = vmin.f32 %v6390, %v6382
        %v6393 = vmin.f32 %v6391, %v6384
        %v6394 = vmin.f32 %v6392, %v6386
        %v6395 = vmin.f32 %v6393, %v6388
        %v6396 = vmin.f32 %v6394, %v6395
        %v6397 = vrot.slane %v6396, 4
        %v6398 = vmin.f32 %v6396, %v6397
        %v6399 = vrot.slane %v6398, 2
        %v6400 = vmin.f32 %v6398, %v6399
        %v6401 = vrot.slane %v6400, 1
        %v6402 = vmin.f32 %v6400, %v6401
        %v6403 = vmin.f32 %v6375, %v6379
        %v6404 = vmin.f32 %v6377, %v6381
        %v6405 = vmin.f32 %v6403, %v6383
        %v6406 = vmin.f32 %v6404, %v6385
        %v6407 = vmin.f32 %v6405, %v6387
        %v6408 = vmin.f32 %v6406, %v6389
        %v6409 = vmin.f32 %v6407, %v6408
        %v6410 = vrot.slane %v6409, 4
        %v6411 = vmin.f32 %v6409, %v6410
        %v6412 = vrot.slane %v6411, 2
        %v6413 = vmin.f32 %v6411, %v6412
        %v6414 = vrot.slane %v6413, 1
        %v6415 = vmin.f32 %v6413, %v6414
        %vm6416 = vcmp.le.f32.partialorder %v6374, %v6402
        %vm6417 = vcmp.le.f32.partialorder %v6375, %v6415
        %vm6418 = vcmp.le.f32.partialorder %v6376, %v6402
        %vm6419 = vcmp.le.f32.partialorder %v6377, %v6415
        %vm6420 = vcmp.le.f32.partialorder %v6378, %v6402
        %vm6421 = vcmp.le.f32.partialorder %v6379, %v6415
        %vm6422 = vcmp.le.f32.partialorder %v6380, %v6402
        %vm6423 = vcmp.le.f32.partialorder %v6381, %v6415
        %vm6424 = vcmp.le.f32.partialorder %v6382, %v6402
        %vm6425 = vcmp.le.f32.partialorder %v6383, %v6415
        %vm6426 = vcmp.le.f32.partialorder %v6384, %v6402
        %vm6427 = vcmp.le.f32.partialorder %v6385, %v6415
        %vm6428 = vcmp.le.f32.partialorder %v6386, %v6402
        %vm6429 = vcmp.le.f32.partialorder %v6387, %v6415
        %vm6430 = vcmp.le.f32.partialorder %v6388, %v6402
        %vm6431 = vcmp.le.f32.partialorder %v6389, %v6415
        %v6432 = vsel %vm6416, %v589, 64
        %v6433 = vsel %vm6417, %v589, 64
        %v6434 = vsel %vm6418, %v590, 64
        %v6435 = vsel %vm6419, %v590, 64
        %v6436 = vsel %vm6420, %v591, 64
        %v6437 = vsel %vm6421, %v591, 64
        %v6438 = vsel %vm6422, %v592, 64
        %v6439 = vsel %vm6423, %v592, 64
        %v6440 = vsel %vm6424, %v593, 64
        %v6441 = vsel %vm6425, %v593, 64
        %v6442 = vsel %vm6426, %v594, 64
        %v6443 = vsel %vm6427, %v594, 64
        %v6444 = vsel %vm6428, %v595, 64
        %v6445 = vsel %vm6429, %v595, 64
        %v6446 = vsel %vm6430, %v596, 64
        %v6447 = vsel %vm6431, %v596, 64
        %vm6448 = vcmp.lt.s32.totalorder %v6432, %v6436
        %v6449 = vsel %vm6448, %v6432, %v6436
        %vm6450 = vcmp.lt.s32.totalorder %v6434, %v6438
        %v6451 = vsel %vm6450, %v6434, %v6438
        %vm6452 = vcmp.lt.s32.totalorder %v6449, %v6440
        %v6453 = vsel %vm6452, %v6449, %v6440
        %vm6454 = vcmp.lt.s32.totalorder %v6451, %v6442
        %v6455 = vsel %vm6454, %v6451, %v6442
        %vm6456 = vcmp.lt.s32.totalorder %v6453, %v6444
        %v6457 = vsel %vm6456, %v6453, %v6444
        %vm6458 = vcmp.lt.s32.totalorder %v6455, %v6446
        %v6459 = vsel %vm6458, %v6455, %v6446
        %vm6460 = vcmp.lt.s32.totalorder %v6457, %v6459
        %v6461 = vsel %vm6460, %v6457, %v6459
        %v6462 = vrot.slane %v6461, 4
        %vm6463 = vcmp.lt.s32.totalorder %v6461, %v6462
        %v6464 = vsel %vm6463, %v6461, %v6462
        %v6465 = vrot.slane %v6464, 2
        %vm6466 = vcmp.lt.s32.totalorder %v6464, %v6465
        %v6467 = vsel %vm6466, %v6464, %v6465
        %v6468 = vrot.slane %v6467, 1
        %vm6469 = vcmp.lt.s32.totalorder %v6467, %v6468
        %v6470 = vsel %vm6469, %v6467, %v6468
        %vm6471 = vcmp.lt.s32.totalorder %v6433, %v6437
        %v6472 = vsel %vm6471, %v6433, %v6437
        %vm6473 = vcmp.lt.s32.totalorder %v6435, %v6439
        %v6474 = vsel %vm6473, %v6435, %v6439
        %vm6475 = vcmp.lt.s32.totalorder %v6472, %v6441
        %v6476 = vsel %vm6475, %v6472, %v6441
        %vm6477 = vcmp.lt.s32.totalorder %v6474, %v6443
        %v6478 = vsel %vm6477, %v6474, %v6443
        %vm6479 = vcmp.lt.s32.totalorder %v6476, %v6445
        %v6480 = vsel %vm6479, %v6476, %v6445
        %vm6481 = vcmp.lt.s32.totalorder %v6478, %v6447
        %v6482 = vsel %vm6481, %v6478, %v6447
        %vm6483 = vcmp.lt.s32.totalorder %v6480, %v6482
        %v6484 = vsel %vm6483, %v6480, %v6482
        %v6485 = vrot.slane %v6484, 4
        %vm6486 = vcmp.lt.s32.totalorder %v6484, %v6485
        %v6487 = vsel %vm6486, %v6484, %v6485
        %v6488 = vrot.slane %v6487, 2
        %vm6489 = vcmp.lt.s32.totalorder %v6487, %v6488
        %v6490 = vsel %vm6489, %v6487, %v6488
        %v6491 = vrot.slane %v6490, 1
        %vm6492 = vcmp.lt.s32.totalorder %v6490, %v6491
        %v6493 = vsel %vm6492, %v6490, %v6491
        %vm6494 = vcmp.eq.s32.totalorder %v589, %v6470
        %vm6495 = vcmp.eq.s32.totalorder %v589, %v6493
        %vm6496 = vcmp.eq.s32.totalorder %v590, %v6470
        %vm6497 = vcmp.eq.s32.totalorder %v590, %v6493
        %vm6498 = vcmp.eq.s32.totalorder %v591, %v6470
        %vm6499 = vcmp.eq.s32.totalorder %v591, %v6493
        %vm6500 = vcmp.eq.s32.totalorder %v592, %v6470
        %vm6501 = vcmp.eq.s32.totalorder %v592, %v6493
        %vm6502 = vcmp.eq.s32.totalorder %v593, %v6470
        %vm6503 = vcmp.eq.s32.totalorder %v593, %v6493
        %vm6504 = vcmp.eq.s32.totalorder %v594, %v6470
        %vm6505 = vcmp.eq.s32.totalorder %v594, %v6493
        %vm6506 = vcmp.eq.s32.totalorder %v595, %v6470
        %vm6507 = vcmp.eq.s32.totalorder %v595, %v6493
        %vm6508 = vcmp.eq.s32.totalorder %v596, %v6470
        %vm6509 = vcmp.eq.s32.totalorder %v596, %v6493
        %v6510 = vsel %vm6494, 1, 0
        %v6511 = vsel %vm6495, 1, 0
        %v6512 = vsel %vm6496, 1, 0
        %v6513 = vsel %vm6497, 1, 0
        %v6514 = vsel %vm6498, 1, 0
        %v6515 = vsel %vm6499, 1, 0
        %v6516 = vsel %vm6500, 1, 0
        %v6517 = vsel %vm6501, 1, 0
        %v6518 = vsel %vm6502, 1, 0
        %v6519 = vsel %vm6503, 1, 0
        %v6520 = vsel %vm6504, 1, 0
        %v6521 = vsel %vm6505, 1, 0
        %v6522 = vsel %vm6506, 1, 0
        %v6523 = vsel %vm6507, 1, 0
        %v6524 = vsel %vm6508, 1, 0
        %v6525 = vsel %vm6509, 1, 0
        %v6526 = vcvt.s32.f32 %v6510
        %v6527 = vcvt.s32.f32 %v6511
        %v6528 = vcvt.s32.f32 %v6512
        %v6529 = vcvt.s32.f32 %v6513
        %v6530 = vcvt.s32.f32 %v6514
        %v6531 = vcvt.s32.f32 %v6515
        %v6532 = vcvt.s32.f32 %v6516
        %v6533 = vcvt.s32.f32 %v6517
        %v6534 = vcvt.s32.f32 %v6518
        %v6535 = vcvt.s32.f32 %v6519
        %v6536 = vcvt.s32.f32 %v6520
        %v6537 = vcvt.s32.f32 %v6521
        %v6538 = vcvt.s32.f32 %v6522
        %v6539 = vcvt.s32.f32 %v6523
        %v6540 = vcvt.s32.f32 %v6524
        %v6541 = vcvt.s32.f32 %v6525
        %v6542 = vpack.c.bf16 %v6528, %v6526
        %v6543 = vpack.c.bf16 %v6529, %v6527
        %v6544 = vpack.c.bf16 %v6532, %v6530
        %v6545 = vpack.c.bf16 %v6533, %v6531
        %v6546 = vpack.c.bf16 %v6536, %v6534
        %v6547 = vpack.c.bf16 %v6537, %v6535
        %v6548 = vpack.c.bf16 %v6540, %v6538
        %v6549 = vpack.c.bf16 %v6541, %v6539
        %6550 = vmatprep.subr.bf16.mxu0 %v507
        %6551 = vmatpush1.bf16.xpose.msra.mxu0 %v506
        %6552 = vmatprep.subr.bf16.mxu0 0
        %6553 = vmatpush1.bf16.xpose.msra.mxu0 0
        %6554 = vmatprep.subr.bf16.mxu0 0
        %6555 = vmatpush1.bf16.xpose.msra.mxu0 0
        %6556 = vmatprep.subr.bf16.mxu0 0
        %6557 = vmatpush1.bf16.xpose.msra.mxu0 0
        %6558 = vmatprep.subr.bf16.mxu0 0
        %6559 = vmatpush1.bf16.xpose.msra.mxu0 0
        %6560 = vmatprep.subr.bf16.mxu0 0
        %6561 = vmatpush1.bf16.xpose.msra.mxu0 0
        %6562 = vmatprep.subr.bf16.mxu0 0
        %6563 = vmatpush1.bf16.xpose.msra.mxu0 0
        %6564 = vmatprep.subr.bf16.mxu0 0
        %6565 = vmatpush1.bf16.xpose.msra.mxu0 0
        %6566 = vmatprep.subr.bf16.mxu0 0
        %6567 = vmatpush1.bf16.xpose.msra.mxu0 0
        %6568 = vmatprep.subr.bf16.mxu0 0
        %6569 = vmatpush1.bf16.xpose.msra.mxu0 0
        %6570 = vmatprep.subr.bf16.mxu0 0
        %6571 = vmatpush1.bf16.xpose.msra.mxu0 0
        %6572 = vmatprep.subr.bf16.mxu0 0
        %6573 = vmatpush1.bf16.xpose.msra.mxu0 0
        %6574 = vmatprep.subr.bf16.mxu0 0
        %6575 = vmatpush1.bf16.xpose.msra.mxu0 0
        %6576 = vmatprep.subr.bf16.mxu0 0
        %6577 = vmatpush1.bf16.xpose.msra.mxu0 0
        %6578 = vmatprep.subr.bf16.mxu0 0
        %6579 = vmatpush1.bf16.xpose.msra.mxu0 0
        %6580 = vmatprep.subr.bf16.mxu0 0
        %6581 = vmatpush1.bf16.xpose.msra.mxu0 0
        %6582 = vmatprep.mubr.bf16.mxu0 %v6543
        %6583 = vmatmul.mubr.bf16.gmra.mrb[0].mxu0 %v6542
        %v6584 = vpop.f32.mrb[0].mxu0
        %v6585 = vadd.f32 0.0, %v6584
        %v6586 = vpop.f32.mrb[0].mxu0
        %v6587 = vpop.f32.mrb[0].mxu0
        %v6588 = vadd.f32 0.0, %v6587
        %v6589 = vpop.f32.mrb[0].mxu0
        %6590 = vmatprep.mubr.bf16.mxu0 %v6545
        %6591 = vmatmul.mubr.bf16.gmra.mrb[0].mxu0 %v6544
        %v6592 = vpop.f32.mrb[0].mxu0
        %v6593 = vadd.f32 0.0, %v6592
        %v6594 = vpop.f32.mrb[0].mxu0
        %v6595 = vpop.f32.mrb[0].mxu0
        %v6596 = vadd.f32 0.0, %v6595
        %v6597 = vpop.f32.mrb[0].mxu0
        %6598 = vmatprep.mubr.bf16.mxu0 %v6547
        %6599 = vmatmul.mubr.bf16.gmra.mrb[0].mxu0 %v6546
        %v6600 = vpop.f32.mrb[0].mxu0
        %v6601 = vadd.f32 0.0, %v6600
        %v6602 = vpop.f32.mrb[0].mxu0
        %v6603 = vpop.f32.mrb[0].mxu0
        %v6604 = vadd.f32 0.0, %v6603
        %v6605 = vpop.f32.mrb[0].mxu0
        %6606 = vmatprep.mubr.bf16.mxu0 %v6549
        %6607 = vmatmul.mubr.bf16.gmra.mrb[0].mxu0 %v6548
        %v6608 = vpop.f32.mrb[0].mxu0
        %v6609 = vadd.f32 0.0, %v6608
        %v6610 = vpop.f32.mrb[0].mxu0
        %v6611 = vpop.f32.mrb[0].mxu0
        %v6612 = vadd.f32 0.0, %v6611
        %v6613 = vpop.f32.mrb[0].mxu0
        %6614 = vdwg.mxu0
        %v6615 = vld [vmem:[%s379] sm:$0xff]
        %v6617 = vunpack.c.l.b16 %v6615
        %v6618 = vunpack.c.h.b16 %v6615
        %v6619 = vpack.c.b16 %v6617, %v6617
        %v6620 = vpack.c.b16 %v6618, %v6618
        %v6622 = vsel %vm444, %v6619, 0
        %v6625 = vsel %vm444, %v6620, 0
        %6627 = vmatprep.subr.bf16.mxu0 %v6625
        %6628 = vmatpush1.bf16.msra.mxu0 %v6622
        %6629 = vmatprep.subr.bf16.mxu0 0
        %6630 = vmatpush1.bf16.msra.mxu0 0
        %6631 = vmatprep.subr.bf16.mxu0 0
        %6632 = vmatpush1.bf16.msra.mxu0 0
        %6633 = vmatprep.subr.bf16.mxu0 0
        %6634 = vmatpush1.bf16.msra.mxu0 0
        %6635 = vmatprep.subr.bf16.mxu0 0
        %6636 = vmatpush1.bf16.msra.mxu0 0
        %6637 = vmatprep.subr.bf16.mxu0 0
        %6638 = vmatpush1.bf16.msra.mxu0 0
        %6639 = vmatprep.subr.bf16.mxu0 0
        %6640 = vmatpush1.bf16.msra.mxu0 0
        %6641 = vmatprep.subr.bf16.mxu0 0
        %6642 = vmatpush1.bf16.msra.mxu0 0
        %6643 = vmatprep.subr.bf16.mxu0 0
        %6644 = vmatpush1.bf16.msra.mxu0 0
        %6645 = vmatprep.subr.bf16.mxu0 0
        %6646 = vmatpush1.bf16.msra.mxu0 0
        %6647 = vmatprep.subr.bf16.mxu0 0
        %6648 = vmatpush1.bf16.msra.mxu0 0
        %6649 = vmatprep.subr.bf16.mxu0 0
        %6650 = vmatpush1.bf16.msra.mxu0 0
        %6651 = vmatprep.subr.bf16.mxu0 0
        %6652 = vmatpush1.bf16.msra.mxu0 0
        %6653 = vmatprep.subr.bf16.mxu0 0
        %6654 = vmatpush1.bf16.msra.mxu0 0
        %6655 = vmatprep.subr.bf16.mxu0 0
        %6656 = vmatpush1.bf16.msra.mxu0 0
        %6657 = vmatprep.subr.bf16.mxu0 0
        %6658 = vmatpush1.bf16.msra.mxu0 0
        %6659 = vmatprep.mubr.bf16.mxu0 0
        %6660 = vmatmul.mubr.bf16.gmra.mrb[0].mxu0 %v439
        %v6661 = vpop.f32.mrb[0].mxu0
        %v6662 = vadd.f32 %v412, %v6661
        %v6663 = vpop.f32.mrb[0].mxu0
        %v6664 = vadd.f32 %v412, %v6663
        %v6665 = vpop.f32.mrb[0].mxu0
        %v6666 = vadd.f32 %v417, %v6665
        %v6667 = vpop.f32.mrb[0].mxu0
        %v6668 = vadd.f32 %v417, %v6667
        %6669 = vdwg.mxu0
        %v6670 = vmax.f32 %v6662, %v6664
        %6671 = vmax.xlane.f32.xlu0 %v6670
        %v6672 = vpop.xlane.xlu0 %6671
        %v6673 = vmax.f32 %v6666, %v6668
        %6674 = vmax.xlane.f32.xlu0 %v6673
        %v6675 = vpop.xlane.xlu0 %6674
        %v6676 = vsub.f32 %v6662, %v6672
        %v6677 = vsub.f32 %v6664, %v6672
        %v6678 = vsub.f32 %v6666, %v6675
        %v6679 = vsub.f32 %v6668, %v6675
        %v6680 = vmul.f32 %v6676, 1.442695
        %v6681 = vpow.pop %v6680
        %v6682 = vmul.f32 %v6677, 1.442695
        %v6683 = vpow.pop %v6682
        %v6684 = vmul.f32 %v6678, 1.442695
        %v6685 = vpow.pop %v6684
        %v6686 = vmul.f32 %v6679, 1.442695
        %v6687 = vpow.pop %v6686
        %v6688 = vadd.f32 %v6681, %v6683
        %6689 = vadd.xlane.f32.xlu0 %v6688
        %v6690 = vpop.xlane.xlu0 %6689
        %v6691 = vadd.f32 %v6685, %v6687
        %6692 = vadd.xlane.f32.xlu0 %v6691
        %v6693 = vpop.xlane.xlu0 %6692
        %v6694 = vrcp.pop %v6690
        %v6695 = vmul.f32 %v6681, %v6694
        %v6696 = vmul.f32 %v6683, %v6694
        %v6697 = vrcp.pop %v6693
        %v6698 = vmul.f32 %v6685, %v6697
        %v6699 = vmul.f32 %v6687, %v6697
        %v6700 = vpack.c.bf16 %v6698, %v6695
        %v6701 = vpack.c.bf16 %v6699, %v6696
        %v6702 = vpack.c.bf16 %v6666, %v6662
        %v6703 = vpack.c.bf16 %v6668, %v6664
        %6704 = vmatprep.subr.bf16.mxu0 %v6703
        %6705 = vmatpush1.bf16.xpose.msra.mxu0 %v6702
        %6706 = vmatprep.subr.bf16.mxu0 0
        %6707 = vmatpush1.bf16.xpose.msra.mxu0 0
        %6708 = vmatprep.subr.bf16.mxu0 0
        %6709 = vmatpush1.bf16.xpose.msra.mxu0 0
        %6710 = vmatprep.subr.bf16.mxu0 0
        %6711 = vmatpush1.bf16.xpose.msra.mxu0 0
        %6712 = vmatprep.subr.bf16.mxu0 0
        %6713 = vmatpush1.bf16.xpose.msra.mxu0 0
        %6714 = vmatprep.subr.bf16.mxu0 0
        %6715 = vmatpush1.bf16.xpose.msra.mxu0 0
        %6716 = vmatprep.subr.bf16.mxu0 0
        %6717 = vmatpush1.bf16.xpose.msra.mxu0 0
        %6718 = vmatprep.subr.bf16.mxu0 0
        %6719 = vmatpush1.bf16.xpose.msra.mxu0 0
        %6720 = vmatprep.subr.bf16.mxu0 0
        %6721 = vmatpush1.bf16.xpose.msra.mxu0 0
        %6722 = vmatprep.subr.bf16.mxu0 0
        %6723 = vmatpush1.bf16.xpose.msra.mxu0 0
        %6724 = vmatprep.subr.bf16.mxu0 0
        %6725 = vmatpush1.bf16.xpose.msra.mxu0 0
        %6726 = vmatprep.subr.bf16.mxu0 0
        %6727 = vmatpush1.bf16.xpose.msra.mxu0 0
        %6728 = vmatprep.subr.bf16.mxu0 0
        %6729 = vmatpush1.bf16.xpose.msra.mxu0 0
        %6730 = vmatprep.subr.bf16.mxu0 0
        %6731 = vmatpush1.bf16.xpose.msra.mxu0 0
        %6732 = vmatprep.subr.bf16.mxu0 0
        %6733 = vmatpush1.bf16.xpose.msra.mxu0 0
        %6734 = vmatprep.subr.bf16.mxu0 0
        %6735 = vmatpush1.bf16.xpose.msra.mxu0 0
        %6736 = vmatprep.mubr.bf16.mxu0 %v6701
        %6737 = vmatmul.mubr.bf16.gmra.mrb[0].mxu0 %v6700
        %v6738 = vpop.f32.mrb[0].mxu0
        %v6739 = vadd.f32 0.0, %v6738
        %v6740 = vpop.f32.mrb[0].mxu0
        %v6741 = vpop.f32.mrb[0].mxu0
        %v6742 = vadd.f32 0.0, %v6741
        %v6743 = vpop.f32.mrb[0].mxu0
        %6744 = vdwg.mxu0
        %6745 = vst.msk [vmem:[%s394] sm:$0xff] %vm586, %v6739
        %6746 = vst.msk [vmem:[%s394 + $0x8] sm:$0xff] %vm586, %v6742
        %s6747 = scalar_lea.vmem %s379, 8
        %v6748 = vld [vmem:[%s6747] sm:$0xff]
        %v6750 = vunpack.c.l.b16 %v6748
        %v6751 = vunpack.c.h.b16 %v6748
        %v6752 = vpack.c.b16 %v6750, %v6750
        %v6753 = vpack.c.b16 %v6751, %v6751
        %v6755 = vsel %vm444, %v6752, 0
        %v6758 = vsel %vm444, %v6753, 0
        %6760 = vmatprep.subr.bf16.mxu0 %v6758
        %6761 = vmatpush1.bf16.msra.mxu0 %v6755
        %6762 = vmatprep.subr.bf16.mxu0 0
        %6763 = vmatpush1.bf16.msra.mxu0 0
        %6764 = vmatprep.subr.bf16.mxu0 0
        %6765 = vmatpush1.bf16.msra.mxu0 0
        %6766 = vmatprep.subr.bf16.mxu0 0
        %6767 = vmatpush1.bf16.msra.mxu0 0
        %6768 = vmatprep.subr.bf16.mxu0 0
        %6769 = vmatpush1.bf16.msra.mxu0 0
        %6770 = vmatprep.subr.bf16.mxu0 0
        %6771 = vmatpush1.bf16.msra.mxu0 0
        %6772 = vmatprep.subr.bf16.mxu0 0
        %6773 = vmatpush1.bf16.msra.mxu0 0
        %6774 = vmatprep.subr.bf16.mxu0 0
        %6775 = vmatpush1.bf16.msra.mxu0 0
        %6776 = vmatprep.subr.bf16.mxu0 0
        %6777 = vmatpush1.bf16.msra.mxu0 0
        %6778 = vmatprep.subr.bf16.mxu0 0
        %6779 = vmatpush1.bf16.msra.mxu0 0
        %6780 = vmatprep.subr.bf16.mxu0 0
        %6781 = vmatpush1.bf16.msra.mxu0 0
        %6782 = vmatprep.subr.bf16.mxu0 0
        %6783 = vmatpush1.bf16.msra.mxu0 0
        %6784 = vmatprep.subr.bf16.mxu0 0
        %6785 = vmatpush1.bf16.msra.mxu0 0
        %6786 = vmatprep.subr.bf16.mxu0 0
        %6787 = vmatpush1.bf16.msra.mxu0 0
        %6788 = vmatprep.subr.bf16.mxu0 0
        %6789 = vmatpush1.bf16.msra.mxu0 0
        %6790 = vmatprep.subr.bf16.mxu0 0
        %6791 = vmatpush1.bf16.msra.mxu0 0
        %6792 = vmatprep.mubr.bf16.mxu0 0
        %6793 = vmatmul.mubr.bf16.gmra.mrb[0].mxu0 %v439
        %v6794 = vpop.f32.mrb[0].mxu0
        %v6795 = vadd.f32 %v412, %v6794
        %v6796 = vpop.f32.mrb[0].mxu0
        %v6797 = vadd.f32 %v412, %v6796
        %v6798 = vpop.f32.mrb[0].mxu0
        %v6799 = vadd.f32 %v417, %v6798
        %v6800 = vpop.f32.mrb[0].mxu0
        %v6801 = vadd.f32 %v417, %v6800
        %6802 = vdwg.mxu0
        %v6803 = vmax.f32 %v6795, %v6797
        %6804 = vmax.xlane.f32.xlu0 %v6803
        %v6805 = vpop.xlane.xlu0 %6804
        %v6806 = vmax.f32 %v6799, %v6801
        %6807 = vmax.xlane.f32.xlu0 %v6806
        %v6808 = vpop.xlane.xlu0 %6807
        %v6809 = vsub.f32 %v6795, %v6805
        %v6810 = vsub.f32 %v6797, %v6805
        %v6811 = vsub.f32 %v6799, %v6808
        %v6812 = vsub.f32 %v6801, %v6808
        %v6813 = vmul.f32 %v6809, 1.442695
        %v6814 = vpow.pop %v6813
        %v6815 = vmul.f32 %v6810, 1.442695
        %v6816 = vpow.pop %v6815
        %v6817 = vmul.f32 %v6811, 1.442695
        %v6818 = vpow.pop %v6817
        %v6819 = vmul.f32 %v6812, 1.442695
        %v6820 = vpow.pop %v6819
        %v6821 = vadd.f32 %v6814, %v6816
        %6822 = vadd.xlane.f32.xlu0 %v6821
        %v6823 = vpop.xlane.xlu0 %6822
        %v6824 = vadd.f32 %v6818, %v6820
        %6825 = vadd.xlane.f32.xlu0 %v6824
        %v6826 = vpop.xlane.xlu0 %6825
        %v6827 = vrcp.pop %v6823
        %v6828 = vmul.f32 %v6814, %v6827
        %v6829 = vmul.f32 %v6816, %v6827
        %v6830 = vrcp.pop %v6826
        %v6831 = vmul.f32 %v6818, %v6830
        %v6832 = vmul.f32 %v6820, %v6830
        %v6833 = vpack.c.bf16 %v6831, %v6828
        %v6834 = vpack.c.bf16 %v6832, %v6829
        %v6835 = vpack.c.bf16 %v6799, %v6795
        %v6836 = vpack.c.bf16 %v6801, %v6797
        %6837 = vmatprep.subr.bf16.mxu0 %v6836
        %6838 = vmatpush1.bf16.xpose.msra.mxu0 %v6835
        %6839 = vmatprep.subr.bf16.mxu0 0
        %6840 = vmatpush1.bf16.xpose.msra.mxu0 0
        %6841 = vmatprep.subr.bf16.mxu0 0
        %6842 = vmatpush1.bf16.xpose.msra.mxu0 0
        %6843 = vmatprep.subr.bf16.mxu0 0
        %6844 = vmatpush1.bf16.xpose.msra.mxu0 0
        %6845 = vmatprep.subr.bf16.mxu0 0
        %6846 = vmatpush1.bf16.xpose.msra.mxu0 0
        %6847 = vmatprep.subr.bf16.mxu0 0
        %6848 = vmatpush1.bf16.xpose.msra.mxu0 0
        %6849 = vmatprep.subr.bf16.mxu0 0
        %6850 = vmatpush1.bf16.xpose.msra.mxu0 0
        %6851 = vmatprep.subr.bf16.mxu0 0
        %6852 = vmatpush1.bf16.xpose.msra.mxu0 0
        %6853 = vmatprep.subr.bf16.mxu0 0
        %6854 = vmatpush1.bf16.xpose.msra.mxu0 0
        %6855 = vmatprep.subr.bf16.mxu0 0
        %6856 = vmatpush1.bf16.xpose.msra.mxu0 0
        %6857 = vmatprep.subr.bf16.mxu0 0
        %6858 = vmatpush1.bf16.xpose.msra.mxu0 0
        %6859 = vmatprep.subr.bf16.mxu0 0
        %6860 = vmatpush1.bf16.xpose.msra.mxu0 0
        %6861 = vmatprep.subr.bf16.mxu0 0
        %6862 = vmatpush1.bf16.xpose.msra.mxu0 0
        %6863 = vmatprep.subr.bf16.mxu0 0
        %6864 = vmatpush1.bf16.xpose.msra.mxu0 0
        %6865 = vmatprep.subr.bf16.mxu0 0
        %6866 = vmatpush1.bf16.xpose.msra.mxu0 0
        %6867 = vmatprep.subr.bf16.mxu0 0
        %6868 = vmatpush1.bf16.xpose.msra.mxu0 0
        %6869 = vmatprep.mubr.bf16.mxu0 %v6834
        %6870 = vmatmul.mubr.bf16.gmra.mrb[0].mxu0 %v6833
        %v6871 = vpop.f32.mrb[0].mxu0
        %v6872 = vadd.f32 0.0, %v6871
        %v6873 = vpop.f32.mrb[0].mxu0
        %v6874 = vpop.f32.mrb[0].mxu0
        %v6875 = vadd.f32 0.0, %v6874
        %v6876 = vpop.f32.mrb[0].mxu0
        %6877 = vdwg.mxu0
        %s6878 = scalar_lea.vmem %s394, 16
        %6879 = vst.msk [vmem:[%s6878] sm:$0xff] %vm586, %v6872
        %6880 = vst.msk [vmem:[%s6878 + $0x8] sm:$0xff] %vm586, %v6875
        %v6881 = vld [vmem:[%s4] sm:$0xf]
        %v6882 = vld [vmem:[%s4 + $0x4] sm:$0xf]
        %v6883 = vld [vmem:[%s4 + $0x8] sm:$0xf]
        %v6884 = vld [vmem:[%s4 + $0xc] sm:$0xf]
        %v6885 = vld [vmem:[%s4 + $0x10] sm:$0xf]
        %v6886 = vld [vmem:[%s4 + $0x14] sm:$0xf]
        %v6887 = vpack.c.bf16 %v6588, %v6585
        %v6888 = vpack.c.bf16 %v6596, %v6593
        %v6889 = vpack.c.bf16 %v6604, %v6601
        %v6890 = vpack.c.bf16 %v6612, %v6609
        %v6897 = vunpack.c.l.b16 %v6881
        %v6898 = vunpack.c.l.b16 %v6882
        %v6899 = vunpack.c.l.b16 %v6883
        %v6900 = vunpack.c.l.b16 %v6884
        %v6901 = vunpack.c.l.b16 %v6885
        %v6902 = vunpack.c.l.b16 %v6886
        %v6903 = vpack.c.b16 %v6898, %v6897
        %v6904 = vpack.c.b16 %v6900, %v6899
        %v6905 = vpack.c.b16 %v6902, %v6901
        %v6907 = vsel %vm586, %v6903, 0
        %v6910 = vsel %vm586, %v6904, 0
        %v6913 = vsel %vm586, %v6905, 0
        %v6916 = vsel %vm586, %v6887, 0
        %v6919 = vsel %vm586, %v6888, 0
        %v6922 = vsel %vm586, %v6889, 0
        %v6925 = vsel %vm586, %v6890, 0
        %6927 = vmatprep.subr.bf16.mxu0 0
        %6928 = vmatpush1.bf16.xpose.msra.mxu0 %v6916
        %6929 = vmatprep.subr.bf16.mxu0 0
        %6930 = vmatpush1.bf16.xpose.msra.mxu0 %v6919
        %6931 = vmatprep.subr.bf16.mxu0 0
        %6932 = vmatpush1.bf16.xpose.msra.mxu0 %v6922
        %6933 = vmatprep.subr.bf16.mxu0 0
        %6934 = vmatpush1.bf16.xpose.msra.mxu0 %v6925
        %6935 = vmatprep.subr.bf16.mxu0 0
        %6936 = vmatpush1.bf16.xpose.msra.mxu0 0
        %6937 = vmatprep.subr.bf16.mxu0 0
        %6938 = vmatpush1.bf16.xpose.msra.mxu0 0
        %6939 = vmatprep.subr.bf16.mxu0 0
        %6940 = vmatpush1.bf16.xpose.msra.mxu0 0
        %6941 = vmatprep.subr.bf16.mxu0 0
        %6942 = vmatpush1.bf16.xpose.msra.mxu0 0
        %6943 = vmatprep.subr.bf16.mxu0 0
        %6944 = vmatpush1.bf16.xpose.msra.mxu0 0
        %6945 = vmatprep.subr.bf16.mxu0 0
        %6946 = vmatpush1.bf16.xpose.msra.mxu0 0
        %6947 = vmatprep.subr.bf16.mxu0 0
        %6948 = vmatpush1.bf16.xpose.msra.mxu0 0
        %6949 = vmatprep.subr.bf16.mxu0 0
        %6950 = vmatpush1.bf16.xpose.msra.mxu0 0
        %6951 = vmatprep.subr.bf16.mxu0 0
        %6952 = vmatpush1.bf16.xpose.msra.mxu0 0
        %6953 = vmatprep.subr.bf16.mxu0 0
        %6954 = vmatpush1.bf16.xpose.msra.mxu0 0
        %6955 = vmatprep.subr.bf16.mxu0 0
        %6956 = vmatpush1.bf16.xpose.msra.mxu0 0
        %6957 = vmatprep.subr.bf16.mxu0 0
        %6958 = vmatpush1.bf16.xpose.msra.mxu0 0
        %6959 = vmatprep.mubr.bf16.mxu0 0
        %6960 = vmatmul.mubr.bf16.gmra.mrb[0].mxu0 %v6907
        %v6961 = vpop.f32.mrb[0].mxu0
        %v6962 = vadd.f32 0.0, %v6961
        %v6963 = vpop.f32.mrb[0].mxu0
        %v6964 = vpop.f32.mrb[0].mxu0
        %v6965 = vadd.f32 0.0, %v6964
        %v6966 = vpop.f32.mrb[0].mxu0
        %6967 = vmatprep.mubr.bf16.mxu0 0
        %6968 = vmatmul.mubr.bf16.gmra.mrb[0].mxu0 %v6910
        %v6969 = vpop.f32.mrb[0].mxu0
        %v6970 = vpop.f32.mrb[0].mxu0
        %v6971 = vpop.f32.mrb[0].mxu0
        %v6972 = vpop.f32.mrb[0].mxu0
        %6973 = vmatprep.mubr.bf16.mxu0 0
        %6974 = vmatmul.mubr.bf16.gmra.mrb[0].mxu0 %v6913
        %v6975 = vpop.f32.mrb[0].mxu0
        %v6976 = vpop.f32.mrb[0].mxu0
        %v6977 = vpop.f32.mrb[0].mxu0
        %v6978 = vpop.f32.mrb[0].mxu0
        %6979 = vdwg.mxu0
        %v6980 = vpack.c.bf16 %v6742, %v6739
        %v6981 = vpack.c.bf16 %v6875, %v6872
        %v6983 = vsel %vm586, %v6980, 0
        %v6986 = vsel %vm586, %v6981, 0
        %6988 = vmatprep.subr.bf16.mxu0 0
        %6989 = vmatpush1.bf16.xpose.msra.mxu0 %v6983
        %6990 = vmatprep.subr.bf16.mxu0 0
        %6991 = vmatpush1.bf16.xpose.msra.mxu0 %v6986
        %6992 = vmatprep.subr.bf16.mxu0 0
        %6993 = vmatpush1.bf16.xpose.msra.mxu0 0
        %6994 = vmatprep.subr.bf16.mxu0 0
        %6995 = vmatpush1.bf16.xpose.msra.mxu0 0
        %6996 = vmatprep.subr.bf16.mxu0 0
        %6997 = vmatpush1.bf16.xpose.msra.mxu0 0
        %6998 = vmatprep.subr.bf16.mxu0 0
        %6999 = vmatpush1.bf16.xpose.msra.mxu0 0
        %7000 = vmatprep.subr.bf16.mxu0 0
        %7001 = vmatpush1.bf16.xpose.msra.mxu0 0
        %7002 = vmatprep.subr.bf16.mxu0 0
        %7003 = vmatpush1.bf16.xpose.msra.mxu0 0
        %7004 = vmatprep.subr.bf16.mxu0 0
        %7005 = vmatpush1.bf16.xpose.msra.mxu0 0
        %7006 = vmatprep.subr.bf16.mxu0 0
        %7007 = vmatpush1.bf16.xpose.msra.mxu0 0
        %7008 = vmatprep.subr.bf16.mxu0 0
        %7009 = vmatpush1.bf16.xpose.msra.mxu0 0
        %7010 = vmatprep.subr.bf16.mxu0 0
        %7011 = vmatpush1.bf16.xpose.msra.mxu0 0
        %7012 = vmatprep.subr.bf16.mxu0 0
        %7013 = vmatpush1.bf16.xpose.msra.mxu0 0
        %7014 = vmatprep.subr.bf16.mxu0 0
        %7015 = vmatpush1.bf16.xpose.msra.mxu0 0
        %7016 = vmatprep.subr.bf16.mxu0 0
        %7017 = vmatpush1.bf16.xpose.msra.mxu0 0
        %7018 = vmatprep.subr.bf16.mxu0 0
        %7019 = vmatpush1.bf16.xpose.msra.mxu0 0
        %7020 = vmatprep.mubr.bf16.mxu0 0
        %7021 = vmatmul.mubr.bf16.gmra.mrb[0].mxu0 %v6907
        %v7022 = vpop.f32.mrb[0].mxu0
        %v7023 = vpop.f32.mrb[0].mxu0
        %v7024 = vpop.f32.mrb[0].mxu0
        %v7025 = vpop.f32.mrb[0].mxu0
        %7026 = vmatprep.mubr.bf16.mxu0 0
        %7027 = vmatmul.mubr.bf16.gmra.mrb[0].mxu0 %v6910
        %v7028 = vpop.f32.mrb[0].mxu0
        %v7029 = vadd.f32 0.0, %v7028
        %v7030 = vpop.f32.mrb[0].mxu0
        %v7031 = vpop.f32.mrb[0].mxu0
        %v7032 = vadd.f32 0.0, %v7031
        %v7033 = vpop.f32.mrb[0].mxu0
        %7034 = vmatprep.mubr.bf16.mxu0 0
        %7035 = vmatmul.mubr.bf16.gmra.mrb[0].mxu0 %v6913
        %v7036 = vpop.f32.mrb[0].mxu0
        %v7037 = vadd.f32 0.0, %v7036
        %v7038 = vpop.f32.mrb[0].mxu0
        %v7039 = vpop.f32.mrb[0].mxu0
        %v7040 = vadd.f32 0.0, %v7039
        %v7041 = vpop.f32.mrb[0].mxu0
        %7042 = vdwg.mxu0
        %7043 = vxpose.xlu0.b32.start [1/16] %v6962, 128
        %7044 = vxpose.xlu0.b32.cont [2/16] %v6965, 128
        %7045 = vxpose.xlu0.b32.cont [3/16] 0.0, 128
        %7046 = vxpose.xlu0.b32.cont [4/16] 0.0, 128
        %7047 = vxpose.xlu0.b32.cont [5/16] 0.0, 128
        %7048 = vxpose.xlu0.b32.cont [6/16] 0.0, 128
        %7049 = vxpose.xlu0.b32.cont [7/16] 0.0, 128
        %7050 = vxpose.xlu0.b32.cont [8/16] 0.0, 128
        %7051 = vxpose.xlu0.b32.cont [9/16] 0.0, 128
        %7052 = vxpose.xlu0.b32.cont [10/16] 0.0, 128
        %7053 = vxpose.xlu0.b32.cont [11/16] 0.0, 128
        %7054 = vxpose.xlu0.b32.cont [12/16] 0.0, 128
        %7055 = vxpose.xlu0.b32.cont [13/16] 0.0, 128
        %7056 = vxpose.xlu0.b32.cont [14/16] 0.0, 128
        %7057 = vxpose.xlu0.b32.cont [15/16] 0.0, 128
        %7058 = vxpose.xlu0.b32.end [16/16] 0.0, 128
        %v7059 = vpop.trf.xlu0
        %v7060 = vpop.trf.xlu0
        %v7061 = vpop.trf.xlu0
        %v7062 = vpop.trf.xlu0
        %v7063 = vpop.trf.xlu0
        %v7064 = vpop.trf.xlu0
        %v7065 = vpop.trf.xlu0
        %v7066 = vpop.trf.xlu0
        %v7067 = vpop.trf.xlu0
        %v7068 = vpop.trf.xlu0
        %v7069 = vpop.trf.xlu0
        %v7070 = vpop.trf.xlu0
        %v7071 = vpop.trf.xlu0
        %v7072 = vpop.trf.xlu0
        %v7073 = vpop.trf.xlu0
        %v7074 = vpop.trf.xlu0
        %v7076 = vsel %vm586, %v7059, 0
        %v7079 = vsel %vm586, %v7060, 0
        %v7082 = vsel %vm586, %v7061, 0
        %v7085 = vsel %vm586, %v7062, 0
        %v7088 = vsel %vm586, %v7063, 0
        %v7091 = vsel %vm586, %v7064, 0
        %v7094 = vsel %vm586, %v7065, 0
        %v7097 = vsel %vm586, %v7066, 0
        %7099 = vmatprep.subr.mxu0 0.0
        %7100 = vmatpush1.msra.mxu0 %v7029
        %7101 = vmatprep.subr.mxu0 0.0
        %7102 = vmatpush1.msra.mxu0 %v7032
        %7103 = vmatprep.subr.mxu0 0.0
        %7104 = vmatpush1.msra.mxu0 0.0
        %7105 = vmatprep.subr.mxu0 0.0
        %7106 = vmatpush1.msra.mxu0 0.0
        %7107 = vmatprep.subr.mxu0 0.0
        %7108 = vmatpush1.msra.mxu0 0.0
        %7109 = vmatprep.subr.mxu0 0.0
        %7110 = vmatpush1.msra.mxu0 0.0
        %7111 = vmatprep.subr.mxu0 0.0
        %7112 = vmatpush1.msra.mxu0 0.0
        %7113 = vmatprep.subr.mxu0 0.0
        %7114 = vmatpush1.msra.mxu0 0.0
        %7115 = vmatprep.subr.mxu0 0.0
        %7116 = vmatpush1.msra.mxu0 0.0
        %7117 = vmatprep.subr.mxu0 0.0
        %7118 = vmatpush1.msra.mxu0 0.0
        %7119 = vmatprep.subr.mxu0 0.0
        %7120 = vmatpush1.msra.mxu0 0.0
        %7121 = vmatprep.subr.mxu0 0.0
        %7122 = vmatpush1.msra.mxu0 0.0
        %7123 = vmatprep.subr.mxu0 0.0
        %7124 = vmatpush1.msra.mxu0 0.0
        %7125 = vmatprep.subr.mxu0 0.0
        %7126 = vmatpush1.msra.mxu0 0.0
        %7127 = vmatprep.subr.mxu0 0.0
        %7128 = vmatpush1.msra.mxu0 0.0
        %7129 = vmatprep.subr.mxu0 0.0
        %7130 = vmatpush1.msra.mxu0 0.0
        %7131 = vmatprep.subr.mxu0 0.0
        %7132 = vmatpush1.msra.mxu0 0.0
        %7133 = vmatprep.subr.mxu0 0.0
        %7134 = vmatpush1.msra.mxu0 0.0
        %7135 = vmatprep.subr.mxu0 0.0
        %7136 = vmatpush1.msra.mxu0 0.0
        %7137 = vmatprep.subr.mxu0 0.0
        %7138 = vmatpush1.msra.mxu0 0.0
        %7139 = vmatprep.subr.mxu0 0.0
        %7140 = vmatpush1.msra.mxu0 0.0
        %7141 = vmatprep.subr.mxu0 0.0
        %7142 = vmatpush1.msra.mxu0 0.0
        %7143 = vmatprep.subr.mxu0 0.0
        %7144 = vmatpush1.msra.mxu0 0.0
        %7145 = vmatprep.subr.mxu0 0.0
        %7146 = vmatpush1.msra.mxu0 0.0
        %7147 = vmatprep.subr.mxu0 0.0
        %7148 = vmatpush1.msra.mxu0 0.0
        %7149 = vmatprep.subr.mxu0 0.0
        %7150 = vmatpush1.msra.mxu0 0.0
        %7151 = vmatprep.subr.mxu0 0.0
        %7152 = vmatpush1.msra.mxu0 0.0
        %7153 = vmatprep.subr.mxu0 0.0
        %7154 = vmatpush1.msra.mxu0 0.0
        %7155 = vmatprep.subr.mxu0 0.0
        %7156 = vmatpush1.msra.mxu0 0.0
        %7157 = vmatprep.subr.mxu0 0.0
        %7158 = vmatpush1.msra.mxu0 0.0
        %7159 = vmatprep.subr.mxu0 0.0
        %7160 = vmatpush1.msra.mxu0 0.0
        %7161 = vmatprep.subr.mxu0 0.0
        %7162 = vmatpush1.msra.mxu0 0.0
        %7163 = vmatprep.mubr.f32.mxu0 0.0
        %7164 = vmatmul.mubr.f32.gmra.mrb[0].mxu0 %v7076
        %v7165 = vpop.f32.mrb[0].mxu0
        %v7166 = vadd.f32 0.0, %v7165
        %v7167 = vpop.f32.mrb[0].mxu0
        %7168 = vmatprep.mubr.f32.mxu0 0.0
        %7169 = vmatmul.mubr.f32.gmra.mrb[0].mxu0 %v7079
        %v7170 = vpop.f32.mrb[0].mxu0
        %v7171 = vadd.f32 0.0, %v7170
        %v7172 = vpop.f32.mrb[0].mxu0
        %7173 = vmatprep.mubr.f32.mxu0 0.0
        %7174 = vmatmul.mubr.f32.gmra.mrb[0].mxu0 %v7082
        %v7175 = vpop.f32.mrb[0].mxu0
        %v7176 = vadd.f32 0.0, %v7175
        %v7177 = vpop.f32.mrb[0].mxu0
        %7178 = vmatprep.mubr.f32.mxu0 0.0
        %7179 = vmatmul.mubr.f32.gmra.mrb[0].mxu0 %v7085
        %v7180 = vpop.f32.mrb[0].mxu0
        %v7181 = vadd.f32 0.0, %v7180
        %v7182 = vpop.f32.mrb[0].mxu0
        %7183 = vmatprep.mubr.f32.mxu0 0.0
        %7184 = vmatmul.mubr.f32.gmra.mrb[0].mxu0 %v7088
        %v7185 = vpop.f32.mrb[0].mxu0
        %v7186 = vadd.f32 0.0, %v7185
        %v7187 = vpop.f32.mrb[0].mxu0
        %7188 = vmatprep.mubr.f32.mxu0 0.0
        %7189 = vmatmul.mubr.f32.gmra.mrb[0].mxu0 %v7091
        %v7190 = vpop.f32.mrb[0].mxu0
        %v7191 = vadd.f32 0.0, %v7190
        %v7192 = vpop.f32.mrb[0].mxu0
        %7193 = vmatprep.mubr.f32.mxu0 0.0
        %7194 = vmatmul.mubr.f32.gmra.mrb[0].mxu0 %v7094
        %v7195 = vpop.f32.mrb[0].mxu0
        %v7196 = vadd.f32 0.0, %v7195
        %v7197 = vpop.f32.mrb[0].mxu0
        %7198 = vmatprep.mubr.f32.mxu0 0.0
        %7199 = vmatmul.mubr.f32.gmra.mrb[0].mxu0 %v7097
        %v7200 = vpop.f32.mrb[0].mxu0
        %v7201 = vadd.f32 0.0, %v7200
        %v7202 = vpop.f32.mrb[0].mxu0
        %7203 = vdwg.mxu0
        %vm7204 = vcmask 261120
        %v7205 = vsel %vm7204, %v7166, -inf
        %7206 = vmax.xlane.f32.xlu0 %v7205
        %v7207 = vpop.xlane.xlu0 %7206
        %v7208 = vsel %vm7204, %v7171, -inf
        %7209 = vmax.xlane.f32.xlu0 %v7208
        %v7210 = vpop.xlane.xlu0 %7209
        %v7211 = vsel %vm7204, %v7176, -inf
        %7212 = vmax.xlane.f32.xlu0 %v7211
        %v7213 = vpop.xlane.xlu0 %7212
        %v7214 = vsel %vm7204, %v7181, -inf
        %7215 = vmax.xlane.f32.xlu0 %v7214
        %v7216 = vpop.xlane.xlu0 %7215
        %v7217 = vsel %vm7204, %v7186, -inf
        %7218 = vmax.xlane.f32.xlu0 %v7217
        %v7219 = vpop.xlane.xlu0 %7218
        %v7220 = vsel %vm7204, %v7191, -inf
        %7221 = vmax.xlane.f32.xlu0 %v7220
        %v7222 = vpop.xlane.xlu0 %7221
        %v7223 = vsel %vm7204, %v7196, -inf
        %7224 = vmax.xlane.f32.xlu0 %v7223
        %v7225 = vpop.xlane.xlu0 %7224
        %v7226 = vsel %vm7204, %v7201, -inf
        %7227 = vmax.xlane.f32.xlu0 %v7226
        %v7228 = vpop.xlane.xlu0 %7227
        %v7229 = vsub.f32 %v7166, %v7207
        %v7230 = vsub.f32 %v7171, %v7210
        %v7231 = vsub.f32 %v7176, %v7213
        %v7232 = vsub.f32 %v7181, %v7216
        %v7233 = vsub.f32 %v7186, %v7219
        %v7234 = vsub.f32 %v7191, %v7222
        %v7235 = vsub.f32 %v7196, %v7225
        %v7236 = vsub.f32 %v7201, %v7228
        %v7237 = vmul.f32 %v7229, 1.442695
        %v7238 = vpow.pop %v7237
        %v7239 = vmul.f32 %v7230, 1.442695
        %v7240 = vpow.pop %v7239
        %v7241 = vmul.f32 %v7231, 1.442695
        %v7242 = vpow.pop %v7241
        %v7243 = vmul.f32 %v7232, 1.442695
        %v7244 = vpow.pop %v7243
        %v7245 = vmul.f32 %v7233, 1.442695
        %v7246 = vpow.pop %v7245
        %v7247 = vmul.f32 %v7234, 1.442695
        %v7248 = vpow.pop %v7247
        %v7249 = vmul.f32 %v7235, 1.442695
        %v7250 = vpow.pop %v7249
        %v7251 = vmul.f32 %v7236, 1.442695
        %v7252 = vpow.pop %v7251
        %v7253 = vsel %vm7204, %v7238, 0.0
        %7254 = vadd.xlane.f32.xlu0 %v7253
        %v7255 = vpop.xlane.xlu0 %7254
        %v7256 = vsel %vm7204, %v7240, 0.0
        %7257 = vadd.xlane.f32.xlu0 %v7256
        %v7258 = vpop.xlane.xlu0 %7257
        %v7259 = vsel %vm7204, %v7242, 0.0
        %7260 = vadd.xlane.f32.xlu0 %v7259
        %v7261 = vpop.xlane.xlu0 %7260
        %v7262 = vsel %vm7204, %v7244, 0.0
        %7263 = vadd.xlane.f32.xlu0 %v7262
        %v7264 = vpop.xlane.xlu0 %7263
        %v7265 = vsel %vm7204, %v7246, 0.0
        %7266 = vadd.xlane.f32.xlu0 %v7265
        %v7267 = vpop.xlane.xlu0 %7266
        %v7268 = vsel %vm7204, %v7248, 0.0
        %7269 = vadd.xlane.f32.xlu0 %v7268
        %v7270 = vpop.xlane.xlu0 %7269
        %v7271 = vsel %vm7204, %v7250, 0.0
        %7272 = vadd.xlane.f32.xlu0 %v7271
        %v7273 = vpop.xlane.xlu0 %7272
        %v7274 = vsel %vm7204, %v7252, 0.0
        %7275 = vadd.xlane.f32.xlu0 %v7274
        %v7276 = vpop.xlane.xlu0 %7275
        %v7277 = vrcp.pop %v7255
        %v7278 = vrcp.pop %v7258
        %v7279 = vrcp.pop %v7261
        %v7280 = vrcp.pop %v7264
        %v7281 = vrcp.pop %v7267
        %v7282 = vrcp.pop %v7270
        %v7283 = vrcp.pop %v7273
        %v7284 = vrcp.pop %v7276
        %v7285 = vmul.f32 %v7238, %v7277
        %v7286 = vmul.f32 %v7240, %v7278
        %v7287 = vmul.f32 %v7242, %v7279
        %v7288 = vmul.f32 %v7244, %v7280
        %v7289 = vmul.f32 %v7246, %v7281
        %v7290 = vmul.f32 %v7248, %v7282
        %v7291 = vmul.f32 %v7250, %v7283
        %v7292 = vmul.f32 %v7252, %v7284
        %v7294 = vsel %vm7204, %v7285, 0
        %v7297 = vsel %vm7204, %v7286, 0
        %v7300 = vsel %vm7204, %v7287, 0
        %v7303 = vsel %vm7204, %v7288, 0
        %v7306 = vsel %vm7204, %v7289, 0
        %v7309 = vsel %vm7204, %v7290, 0
        %v7312 = vsel %vm7204, %v7291, 0
        %v7315 = vsel %vm7204, %v7292, 0
        %v7318 = vsel %vm7204, %v7037, 0
        %v7321 = vsel %vm7204, %v7040, 0
        %7323 = vmatprep.subr.mxu0 0.0
        %7324 = vmatpush1.xpose.msra.mxu0 %v7318
        %7325 = vmatprep.subr.mxu0 0.0
        %7326 = vmatpush1.xpose.msra.mxu0 %v7321
        %7327 = vmatprep.subr.mxu0 0.0
        %7328 = vmatpush1.xpose.msra.mxu0 0.0
        %7329 = vmatprep.subr.mxu0 0.0
        %7330 = vmatpush1.xpose.msra.mxu0 0.0
        %7331 = vmatprep.subr.mxu0 0.0
        %7332 = vmatpush1.xpose.msra.mxu0 0.0
        %7333 = vmatprep.subr.mxu0 0.0
        %7334 = vmatpush1.xpose.msra.mxu0 0.0
        %7335 = vmatprep.subr.mxu0 0.0
        %7336 = vmatpush1.xpose.msra.mxu0 0.0
        %7337 = vmatprep.subr.mxu0 0.0
        %7338 = vmatpush1.xpose.msra.mxu0 0.0
        %7339 = vmatprep.subr.mxu0 0.0
        %7340 = vmatpush1.xpose.msra.mxu0 0.0
        %7341 = vmatprep.subr.mxu0 0.0
        %7342 = vmatpush1.xpose.msra.mxu0 0.0
        %7343 = vmatprep.subr.mxu0 0.0
        %7344 = vmatpush1.xpose.msra.mxu0 0.0
        %7345 = vmatprep.subr.mxu0 0.0
        %7346 = vmatpush1.xpose.msra.mxu0 0.0
        %7347 = vmatprep.subr.mxu0 0.0
        %7348 = vmatpush1.xpose.msra.mxu0 0.0
        %7349 = vmatprep.subr.mxu0 0.0
        %7350 = vmatpush1.xpose.msra.mxu0 0.0
        %7351 = vmatprep.subr.mxu0 0.0
        %7352 = vmatpush1.xpose.msra.mxu0 0.0
        %7353 = vmatprep.subr.mxu0 0.0
        %7354 = vmatpush1.xpose.msra.mxu0 0.0
        %7355 = vmatprep.subr.mxu0 0.0
        %7356 = vmatpush1.xpose.msra.mxu0 0.0
        %7357 = vmatprep.subr.mxu0 0.0
        %7358 = vmatpush1.xpose.msra.mxu0 0.0
        %7359 = vmatprep.subr.mxu0 0.0
        %7360 = vmatpush1.xpose.msra.mxu0 0.0
        %7361 = vmatprep.subr.mxu0 0.0
        %7362 = vmatpush1.xpose.msra.mxu0 0.0
        %7363 = vmatprep.subr.mxu0 0.0
        %7364 = vmatpush1.xpose.msra.mxu0 0.0
        %7365 = vmatprep.subr.mxu0 0.0
        %7366 = vmatpush1.xpose.msra.mxu0 0.0
        %7367 = vmatprep.subr.mxu0 0.0
        %7368 = vmatpush1.xpose.msra.mxu0 0.0
        %7369 = vmatprep.subr.mxu0 0.0
        %7370 = vmatpush1.xpose.msra.mxu0 0.0
        %7371 = vmatprep.subr.mxu0 0.0
        %7372 = vmatpush1.xpose.msra.mxu0 0.0
        %7373 = vmatprep.subr.mxu0 0.0
        %7374 = vmatpush1.xpose.msra.mxu0 0.0
        %7375 = vmatprep.subr.mxu0 0.0
        %7376 = vmatpush1.xpose.msra.mxu0 0.0
        %7377 = vmatprep.subr.mxu0 0.0
        %7378 = vmatpush1.xpose.msra.mxu0 0.0
        %7379 = vmatprep.subr.mxu0 0.0
        %7380 = vmatpush1.xpose.msra.mxu0 0.0
        %7381 = vmatprep.subr.mxu0 0.0
        %7382 = vmatpush1.xpose.msra.mxu0 0.0
        %7383 = vmatprep.subr.mxu0 0.0
        %7384 = vmatpush1.xpose.msra.mxu0 0.0
        %7385 = vmatprep.subr.mxu0 0.0
        %7386 = vmatpush1.xpose.msra.mxu0 0.0
        %7387 = vmatprep.mubr.f32.mxu0 0.0
        %7388 = vmatmul.mubr.f32.gmra.mrb[0].mxu0 %v7294
        %v7389 = vpop.f32.mrb[0].mxu0
        %v7390 = vadd.f32 0.0, %v7389
        %v7391 = vpop.f32.mrb[0].mxu0
        %7392 = vmatprep.mubr.f32.mxu0 0.0
        %7393 = vmatmul.mubr.f32.gmra.mrb[0].mxu0 %v7297
        %v7394 = vpop.f32.mrb[0].mxu0
        %v7395 = vadd.f32 0.0, %v7394
        %v7396 = vpop.f32.mrb[0].mxu0
        %7397 = vmatprep.mubr.f32.mxu0 0.0
        %7398 = vmatmul.mubr.f32.gmra.mrb[0].mxu0 %v7300
        %v7399 = vpop.f32.mrb[0].mxu0
        %v7400 = vadd.f32 0.0, %v7399
        %v7401 = vpop.f32.mrb[0].mxu0
        %7402 = vmatprep.mubr.f32.mxu0 0.0
        %7403 = vmatmul.mubr.f32.gmra.mrb[0].mxu0 %v7303
        %v7404 = vpop.f32.mrb[0].mxu0
        %v7405 = vadd.f32 0.0, %v7404
        %v7406 = vpop.f32.mrb[0].mxu0
        %7407 = vmatprep.mubr.f32.mxu0 0.0
        %7408 = vmatmul.mubr.f32.gmra.mrb[0].mxu0 %v7306
        %v7409 = vpop.f32.mrb[0].mxu0
        %v7410 = vadd.f32 0.0, %v7409
        %v7411 = vpop.f32.mrb[0].mxu0
        %7412 = vmatprep.mubr.f32.mxu0 0.0
        %7413 = vmatmul.mubr.f32.gmra.mrb[0].mxu0 %v7309
        %v7414 = vpop.f32.mrb[0].mxu0
        %v7415 = vadd.f32 0.0, %v7414
        %v7416 = vpop.f32.mrb[0].mxu0
        %7417 = vmatprep.mubr.f32.mxu0 0.0
        %7418 = vmatmul.mubr.f32.gmra.mrb[0].mxu0 %v7312
        %v7419 = vpop.f32.mrb[0].mxu0
        %v7420 = vadd.f32 0.0, %v7419
        %v7421 = vpop.f32.mrb[0].mxu0
        %7422 = vmatprep.mubr.f32.mxu0 0.0
        %7423 = vmatmul.mubr.f32.gmra.mrb[0].mxu0 %v7315
        %v7424 = vpop.f32.mrb[0].mxu0
        %v7425 = vadd.f32 0.0, %v7424
        %v7426 = vpop.f32.mrb[0].mxu0
        %7427 = vdwg.mxu0
        %v7428 = vadd.f32 %v6585, %v7390
        %v7429 = vadd.f32 %v6588, %v7395
        %v7430 = vadd.f32 %v6593, %v7400
        %v7431 = vadd.f32 %v6596, %v7405
        %v7432 = vadd.f32 %v6601, %v7410
        %v7433 = vadd.f32 %v6604, %v7415
        %v7434 = vadd.f32 %v6609, %v7420
        %v7435 = vadd.f32 %v6612, %v7425
        %7436 = vst.msk [vmem:[%s389] sm:$0xff] %vm586, %v7428
        %7437 = vst.msk [vmem:[%s389 + $0x8] sm:$0xff] %vm586, %v7429
        %7438 = vst.msk [vmem:[%s389 + $0x10] sm:$0xff] %vm586, %v7430
        %7439 = vst.msk [vmem:[%s389 + $0x18] sm:$0xff] %vm586, %v7431
        %7440 = vst.msk [vmem:[%s389 + $0x20] sm:$0xff] %vm586, %v7432
        %7441 = vst.msk [vmem:[%s389 + $0x28] sm:$0xff] %vm586, %v7433
        %7442 = vst.msk [vmem:[%s389 + $0x30] sm:$0xff] %vm586, %v7434
        %7443 = vst.msk [vmem:[%s389 + $0x38] sm:$0xff] %vm586, %v7435
        %p7444 = scmp.lt.s32.totalorder %s24, 1
        %s7445 = scalar_select %p7444, %s24, 1
        %s7446 = smul.addr %s7445, 4
        %s7447 = smul.addr %s7446, 8
        %s7448 = scalar_lea.vmem %s5, %s7447
        %p7449 = scmp.lt.s32.totalorder %s24, 1
        %s7450 = scalar_select %p7449, %s24, 1
        %s7451 = smul.addr %s7450, 8
        %s7452 = smul.addr %s7451, 8
        %s7453 = scalar_lea.vmem %s6, %s7452
        %p7454 = scmp.lt.s32.totalorder %s24, 1
        %s7455 = scalar_select %p7454, %s24, 1
        %s7456 = smul.addr %s7455, 4
        %s7457 = smul.addr %s7456, 8
        %s7458 = scalar_lea.vmem %s7, %s7457
        %s7459 = sand.u32 %s225, 1
        %s7460 = scalar_lea.sflag [#allocation3], %s7459
        %s7461 = sand.u32 %s225, 1
        %s7462 = smul.addr %s7461, 8
        %s7463 = scalar_lea.vmem [#allocation2], %s7462
        %p7464 = scmp.lt.s32.totalorder %s24, 1
        %s7465 = scalar_select %p7464, %s24, 1
        %s7466 = smul.addr %s7465, 2
        %s7467 = smul.addr %s7466, 8
        %s7468 = scalar_lea.vmem %s9, %s7467
        // Predicated region
        $region41: #{slot_generator_forward.1} parent=39 // pred_check
          %p7469 = pneg %p157
        $region42: #{slot_generator_forward.1} parent=39 // pred_check_branch
          %7471 = sbr.rel (%p7469) target = $region44
        $region43: #{slot_generator_forward.1} parent=39 // pred_region
          _
        $region44: #{slot_generator_forward.1} parent=39 // pred_fallthru
          _
        // Predicated region
        $region45: #{slot_generator_forward.1} parent=39 // pred_check
          %p7472 = pneg %p183
        $region46: #{slot_generator_forward.1} parent=39 // pred_check_branch
          %7474 = sbr.rel (%p7472) target = $region48
        $region47: #{slot_generator_forward.1} parent=39 // pred_region
          _
        $region48: #{slot_generator_forward.1} parent=39 // pred_fallthru
          _
        // Predicated region
        $region49: #{slot_generator_forward.1} parent=39 // pred_check
          %p7475 = pneg %p209
        $region50: #{slot_generator_forward.1} parent=39 // pred_check_branch
          %7477 = sbr.rel (%p7475) target = $region52
        $region51: #{slot_generator_forward.1} parent=39 // pred_region
          _
        $region52: #{slot_generator_forward.1} parent=39 // pred_fallthru
          _
        // Predicated region
        $region53: #{slot_generator_forward.1} parent=39 // pred_check
          %p7478 = pneg %p235
        $region54: #{slot_generator_forward.1} parent=39 // pred_check_branch
          %7480 = sbr.rel (%p7478) target = $region56
        $region55: #{slot_generator_forward.1} parent=39 // pred_region
          %s7482 = ssub.s32 128, 128
          %7483 = vsyncadd %s7460, %s7482
          %s7484 = smul.addr %s24, 128
          %s7485 = scalar_lea.hbm %s8, %s7484
          %s7487 = sshll.u32 %s7463, 4
          %s7488 = int_to_ptr.vmem [resolvable:$true] %s7487
          %7490 = dma.vmem_to_hbm [thread:$0]  %s7488, 128, %s7485, %s7460
        $region56: #{slot_generator_forward.1} parent=39 // pred_fallthru
          _
        // Predicated region
        $region57: #{slot_generator_forward.1} parent=39 // pred_check
          %p7491 = pneg %p261
        $region58: #{slot_generator_forward.1} parent=39 // pred_check_branch
          %7493 = sbr.rel (%p7491) target = $region60
        $region59: #{slot_generator_forward.1} parent=39 // pred_region
          _
        $region60: #{slot_generator_forward.1} parent=39 // pred_fallthru
          _
      $region40: #{slot_generator_forward.1} parent=5 // pred_fallthru
        _
      %p7494 = scmp.le.s32.totalorder 2, %s19
      // Predicated region
      $region61: #{slot_generator_forward.1} parent=5 // pred_check
        %p7495 = pneg %p7494
      $region62: #{slot_generator_forward.1} parent=5 // pred_check_branch
        %7497 = sbr.rel (%p7495) target = $region64
      $region63: #{slot_generator_forward.1} parent=5 // pred_region
        %s7498 = ssub.s32 %s19, 2
        // Predicated region
        $region65: #{slot_generator_forward.1} parent=63 // pred_check
          %p7499 = pneg %p163
        $region66: #{slot_generator_forward.1} parent=63 // pred_check_branch
          %7501 = sbr.rel (%p7499) target = $region68
        $region67: #{slot_generator_forward.1} parent=63 // pred_region
          %p7502 = scmp.lt.s32.totalorder %s25, 1
          %s7503 = scalar_select %p7502, %s25, 1
          %s7504 = smul.addr %s7503, 4
          %s7505 = smul.addr %s7504, 8
          %s7506 = scalar_lea.vmem %s5, %s7505
        $region68: #{slot_generator_forward.1} parent=63 // pred_fallthru
          _
        // Predicated region
        $region69: #{slot_generator_forward.1} parent=63 // pred_check
          %p7507 = pneg %p189
        $region70: #{slot_generator_forward.1} parent=63 // pred_check_branch
          %7509 = sbr.rel (%p7507) target = $region72
        $region71: #{slot_generator_forward.1} parent=63 // pred_region
          %p7510 = scmp.lt.s32.totalorder %s25, 1
          %s7511 = scalar_select %p7510, %s25, 1
          %s7512 = smul.addr %s7511, 8
          %s7513 = smul.addr %s7512, 8
          %s7514 = scalar_lea.vmem %s6, %s7513
        $region72: #{slot_generator_forward.1} parent=63 // pred_fallthru
          _
        // Predicated region
        $region73: #{slot_generator_forward.1} parent=63 // pred_check
          %p7515 = pneg %p215
        $region74: #{slot_generator_forward.1} parent=63 // pred_check_branch
          %7517 = sbr.rel (%p7515) target = $region76
        $region75: #{slot_generator_forward.1} parent=63 // pred_region
          %p7518 = scmp.lt.s32.totalorder %s25, 1
          %s7519 = scalar_select %p7518, %s25, 1
          %s7520 = smul.addr %s7519, 4
          %s7521 = smul.addr %s7520, 8
          %s7522 = scalar_lea.vmem %s7, %s7521
        $region76: #{slot_generator_forward.1} parent=63 // pred_fallthru
          _
        // Predicated region
        $region77: #{slot_generator_forward.1} parent=63 // pred_check
          %p7523 = pneg %p241
        $region78: #{slot_generator_forward.1} parent=63 // pred_check_branch
          %7525 = sbr.rel (%p7523) target = $region80
        $region79: #{slot_generator_forward.1} parent=63 // pred_region
          %s7526 = sand.u32 %s226, 1
          %s7527 = scalar_lea.sflag [#allocation3], %s7526
          %s7528 = sand.u32 %s226, 1
          %s7529 = smul.addr %s7528, 8
          %s7530 = scalar_lea.vmem [#allocation2], %s7529
          %7531 = dma.done %s7527, 128
        $region80: #{slot_generator_forward.1} parent=63 // pred_fallthru
          _
        // Predicated region
        $region81: #{slot_generator_forward.1} parent=63 // pred_check
          %p7532 = pneg %p267
        $region82: #{slot_generator_forward.1} parent=63 // pred_check_branch
          %7534 = sbr.rel (%p7532) target = $region84
        $region83: #{slot_generator_forward.1} parent=63 // pred_region
          %p7535 = scmp.lt.s32.totalorder %s25, 1
          %s7536 = scalar_select %p7535, %s25, 1
          %s7537 = smul.addr %s7536, 2
          %s7538 = smul.addr %s7537, 8
          %s7539 = scalar_lea.vmem %s9, %s7538
        $region84: #{slot_generator_forward.1} parent=63 // pred_fallthru
          _
      $region64: #{slot_generator_forward.1} parent=5 // pred_fallthru
        _
    $region6: #{slot_generator_forward.1} parent=1 // loop_footer
      %s23 = sadd.s32 1, %s19
    $region7: #{slot_generator_forward.1} parent=1 // loop_footer_branch
      %18 = sbr.rel target = $region3
    $region8: #{slot_generator_forward.1} parent=1 // loop_exit
      _
    %7540 = vsyncpa [#allocation3], 1
    %s7541 = scalar_lea.sflag [#allocation3], 1
    %7542 = vsyncpa %s7541, 1

</llo_original>
